<compile_context>
chip_gen: v7x
topology: tpu7x:2x2x1
jax: 0.10.0
libtpu: 0.0.40
codegen_flags: <defaults>
</compile_context>

<pallas_src>
import random

import jax
import jax.numpy as jnp
from jax import lax
from jax.experimental import pallas as pl
from jax.experimental.pallas import tpu as pltpu

# ----------------------------- model sizes ---------------------------------
B = 2            # batch
S = 8            # source sequence length
MAX_LEN = 6      # target sequence length
SRC_VOCAB = 100
SRC_PAD = 128    # lane-padded source vocab (one-hot width)
TYPE_VOCAB = 2
TRG_VOCAB = 64   # decoder.output_dim
V_PAD = 128      # lane-dense padded logits width
EMB_IN = 32      # encoder embedding dim
ENC_HID = 32     # encoder hidden (bert hidden size)
DEC_HID = 32     # decoder.dec_hid_dim
DEC_EMB = 32     # decoder token embedding dim
NUM_LAYERS = 1   # decoder.num_layers


# --------------------------- fused seq2seq kernel ---------------------------
def seq2seq_kernel(
    ids_ref, tids_ref, mask_ref, trg_ref, tf_ref,
    word_emb_ref, type_emb_ref, enc_w_ref, enc_b_ref,
    wa_enc_ref, b_attn_ref, wa_h_ref, va_ref, dec_emb_ref,
    wi_emb_r_ref, wi_emb_z_ref, wi_emb_n_ref,
    wi_ctx_r_ref, wi_ctx_z_ref, wi_ctx_n_ref,
    wh_r_ref, wh_z_ref, wh_n_ref,
    b_r_ref, b_z_ref, b_n_ref,
    wo_h_ref, wo_ctx_ref, wo_emb_ref, bo_ref,
    out_ref):
  f32 = jnp.float32

  # ---------------- encoder (once) ----------------
  ids = ids_ref[...]                                          # (B*S,1) int32
  src_iota = lax.broadcasted_iota(jnp.int32, (B * S, SRC_PAD), 1)
  word = jnp.dot((src_iota == ids).astype(f32), word_emb_ref[...],
                 preferred_element_type=f32)                  # (B*S, EMB_IN)
  te = type_emb_ref[...]                                      # (2, EMB_IN)
  tid_f = tids_ref[...].astype(f32)                           # (B*S, 1)
  typ = (1.0 - tid_f) * te[0:1, :] + tid_f * te[1:2, :]       # (B*S, EMB_IN)
  x = word + typ
  h_enc = jnp.tanh(jnp.dot(x, enc_w_ref[...], preferred_element_type=f32)
                   + enc_b_ref[...]) * mask_ref[...]          # (B*S, ENC_HID)
  # time-invariant Bahdanau attention keys
  keys = (jnp.dot(h_enc, wa_enc_ref[...], preferred_element_type=f32)
          + b_attn_ref[...])                                  # (B*S, DEC_HID)
  enc3 = h_enc.reshape(B, S, ENC_HID)
  keys3 = keys.reshape(B, S, DEC_HID)

  dec_emb = dec_emb_ref[...]                                  # (TRG_VOCAB, DEC_EMB)
  va = va_ref[...][None]                                      # (1,1,DEC_HID)
  v_iota = lax.broadcasted_iota(jnp.int32, (B, TRG_VOCAB), 1)

  # outputs[:, 0] stays zero, as in torch
  out_ref[0] = jnp.zeros((B, V_PAD), f32)

  # ---------------- decoder init ----------------
  h = jnp.zeros((B, DEC_HID), f32)                            # zero initial hidden
  emb = jnp.dot((v_iota == trg_ref[0]).astype(f32), dec_emb,
                preferred_element_type=f32)                   # trg[:, 0] embedding

  # ---------------- unrolled decode loop ----------------
  for t in range(1, MAX_LEN):
    # Bahdanau attention (keys precomputed; no concat)
    q = jnp.dot(h, wa_h_ref[...], preferred_element_type=f32)       # (B,D)
    energy = jnp.tanh(keys3 + q[:, None, :])                        # (B,S,D)
    scores = jnp.sum(energy * va, axis=-1)                          # (B,S)
    scores = scores - jnp.max(scores, axis=-1, keepdims=True)
    p = jnp.exp(scores)
    alpha = p * pl.reciprocal(jnp.sum(p, axis=-1, keepdims=True), approx=True)
    ctx = jnp.sum(alpha[:, :, None] * enc3, axis=1)                 # (B, ENC_HID)

    # GRU cell — separate lane-0-aligned matmuls per gate (no gate slicing)
    r = jax.nn.sigmoid(
        jnp.dot(emb, wi_emb_r_ref[...], preferred_element_type=f32)
        + jnp.dot(ctx, wi_ctx_r_ref[...], preferred_element_type=f32)
        + b_r_ref[...]
        + jnp.dot(h, wh_r_ref[...], preferred_element_type=f32))
    z = jax.nn.sigmoid(
        jnp.dot(emb, wi_emb_z_ref[...], preferred_element_type=f32)
        + jnp.dot(ctx, wi_ctx_z_ref[...], preferred_element_type=f32)
        + b_z_ref[...]
        + jnp.dot(h, wh_z_ref[...], preferred_element_type=f32))
    n = jnp.tanh(
        jnp.dot(emb, wi_emb_n_ref[...], preferred_element_type=f32)
        + jnp.dot(ctx, wi_ctx_n_ref[...], preferred_element_type=f32)
        + b_n_ref[...]
        + r * jnp.dot(h, wh_n_ref[...], preferred_element_type=f32))
    h = (1.0 - z) * n + z * h

    # output projection (split weights, lane-dense V_PAD=128)
    logits = (jnp.dot(h, wo_h_ref[...], preferred_element_type=f32)
              + jnp.dot(ctx, wo_ctx_ref[...], preferred_element_type=f32)
              + jnp.dot(emb, wo_emb_ref[...], preferred_element_type=f32)
              + bo_ref[...])                                        # (B, V_PAD)
    out_ref[t] = logits

    if t < MAX_LEN - 1:
      # next decoder input: teacher-forced token vs greedy argmax
      logits_real = logits[:, :TRG_VOCAB]
      maxv = jnp.max(logits_real, axis=-1, keepdims=True)
      cand = jnp.where(logits_real == maxv, v_iota, TRG_VOCAB)
      top1 = jnp.min(cand, axis=-1, keepdims=True)                  # first argmax
      greedy = jnp.dot((v_iota == top1).astype(f32), dec_emb,
                       preferred_element_type=f32)                  # (B, DEC_EMB)
      teach = jnp.dot((v_iota == trg_ref[t]).astype(f32), dec_emb,
                      preferred_element_type=f32)                   # (B, DEC_EMB)
      tf_t = tf_ref[t]                                              # (B,1) 0/1 gate
      emb = tf_t * teach + (1.0 - tf_t) * greedy


# ---------------------------- seq2seq forward -------------------------------
@jax.jit
def seq2seq_forward(params, input_ids, token_type_ids, attention_mask, trg,
                    tf_gate):
  ids = input_ids.reshape(B * S, 1).astype(jnp.int32)
  tids = token_type_ids.reshape(B * S, 1).astype(jnp.int32)
  mask = attention_mask.astype(jnp.float32).reshape(B * S, 1)
  trg_ids = trg.T.reshape(MAX_LEN, B, 1).astype(jnp.int32)

  args = (ids, tids, mask, trg_ids, tf_gate,
          params["word_emb_pad"], params["type_emb"],
          params["enc_w"], params["enc_b"],
          params["wa_enc"], params["b_attn"], params["wa_h"], params["va"],
          params["dec_emb"],
          params["wi_emb_r"], params["wi_emb_z"], params["wi_emb_n"],
          params["wi_ctx_r"], params["wi_ctx_z"], params["wi_ctx_n"],
          params["wh_r"], params["wh_z"], params["wh_n"],
          params["b_r"], params["b_z"], params["b_n"],
          params["wo_h"], params["wo_ctx"], params["wo_emb"], params["b_out"])

  out = pl.pallas_call(
      seq2seq_kernel,
      out_shape=jax.ShapeDtypeStruct((MAX_LEN, B, V_PAD), jnp.float32),
      in_specs=[pl.BlockSpec(memory_space=pltpu.MemorySpace.VMEM)
                for _ in range(len(args))],
      out_specs=pl.BlockSpec(memory_space=pltpu.MemorySpace.VMEM),
  )(*args)

  # (MAX_LEN, B, V_PAD) -> (B, MAX_LEN, TRG_VOCAB)
  return jnp.transpose(out, (1, 0, 2))[:, :, :TRG_VOCAB]


# ------------------------------ parameters ----------------------------------
def init_params(key):
  ks = jax.random.split(key, 32)
  s = 0.1

  def rnd(k, shape):
    return (s * jax.random.normal(k, shape)).astype(jnp.float32)

  def pad_lanes(w):   # zero-pad last dim TRG_VOCAB -> V_PAD (lane-dense output)
    return jnp.pad(w, ((0, 0), (0, V_PAD - w.shape[-1])))

  word = rnd(ks[0], (SRC_VOCAB, EMB_IN))
  return {
      # encoder
      "word_emb_pad": jnp.pad(word, ((0, SRC_PAD - SRC_VOCAB), (0, 0))),
      "type_emb": rnd(ks[1], (TYPE_VOCAB, EMB_IN)),
      "enc_w": rnd(ks[2], (EMB_IN, ENC_HID)),
      "enc_b": rnd(ks[3], (1, ENC_HID)),
      # decoder embedding + attention (w_attn split into h / enc halves)
      "dec_emb": rnd(ks[4], (TRG_VOCAB, DEC_EMB)),
      "wa_h": rnd(ks[5], (DEC_HID, DEC_HID)),
      "wa_enc": rnd(ks[6], (ENC_HID, DEC_HID)),
      "b_attn": rnd(ks[7], (1, DEC_HID)),
      "va": rnd(ks[8], (1, DEC_HID)),
      # GRU gates: one lane-0-aligned weight per gate (r / z / n)
      "wi_emb_r": rnd(ks[9], (DEC_EMB, DEC_HID)),
      "wi_emb_z": rnd(ks[10], (DEC_EMB, DEC_HID)),
      "wi_emb_n": rnd(ks[11], (DEC_EMB, DEC_HID)),
      "wi_ctx_r": rnd(ks[12], (ENC_HID, DEC_HID)),
      "wi_ctx_z": rnd(ks[13], (ENC_HID, DEC_HID)),
      "wi_ctx_n": rnd(ks[14], (ENC_HID, DEC_HID)),
      "wh_r": rnd(ks[15], (DEC_HID, DEC_HID)),
      "wh_z": rnd(ks[16], (DEC_HID, DEC_HID)),
      "wh_n": rnd(ks[17], (DEC_HID, DEC_HID)),
      "b_r": rnd(ks[18], (1, DEC_HID)),
      "b_z": rnd(ks[19], (1, DEC_HID)),
      "b_n": rnd(ks[20], (1, DEC_HID)),
      # output projection split over [h_new | context | emb], lane-padded
      "wo_h": pad_lanes(rnd(ks[21], (DEC_HID, TRG_VOCAB))),
      "wo_ctx": pad_lanes(rnd(ks[22], (ENC_HID, TRG_VOCAB))),
      "wo_emb": pad_lanes(rnd(ks[23], (DEC_EMB, TRG_VOCAB))),
      "b_out": pad_lanes(rnd(ks[24], (1, TRG_VOCAB))),
  }


if __name__ == "__main__":
  random.seed(0)  # deterministic host-side teacher forcing decisions (as in torch)
  key = jax.random.PRNGKey(0)
  kp, k1, k2, k3 = jax.random.split(key, 4)

  params = init_params(kp)

  input_ids = jax.random.randint(k1, (B, S), 0, SRC_VOCAB, dtype=jnp.int32)
  token_type_ids = jax.random.randint(k2, (B, S), 0, TYPE_VOCAB, dtype=jnp.int32)
  attention_mask = jnp.ones((B, S), dtype=jnp.int32)
  trg = jax.random.randint(k3, (B, MAX_LEN), 0, TRG_VOCAB, dtype=jnp.int32)

  teacher_forcing_ratio = 0.5
  # random.random() drawn once per t = 1..max_len-1, same order as the torch loop
  tf_flags = [0.0] + [1.0 if random.random() < teacher_forcing_ratio else 0.0
                      for _ in range(1, MAX_LEN)]
  tf_gate = jnp.broadcast_to(
      jnp.array(tf_flags, jnp.float32)[:, None, None], (MAX_LEN, B, 1))

  outputs = seq2seq_forward(params, input_ids, token_type_ids,
                            attention_mask, trg, tf_gate)
  outputs = jax.block_until_ready(outputs)

  assert outputs.shape == (B, MAX_LEN, TRG_VOCAB)
  assert bool(jnp.all(outputs[:, 0] == 0.0))   # t=0 row stays zero, as in torch
  assert bool(jnp.all(jnp.isfinite(outputs)))
  print("KERNEL_OK")
</pallas_src>

<mosaic_0001>
module attributes {stable_mosaic.version = 11 : i64} {
  func.func @seq2seq_kernel(%arg0: memref<16x1xi32, #tpu.memory_space<vmem>>, %arg1: memref<16x1xi32, #tpu.memory_space<vmem>>, %arg2: memref<16x1xf32, #tpu.memory_space<vmem>>, %arg3: memref<6x2x1xi32, #tpu.memory_space<vmem>>, %arg4: memref<6x2x1xf32, #tpu.memory_space<vmem>>, %arg5: memref<128x32xf32, #tpu.memory_space<vmem>>, %arg6: memref<2x32xf32, #tpu.memory_space<vmem>>, %arg7: memref<32x32xf32, #tpu.memory_space<vmem>>, %arg8: memref<1x32xf32, #tpu.memory_space<vmem>>, %arg9: memref<32x32xf32, #tpu.memory_space<vmem>>, %arg10: memref<1x32xf32, #tpu.memory_space<vmem>>, %arg11: memref<32x32xf32, #tpu.memory_space<vmem>>, %arg12: memref<1x32xf32, #tpu.memory_space<vmem>>, %arg13: memref<64x32xf32, #tpu.memory_space<vmem>>, %arg14: memref<32x32xf32, #tpu.memory_space<vmem>>, %arg15: memref<32x32xf32, #tpu.memory_space<vmem>>, %arg16: memref<32x32xf32, #tpu.memory_space<vmem>>, %arg17: memref<32x32xf32, #tpu.memory_space<vmem>>, %arg18: memref<32x32xf32, #tpu.memory_space<vmem>>, %arg19: memref<32x32xf32, #tpu.memory_space<vmem>>, %arg20: memref<32x32xf32, #tpu.memory_space<vmem>>, %arg21: memref<32x32xf32, #tpu.memory_space<vmem>>, %arg22: memref<32x32xf32, #tpu.memory_space<vmem>>, %arg23: memref<1x32xf32, #tpu.memory_space<vmem>>, %arg24: memref<1x32xf32, #tpu.memory_space<vmem>>, %arg25: memref<1x32xf32, #tpu.memory_space<vmem>>, %arg26: memref<32x128xf32, #tpu.memory_space<vmem>>, %arg27: memref<32x128xf32, #tpu.memory_space<vmem>>, %arg28: memref<32x128xf32, #tpu.memory_space<vmem>>, %arg29: memref<1x128xf32, #tpu.memory_space<vmem>>, %arg30: memref<6x2x128xf32, #tpu.memory_space<vmem>>) attributes {dimension_semantics = [], scalar_prefetch = 0 : i64, scratch_operands = 0 : i64, tpu.core_type = #tpu.core_type<tc>} {
    %c0 = arith.constant 0 : index
    %c0_0 = arith.constant 0 : index
    %0 = vector.load %arg0[%c0, %c0_0] : memref<16x1xi32, #tpu.memory_space<vmem>>, vector<16x1xi32>
    %1 = tpu.iota {dimensions = array<i32: 1>} : vector<16x128xi32>
    %2 = vector.broadcast %0 : vector<16x1xi32> to vector<16x128xi32>
    %3 = arith.cmpi eq, %1, %2 : vector<16x128xi32>
    %4 = arith.extui %3 : vector<16x128xi1> to vector<16x128xi32>
    %5 = arith.sitofp %4 : vector<16x128xi32> to vector<16x128xf32>
    %c0_1 = arith.constant 0 : index
    %c0_2 = arith.constant 0 : index
    %6 = vector.load %arg5[%c0_1, %c0_2] : memref<128x32xf32, #tpu.memory_space<vmem>>, vector<128x32xf32>
    %cst = arith.constant dense<0.000000e+00> : vector<16x32xf32>
    %7 = tpu.matmul %5, %6, %cst {dimension_numbers = #tpu.dot_dimension_numbers<[1], [0], [0], [1], [0, 0, 1, 1], [], []>} : vector<16x128xf32>, vector<128x32xf32>, vector<16x32xf32> -> vector<16x32xf32>
    %c0_3 = arith.constant 0 : index
    %c0_4 = arith.constant 0 : index
    %8 = vector.load %arg6[%c0_3, %c0_4] : memref<2x32xf32, #tpu.memory_space<vmem>>, vector<2x32xf32>
    %c0_5 = arith.constant 0 : index
    %c0_6 = arith.constant 0 : index
    %9 = vector.load %arg1[%c0_5, %c0_6] : memref<16x1xi32, #tpu.memory_space<vmem>>, vector<16x1xi32>
    %10 = arith.sitofp %9 : vector<16x1xi32> to vector<16x1xf32>
    %cst_7 = arith.constant 1.000000e+00 : f32
    %11 = vector.broadcast %cst_7 : f32 to vector<16x1xf32>
    %12 = arith.subf %11, %10 : vector<16x1xf32>
    %13 = vector.extract_strided_slice %8 {offsets = [0, 0], sizes = [1, 32], strides = [1, 1]} : vector<2x32xf32> to vector<1x32xf32>
    %14 = vector.broadcast %12 : vector<16x1xf32> to vector<16x32xf32>
    %15 = vector.broadcast %13 : vector<1x32xf32> to vector<16x32xf32>
    %16 = arith.mulf %14, %15 : vector<16x32xf32>
    %17 = vector.extract_strided_slice %8 {offsets = [1, 0], sizes = [1, 32], strides = [1, 1]} : vector<2x32xf32> to vector<1x32xf32>
    %18 = vector.broadcast %10 : vector<16x1xf32> to vector<16x32xf32>
    %19 = vector.broadcast %17 : vector<1x32xf32> to vector<16x32xf32>
    %20 = arith.mulf %18, %19 : vector<16x32xf32>
    %21 = arith.addf %16, %20 : vector<16x32xf32>
    %22 = arith.addf %7, %21 : vector<16x32xf32>
    %c0_8 = arith.constant 0 : index
    %c0_9 = arith.constant 0 : index
    %23 = vector.load %arg7[%c0_8, %c0_9] : memref<32x32xf32, #tpu.memory_space<vmem>>, vector<32x32xf32>
    %cst_10 = arith.constant dense<0.000000e+00> : vector<16x32xf32>
    %24 = tpu.matmul %22, %23, %cst_10 {dimension_numbers = #tpu.dot_dimension_numbers<[1], [0], [0], [1], [0, 0, 1, 1], [], []>} : vector<16x32xf32>, vector<32x32xf32>, vector<16x32xf32> -> vector<16x32xf32>
    %c0_11 = arith.constant 0 : index
    %c0_12 = arith.constant 0 : index
    %25 = vector.load %arg8[%c0_11, %c0_12] : memref<1x32xf32, #tpu.memory_space<vmem>>, vector<1x32xf32>
    %26 = vector.broadcast %25 : vector<1x32xf32> to vector<16x32xf32>
    %27 = arith.addf %24, %26 : vector<16x32xf32>
    %28 = math.tanh %27 : vector<16x32xf32>
    %c0_13 = arith.constant 0 : index
    %c0_14 = arith.constant 0 : index
    %29 = vector.load %arg2[%c0_13, %c0_14] : memref<16x1xf32, #tpu.memory_space<vmem>>, vector<16x1xf32>
    %30 = vector.broadcast %29 : vector<16x1xf32> to vector<16x32xf32>
    %31 = arith.mulf %28, %30 : vector<16x32xf32>
    %c0_15 = arith.constant 0 : index
    %c0_16 = arith.constant 0 : index
    %32 = vector.load %arg9[%c0_15, %c0_16] : memref<32x32xf32, #tpu.memory_space<vmem>>, vector<32x32xf32>
    %cst_17 = arith.constant dense<0.000000e+00> : vector<16x32xf32>
    %33 = tpu.matmul %31, %32, %cst_17 {dimension_numbers = #tpu.dot_dimension_numbers<[1], [0], [0], [1], [0, 0, 1, 1], [], []>} : vector<16x32xf32>, vector<32x32xf32>, vector<16x32xf32> -> vector<16x32xf32>
    %c0_18 = arith.constant 0 : index
    %c0_19 = arith.constant 0 : index
    %34 = vector.load %arg10[%c0_18, %c0_19] : memref<1x32xf32, #tpu.memory_space<vmem>>, vector<1x32xf32>
    %35 = vector.broadcast %34 : vector<1x32xf32> to vector<16x32xf32>
    %36 = arith.addf %33, %35 : vector<16x32xf32>
    %37 = vector.shape_cast %31 : vector<16x32xf32> to vector<2x8x32xf32>
    %38 = vector.shape_cast %36 : vector<16x32xf32> to vector<2x8x32xf32>
    %c0_20 = arith.constant 0 : index
    %c0_21 = arith.constant 0 : index
    %39 = vector.load %arg13[%c0_20, %c0_21] : memref<64x32xf32, #tpu.memory_space<vmem>>, vector<64x32xf32>
    %c0_22 = arith.constant 0 : index
    %c0_23 = arith.constant 0 : index
    %40 = vector.load %arg12[%c0_22, %c0_23] : memref<1x32xf32, #tpu.memory_space<vmem>>, vector<1x32xf32>
    %41 = vector.shape_cast %40 : vector<1x32xf32> to vector<1x1x32xf32>
    %42 = tpu.iota {dimensions = array<i32: 1>} : vector<2x64xi32>
    %cst_24 = arith.constant 0.000000e+00 : f32
    %43 = vector.broadcast %cst_24 : f32 to vector<2x128xf32>
    %c0_25 = arith.constant 0 : index
    %c0_26 = arith.constant 0 : index
    %c0_27 = arith.constant 0 : index
    %44 = vector.load %arg30[%c0_25, %c0_26, %c0_27] : memref<6x2x128xf32, #tpu.memory_space<vmem>>, vector<1x2x128xf32>
    %45 = vector.shape_cast %44 : vector<1x2x128xf32> to vector<2x128xf32>
    %46 = vector.shape_cast %43 : vector<2x128xf32> to vector<1x2x128xf32>
    tpu.vector_store %arg30[%c0_25, %c0_26, %c0_27], %46 {strides = array<i32>} : memref<6x2x128xf32, #tpu.memory_space<vmem>>, vector<1x2x128xf32>,
    %cst_28 = arith.constant 0.000000e+00 : f32
    %47 = vector.broadcast %cst_28 : f32 to vector<2x32xf32>
    %c0_29 = arith.constant 0 : index
    %c0_30 = arith.constant 0 : index
    %c0_31 = arith.constant 0 : index
    %48 = vector.load %arg3[%c0_29, %c0_30, %c0_31] : memref<6x2x1xi32, #tpu.memory_space<vmem>>, vector<1x2x1xi32>
    %49 = vector.shape_cast %48 : vector<1x2x1xi32> to vector<2x1xi32>
    %50 = vector.broadcast %49 : vector<2x1xi32> to vector<2x64xi32>
    %51 = arith.cmpi eq, %42, %50 : vector<2x64xi32>
    %52 = arith.extui %51 : vector<2x64xi1> to vector<2x64xi32>
    %53 = arith.sitofp %52 : vector<2x64xi32> to vector<2x64xf32>
    %cst_32 = arith.constant dense<0.000000e+00> : vector<2x32xf32>
    %54 = tpu.matmul %53, %39, %cst_32 {dimension_numbers = #tpu.dot_dimension_numbers<[1], [0], [0], [1], [0, 0, 1, 1], [], []>} : vector<2x64xf32>, vector<64x32xf32>, vector<2x32xf32> -> vector<2x32xf32>
    %c0_33 = arith.constant 0 : index
    %c0_34 = arith.constant 0 : index
    %55 = vector.load %arg11[%c0_33, %c0_34] : memref<32x32xf32, #tpu.memory_space<vmem>>, vector<32x32xf32>
    %cst_35 = arith.constant dense<0.000000e+00> : vector<2x32xf32>
    %56 = tpu.matmul %47, %55, %cst_35 {dimension_numbers = #tpu.dot_dimension_numbers<[1], [0], [0], [1], [0, 0, 1, 1], [], []>} : vector<2x32xf32>, vector<32x32xf32>, vector<2x32xf32> -> vector<2x32xf32>
    %57 = vector.shape_cast %56 : vector<2x32xf32> to vector<2x1x32xf32>
    %58 = vector.broadcast %57 : vector<2x1x32xf32> to vector<2x8x32xf32>
    %59 = arith.addf %38, %58 : vector<2x8x32xf32>
    %60 = math.tanh %59 : vector<2x8x32xf32>
    %61 = vector.broadcast %41 : vector<1x1x32xf32> to vector<2x8x32xf32>
    %62 = arith.mulf %60, %61 : vector<2x8x32xf32>
    %cst_36 = arith.constant dense<0.000000e+00> : vector<2x8xf32>
    %63 = vector.multi_reduction <add>, %62, %cst_36 [2] : vector<2x8x32xf32> to vector<2x8xf32>
    %cst_37 = arith.constant dense<0xFF800000> : vector<2xf32>
    %64 = vector.multi_reduction <maximumf>, %63, %cst_37 [1] : vector<2x8xf32> to vector<2xf32>
    %65 = vector.shape_cast %64 : vector<2xf32> to vector<2x1xf32>
    %66 = vector.broadcast %65 : vector<2x1xf32> to vector<2x8xf32>
    %67 = arith.subf %63, %66 : vector<2x8xf32>
    %68 = math.exp %67 : vector<2x8xf32>
    %cst_38 = arith.constant dense<0.000000e+00> : vector<2xf32>
    %69 = vector.multi_reduction <add>, %68, %cst_38 [1] : vector<2x8xf32> to vector<2xf32>
    %70 = vector.shape_cast %69 : vector<2xf32> to vector<2x1xf32>
    %71 = tpu.reciprocal %70 {approx = true} : vector<2x1xf32> -> vector<2x1xf32>
    %72 = vector.broadcast %71 : vector<2x1xf32> to vector<2x8xf32>
    %73 = arith.mulf %68, %72 : vector<2x8xf32>
    %74 = vector.shape_cast %73 : vector<2x8xf32> to vector<2x8x1xf32>
    %75 = vector.broadcast %74 : vector<2x8x1xf32> to vector<2x8x32xf32>
    %76 = arith.mulf %75, %37 : vector<2x8x32xf32>
    %cst_39 = arith.constant dense<0.000000e+00> : vector<2x32xf32>
    %77 = vector.multi_reduction <add>, %76, %cst_39 [1] : vector<2x8x32xf32> to vector<2x32xf32>
    %c0_40 = arith.constant 0 : index
    %c0_41 = arith.constant 0 : index
    %78 = vector.load %arg14[%c0_40, %c0_41] : memref<32x32xf32, #tpu.memory_space<vmem>>, vector<32x32xf32>
    %cst_42 = arith.constant dense<0.000000e+00> : vector<2x32xf32>
    %79 = tpu.matmul %54, %78, %cst_42 {dimension_numbers = #tpu.dot_dimension_numbers<[1], [0], [0], [1], [0, 0, 1, 1], [], []>} : vector<2x32xf32>, vector<32x32xf32>, vector<2x32xf32> -> vector<2x32xf32>
    %c0_43 = arith.constant 0 : index
    %c0_44 = arith.constant 0 : index
    %80 = vector.load %arg17[%c0_43, %c0_44] : memref<32x32xf32, #tpu.memory_space<vmem>>, vector<32x32xf32>
    %cst_45 = arith.constant dense<0.000000e+00> : vector<2x32xf32>
    %81 = tpu.matmul %77, %80, %cst_45 {dimension_numbers = #tpu.dot_dimension_numbers<[1], [0], [0], [1], [0, 0, 1, 1], [], []>} : vector<2x32xf32>, vector<32x32xf32>, vector<2x32xf32> -> vector<2x32xf32>
    %82 = arith.addf %79, %81 : vector<2x32xf32>
    %c0_46 = arith.constant 0 : index
    %c0_47 = arith.constant 0 : index
    %83 = vector.load %arg23[%c0_46, %c0_47] : memref<1x32xf32, #tpu.memory_space<vmem>>, vector<1x32xf32>
    %84 = vector.broadcast %83 : vector<1x32xf32> to vector<2x32xf32>
    %85 = arith.addf %82, %84 : vector<2x32xf32>
    %c0_48 = arith.constant 0 : index
    %c0_49 = arith.constant 0 : index
    %86 = vector.load %arg20[%c0_48, %c0_49] : memref<32x32xf32, #tpu.memory_space<vmem>>, vector<32x32xf32>
    %cst_50 = arith.constant dense<0.000000e+00> : vector<2x32xf32>
    %87 = tpu.matmul %47, %86, %cst_50 {dimension_numbers = #tpu.dot_dimension_numbers<[1], [0], [0], [1], [0, 0, 1, 1], [], []>} : vector<2x32xf32>, vector<32x32xf32>, vector<2x32xf32> -> vector<2x32xf32>
    %88 = arith.addf %85, %87 : vector<2x32xf32>
    %89 = arith.negf %88 : vector<2x32xf32>
    %90 = math.exp %89 : vector<2x32xf32>
    %cst_51 = arith.constant 1.000000e+00 : f32
    %91 = vector.broadcast %cst_51 : f32 to vector<2x32xf32>
    %92 = arith.addf %91, %90 : vector<2x32xf32>
    %93 = arith.divf %91, %92 : vector<2x32xf32>
    %c0_52 = arith.constant 0 : index
    %c0_53 = arith.constant 0 : index
    %94 = vector.load %arg15[%c0_52, %c0_53] : memref<32x32xf32, #tpu.memory_space<vmem>>, vector<32x32xf32>
    %cst_54 = arith.constant dense<0.000000e+00> : vector<2x32xf32>
    %95 = tpu.matmul %54, %94, %cst_54 {dimension_numbers = #tpu.dot_dimension_numbers<[1], [0], [0], [1], [0, 0, 1, 1], [], []>} : vector<2x32xf32>, vector<32x32xf32>, vector<2x32xf32> -> vector<2x32xf32>
    %c0_55 = arith.constant 0 : index
    %c0_56 = arith.constant 0 : index
    %96 = vector.load %arg18[%c0_55, %c0_56] : memref<32x32xf32, #tpu.memory_space<vmem>>, vector<32x32xf32>
    %cst_57 = arith.constant dense<0.000000e+00> : vector<2x32xf32>
    %97 = tpu.matmul %77, %96, %cst_57 {dimension_numbers = #tpu.dot_dimension_numbers<[1], [0], [0], [1], [0, 0, 1, 1], [], []>} : vector<2x32xf32>, vector<32x32xf32>, vector<2x32xf32> -> vector<2x32xf32>
    %98 = arith.addf %95, %97 : vector<2x32xf32>
    %c0_58 = arith.constant 0 : index
    %c0_59 = arith.constant 0 : index
    %99 = vector.load %arg24[%c0_58, %c0_59] : memref<1x32xf32, #tpu.memory_space<vmem>>, vector<1x32xf32>
    %100 = vector.broadcast %99 : vector<1x32xf32> to vector<2x32xf32>
    %101 = arith.addf %98, %100 : vector<2x32xf32>
    %c0_60 = arith.constant 0 : index
    %c0_61 = arith.constant 0 : index
    %102 = vector.load %arg21[%c0_60, %c0_61] : memref<32x32xf32, #tpu.memory_space<vmem>>, vector<32x32xf32>
    %cst_62 = arith.constant dense<0.000000e+00> : vector<2x32xf32>
    %103 = tpu.matmul %47, %102, %cst_62 {dimension_numbers = #tpu.dot_dimension_numbers<[1], [0], [0], [1], [0, 0, 1, 1], [], []>} : vector<2x32xf32>, vector<32x32xf32>, vector<2x32xf32> -> vector<2x32xf32>
    %104 = arith.addf %101, %103 : vector<2x32xf32>
    %105 = arith.negf %104 : vector<2x32xf32>
    %106 = math.exp %105 : vector<2x32xf32>
    %cst_63 = arith.constant 1.000000e+00 : f32
    %107 = vector.broadcast %cst_63 : f32 to vector<2x32xf32>
    %108 = arith.addf %107, %106 : vector<2x32xf32>
    %109 = arith.divf %107, %108 : vector<2x32xf32>
    %c0_64 = arith.constant 0 : index
    %c0_65 = arith.constant 0 : index
    %110 = vector.load %arg16[%c0_64, %c0_65] : memref<32x32xf32, #tpu.memory_space<vmem>>, vector<32x32xf32>
    %cst_66 = arith.constant dense<0.000000e+00> : vector<2x32xf32>
    %111 = tpu.matmul %54, %110, %cst_66 {dimension_numbers = #tpu.dot_dimension_numbers<[1], [0], [0], [1], [0, 0, 1, 1], [], []>} : vector<2x32xf32>, vector<32x32xf32>, vector<2x32xf32> -> vector<2x32xf32>
    %c0_67 = arith.constant 0 : index
    %c0_68 = arith.constant 0 : index
    %112 = vector.load %arg19[%c0_67, %c0_68] : memref<32x32xf32, #tpu.memory_space<vmem>>, vector<32x32xf32>
    %cst_69 = arith.constant dense<0.000000e+00> : vector<2x32xf32>
    %113 = tpu.matmul %77, %112, %cst_69 {dimension_numbers = #tpu.dot_dimension_numbers<[1], [0], [0], [1], [0, 0, 1, 1], [], []>} : vector<2x32xf32>, vector<32x32xf32>, vector<2x32xf32> -> vector<2x32xf32>
    %114 = arith.addf %111, %113 : vector<2x32xf32>
    %c0_70 = arith.constant 0 : index
    %c0_71 = arith.constant 0 : index
    %115 = vector.load %arg25[%c0_70, %c0_71] : memref<1x32xf32, #tpu.memory_space<vmem>>, vector<1x32xf32>
    %116 = vector.broadcast %115 : vector<1x32xf32> to vector<2x32xf32>
    %117 = arith.addf %114, %116 : vector<2x32xf32>
    %c0_72 = arith.constant 0 : index
    %c0_73 = arith.constant 0 : index
    %118 = vector.load %arg22[%c0_72, %c0_73] : memref<32x32xf32, #tpu.memory_space<vmem>>, vector<32x32xf32>
    %cst_74 = arith.constant dense<0.000000e+00> : vector<2x32xf32>
    %119 = tpu.matmul %47, %118, %cst_74 {dimension_numbers = #tpu.dot_dimension_numbers<[1], [0], [0], [1], [0, 0, 1, 1], [], []>} : vector<2x32xf32>, vector<32x32xf32>, vector<2x32xf32> -> vector<2x32xf32>
    %120 = arith.mulf %93, %119 : vector<2x32xf32>
    %121 = arith.addf %117, %120 : vector<2x32xf32>
    %122 = math.tanh %121 : vector<2x32xf32>
    %cst_75 = arith.constant 1.000000e+00 : f32
    %123 = vector.broadcast %cst_75 : f32 to vector<2x32xf32>
    %124 = arith.subf %123, %109 : vector<2x32xf32>
    %125 = arith.mulf %124, %122 : vector<2x32xf32>
    %126 = arith.mulf %109, %47 : vector<2x32xf32>
    %127 = arith.addf %125, %126 : vector<2x32xf32>
    %c0_76 = arith.constant 0 : index
    %c0_77 = arith.constant 0 : index
    %128 = vector.load %arg26[%c0_76, %c0_77] : memref<32x128xf32, #tpu.memory_space<vmem>>, vector<32x128xf32>
    %cst_78 = arith.constant dense<0.000000e+00> : vector<2x128xf32>
    %129 = tpu.matmul %127, %128, %cst_78 {dimension_numbers = #tpu.dot_dimension_numbers<[1], [0], [0], [1], [0, 0, 1, 1], [], []>} : vector<2x32xf32>, vector<32x128xf32>, vector<2x128xf32> -> vector<2x128xf32>
    %c0_79 = arith.constant 0 : index
    %c0_80 = arith.constant 0 : index
    %130 = vector.load %arg27[%c0_79, %c0_80] : memref<32x128xf32, #tpu.memory_space<vmem>>, vector<32x128xf32>
    %cst_81 = arith.constant dense<0.000000e+00> : vector<2x128xf32>
    %131 = tpu.matmul %77, %130, %cst_81 {dimension_numbers = #tpu.dot_dimension_numbers<[1], [0], [0], [1], [0, 0, 1, 1], [], []>} : vector<2x32xf32>, vector<32x128xf32>, vector<2x128xf32> -> vector<2x128xf32>
    %132 = arith.addf %129, %131 : vector<2x128xf32>
    %c0_82 = arith.constant 0 : index
    %c0_83 = arith.constant 0 : index
    %133 = vector.load %arg28[%c0_82, %c0_83] : memref<32x128xf32, #tpu.memory_space<vmem>>, vector<32x128xf32>
    %cst_84 = arith.constant dense<0.000000e+00> : vector<2x128xf32>
    %134 = tpu.matmul %54, %133, %cst_84 {dimension_numbers = #tpu.dot_dimension_numbers<[1], [0], [0], [1], [0, 0, 1, 1], [], []>} : vector<2x32xf32>, vector<32x128xf32>, vector<2x128xf32> -> vector<2x128xf32>
    %135 = arith.addf %132, %134 : vector<2x128xf32>
    %c0_85 = arith.constant 0 : index
    %c0_86 = arith.constant 0 : index
    %136 = vector.load %arg29[%c0_85, %c0_86] : memref<1x128xf32, #tpu.memory_space<vmem>>, vector<1x128xf32>
    %137 = vector.broadcast %136 : vector<1x128xf32> to vector<2x128xf32>
    %138 = arith.addf %135, %137 : vector<2x128xf32>
    %c1 = arith.constant 1 : index
    %c0_87 = arith.constant 0 : index
    %c0_88 = arith.constant 0 : index
    %139 = vector.load %arg30[%c1, %c0_87, %c0_88] : memref<6x2x128xf32, #tpu.memory_space<vmem>>, vector<1x2x128xf32>
    %140 = vector.shape_cast %139 : vector<1x2x128xf32> to vector<2x128xf32>
    %141 = vector.shape_cast %138 : vector<2x128xf32> to vector<1x2x128xf32>
    tpu.vector_store %arg30[%c1, %c0_87, %c0_88], %141 {strides = array<i32>} : memref<6x2x128xf32, #tpu.memory_space<vmem>>, vector<1x2x128xf32>,
    %142 = vector.extract_strided_slice %138 {offsets = [0, 0], sizes = [2, 64], strides = [1, 1]} : vector<2x128xf32> to vector<2x64xf32>
    %cst_89 = arith.constant dense<0xFF800000> : vector<2xf32>
    %143 = vector.multi_reduction <maximumf>, %142, %cst_89 [1] : vector<2x64xf32> to vector<2xf32>
    %144 = vector.shape_cast %143 : vector<2xf32> to vector<2x1xf32>
    %145 = vector.broadcast %144 : vector<2x1xf32> to vector<2x64xf32>
    %146 = arith.cmpf oeq, %142, %145 : vector<2x64xf32>
    %c64_i32 = arith.constant 64 : i32
    %147 = vector.broadcast %c64_i32 : i32 to vector<2x64xi32>
    %148 = arith.select %146, %42, %147 : vector<2x64xi1>, vector<2x64xi32>
    %cst_90 = arith.constant dense<2147483647> : vector<2xi32>
    %149 = vector.multi_reduction <minsi>, %148, %cst_90 [1] : vector<2x64xi32> to vector<2xi32>
    %150 = vector.shape_cast %149 : vector<2xi32> to vector<2x1xi32>
    %151 = vector.broadcast %150 : vector<2x1xi32> to vector<2x64xi32>
    %152 = arith.cmpi eq, %42, %151 : vector<2x64xi32>
    %153 = arith.extui %152 : vector<2x64xi1> to vector<2x64xi32>
    %154 = arith.sitofp %153 : vector<2x64xi32> to vector<2x64xf32>
    %cst_91 = arith.constant dense<0.000000e+00> : vector<2x32xf32>
    %155 = tpu.matmul %154, %39, %cst_91 {dimension_numbers = #tpu.dot_dimension_numbers<[1], [0], [0], [1], [0, 0, 1, 1], [], []>} : vector<2x64xf32>, vector<64x32xf32>, vector<2x32xf32> -> vector<2x32xf32>
    %c1_92 = arith.constant 1 : index
    %c0_93 = arith.constant 0 : index
    %c0_94 = arith.constant 0 : index
    %156 = vector.load %arg3[%c1_92, %c0_93, %c0_94] : memref<6x2x1xi32, #tpu.memory_space<vmem>>, vector<1x2x1xi32>
    %157 = vector.shape_cast %156 : vector<1x2x1xi32> to vector<2x1xi32>
    %158 = vector.broadcast %157 : vector<2x1xi32> to vector<2x64xi32>
    %159 = arith.cmpi eq, %42, %158 : vector<2x64xi32>
    %160 = arith.extui %159 : vector<2x64xi1> to vector<2x64xi32>
    %161 = arith.sitofp %160 : vector<2x64xi32> to vector<2x64xf32>
    %cst_95 = arith.constant dense<0.000000e+00> : vector<2x32xf32>
    %162 = tpu.matmul %161, %39, %cst_95 {dimension_numbers = #tpu.dot_dimension_numbers<[1], [0], [0], [1], [0, 0, 1, 1], [], []>} : vector<2x64xf32>, vector<64x32xf32>, vector<2x32xf32> -> vector<2x32xf32>
    %c1_96 = arith.constant 1 : index
    %c0_97 = arith.constant 0 : index
    %c0_98 = arith.constant 0 : index
    %163 = vector.load %arg4[%c1_96, %c0_97, %c0_98] : memref<6x2x1xf32, #tpu.memory_space<vmem>>, vector<1x2x1xf32>
    %164 = vector.shape_cast %163 : vector<1x2x1xf32> to vector<2x1xf32>
    %165 = vector.broadcast %164 : vector<2x1xf32> to vector<2x32xf32>
    %166 = arith.mulf %165, %162 : vector<2x32xf32>
    %cst_99 = arith.constant 1.000000e+00 : f32
    %167 = vector.broadcast %cst_99 : f32 to vector<2x1xf32>
    %168 = arith.subf %167, %164 : vector<2x1xf32>
    %169 = vector.broadcast %168 : vector<2x1xf32> to vector<2x32xf32>
    %170 = arith.mulf %169, %155 : vector<2x32xf32>
    %171 = arith.addf %166, %170 : vector<2x32xf32>
    %c0_100 = arith.constant 0 : index
    %c0_101 = arith.constant 0 : index
    %172 = vector.load %arg11[%c0_100, %c0_101] : memref<32x32xf32, #tpu.memory_space<vmem>>, vector<32x32xf32>
    %cst_102 = arith.constant dense<0.000000e+00> : vector<2x32xf32>
    %173 = tpu.matmul %127, %172, %cst_102 {dimension_numbers = #tpu.dot_dimension_numbers<[1], [0], [0], [1], [0, 0, 1, 1], [], []>} : vector<2x32xf32>, vector<32x32xf32>, vector<2x32xf32> -> vector<2x32xf32>
    %174 = vector.shape_cast %173 : vector<2x32xf32> to vector<2x1x32xf32>
    %175 = vector.broadcast %174 : vector<2x1x32xf32> to vector<2x8x32xf32>
    %176 = arith.addf %38, %175 : vector<2x8x32xf32>
    %177 = math.tanh %176 : vector<2x8x32xf32>
    %178 = vector.broadcast %41 : vector<1x1x32xf32> to vector<2x8x32xf32>
    %179 = arith.mulf %177, %178 : vector<2x8x32xf32>
    %cst_103 = arith.constant dense<0.000000e+00> : vector<2x8xf32>
    %180 = vector.multi_reduction <add>, %179, %cst_103 [2] : vector<2x8x32xf32> to vector<2x8xf32>
    %cst_104 = arith.constant dense<0xFF800000> : vector<2xf32>
    %181 = vector.multi_reduction <maximumf>, %180, %cst_104 [1] : vector<2x8xf32> to vector<2xf32>
    %182 = vector.shape_cast %181 : vector<2xf32> to vector<2x1xf32>
    %183 = vector.broadcast %182 : vector<2x1xf32> to vector<2x8xf32>
    %184 = arith.subf %180, %183 : vector<2x8xf32>
    %185 = math.exp %184 : vector<2x8xf32>
    %cst_105 = arith.constant dense<0.000000e+00> : vector<2xf32>
    %186 = vector.multi_reduction <add>, %185, %cst_105 [1] : vector<2x8xf32> to vector<2xf32>
    %187 = vector.shape_cast %186 : vector<2xf32> to vector<2x1xf32>
    %188 = tpu.reciprocal %187 {approx = true} : vector<2x1xf32> -> vector<2x1xf32>
    %189 = vector.broadcast %188 : vector<2x1xf32> to vector<2x8xf32>
    %190 = arith.mulf %185, %189 : vector<2x8xf32>
    %191 = vector.shape_cast %190 : vector<2x8xf32> to vector<2x8x1xf32>
    %192 = vector.broadcast %191 : vector<2x8x1xf32> to vector<2x8x32xf32>
    %193 = arith.mulf %192, %37 : vector<2x8x32xf32>
    %cst_106 = arith.constant dense<0.000000e+00> : vector<2x32xf32>
    %194 = vector.multi_reduction <add>, %193, %cst_106 [1] : vector<2x8x32xf32> to vector<2x32xf32>
    %c0_107 = arith.constant 0 : index
    %c0_108 = arith.constant 0 : index
    %195 = vector.load %arg14[%c0_107, %c0_108] : memref<32x32xf32, #tpu.memory_space<vmem>>, vector<32x32xf32>
    %cst_109 = arith.constant dense<0.000000e+00> : vector<2x32xf32>
    %196 = tpu.matmul %171, %195, %cst_109 {dimension_numbers = #tpu.dot_dimension_numbers<[1], [0], [0], [1], [0, 0, 1, 1], [], []>} : vector<2x32xf32>, vector<32x32xf32>, vector<2x32xf32> -> vector<2x32xf32>
    %c0_110 = arith.constant 0 : index
    %c0_111 = arith.constant 0 : index
    %197 = vector.load %arg17[%c0_110, %c0_111] : memref<32x32xf32, #tpu.memory_space<vmem>>, vector<32x32xf32>
    %cst_112 = arith.constant dense<0.000000e+00> : vector<2x32xf32>
    %198 = tpu.matmul %194, %197, %cst_112 {dimension_numbers = #tpu.dot_dimension_numbers<[1], [0], [0], [1], [0, 0, 1, 1], [], []>} : vector<2x32xf32>, vector<32x32xf32>, vector<2x32xf32> -> vector<2x32xf32>
    %199 = arith.addf %196, %198 : vector<2x32xf32>
    %c0_113 = arith.constant 0 : index
    %c0_114 = arith.constant 0 : index
    %200 = vector.load %arg23[%c0_113, %c0_114] : memref<1x32xf32, #tpu.memory_space<vmem>>, vector<1x32xf32>
    %201 = vector.broadcast %200 : vector<1x32xf32> to vector<2x32xf32>
    %202 = arith.addf %199, %201 : vector<2x32xf32>
    %c0_115 = arith.constant 0 : index
    %c0_116 = arith.constant 0 : index
    %203 = vector.load %arg20[%c0_115, %c0_116] : memref<32x32xf32, #tpu.memory_space<vmem>>, vector<32x32xf32>
    %cst_117 = arith.constant dense<0.000000e+00> : vector<2x32xf32>
    %204 = tpu.matmul %127, %203, %cst_117 {dimension_numbers = #tpu.dot_dimension_numbers<[1], [0], [0], [1], [0, 0, 1, 1], [], []>} : vector<2x32xf32>, vector<32x32xf32>, vector<2x32xf32> -> vector<2x32xf32>
    %205 = arith.addf %202, %204 : vector<2x32xf32>
    %206 = arith.negf %205 : vector<2x32xf32>
    %207 = math.exp %206 : vector<2x32xf32>
    %cst_118 = arith.constant 1.000000e+00 : f32
    %208 = vector.broadcast %cst_118 : f32 to vector<2x32xf32>
    %209 = arith.addf %208, %207 : vector<2x32xf32>
    %210 = arith.divf %208, %209 : vector<2x32xf32>
    %c0_119 = arith.constant 0 : index
    %c0_120 = arith.constant 0 : index
    %211 = vector.load %arg15[%c0_119, %c0_120] : memref<32x32xf32, #tpu.memory_space<vmem>>, vector<32x32xf32>
    %cst_121 = arith.constant dense<0.000000e+00> : vector<2x32xf32>
    %212 = tpu.matmul %171, %211, %cst_121 {dimension_numbers = #tpu.dot_dimension_numbers<[1], [0], [0], [1], [0, 0, 1, 1], [], []>} : vector<2x32xf32>, vector<32x32xf32>, vector<2x32xf32> -> vector<2x32xf32>
    %c0_122 = arith.constant 0 : index
    %c0_123 = arith.constant 0 : index
    %213 = vector.load %arg18[%c0_122, %c0_123] : memref<32x32xf32, #tpu.memory_space<vmem>>, vector<32x32xf32>
    %cst_124 = arith.constant dense<0.000000e+00> : vector<2x32xf32>
    %214 = tpu.matmul %194, %213, %cst_124 {dimension_numbers = #tpu.dot_dimension_numbers<[1], [0], [0], [1], [0, 0, 1, 1], [], []>} : vector<2x32xf32>, vector<32x32xf32>, vector<2x32xf32> -> vector<2x32xf32>
    %215 = arith.addf %212, %214 : vector<2x32xf32>
    %c0_125 = arith.constant 0 : index
    %c0_126 = arith.constant 0 : index
    %216 = vector.load %arg24[%c0_125, %c0_126] : memref<1x32xf32, #tpu.memory_space<vmem>>, vector<1x32xf32>
    %217 = vector.broadcast %216 : vector<1x32xf32> to vector<2x32xf32>
    %218 = arith.addf %215, %217 : vector<2x32xf32>
    %c0_127 = arith.constant 0 : index
    %c0_128 = arith.constant 0 : index
    %219 = vector.load %arg21[%c0_127, %c0_128] : memref<32x32xf32, #tpu.memory_space<vmem>>, vector<32x32xf32>
    %cst_129 = arith.constant dense<0.000000e+00> : vector<2x32xf32>
    %220 = tpu.matmul %127, %219, %cst_129 {dimension_numbers = #tpu.dot_dimension_numbers<[1], [0], [0], [1], [0, 0, 1, 1], [], []>} : vector<2x32xf32>, vector<32x32xf32>, vector<2x32xf32> -> vector<2x32xf32>
    %221 = arith.addf %218, %220 : vector<2x32xf32>
    %222 = arith.negf %221 : vector<2x32xf32>
    %223 = math.exp %222 : vector<2x32xf32>
    %cst_130 = arith.constant 1.000000e+00 : f32
    %224 = vector.broadcast %cst_130 : f32 to vector<2x32xf32>
    %225 = arith.addf %224, %223 : vector<2x32xf32>
    %226 = arith.divf %224, %225 : vector<2x32xf32>
    %c0_131 = arith.constant 0 : index
    %c0_132 = arith.constant 0 : index
    %227 = vector.load %arg16[%c0_131, %c0_132] : memref<32x32xf32, #tpu.memory_space<vmem>>, vector<32x32xf32>
    %cst_133 = arith.constant dense<0.000000e+00> : vector<2x32xf32>
    %228 = tpu.matmul %171, %227, %cst_133 {dimension_numbers = #tpu.dot_dimension_numbers<[1], [0], [0], [1], [0, 0, 1, 1], [], []>} : vector<2x32xf32>, vector<32x32xf32>, vector<2x32xf32> -> vector<2x32xf32>
    %c0_134 = arith.constant 0 : index
    %c0_135 = arith.constant 0 : index
    %229 = vector.load %arg19[%c0_134, %c0_135] : memref<32x32xf32, #tpu.memory_space<vmem>>, vector<32x32xf32>
    %cst_136 = arith.constant dense<0.000000e+00> : vector<2x32xf32>
    %230 = tpu.matmul %194, %229, %cst_136 {dimension_numbers = #tpu.dot_dimension_numbers<[1], [0], [0], [1], [0, 0, 1, 1], [], []>} : vector<2x32xf32>, vector<32x32xf32>, vector<2x32xf32> -> vector<2x32xf32>
    %231 = arith.addf %228, %230 : vector<2x32xf32>
    %c0_137 = arith.constant 0 : index
    %c0_138 = arith.constant 0 : index
    %232 = vector.load %arg25[%c0_137, %c0_138] : memref<1x32xf32, #tpu.memory_space<vmem>>, vector<1x32xf32>
    %233 = vector.broadcast %232 : vector<1x32xf32> to vector<2x32xf32>
    %234 = arith.addf %231, %233 : vector<2x32xf32>
    %c0_139 = arith.constant 0 : index
    %c0_140 = arith.constant 0 : index
    %235 = vector.load %arg22[%c0_139, %c0_140] : memref<32x32xf32, #tpu.memory_space<vmem>>, vector<32x32xf32>
    %cst_141 = arith.constant dense<0.000000e+00> : vector<2x32xf32>
    %236 = tpu.matmul %127, %235, %cst_141 {dimension_numbers = #tpu.dot_dimension_numbers<[1], [0], [0], [1], [0, 0, 1, 1], [], []>} : vector<2x32xf32>, vector<32x32xf32>, vector<2x32xf32> -> vector<2x32xf32>
    %237 = arith.mulf %210, %236 : vector<2x32xf32>
    %238 = arith.addf %234, %237 : vector<2x32xf32>
    %239 = math.tanh %238 : vector<2x32xf32>
    %cst_142 = arith.constant 1.000000e+00 : f32
    %240 = vector.broadcast %cst_142 : f32 to vector<2x32xf32>
    %241 = arith.subf %240, %226 : vector<2x32xf32>
    %242 = arith.mulf %241, %239 : vector<2x32xf32>
    %243 = arith.mulf %226, %127 : vector<2x32xf32>
    %244 = arith.addf %242, %243 : vector<2x32xf32>
    %c0_143 = arith.constant 0 : index
    %c0_144 = arith.constant 0 : index
    %245 = vector.load %arg26[%c0_143, %c0_144] : memref<32x128xf32, #tpu.memory_space<vmem>>, vector<32x128xf32>
    %cst_145 = arith.constant dense<0.000000e+00> : vector<2x128xf32>
    %246 = tpu.matmul %244, %245, %cst_145 {dimension_numbers = #tpu.dot_dimension_numbers<[1], [0], [0], [1], [0, 0, 1, 1], [], []>} : vector<2x32xf32>, vector<32x128xf32>, vector<2x128xf32> -> vector<2x128xf32>
    %c0_146 = arith.constant 0 : index
    %c0_147 = arith.constant 0 : index
    %247 = vector.load %arg27[%c0_146, %c0_147] : memref<32x128xf32, #tpu.memory_space<vmem>>, vector<32x128xf32>
    %cst_148 = arith.constant dense<0.000000e+00> : vector<2x128xf32>
    %248 = tpu.matmul %194, %247, %cst_148 {dimension_numbers = #tpu.dot_dimension_numbers<[1], [0], [0], [1], [0, 0, 1, 1], [], []>} : vector<2x32xf32>, vector<32x128xf32>, vector<2x128xf32> -> vector<2x128xf32>
    %249 = arith.addf %246, %248 : vector<2x128xf32>
    %c0_149 = arith.constant 0 : index
    %c0_150 = arith.constant 0 : index
    %250 = vector.load %arg28[%c0_149, %c0_150] : memref<32x128xf32, #tpu.memory_space<vmem>>, vector<32x128xf32>
    %cst_151 = arith.constant dense<0.000000e+00> : vector<2x128xf32>
    %251 = tpu.matmul %171, %250, %cst_151 {dimension_numbers = #tpu.dot_dimension_numbers<[1], [0], [0], [1], [0, 0, 1, 1], [], []>} : vector<2x32xf32>, vector<32x128xf32>, vector<2x128xf32> -> vector<2x128xf32>
    %252 = arith.addf %249, %251 : vector<2x128xf32>
    %c0_152 = arith.constant 0 : index
    %c0_153 = arith.constant 0 : index
    %253 = vector.load %arg29[%c0_152, %c0_153] : memref<1x128xf32, #tpu.memory_space<vmem>>, vector<1x128xf32>
    %254 = vector.broadcast %253 : vector<1x128xf32> to vector<2x128xf32>
    %255 = arith.addf %252, %254 : vector<2x128xf32>
    %c2 = arith.constant 2 : index
    %c0_154 = arith.constant 0 : index
    %c0_155 = arith.constant 0 : index
    %256 = vector.load %arg30[%c2, %c0_154, %c0_155] : memref<6x2x128xf32, #tpu.memory_space<vmem>>, vector<1x2x128xf32>
    %257 = vector.shape_cast %256 : vector<1x2x128xf32> to vector<2x128xf32>
    %258 = vector.shape_cast %255 : vector<2x128xf32> to vector<1x2x128xf32>
    tpu.vector_store %arg30[%c2, %c0_154, %c0_155], %258 {strides = array<i32>} : memref<6x2x128xf32, #tpu.memory_space<vmem>>, vector<1x2x128xf32>,
    %259 = vector.extract_strided_slice %255 {offsets = [0, 0], sizes = [2, 64], strides = [1, 1]} : vector<2x128xf32> to vector<2x64xf32>
    %cst_156 = arith.constant dense<0xFF800000> : vector<2xf32>
    %260 = vector.multi_reduction <maximumf>, %259, %cst_156 [1] : vector<2x64xf32> to vector<2xf32>
    %261 = vector.shape_cast %260 : vector<2xf32> to vector<2x1xf32>
    %262 = vector.broadcast %261 : vector<2x1xf32> to vector<2x64xf32>
    %263 = arith.cmpf oeq, %259, %262 : vector<2x64xf32>
    %c64_i32_157 = arith.constant 64 : i32
    %264 = vector.broadcast %c64_i32_157 : i32 to vector<2x64xi32>
    %265 = arith.select %263, %42, %264 : vector<2x64xi1>, vector<2x64xi32>
    %cst_158 = arith.constant dense<2147483647> : vector<2xi32>
    %266 = vector.multi_reduction <minsi>, %265, %cst_158 [1] : vector<2x64xi32> to vector<2xi32>
    %267 = vector.shape_cast %266 : vector<2xi32> to vector<2x1xi32>
    %268 = vector.broadcast %267 : vector<2x1xi32> to vector<2x64xi32>
    %269 = arith.cmpi eq, %42, %268 : vector<2x64xi32>
    %270 = arith.extui %269 : vector<2x64xi1> to vector<2x64xi32>
    %271 = arith.sitofp %270 : vector<2x64xi32> to vector<2x64xf32>
    %cst_159 = arith.constant dense<0.000000e+00> : vector<2x32xf32>
    %272 = tpu.matmul %271, %39, %cst_159 {dimension_numbers = #tpu.dot_dimension_numbers<[1], [0], [0], [1], [0, 0, 1, 1], [], []>} : vector<2x64xf32>, vector<64x32xf32>, vector<2x32xf32> -> vector<2x32xf32>
    %c2_160 = arith.constant 2 : index
    %c0_161 = arith.constant 0 : index
    %c0_162 = arith.constant 0 : index
    %273 = vector.load %arg3[%c2_160, %c0_161, %c0_162] : memref<6x2x1xi32, #tpu.memory_space<vmem>>, vector<1x2x1xi32>
    %274 = vector.shape_cast %273 : vector<1x2x1xi32> to vector<2x1xi32>
    %275 = vector.broadcast %274 : vector<2x1xi32> to vector<2x64xi32>
    %276 = arith.cmpi eq, %42, %275 : vector<2x64xi32>
    %277 = arith.extui %276 : vector<2x64xi1> to vector<2x64xi32>
    %278 = arith.sitofp %277 : vector<2x64xi32> to vector<2x64xf32>
    %cst_163 = arith.constant dense<0.000000e+00> : vector<2x32xf32>
    %279 = tpu.matmul %278, %39, %cst_163 {dimension_numbers = #tpu.dot_dimension_numbers<[1], [0], [0], [1], [0, 0, 1, 1], [], []>} : vector<2x64xf32>, vector<64x32xf32>, vector<2x32xf32> -> vector<2x32xf32>
    %c2_164 = arith.constant 2 : index
    %c0_165 = arith.constant 0 : index
    %c0_166 = arith.constant 0 : index
    %280 = vector.load %arg4[%c2_164, %c0_165, %c0_166] : memref<6x2x1xf32, #tpu.memory_space<vmem>>, vector<1x2x1xf32>
    %281 = vector.shape_cast %280 : vector<1x2x1xf32> to vector<2x1xf32>
    %282 = vector.broadcast %281 : vector<2x1xf32> to vector<2x32xf32>
    %283 = arith.mulf %282, %279 : vector<2x32xf32>
    %cst_167 = arith.constant 1.000000e+00 : f32
    %284 = vector.broadcast %cst_167 : f32 to vector<2x1xf32>
    %285 = arith.subf %284, %281 : vector<2x1xf32>
    %286 = vector.broadcast %285 : vector<2x1xf32> to vector<2x32xf32>
    %287 = arith.mulf %286, %272 : vector<2x32xf32>
    %288 = arith.addf %283, %287 : vector<2x32xf32>
    %c0_168 = arith.constant 0 : index
    %c0_169 = arith.constant 0 : index
    %289 = vector.load %arg11[%c0_168, %c0_169] : memref<32x32xf32, #tpu.memory_space<vmem>>, vector<32x32xf32>
    %cst_170 = arith.constant dense<0.000000e+00> : vector<2x32xf32>
    %290 = tpu.matmul %244, %289, %cst_170 {dimension_numbers = #tpu.dot_dimension_numbers<[1], [0], [0], [1], [0, 0, 1, 1], [], []>} : vector<2x32xf32>, vector<32x32xf32>, vector<2x32xf32> -> vector<2x32xf32>
    %291 = vector.shape_cast %290 : vector<2x32xf32> to vector<2x1x32xf32>
    %292 = vector.broadcast %291 : vector<2x1x32xf32> to vector<2x8x32xf32>
    %293 = arith.addf %38, %292 : vector<2x8x32xf32>
    %294 = math.tanh %293 : vector<2x8x32xf32>
    %295 = vector.broadcast %41 : vector<1x1x32xf32> to vector<2x8x32xf32>
    %296 = arith.mulf %294, %295 : vector<2x8x32xf32>
    %cst_171 = arith.constant dense<0.000000e+00> : vector<2x8xf32>
    %297 = vector.multi_reduction <add>, %296, %cst_171 [2] : vector<2x8x32xf32> to vector<2x8xf32>
    %cst_172 = arith.constant dense<0xFF800000> : vector<2xf32>
    %298 = vector.multi_reduction <maximumf>, %297, %cst_172 [1] : vector<2x8xf32> to vector<2xf32>
    %299 = vector.shape_cast %298 : vector<2xf32> to vector<2x1xf32>
    %300 = vector.broadcast %299 : vector<2x1xf32> to vector<2x8xf32>
    %301 = arith.subf %297, %300 : vector<2x8xf32>
    %302 = math.exp %301 : vector<2x8xf32>
    %cst_173 = arith.constant dense<0.000000e+00> : vector<2xf32>
    %303 = vector.multi_reduction <add>, %302, %cst_173 [1] : vector<2x8xf32> to vector<2xf32>
    %304 = vector.shape_cast %303 : vector<2xf32> to vector<2x1xf32>
    %305 = tpu.reciprocal %304 {approx = true} : vector<2x1xf32> -> vector<2x1xf32>
    %306 = vector.broadcast %305 : vector<2x1xf32> to vector<2x8xf32>
    %307 = arith.mulf %302, %306 : vector<2x8xf32>
    %308 = vector.shape_cast %307 : vector<2x8xf32> to vector<2x8x1xf32>
    %309 = vector.broadcast %308 : vector<2x8x1xf32> to vector<2x8x32xf32>
    %310 = arith.mulf %309, %37 : vector<2x8x32xf32>
    %cst_174 = arith.constant dense<0.000000e+00> : vector<2x32xf32>
    %311 = vector.multi_reduction <add>, %310, %cst_174 [1] : vector<2x8x32xf32> to vector<2x32xf32>
    %c0_175 = arith.constant 0 : index
    %c0_176 = arith.constant 0 : index
    %312 = vector.load %arg14[%c0_175, %c0_176] : memref<32x32xf32, #tpu.memory_space<vmem>>, vector<32x32xf32>
    %cst_177 = arith.constant dense<0.000000e+00> : vector<2x32xf32>
    %313 = tpu.matmul %288, %312, %cst_177 {dimension_numbers = #tpu.dot_dimension_numbers<[1], [0], [0], [1], [0, 0, 1, 1], [], []>} : vector<2x32xf32>, vector<32x32xf32>, vector<2x32xf32> -> vector<2x32xf32>
    %c0_178 = arith.constant 0 : index
    %c0_179 = arith.constant 0 : index
    %314 = vector.load %arg17[%c0_178, %c0_179] : memref<32x32xf32, #tpu.memory_space<vmem>>, vector<32x32xf32>
    %cst_180 = arith.constant dense<0.000000e+00> : vector<2x32xf32>
    %315 = tpu.matmul %311, %314, %cst_180 {dimension_numbers = #tpu.dot_dimension_numbers<[1], [0], [0], [1], [0, 0, 1, 1], [], []>} : vector<2x32xf32>, vector<32x32xf32>, vector<2x32xf32> -> vector<2x32xf32>
    %316 = arith.addf %313, %315 : vector<2x32xf32>
    %c0_181 = arith.constant 0 : index
    %c0_182 = arith.constant 0 : index
    %317 = vector.load %arg23[%c0_181, %c0_182] : memref<1x32xf32, #tpu.memory_space<vmem>>, vector<1x32xf32>
    %318 = vector.broadcast %317 : vector<1x32xf32> to vector<2x32xf32>
    %319 = arith.addf %316, %318 : vector<2x32xf32>
    %c0_183 = arith.constant 0 : index
    %c0_184 = arith.constant 0 : index
    %320 = vector.load %arg20[%c0_183, %c0_184] : memref<32x32xf32, #tpu.memory_space<vmem>>, vector<32x32xf32>
    %cst_185 = arith.constant dense<0.000000e+00> : vector<2x32xf32>
    %321 = tpu.matmul %244, %320, %cst_185 {dimension_numbers = #tpu.dot_dimension_numbers<[1], [0], [0], [1], [0, 0, 1, 1], [], []>} : vector<2x32xf32>, vector<32x32xf32>, vector<2x32xf32> -> vector<2x32xf32>
    %322 = arith.addf %319, %321 : vector<2x32xf32>
    %323 = arith.negf %322 : vector<2x32xf32>
    %324 = math.exp %323 : vector<2x32xf32>
    %cst_186 = arith.constant 1.000000e+00 : f32
    %325 = vector.broadcast %cst_186 : f32 to vector<2x32xf32>
    %326 = arith.addf %325, %324 : vector<2x32xf32>
    %327 = arith.divf %325, %326 : vector<2x32xf32>
    %c0_187 = arith.constant 0 : index
    %c0_188 = arith.constant 0 : index
    %328 = vector.load %arg15[%c0_187, %c0_188] : memref<32x32xf32, #tpu.memory_space<vmem>>, vector<32x32xf32>
    %cst_189 = arith.constant dense<0.000000e+00> : vector<2x32xf32>
    %329 = tpu.matmul %288, %328, %cst_189 {dimension_numbers = #tpu.dot_dimension_numbers<[1], [0], [0], [1], [0, 0, 1, 1], [], []>} : vector<2x32xf32>, vector<32x32xf32>, vector<2x32xf32> -> vector<2x32xf32>
    %c0_190 = arith.constant 0 : index
    %c0_191 = arith.constant 0 : index
    %330 = vector.load %arg18[%c0_190, %c0_191] : memref<32x32xf32, #tpu.memory_space<vmem>>, vector<32x32xf32>
    %cst_192 = arith.constant dense<0.000000e+00> : vector<2x32xf32>
    %331 = tpu.matmul %311, %330, %cst_192 {dimension_numbers = #tpu.dot_dimension_numbers<[1], [0], [0], [1], [0, 0, 1, 1], [], []>} : vector<2x32xf32>, vector<32x32xf32>, vector<2x32xf32> -> vector<2x32xf32>
    %332 = arith.addf %329, %331 : vector<2x32xf32>
    %c0_193 = arith.constant 0 : index
    %c0_194 = arith.constant 0 : index
    %333 = vector.load %arg24[%c0_193, %c0_194] : memref<1x32xf32, #tpu.memory_space<vmem>>, vector<1x32xf32>
    %334 = vector.broadcast %333 : vector<1x32xf32> to vector<2x32xf32>
    %335 = arith.addf %332, %334 : vector<2x32xf32>
    %c0_195 = arith.constant 0 : index
    %c0_196 = arith.constant 0 : index
    %336 = vector.load %arg21[%c0_195, %c0_196] : memref<32x32xf32, #tpu.memory_space<vmem>>, vector<32x32xf32>
    %cst_197 = arith.constant dense<0.000000e+00> : vector<2x32xf32>
    %337 = tpu.matmul %244, %336, %cst_197 {dimension_numbers = #tpu.dot_dimension_numbers<[1], [0], [0], [1], [0, 0, 1, 1], [], []>} : vector<2x32xf32>, vector<32x32xf32>, vector<2x32xf32> -> vector<2x32xf32>
    %338 = arith.addf %335, %337 : vector<2x32xf32>
    %339 = arith.negf %338 : vector<2x32xf32>
    %340 = math.exp %339 : vector<2x32xf32>
    %cst_198 = arith.constant 1.000000e+00 : f32
    %341 = vector.broadcast %cst_198 : f32 to vector<2x32xf32>
    %342 = arith.addf %341, %340 : vector<2x32xf32>
    %343 = arith.divf %341, %342 : vector<2x32xf32>
    %c0_199 = arith.constant 0 : index
    %c0_200 = arith.constant 0 : index
    %344 = vector.load %arg16[%c0_199, %c0_200] : memref<32x32xf32, #tpu.memory_space<vmem>>, vector<32x32xf32>
    %cst_201 = arith.constant dense<0.000000e+00> : vector<2x32xf32>
    %345 = tpu.matmul %288, %344, %cst_201 {dimension_numbers = #tpu.dot_dimension_numbers<[1], [0], [0], [1], [0, 0, 1, 1], [], []>} : vector<2x32xf32>, vector<32x32xf32>, vector<2x32xf32> -> vector<2x32xf32>
    %c0_202 = arith.constant 0 : index
    %c0_203 = arith.constant 0 : index
    %346 = vector.load %arg19[%c0_202, %c0_203] : memref<32x32xf32, #tpu.memory_space<vmem>>, vector<32x32xf32>
    %cst_204 = arith.constant dense<0.000000e+00> : vector<2x32xf32>
    %347 = tpu.matmul %311, %346, %cst_204 {dimension_numbers = #tpu.dot_dimension_numbers<[1], [0], [0], [1], [0, 0, 1, 1], [], []>} : vector<2x32xf32>, vector<32x32xf32>, vector<2x32xf32> -> vector<2x32xf32>
    %348 = arith.addf %345, %347 : vector<2x32xf32>
    %c0_205 = arith.constant 0 : index
    %c0_206 = arith.constant 0 : index
    %349 = vector.load %arg25[%c0_205, %c0_206] : memref<1x32xf32, #tpu.memory_space<vmem>>, vector<1x32xf32>
    %350 = vector.broadcast %349 : vector<1x32xf32> to vector<2x32xf32>
    %351 = arith.addf %348, %350 : vector<2x32xf32>
    %c0_207 = arith.constant 0 : index
    %c0_208 = arith.constant 0 : index
    %352 = vector.load %arg22[%c0_207, %c0_208] : memref<32x32xf32, #tpu.memory_space<vmem>>, vector<32x32xf32>
    %cst_209 = arith.constant dense<0.000000e+00> : vector<2x32xf32>
    %353 = tpu.matmul %244, %352, %cst_209 {dimension_numbers = #tpu.dot_dimension_numbers<[1], [0], [0], [1], [0, 0, 1, 1], [], []>} : vector<2x32xf32>, vector<32x32xf32>, vector<2x32xf32> -> vector<2x32xf32>
    %354 = arith.mulf %327, %353 : vector<2x32xf32>
    %355 = arith.addf %351, %354 : vector<2x32xf32>
    %356 = math.tanh %355 : vector<2x32xf32>
    %cst_210 = arith.constant 1.000000e+00 : f32
    %357 = vector.broadcast %cst_210 : f32 to vector<2x32xf32>
    %358 = arith.subf %357, %343 : vector<2x32xf32>
    %359 = arith.mulf %358, %356 : vector<2x32xf32>
    %360 = arith.mulf %343, %244 : vector<2x32xf32>
    %361 = arith.addf %359, %360 : vector<2x32xf32>
    %c0_211 = arith.constant 0 : index
    %c0_212 = arith.constant 0 : index
    %362 = vector.load %arg26[%c0_211, %c0_212] : memref<32x128xf32, #tpu.memory_space<vmem>>, vector<32x128xf32>
    %cst_213 = arith.constant dense<0.000000e+00> : vector<2x128xf32>
    %363 = tpu.matmul %361, %362, %cst_213 {dimension_numbers = #tpu.dot_dimension_numbers<[1], [0], [0], [1], [0, 0, 1, 1], [], []>} : vector<2x32xf32>, vector<32x128xf32>, vector<2x128xf32> -> vector<2x128xf32>
    %c0_214 = arith.constant 0 : index
    %c0_215 = arith.constant 0 : index
    %364 = vector.load %arg27[%c0_214, %c0_215] : memref<32x128xf32, #tpu.memory_space<vmem>>, vector<32x128xf32>
    %cst_216 = arith.constant dense<0.000000e+00> : vector<2x128xf32>
    %365 = tpu.matmul %311, %364, %cst_216 {dimension_numbers = #tpu.dot_dimension_numbers<[1], [0], [0], [1], [0, 0, 1, 1], [], []>} : vector<2x32xf32>, vector<32x128xf32>, vector<2x128xf32> -> vector<2x128xf32>
    %366 = arith.addf %363, %365 : vector<2x128xf32>
    %c0_217 = arith.constant 0 : index
    %c0_218 = arith.constant 0 : index
    %367 = vector.load %arg28[%c0_217, %c0_218] : memref<32x128xf32, #tpu.memory_space<vmem>>, vector<32x128xf32>
    %cst_219 = arith.constant dense<0.000000e+00> : vector<2x128xf32>
    %368 = tpu.matmul %288, %367, %cst_219 {dimension_numbers = #tpu.dot_dimension_numbers<[1], [0], [0], [1], [0, 0, 1, 1], [], []>} : vector<2x32xf32>, vector<32x128xf32>, vector<2x128xf32> -> vector<2x128xf32>
    %369 = arith.addf %366, %368 : vector<2x128xf32>
    %c0_220 = arith.constant 0 : index
    %c0_221 = arith.constant 0 : index
    %370 = vector.load %arg29[%c0_220, %c0_221] : memref<1x128xf32, #tpu.memory_space<vmem>>, vector<1x128xf32>
    %371 = vector.broadcast %370 : vector<1x128xf32> to vector<2x128xf32>
    %372 = arith.addf %369, %371 : vector<2x128xf32>
    %c3 = arith.constant 3 : index
    %c0_222 = arith.constant 0 : index
    %c0_223 = arith.constant 0 : index
    %373 = vector.load %arg30[%c3, %c0_222, %c0_223] : memref<6x2x128xf32, #tpu.memory_space<vmem>>, vector<1x2x128xf32>
    %374 = vector.shape_cast %373 : vector<1x2x128xf32> to vector<2x128xf32>
    %375 = vector.shape_cast %372 : vector<2x128xf32> to vector<1x2x128xf32>
    tpu.vector_store %arg30[%c3, %c0_222, %c0_223], %375 {strides = array<i32>} : memref<6x2x128xf32, #tpu.memory_space<vmem>>, vector<1x2x128xf32>,
    %376 = vector.extract_strided_slice %372 {offsets = [0, 0], sizes = [2, 64], strides = [1, 1]} : vector<2x128xf32> to vector<2x64xf32>
    %cst_224 = arith.constant dense<0xFF800000> : vector<2xf32>
    %377 = vector.multi_reduction <maximumf>, %376, %cst_224 [1] : vector<2x64xf32> to vector<2xf32>
    %378 = vector.shape_cast %377 : vector<2xf32> to vector<2x1xf32>
    %379 = vector.broadcast %378 : vector<2x1xf32> to vector<2x64xf32>
    %380 = arith.cmpf oeq, %376, %379 : vector<2x64xf32>
    %c64_i32_225 = arith.constant 64 : i32
    %381 = vector.broadcast %c64_i32_225 : i32 to vector<2x64xi32>
    %382 = arith.select %380, %42, %381 : vector<2x64xi1>, vector<2x64xi32>
    %cst_226 = arith.constant dense<2147483647> : vector<2xi32>
    %383 = vector.multi_reduction <minsi>, %382, %cst_226 [1] : vector<2x64xi32> to vector<2xi32>
    %384 = vector.shape_cast %383 : vector<2xi32> to vector<2x1xi32>
    %385 = vector.broadcast %384 : vector<2x1xi32> to vector<2x64xi32>
    %386 = arith.cmpi eq, %42, %385 : vector<2x64xi32>
    %387 = arith.extui %386 : vector<2x64xi1> to vector<2x64xi32>
    %388 = arith.sitofp %387 : vector<2x64xi32> to vector<2x64xf32>
    %cst_227 = arith.constant dense<0.000000e+00> : vector<2x32xf32>
    %389 = tpu.matmul %388, %39, %cst_227 {dimension_numbers = #tpu.dot_dimension_numbers<[1], [0], [0], [1], [0, 0, 1, 1], [], []>} : vector<2x64xf32>, vector<64x32xf32>, vector<2x32xf32> -> vector<2x32xf32>
    %c3_228 = arith.constant 3 : index
    %c0_229 = arith.constant 0 : index
    %c0_230 = arith.constant 0 : index
    %390 = vector.load %arg3[%c3_228, %c0_229, %c0_230] : memref<6x2x1xi32, #tpu.memory_space<vmem>>, vector<1x2x1xi32>
    %391 = vector.shape_cast %390 : vector<1x2x1xi32> to vector<2x1xi32>
    %392 = vector.broadcast %391 : vector<2x1xi32> to vector<2x64xi32>
    %393 = arith.cmpi eq, %42, %392 : vector<2x64xi32>
    %394 = arith.extui %393 : vector<2x64xi1> to vector<2x64xi32>
    %395 = arith.sitofp %394 : vector<2x64xi32> to vector<2x64xf32>
    %cst_231 = arith.constant dense<0.000000e+00> : vector<2x32xf32>
    %396 = tpu.matmul %395, %39, %cst_231 {dimension_numbers = #tpu.dot_dimension_numbers<[1], [0], [0], [1], [0, 0, 1, 1], [], []>} : vector<2x64xf32>, vector<64x32xf32>, vector<2x32xf32> -> vector<2x32xf32>
    %c3_232 = arith.constant 3 : index
    %c0_233 = arith.constant 0 : index
    %c0_234 = arith.constant 0 : index
    %397 = vector.load %arg4[%c3_232, %c0_233, %c0_234] : memref<6x2x1xf32, #tpu.memory_space<vmem>>, vector<1x2x1xf32>
    %398 = vector.shape_cast %397 : vector<1x2x1xf32> to vector<2x1xf32>
    %399 = vector.broadcast %398 : vector<2x1xf32> to vector<2x32xf32>
    %400 = arith.mulf %399, %396 : vector<2x32xf32>
    %cst_235 = arith.constant 1.000000e+00 : f32
    %401 = vector.broadcast %cst_235 : f32 to vector<2x1xf32>
    %402 = arith.subf %401, %398 : vector<2x1xf32>
    %403 = vector.broadcast %402 : vector<2x1xf32> to vector<2x32xf32>
    %404 = arith.mulf %403, %389 : vector<2x32xf32>
    %405 = arith.addf %400, %404 : vector<2x32xf32>
    %c0_236 = arith.constant 0 : index
    %c0_237 = arith.constant 0 : index
    %406 = vector.load %arg11[%c0_236, %c0_237] : memref<32x32xf32, #tpu.memory_space<vmem>>, vector<32x32xf32>
    %cst_238 = arith.constant dense<0.000000e+00> : vector<2x32xf32>
    %407 = tpu.matmul %361, %406, %cst_238 {dimension_numbers = #tpu.dot_dimension_numbers<[1], [0], [0], [1], [0, 0, 1, 1], [], []>} : vector<2x32xf32>, vector<32x32xf32>, vector<2x32xf32> -> vector<2x32xf32>
    %408 = vector.shape_cast %407 : vector<2x32xf32> to vector<2x1x32xf32>
    %409 = vector.broadcast %408 : vector<2x1x32xf32> to vector<2x8x32xf32>
    %410 = arith.addf %38, %409 : vector<2x8x32xf32>
    %411 = math.tanh %410 : vector<2x8x32xf32>
    %412 = vector.broadcast %41 : vector<1x1x32xf32> to vector<2x8x32xf32>
    %413 = arith.mulf %411, %412 : vector<2x8x32xf32>
    %cst_239 = arith.constant dense<0.000000e+00> : vector<2x8xf32>
    %414 = vector.multi_reduction <add>, %413, %cst_239 [2] : vector<2x8x32xf32> to vector<2x8xf32>
    %cst_240 = arith.constant dense<0xFF800000> : vector<2xf32>
    %415 = vector.multi_reduction <maximumf>, %414, %cst_240 [1] : vector<2x8xf32> to vector<2xf32>
    %416 = vector.shape_cast %415 : vector<2xf32> to vector<2x1xf32>
    %417 = vector.broadcast %416 : vector<2x1xf32> to vector<2x8xf32>
    %418 = arith.subf %414, %417 : vector<2x8xf32>
    %419 = math.exp %418 : vector<2x8xf32>
    %cst_241 = arith.constant dense<0.000000e+00> : vector<2xf32>
    %420 = vector.multi_reduction <add>, %419, %cst_241 [1] : vector<2x8xf32> to vector<2xf32>
    %421 = vector.shape_cast %420 : vector<2xf32> to vector<2x1xf32>
    %422 = tpu.reciprocal %421 {approx = true} : vector<2x1xf32> -> vector<2x1xf32>
    %423 = vector.broadcast %422 : vector<2x1xf32> to vector<2x8xf32>
    %424 = arith.mulf %419, %423 : vector<2x8xf32>
    %425 = vector.shape_cast %424 : vector<2x8xf32> to vector<2x8x1xf32>
    %426 = vector.broadcast %425 : vector<2x8x1xf32> to vector<2x8x32xf32>
    %427 = arith.mulf %426, %37 : vector<2x8x32xf32>
    %cst_242 = arith.constant dense<0.000000e+00> : vector<2x32xf32>
    %428 = vector.multi_reduction <add>, %427, %cst_242 [1] : vector<2x8x32xf32> to vector<2x32xf32>
    %c0_243 = arith.constant 0 : index
    %c0_244 = arith.constant 0 : index
    %429 = vector.load %arg14[%c0_243, %c0_244] : memref<32x32xf32, #tpu.memory_space<vmem>>, vector<32x32xf32>
    %cst_245 = arith.constant dense<0.000000e+00> : vector<2x32xf32>
    %430 = tpu.matmul %405, %429, %cst_245 {dimension_numbers = #tpu.dot_dimension_numbers<[1], [0], [0], [1], [0, 0, 1, 1], [], []>} : vector<2x32xf32>, vector<32x32xf32>, vector<2x32xf32> -> vector<2x32xf32>
    %c0_246 = arith.constant 0 : index
    %c0_247 = arith.constant 0 : index
    %431 = vector.load %arg17[%c0_246, %c0_247] : memref<32x32xf32, #tpu.memory_space<vmem>>, vector<32x32xf32>
    %cst_248 = arith.constant dense<0.000000e+00> : vector<2x32xf32>
    %432 = tpu.matmul %428, %431, %cst_248 {dimension_numbers = #tpu.dot_dimension_numbers<[1], [0], [0], [1], [0, 0, 1, 1], [], []>} : vector<2x32xf32>, vector<32x32xf32>, vector<2x32xf32> -> vector<2x32xf32>
    %433 = arith.addf %430, %432 : vector<2x32xf32>
    %c0_249 = arith.constant 0 : index
    %c0_250 = arith.constant 0 : index
    %434 = vector.load %arg23[%c0_249, %c0_250] : memref<1x32xf32, #tpu.memory_space<vmem>>, vector<1x32xf32>
    %435 = vector.broadcast %434 : vector<1x32xf32> to vector<2x32xf32>
    %436 = arith.addf %433, %435 : vector<2x32xf32>
    %c0_251 = arith.constant 0 : index
    %c0_252 = arith.constant 0 : index
    %437 = vector.load %arg20[%c0_251, %c0_252] : memref<32x32xf32, #tpu.memory_space<vmem>>, vector<32x32xf32>
    %cst_253 = arith.constant dense<0.000000e+00> : vector<2x32xf32>
    %438 = tpu.matmul %361, %437, %cst_253 {dimension_numbers = #tpu.dot_dimension_numbers<[1], [0], [0], [1], [0, 0, 1, 1], [], []>} : vector<2x32xf32>, vector<32x32xf32>, vector<2x32xf32> -> vector<2x32xf32>
    %439 = arith.addf %436, %438 : vector<2x32xf32>
    %440 = arith.negf %439 : vector<2x32xf32>
    %441 = math.exp %440 : vector<2x32xf32>
    %cst_254 = arith.constant 1.000000e+00 : f32
    %442 = vector.broadcast %cst_254 : f32 to vector<2x32xf32>
    %443 = arith.addf %442, %441 : vector<2x32xf32>
    %444 = arith.divf %442, %443 : vector<2x32xf32>
    %c0_255 = arith.constant 0 : index
    %c0_256 = arith.constant 0 : index
    %445 = vector.load %arg15[%c0_255, %c0_256] : memref<32x32xf32, #tpu.memory_space<vmem>>, vector<32x32xf32>
    %cst_257 = arith.constant dense<0.000000e+00> : vector<2x32xf32>
    %446 = tpu.matmul %405, %445, %cst_257 {dimension_numbers = #tpu.dot_dimension_numbers<[1], [0], [0], [1], [0, 0, 1, 1], [], []>} : vector<2x32xf32>, vector<32x32xf32>, vector<2x32xf32> -> vector<2x32xf32>
    %c0_258 = arith.constant 0 : index
    %c0_259 = arith.constant 0 : index
    %447 = vector.load %arg18[%c0_258, %c0_259] : memref<32x32xf32, #tpu.memory_space<vmem>>, vector<32x32xf32>
    %cst_260 = arith.constant dense<0.000000e+00> : vector<2x32xf32>
    %448 = tpu.matmul %428, %447, %cst_260 {dimension_numbers = #tpu.dot_dimension_numbers<[1], [0], [0], [1], [0, 0, 1, 1], [], []>} : vector<2x32xf32>, vector<32x32xf32>, vector<2x32xf32> -> vector<2x32xf32>
    %449 = arith.addf %446, %448 : vector<2x32xf32>
    %c0_261 = arith.constant 0 : index
    %c0_262 = arith.constant 0 : index
    %450 = vector.load %arg24[%c0_261, %c0_262] : memref<1x32xf32, #tpu.memory_space<vmem>>, vector<1x32xf32>
    %451 = vector.broadcast %450 : vector<1x32xf32> to vector<2x32xf32>
    %452 = arith.addf %449, %451 : vector<2x32xf32>
    %c0_263 = arith.constant 0 : index
    %c0_264 = arith.constant 0 : index
    %453 = vector.load %arg21[%c0_263, %c0_264] : memref<32x32xf32, #tpu.memory_space<vmem>>, vector<32x32xf32>
    %cst_265 = arith.constant dense<0.000000e+00> : vector<2x32xf32>
    %454 = tpu.matmul %361, %453, %cst_265 {dimension_numbers = #tpu.dot_dimension_numbers<[1], [0], [0], [1], [0, 0, 1, 1], [], []>} : vector<2x32xf32>, vector<32x32xf32>, vector<2x32xf32> -> vector<2x32xf32>
    %455 = arith.addf %452, %454 : vector<2x32xf32>
    %456 = arith.negf %455 : vector<2x32xf32>
    %457 = math.exp %456 : vector<2x32xf32>
    %cst_266 = arith.constant 1.000000e+00 : f32
    %458 = vector.broadcast %cst_266 : f32 to vector<2x32xf32>
    %459 = arith.addf %458, %457 : vector<2x32xf32>
    %460 = arith.divf %458, %459 : vector<2x32xf32>
    %c0_267 = arith.constant 0 : index
    %c0_268 = arith.constant 0 : index
    %461 = vector.load %arg16[%c0_267, %c0_268] : memref<32x32xf32, #tpu.memory_space<vmem>>, vector<32x32xf32>
    %cst_269 = arith.constant dense<0.000000e+00> : vector<2x32xf32>
    %462 = tpu.matmul %405, %461, %cst_269 {dimension_numbers = #tpu.dot_dimension_numbers<[1], [0], [0], [1], [0, 0, 1, 1], [], []>} : vector<2x32xf32>, vector<32x32xf32>, vector<2x32xf32> -> vector<2x32xf32>
    %c0_270 = arith.constant 0 : index
    %c0_271 = arith.constant 0 : index
    %463 = vector.load %arg19[%c0_270, %c0_271] : memref<32x32xf32, #tpu.memory_space<vmem>>, vector<32x32xf32>
    %cst_272 = arith.constant dense<0.000000e+00> : vector<2x32xf32>
    %464 = tpu.matmul %428, %463, %cst_272 {dimension_numbers = #tpu.dot_dimension_numbers<[1], [0], [0], [1], [0, 0, 1, 1], [], []>} : vector<2x32xf32>, vector<32x32xf32>, vector<2x32xf32> -> vector<2x32xf32>
    %465 = arith.addf %462, %464 : vector<2x32xf32>
    %c0_273 = arith.constant 0 : index
    %c0_274 = arith.constant 0 : index
    %466 = vector.load %arg25[%c0_273, %c0_274] : memref<1x32xf32, #tpu.memory_space<vmem>>, vector<1x32xf32>
    %467 = vector.broadcast %466 : vector<1x32xf32> to vector<2x32xf32>
    %468 = arith.addf %465, %467 : vector<2x32xf32>
    %c0_275 = arith.constant 0 : index
    %c0_276 = arith.constant 0 : index
    %469 = vector.load %arg22[%c0_275, %c0_276] : memref<32x32xf32, #tpu.memory_space<vmem>>, vector<32x32xf32>
    %cst_277 = arith.constant dense<0.000000e+00> : vector<2x32xf32>
    %470 = tpu.matmul %361, %469, %cst_277 {dimension_numbers = #tpu.dot_dimension_numbers<[1], [0], [0], [1], [0, 0, 1, 1], [], []>} : vector<2x32xf32>, vector<32x32xf32>, vector<2x32xf32> -> vector<2x32xf32>
    %471 = arith.mulf %444, %470 : vector<2x32xf32>
    %472 = arith.addf %468, %471 : vector<2x32xf32>
    %473 = math.tanh %472 : vector<2x32xf32>
    %cst_278 = arith.constant 1.000000e+00 : f32
    %474 = vector.broadcast %cst_278 : f32 to vector<2x32xf32>
    %475 = arith.subf %474, %460 : vector<2x32xf32>
    %476 = arith.mulf %475, %473 : vector<2x32xf32>
    %477 = arith.mulf %460, %361 : vector<2x32xf32>
    %478 = arith.addf %476, %477 : vector<2x32xf32>
    %c0_279 = arith.constant 0 : index
    %c0_280 = arith.constant 0 : index
    %479 = vector.load %arg26[%c0_279, %c0_280] : memref<32x128xf32, #tpu.memory_space<vmem>>, vector<32x128xf32>
    %cst_281 = arith.constant dense<0.000000e+00> : vector<2x128xf32>
    %480 = tpu.matmul %478, %479, %cst_281 {dimension_numbers = #tpu.dot_dimension_numbers<[1], [0], [0], [1], [0, 0, 1, 1], [], []>} : vector<2x32xf32>, vector<32x128xf32>, vector<2x128xf32> -> vector<2x128xf32>
    %c0_282 = arith.constant 0 : index
    %c0_283 = arith.constant 0 : index
    %481 = vector.load %arg27[%c0_282, %c0_283] : memref<32x128xf32, #tpu.memory_space<vmem>>, vector<32x128xf32>
    %cst_284 = arith.constant dense<0.000000e+00> : vector<2x128xf32>
    %482 = tpu.matmul %428, %481, %cst_284 {dimension_numbers = #tpu.dot_dimension_numbers<[1], [0], [0], [1], [0, 0, 1, 1], [], []>} : vector<2x32xf32>, vector<32x128xf32>, vector<2x128xf32> -> vector<2x128xf32>
    %483 = arith.addf %480, %482 : vector<2x128xf32>
    %c0_285 = arith.constant 0 : index
    %c0_286 = arith.constant 0 : index
    %484 = vector.load %arg28[%c0_285, %c0_286] : memref<32x128xf32, #tpu.memory_space<vmem>>, vector<32x128xf32>
    %cst_287 = arith.constant dense<0.000000e+00> : vector<2x128xf32>
    %485 = tpu.matmul %405, %484, %cst_287 {dimension_numbers = #tpu.dot_dimension_numbers<[1], [0], [0], [1], [0, 0, 1, 1], [], []>} : vector<2x32xf32>, vector<32x128xf32>, vector<2x128xf32> -> vector<2x128xf32>
    %486 = arith.addf %483, %485 : vector<2x128xf32>
    %c0_288 = arith.constant 0 : index
    %c0_289 = arith.constant 0 : index
    %487 = vector.load %arg29[%c0_288, %c0_289] : memref<1x128xf32, #tpu.memory_space<vmem>>, vector<1x128xf32>
    %488 = vector.broadcast %487 : vector<1x128xf32> to vector<2x128xf32>
    %489 = arith.addf %486, %488 : vector<2x128xf32>
    %c4 = arith.constant 4 : index
    %c0_290 = arith.constant 0 : index
    %c0_291 = arith.constant 0 : index
    %490 = vector.load %arg30[%c4, %c0_290, %c0_291] : memref<6x2x128xf32, #tpu.memory_space<vmem>>, vector<1x2x128xf32>
    %491 = vector.shape_cast %490 : vector<1x2x128xf32> to vector<2x128xf32>
    %492 = vector.shape_cast %489 : vector<2x128xf32> to vector<1x2x128xf32>
    tpu.vector_store %arg30[%c4, %c0_290, %c0_291], %492 {strides = array<i32>} : memref<6x2x128xf32, #tpu.memory_space<vmem>>, vector<1x2x128xf32>,
    %493 = vector.extract_strided_slice %489 {offsets = [0, 0], sizes = [2, 64], strides = [1, 1]} : vector<2x128xf32> to vector<2x64xf32>
    %cst_292 = arith.constant dense<0xFF800000> : vector<2xf32>
    %494 = vector.multi_reduction <maximumf>, %493, %cst_292 [1] : vector<2x64xf32> to vector<2xf32>
    %495 = vector.shape_cast %494 : vector<2xf32> to vector<2x1xf32>
    %496 = vector.broadcast %495 : vector<2x1xf32> to vector<2x64xf32>
    %497 = arith.cmpf oeq, %493, %496 : vector<2x64xf32>
    %c64_i32_293 = arith.constant 64 : i32
    %498 = vector.broadcast %c64_i32_293 : i32 to vector<2x64xi32>
    %499 = arith.select %497, %42, %498 : vector<2x64xi1>, vector<2x64xi32>
    %cst_294 = arith.constant dense<2147483647> : vector<2xi32>
    %500 = vector.multi_reduction <minsi>, %499, %cst_294 [1] : vector<2x64xi32> to vector<2xi32>
    %501 = vector.shape_cast %500 : vector<2xi32> to vector<2x1xi32>
    %502 = vector.broadcast %501 : vector<2x1xi32> to vector<2x64xi32>
    %503 = arith.cmpi eq, %42, %502 : vector<2x64xi32>
    %504 = arith.extui %503 : vector<2x64xi1> to vector<2x64xi32>
    %505 = arith.sitofp %504 : vector<2x64xi32> to vector<2x64xf32>
    %cst_295 = arith.constant dense<0.000000e+00> : vector<2x32xf32>
    %506 = tpu.matmul %505, %39, %cst_295 {dimension_numbers = #tpu.dot_dimension_numbers<[1], [0], [0], [1], [0, 0, 1, 1], [], []>} : vector<2x64xf32>, vector<64x32xf32>, vector<2x32xf32> -> vector<2x32xf32>
    %c4_296 = arith.constant 4 : index
    %c0_297 = arith.constant 0 : index
    %c0_298 = arith.constant 0 : index
    %507 = vector.load %arg3[%c4_296, %c0_297, %c0_298] : memref<6x2x1xi32, #tpu.memory_space<vmem>>, vector<1x2x1xi32>
    %508 = vector.shape_cast %507 : vector<1x2x1xi32> to vector<2x1xi32>
    %509 = vector.broadcast %508 : vector<2x1xi32> to vector<2x64xi32>
    %510 = arith.cmpi eq, %42, %509 : vector<2x64xi32>
    %511 = arith.extui %510 : vector<2x64xi1> to vector<2x64xi32>
    %512 = arith.sitofp %511 : vector<2x64xi32> to vector<2x64xf32>
    %cst_299 = arith.constant dense<0.000000e+00> : vector<2x32xf32>
    %513 = tpu.matmul %512, %39, %cst_299 {dimension_numbers = #tpu.dot_dimension_numbers<[1], [0], [0], [1], [0, 0, 1, 1], [], []>} : vector<2x64xf32>, vector<64x32xf32>, vector<2x32xf32> -> vector<2x32xf32>
    %c4_300 = arith.constant 4 : index
    %c0_301 = arith.constant 0 : index
    %c0_302 = arith.constant 0 : index
    %514 = vector.load %arg4[%c4_300, %c0_301, %c0_302] : memref<6x2x1xf32, #tpu.memory_space<vmem>>, vector<1x2x1xf32>
    %515 = vector.shape_cast %514 : vector<1x2x1xf32> to vector<2x1xf32>
    %516 = vector.broadcast %515 : vector<2x1xf32> to vector<2x32xf32>
    %517 = arith.mulf %516, %513 : vector<2x32xf32>
    %cst_303 = arith.constant 1.000000e+00 : f32
    %518 = vector.broadcast %cst_303 : f32 to vector<2x1xf32>
    %519 = arith.subf %518, %515 : vector<2x1xf32>
    %520 = vector.broadcast %519 : vector<2x1xf32> to vector<2x32xf32>
    %521 = arith.mulf %520, %506 : vector<2x32xf32>
    %522 = arith.addf %517, %521 : vector<2x32xf32>
    %c0_304 = arith.constant 0 : index
    %c0_305 = arith.constant 0 : index
    %523 = vector.load %arg11[%c0_304, %c0_305] : memref<32x32xf32, #tpu.memory_space<vmem>>, vector<32x32xf32>
    %cst_306 = arith.constant dense<0.000000e+00> : vector<2x32xf32>
    %524 = tpu.matmul %478, %523, %cst_306 {dimension_numbers = #tpu.dot_dimension_numbers<[1], [0], [0], [1], [0, 0, 1, 1], [], []>} : vector<2x32xf32>, vector<32x32xf32>, vector<2x32xf32> -> vector<2x32xf32>
    %525 = vector.shape_cast %524 : vector<2x32xf32> to vector<2x1x32xf32>
    %526 = vector.broadcast %525 : vector<2x1x32xf32> to vector<2x8x32xf32>
    %527 = arith.addf %38, %526 : vector<2x8x32xf32>
    %528 = math.tanh %527 : vector<2x8x32xf32>
    %529 = vector.broadcast %41 : vector<1x1x32xf32> to vector<2x8x32xf32>
    %530 = arith.mulf %528, %529 : vector<2x8x32xf32>
    %cst_307 = arith.constant dense<0.000000e+00> : vector<2x8xf32>
    %531 = vector.multi_reduction <add>, %530, %cst_307 [2] : vector<2x8x32xf32> to vector<2x8xf32>
    %cst_308 = arith.constant dense<0xFF800000> : vector<2xf32>
    %532 = vector.multi_reduction <maximumf>, %531, %cst_308 [1] : vector<2x8xf32> to vector<2xf32>
    %533 = vector.shape_cast %532 : vector<2xf32> to vector<2x1xf32>
    %534 = vector.broadcast %533 : vector<2x1xf32> to vector<2x8xf32>
    %535 = arith.subf %531, %534 : vector<2x8xf32>
    %536 = math.exp %535 : vector<2x8xf32>
    %cst_309 = arith.constant dense<0.000000e+00> : vector<2xf32>
    %537 = vector.multi_reduction <add>, %536, %cst_309 [1] : vector<2x8xf32> to vector<2xf32>
    %538 = vector.shape_cast %537 : vector<2xf32> to vector<2x1xf32>
    %539 = tpu.reciprocal %538 {approx = true} : vector<2x1xf32> -> vector<2x1xf32>
    %540 = vector.broadcast %539 : vector<2x1xf32> to vector<2x8xf32>
    %541 = arith.mulf %536, %540 : vector<2x8xf32>
    %542 = vector.shape_cast %541 : vector<2x8xf32> to vector<2x8x1xf32>
    %543 = vector.broadcast %542 : vector<2x8x1xf32> to vector<2x8x32xf32>
    %544 = arith.mulf %543, %37 : vector<2x8x32xf32>
    %cst_310 = arith.constant dense<0.000000e+00> : vector<2x32xf32>
    %545 = vector.multi_reduction <add>, %544, %cst_310 [1] : vector<2x8x32xf32> to vector<2x32xf32>
    %c0_311 = arith.constant 0 : index
    %c0_312 = arith.constant 0 : index
    %546 = vector.load %arg14[%c0_311, %c0_312] : memref<32x32xf32, #tpu.memory_space<vmem>>, vector<32x32xf32>
    %cst_313 = arith.constant dense<0.000000e+00> : vector<2x32xf32>
    %547 = tpu.matmul %522, %546, %cst_313 {dimension_numbers = #tpu.dot_dimension_numbers<[1], [0], [0], [1], [0, 0, 1, 1], [], []>} : vector<2x32xf32>, vector<32x32xf32>, vector<2x32xf32> -> vector<2x32xf32>
    %c0_314 = arith.constant 0 : index
    %c0_315 = arith.constant 0 : index
    %548 = vector.load %arg17[%c0_314, %c0_315] : memref<32x32xf32, #tpu.memory_space<vmem>>, vector<32x32xf32>
    %cst_316 = arith.constant dense<0.000000e+00> : vector<2x32xf32>
    %549 = tpu.matmul %545, %548, %cst_316 {dimension_numbers = #tpu.dot_dimension_numbers<[1], [0], [0], [1], [0, 0, 1, 1], [], []>} : vector<2x32xf32>, vector<32x32xf32>, vector<2x32xf32> -> vector<2x32xf32>
    %550 = arith.addf %547, %549 : vector<2x32xf32>
    %c0_317 = arith.constant 0 : index
    %c0_318 = arith.constant 0 : index
    %551 = vector.load %arg23[%c0_317, %c0_318] : memref<1x32xf32, #tpu.memory_space<vmem>>, vector<1x32xf32>
    %552 = vector.broadcast %551 : vector<1x32xf32> to vector<2x32xf32>
    %553 = arith.addf %550, %552 : vector<2x32xf32>
    %c0_319 = arith.constant 0 : index
    %c0_320 = arith.constant 0 : index
    %554 = vector.load %arg20[%c0_319, %c0_320] : memref<32x32xf32, #tpu.memory_space<vmem>>, vector<32x32xf32>
    %cst_321 = arith.constant dense<0.000000e+00> : vector<2x32xf32>
    %555 = tpu.matmul %478, %554, %cst_321 {dimension_numbers = #tpu.dot_dimension_numbers<[1], [0], [0], [1], [0, 0, 1, 1], [], []>} : vector<2x32xf32>, vector<32x32xf32>, vector<2x32xf32> -> vector<2x32xf32>
    %556 = arith.addf %553, %555 : vector<2x32xf32>
    %557 = arith.negf %556 : vector<2x32xf32>
    %558 = math.exp %557 : vector<2x32xf32>
    %cst_322 = arith.constant 1.000000e+00 : f32
    %559 = vector.broadcast %cst_322 : f32 to vector<2x32xf32>
    %560 = arith.addf %559, %558 : vector<2x32xf32>
    %561 = arith.divf %559, %560 : vector<2x32xf32>
    %c0_323 = arith.constant 0 : index
    %c0_324 = arith.constant 0 : index
    %562 = vector.load %arg15[%c0_323, %c0_324] : memref<32x32xf32, #tpu.memory_space<vmem>>, vector<32x32xf32>
    %cst_325 = arith.constant dense<0.000000e+00> : vector<2x32xf32>
    %563 = tpu.matmul %522, %562, %cst_325 {dimension_numbers = #tpu.dot_dimension_numbers<[1], [0], [0], [1], [0, 0, 1, 1], [], []>} : vector<2x32xf32>, vector<32x32xf32>, vector<2x32xf32> -> vector<2x32xf32>
    %c0_326 = arith.constant 0 : index
    %c0_327 = arith.constant 0 : index
    %564 = vector.load %arg18[%c0_326, %c0_327] : memref<32x32xf32, #tpu.memory_space<vmem>>, vector<32x32xf32>
    %cst_328 = arith.constant dense<0.000000e+00> : vector<2x32xf32>
    %565 = tpu.matmul %545, %564, %cst_328 {dimension_numbers = #tpu.dot_dimension_numbers<[1], [0], [0], [1], [0, 0, 1, 1], [], []>} : vector<2x32xf32>, vector<32x32xf32>, vector<2x32xf32> -> vector<2x32xf32>
    %566 = arith.addf %563, %565 : vector<2x32xf32>
    %c0_329 = arith.constant 0 : index
    %c0_330 = arith.constant 0 : index
    %567 = vector.load %arg24[%c0_329, %c0_330] : memref<1x32xf32, #tpu.memory_space<vmem>>, vector<1x32xf32>
    %568 = vector.broadcast %567 : vector<1x32xf32> to vector<2x32xf32>
    %569 = arith.addf %566, %568 : vector<2x32xf32>
    %c0_331 = arith.constant 0 : index
    %c0_332 = arith.constant 0 : index
    %570 = vector.load %arg21[%c0_331, %c0_332] : memref<32x32xf32, #tpu.memory_space<vmem>>, vector<32x32xf32>
    %cst_333 = arith.constant dense<0.000000e+00> : vector<2x32xf32>
    %571 = tpu.matmul %478, %570, %cst_333 {dimension_numbers = #tpu.dot_dimension_numbers<[1], [0], [0], [1], [0, 0, 1, 1], [], []>} : vector<2x32xf32>, vector<32x32xf32>, vector<2x32xf32> -> vector<2x32xf32>
    %572 = arith.addf %569, %571 : vector<2x32xf32>
    %573 = arith.negf %572 : vector<2x32xf32>
    %574 = math.exp %573 : vector<2x32xf32>
    %cst_334 = arith.constant 1.000000e+00 : f32
    %575 = vector.broadcast %cst_334 : f32 to vector<2x32xf32>
    %576 = arith.addf %575, %574 : vector<2x32xf32>
    %577 = arith.divf %575, %576 : vector<2x32xf32>
    %c0_335 = arith.constant 0 : index
    %c0_336 = arith.constant 0 : index
    %578 = vector.load %arg16[%c0_335, %c0_336] : memref<32x32xf32, #tpu.memory_space<vmem>>, vector<32x32xf32>
    %cst_337 = arith.constant dense<0.000000e+00> : vector<2x32xf32>
    %579 = tpu.matmul %522, %578, %cst_337 {dimension_numbers = #tpu.dot_dimension_numbers<[1], [0], [0], [1], [0, 0, 1, 1], [], []>} : vector<2x32xf32>, vector<32x32xf32>, vector<2x32xf32> -> vector<2x32xf32>
    %c0_338 = arith.constant 0 : index
    %c0_339 = arith.constant 0 : index
    %580 = vector.load %arg19[%c0_338, %c0_339] : memref<32x32xf32, #tpu.memory_space<vmem>>, vector<32x32xf32>
    %cst_340 = arith.constant dense<0.000000e+00> : vector<2x32xf32>
    %581 = tpu.matmul %545, %580, %cst_340 {dimension_numbers = #tpu.dot_dimension_numbers<[1], [0], [0], [1], [0, 0, 1, 1], [], []>} : vector<2x32xf32>, vector<32x32xf32>, vector<2x32xf32> -> vector<2x32xf32>
    %582 = arith.addf %579, %581 : vector<2x32xf32>
    %c0_341 = arith.constant 0 : index
    %c0_342 = arith.constant 0 : index
    %583 = vector.load %arg25[%c0_341, %c0_342] : memref<1x32xf32, #tpu.memory_space<vmem>>, vector<1x32xf32>
    %584 = vector.broadcast %583 : vector<1x32xf32> to vector<2x32xf32>
    %585 = arith.addf %582, %584 : vector<2x32xf32>
    %c0_343 = arith.constant 0 : index
    %c0_344 = arith.constant 0 : index
    %586 = vector.load %arg22[%c0_343, %c0_344] : memref<32x32xf32, #tpu.memory_space<vmem>>, vector<32x32xf32>
    %cst_345 = arith.constant dense<0.000000e+00> : vector<2x32xf32>
    %587 = tpu.matmul %478, %586, %cst_345 {dimension_numbers = #tpu.dot_dimension_numbers<[1], [0], [0], [1], [0, 0, 1, 1], [], []>} : vector<2x32xf32>, vector<32x32xf32>, vector<2x32xf32> -> vector<2x32xf32>
    %588 = arith.mulf %561, %587 : vector<2x32xf32>
    %589 = arith.addf %585, %588 : vector<2x32xf32>
    %590 = math.tanh %589 : vector<2x32xf32>
    %cst_346 = arith.constant 1.000000e+00 : f32
    %591 = vector.broadcast %cst_346 : f32 to vector<2x32xf32>
    %592 = arith.subf %591, %577 : vector<2x32xf32>
    %593 = arith.mulf %592, %590 : vector<2x32xf32>
    %594 = arith.mulf %577, %478 : vector<2x32xf32>
    %595 = arith.addf %593, %594 : vector<2x32xf32>
    %c0_347 = arith.constant 0 : index
    %c0_348 = arith.constant 0 : index
    %596 = vector.load %arg26[%c0_347, %c0_348] : memref<32x128xf32, #tpu.memory_space<vmem>>, vector<32x128xf32>
    %cst_349 = arith.constant dense<0.000000e+00> : vector<2x128xf32>
    %597 = tpu.matmul %595, %596, %cst_349 {dimension_numbers = #tpu.dot_dimension_numbers<[1], [0], [0], [1], [0, 0, 1, 1], [], []>} : vector<2x32xf32>, vector<32x128xf32>, vector<2x128xf32> -> vector<2x128xf32>
    %c0_350 = arith.constant 0 : index
    %c0_351 = arith.constant 0 : index
    %598 = vector.load %arg27[%c0_350, %c0_351] : memref<32x128xf32, #tpu.memory_space<vmem>>, vector<32x128xf32>
    %cst_352 = arith.constant dense<0.000000e+00> : vector<2x128xf32>
    %599 = tpu.matmul %545, %598, %cst_352 {dimension_numbers = #tpu.dot_dimension_numbers<[1], [0], [0], [1], [0, 0, 1, 1], [], []>} : vector<2x32xf32>, vector<32x128xf32>, vector<2x128xf32> -> vector<2x128xf32>
    %600 = arith.addf %597, %599 : vector<2x128xf32>
    %c0_353 = arith.constant 0 : index
    %c0_354 = arith.constant 0 : index
    %601 = vector.load %arg28[%c0_353, %c0_354] : memref<32x128xf32, #tpu.memory_space<vmem>>, vector<32x128xf32>
    %cst_355 = arith.constant dense<0.000000e+00> : vector<2x128xf32>
    %602 = tpu.matmul %522, %601, %cst_355 {dimension_numbers = #tpu.dot_dimension_numbers<[1], [0], [0], [1], [0, 0, 1, 1], [], []>} : vector<2x32xf32>, vector<32x128xf32>, vector<2x128xf32> -> vector<2x128xf32>
    %603 = arith.addf %600, %602 : vector<2x128xf32>
    %c0_356 = arith.constant 0 : index
    %c0_357 = arith.constant 0 : index
    %604 = vector.load %arg29[%c0_356, %c0_357] : memref<1x128xf32, #tpu.memory_space<vmem>>, vector<1x128xf32>
    %605 = vector.broadcast %604 : vector<1x128xf32> to vector<2x128xf32>
    %606 = arith.addf %603, %605 : vector<2x128xf32>
    %c5 = arith.constant 5 : index
    %c0_358 = arith.constant 0 : index
    %c0_359 = arith.constant 0 : index
    %607 = vector.load %arg30[%c5, %c0_358, %c0_359] : memref<6x2x128xf32, #tpu.memory_space<vmem>>, vector<1x2x128xf32>
    %608 = vector.shape_cast %607 : vector<1x2x128xf32> to vector<2x128xf32>
    %609 = vector.shape_cast %606 : vector<2x128xf32> to vector<1x2x128xf32>
    tpu.vector_store %arg30[%c5, %c0_358, %c0_359], %609 {strides = array<i32>} : memref<6x2x128xf32, #tpu.memory_space<vmem>>, vector<1x2x128xf32>,
    return
  }
}

</mosaic_0001>

<llo_original>
// kernel: seq2seq_forward.1
$region0: #{seq2seq_forward.1}
  #allocation0 [shape = 'u32[]', space=smem, size = 0x4, offset = 0x4, fixed_abs, tag = 'smem constant byte address 0x4 - core index']
  #allocation1 [shape = 'u32[144,128]{1,0:T(1,128)}', space=vmem, size = 0x12000, scoped, tag = 'internal scratch']
  %s0 = inlined_call_operand.smem [shape: u32[31], index: -1, kind: input, shape index: {}]
  %s1 = sld [smem:[%s0]]
  %s2 = scalar_lea.smem %s0, 1
  %s3 = sld [smem:[%s2]]
  %s4 = scalar_lea.smem %s0, 2
  %s5 = sld [smem:[%s4]]
  %s6 = scalar_lea.smem %s0, 3
  %s7 = sld [smem:[%s6]]
  %s8 = scalar_lea.smem %s0, 4
  %s9 = sld [smem:[%s8]]
  %s10 = scalar_lea.smem %s0, 5
  %s11 = sld [smem:[%s10]]
  %s12 = scalar_lea.smem %s0, 6
  %s13 = sld [smem:[%s12]]
  %s14 = scalar_lea.smem %s0, 7
  %s15 = sld [smem:[%s14]]
  %s16 = scalar_lea.smem %s0, 8
  %s17 = sld [smem:[%s16]]
  %s18 = scalar_lea.smem %s0, 9
  %s19 = sld [smem:[%s18]]
  %s20 = scalar_lea.smem %s0, 10
  %s21 = sld [smem:[%s20]]
  %s22 = scalar_lea.smem %s0, 11
  %s23 = sld [smem:[%s22]]
  %s24 = scalar_lea.smem %s0, 12
  %s25 = sld [smem:[%s24]]
  %s26 = scalar_lea.smem %s0, 13
  %s27 = sld [smem:[%s26]]
  %s28 = scalar_lea.smem %s0, 14
  %s29 = sld [smem:[%s28]]
  %s30 = scalar_lea.smem %s0, 15
  %s31 = sld [smem:[%s30]]
  %s32 = scalar_lea.smem %s0, 16
  %s33 = sld [smem:[%s32]]
  %s34 = scalar_lea.smem %s0, 17
  %s35 = sld [smem:[%s34]]
  %s36 = scalar_lea.smem %s0, 18
  %s37 = sld [smem:[%s36]]
  %s38 = scalar_lea.smem %s0, 19
  %s39 = sld [smem:[%s38]]
  %s40 = scalar_lea.smem %s0, 20
  %s41 = sld [smem:[%s40]]
  %s42 = scalar_lea.smem %s0, 21
  %s43 = sld [smem:[%s42]]
  %s44 = scalar_lea.smem %s0, 22
  %s45 = sld [smem:[%s44]]
  %s46 = scalar_lea.smem %s0, 23
  %s47 = sld [smem:[%s46]]
  %s48 = scalar_lea.smem %s0, 24
  %s49 = sld [smem:[%s48]]
  %s50 = scalar_lea.smem %s0, 25
  %s51 = sld [smem:[%s50]]
  %s52 = scalar_lea.smem %s0, 26
  %s53 = sld [smem:[%s52]]
  %s54 = scalar_lea.smem %s0, 27
  %s55 = sld [smem:[%s54]]
  %s56 = scalar_lea.smem %s0, 28
  %s57 = sld [smem:[%s56]]
  %s58 = scalar_lea.smem %s0, 29
  %s59 = sld [smem:[%s58]]
  %s60 = scalar_lea.smem %s0, 30
  %s61 = sld [smem:[%s60]]
  %s62 = sld [smem:[#allocation0]]
  $region170: #{seq2seq_forward.1} parent=0
    _
  %s64 = ssub.s32 1, %s62
  %s65 = scalar_select 0, %s64, %s62
  $region1: #{seq2seq_forward.1} parent=0
    #allocation2 [shape = 'u8[512]{0}', space=vmem, size = 0x400, scoped, tag = 'input window, operand 10, single buffered']
    #allocation3 [shape = 's32[1]{0}', space=sflag, size = 0x4, scoped, tag = 'scoped memory for seq2seq_forward.1']
    #allocation4 [shape = 's32[1]{0}', space=sflag, size = 0x4, scoped, tag = 'scoped memory for seq2seq_forward.1']
    #allocation5 [shape = 'u8[512]{0}', space=vmem, size = 0x400, scoped, tag = 'input window, operand 12, single buffered']
    #allocation6 [shape = 's32[1]{0}', space=sflag, size = 0x4, scoped, tag = 'scoped memory for seq2seq_forward.1']
    #allocation7 [shape = 'u8[16384]{0}', space=vmem, size = 0x4000, scoped, tag = 'input window, operand 21, single buffered']
    #allocation8 [shape = 'u8[16384]{0}', space=vmem, size = 0x4000, scoped, tag = 'input window, operand 22, single buffered']
    #allocation9 [shape = 's32[1]{0}', space=sflag, size = 0x4, scoped, tag = 'scoped memory for seq2seq_forward.1']
    #allocation10 [shape = 'u8[512]{0}', space=vmem, size = 0x400, scoped, tag = 'input window, operand 23, single buffered']
    #allocation11 [shape = 'u8[512]{0}', space=vmem, size = 0x400, scoped, tag = 'input window, operand 24, single buffered']
    #allocation12 [shape = 's32[1]{0}', space=sflag, size = 0x4, scoped, tag = 'scoped memory for seq2seq_forward.1']
    #allocation13 [shape = 'u8[512]{0}', space=vmem, size = 0x400, scoped, tag = 'input window, operand 25, single buffered']
    #allocation14 [shape = 'u8[16384]{0}', space=vmem, size = 0x4000, scoped, tag = 'input window, operand 27, single buffered']
    #allocation15 [shape = 's32[1]{0}', space=sflag, size = 0x4, scoped, tag = 'scoped memory for seq2seq_forward.1']
    #allocation16 [shape = 'u8[16384]{0}', space=vmem, size = 0x4000, scoped, tag = 'input window, operand 28, single buffered']
    #allocation17 [shape = 'u8[512]{0}', space=vmem, size = 0x400, scoped, tag = 'input window, operand 29, single buffered']
    #allocation18 [shape = 's32[1]{0}', space=sflag, size = 0x4, scoped, tag = 'scoped memory for seq2seq_forward.1']
    #allocation19 [shape = 'u8[6144]{0}', space=vmem, size = 0x1800, scoped, tag = 'output window, operand 0, single buffered']
    %66 = vsyncpa [#allocation3], 0
    %67 = vsyncpa [#allocation6], 0
    %68 = vsyncpa [#allocation9], 0
    %69 = vsyncpa [#allocation12], 0
    %70 = vsyncpa [#allocation15], 0
    %71 = vsyncpa [#allocation18], 0
    %72 = vsyncpa [#allocation4], 0
    // Predicated region
    $region2: #{seq2seq_forward.1} parent=1 // pred_check
      _
    $region3: #{seq2seq_forward.1} parent=1 // pred_check_branch
      %74 = sbr.rel (0) target = $region5
    $region4: #{seq2seq_forward.1} parent=1 // pred_region
      _
    $region5: #{seq2seq_forward.1} parent=1 // pred_fallthru
      _
    // Predicated region
    $region6: #{seq2seq_forward.1} parent=1 // pred_check
      _
    $region7: #{seq2seq_forward.1} parent=1 // pred_check_branch
      %76 = sbr.rel (0) target = $region9
    $region8: #{seq2seq_forward.1} parent=1 // pred_region
      _
    $region9: #{seq2seq_forward.1} parent=1 // pred_fallthru
      _
    // Predicated region
    $region10: #{seq2seq_forward.1} parent=1 // pred_check
      _
    $region11: #{seq2seq_forward.1} parent=1 // pred_check_branch
      %78 = sbr.rel (0) target = $region13
    $region12: #{seq2seq_forward.1} parent=1 // pred_region
      _
    $region13: #{seq2seq_forward.1} parent=1 // pred_fallthru
      _
    // Predicated region
    $region14: #{seq2seq_forward.1} parent=1 // pred_check
      _
    $region15: #{seq2seq_forward.1} parent=1 // pred_check_branch
      %80 = sbr.rel (0) target = $region17
    $region16: #{seq2seq_forward.1} parent=1 // pred_region
      _
    $region17: #{seq2seq_forward.1} parent=1 // pred_fallthru
      _
    // Predicated region
    $region18: #{seq2seq_forward.1} parent=1 // pred_check
      _
    $region19: #{seq2seq_forward.1} parent=1 // pred_check_branch
      %82 = sbr.rel (0) target = $region21
    $region20: #{seq2seq_forward.1} parent=1 // pred_region
      _
    $region21: #{seq2seq_forward.1} parent=1 // pred_fallthru
      _
    // Predicated region
    $region22: #{seq2seq_forward.1} parent=1 // pred_check
      _
    $region23: #{seq2seq_forward.1} parent=1 // pred_check_branch
      %84 = sbr.rel (0) target = $region25
    $region24: #{seq2seq_forward.1} parent=1 // pred_region
      _
    $region25: #{seq2seq_forward.1} parent=1 // pred_fallthru
      _
    // Predicated region
    $region26: #{seq2seq_forward.1} parent=1 // pred_check
      _
    $region27: #{seq2seq_forward.1} parent=1 // pred_check_branch
      %86 = sbr.rel (0) target = $region29
    $region28: #{seq2seq_forward.1} parent=1 // pred_region
      _
    $region29: #{seq2seq_forward.1} parent=1 // pred_fallthru
      _
    // Predicated region
    $region30: #{seq2seq_forward.1} parent=1 // pred_check
      _
    $region31: #{seq2seq_forward.1} parent=1 // pred_check_branch
      %88 = sbr.rel (0) target = $region33
    $region32: #{seq2seq_forward.1} parent=1 // pred_region
      _
    $region33: #{seq2seq_forward.1} parent=1 // pred_fallthru
      _
    // Predicated region
    $region34: #{seq2seq_forward.1} parent=1 // pred_check
      _
    $region35: #{seq2seq_forward.1} parent=1 // pred_check_branch
      %90 = sbr.rel (0) target = $region37
    $region36: #{seq2seq_forward.1} parent=1 // pred_region
      _
    $region37: #{seq2seq_forward.1} parent=1 // pred_fallthru
      _
    // Predicated region
    $region38: #{seq2seq_forward.1} parent=1 // pred_check
      _
    $region39: #{seq2seq_forward.1} parent=1 // pred_check_branch
      %92 = sbr.rel (0) target = $region41
    $region40: #{seq2seq_forward.1} parent=1 // pred_region
      _
    $region41: #{seq2seq_forward.1} parent=1 // pred_fallthru
      _
    // Predicated region
    $region42: #{seq2seq_forward.1} parent=1 // pred_check
      _
    $region43: #{seq2seq_forward.1} parent=1 // pred_check_branch
      %94 = sbr.rel (0) target = $region45
    $region44: #{seq2seq_forward.1} parent=1 // pred_region
      %s96 = ssub.s32 16, 16
      %97 = vsyncadd [#allocation3], %s96
      %s99 = sshll.u32 [#allocation2], 4
      %s100 = int_to_ptr.vmem [resolvable:$true] %s99
      %102 = dma.hbm_to_vmem [thread:$0]  %s21, 16, %s100, [#allocation3]
    $region45: #{seq2seq_forward.1} parent=1 // pred_fallthru
      _
    // Predicated region
    $region46: #{seq2seq_forward.1} parent=1 // pred_check
      _
    $region47: #{seq2seq_forward.1} parent=1 // pred_check_branch
      %104 = sbr.rel (0) target = $region49
    $region48: #{seq2seq_forward.1} parent=1 // pred_region
      _
    $region49: #{seq2seq_forward.1} parent=1 // pred_fallthru
      _
    // Predicated region
    $region50: #{seq2seq_forward.1} parent=1 // pred_check
      _
    $region51: #{seq2seq_forward.1} parent=1 // pred_check_branch
      %106 = sbr.rel (0) target = $region53
    $region52: #{seq2seq_forward.1} parent=1 // pred_region
      %s108 = ssub.s32 16, 16
      %109 = vsyncadd [#allocation6], %s108
      %s111 = sshll.u32 [#allocation5], 4
      %s112 = int_to_ptr.vmem [resolvable:$true] %s111
      %114 = dma.hbm_to_vmem [thread:$0]  %s25, 16, %s112, [#allocation6]
    $region53: #{seq2seq_forward.1} parent=1 // pred_fallthru
      _
    // Predicated region
    $region54: #{seq2seq_forward.1} parent=1 // pred_check
      _
    $region55: #{seq2seq_forward.1} parent=1 // pred_check_branch
      %116 = sbr.rel (0) target = $region57
    $region56: #{seq2seq_forward.1} parent=1 // pred_region
      _
    $region57: #{seq2seq_forward.1} parent=1 // pred_fallthru
      _
    // Predicated region
    $region58: #{seq2seq_forward.1} parent=1 // pred_check
      _
    $region59: #{seq2seq_forward.1} parent=1 // pred_check_branch
      %118 = sbr.rel (0) target = $region61
    $region60: #{seq2seq_forward.1} parent=1 // pred_region
      _
    $region61: #{seq2seq_forward.1} parent=1 // pred_fallthru
      _
    // Predicated region
    $region62: #{seq2seq_forward.1} parent=1 // pred_check
      _
    $region63: #{seq2seq_forward.1} parent=1 // pred_check_branch
      %120 = sbr.rel (0) target = $region65
    $region64: #{seq2seq_forward.1} parent=1 // pred_region
      _
    $region65: #{seq2seq_forward.1} parent=1 // pred_fallthru
      _
    // Predicated region
    $region66: #{seq2seq_forward.1} parent=1 // pred_check
      _
    $region67: #{seq2seq_forward.1} parent=1 // pred_check_branch
      %122 = sbr.rel (0) target = $region69
    $region68: #{seq2seq_forward.1} parent=1 // pred_region
      _
    $region69: #{seq2seq_forward.1} parent=1 // pred_fallthru
      _
    // Predicated region
    $region70: #{seq2seq_forward.1} parent=1 // pred_check
      _
    $region71: #{seq2seq_forward.1} parent=1 // pred_check_branch
      %124 = sbr.rel (0) target = $region73
    $region72: #{seq2seq_forward.1} parent=1 // pred_region
      _
    $region73: #{seq2seq_forward.1} parent=1 // pred_fallthru
      _
    // Predicated region
    $region74: #{seq2seq_forward.1} parent=1 // pred_check
      _
    $region75: #{seq2seq_forward.1} parent=1 // pred_check_branch
      %126 = sbr.rel (0) target = $region77
    $region76: #{seq2seq_forward.1} parent=1 // pred_region
      _
    $region77: #{seq2seq_forward.1} parent=1 // pred_fallthru
      _
    // Predicated region
    $region78: #{seq2seq_forward.1} parent=1 // pred_check
      _
    $region79: #{seq2seq_forward.1} parent=1 // pred_check_branch
      %128 = sbr.rel (0) target = $region81
    $region80: #{seq2seq_forward.1} parent=1 // pred_region
      _
    $region81: #{seq2seq_forward.1} parent=1 // pred_fallthru
      _
    // Predicated region
    $region82: #{seq2seq_forward.1} parent=1 // pred_check
      _
    $region83: #{seq2seq_forward.1} parent=1 // pred_check_branch
      %130 = sbr.rel (0) target = $region85
    $region84: #{seq2seq_forward.1} parent=1 // pred_region
      _
    $region85: #{seq2seq_forward.1} parent=1 // pred_fallthru
      _
    // Predicated region
    $region86: #{seq2seq_forward.1} parent=1 // pred_check
      _
    $region87: #{seq2seq_forward.1} parent=1 // pred_check_branch
      %132 = sbr.rel (0) target = $region89
    $region88: #{seq2seq_forward.1} parent=1 // pred_region
      %s134 = ssub.s32 512, 512
      %135 = vsyncadd [#allocation6], %s134
      %s136 = sshll.u32 [#allocation7], 4
      %s137 = int_to_ptr.vmem [resolvable:$true] %s136
      %142 = dma.hbm_to_vmem [thread:$0]  %s43, 512, %s137, [#allocation6], 128, 128, 8
    $region89: #{seq2seq_forward.1} parent=1 // pred_fallthru
      _
    // Predicated region
    $region90: #{seq2seq_forward.1} parent=1 // pred_check
      _
    $region91: #{seq2seq_forward.1} parent=1 // pred_check_branch
      %144 = sbr.rel (0) target = $region93
    $region92: #{seq2seq_forward.1} parent=1 // pred_region
      %s146 = ssub.s32 512, 512
      %147 = vsyncadd [#allocation9], %s146
      %s148 = sshll.u32 [#allocation8], 4
      %s149 = int_to_ptr.vmem [resolvable:$true] %s148
      %154 = dma.hbm_to_vmem [thread:$0]  %s45, 512, %s149, [#allocation9], 128, 128, 8
    $region93: #{seq2seq_forward.1} parent=1 // pred_fallthru
      _
    // Predicated region
    $region94: #{seq2seq_forward.1} parent=1 // pred_check
      _
    $region95: #{seq2seq_forward.1} parent=1 // pred_check_branch
      %156 = sbr.rel (0) target = $region97
    $region96: #{seq2seq_forward.1} parent=1 // pred_region
      %s158 = ssub.s32 16, 16
      %159 = vsyncadd [#allocation9], %s158
      %s161 = sshll.u32 [#allocation10], 4
      %s162 = int_to_ptr.vmem [resolvable:$true] %s161
      %164 = dma.hbm_to_vmem [thread:$0]  %s47, 16, %s162, [#allocation9]
    $region97: #{seq2seq_forward.1} parent=1 // pred_fallthru
      _
    // Predicated region
    $region98: #{seq2seq_forward.1} parent=1 // pred_check
      _
    $region99: #{seq2seq_forward.1} parent=1 // pred_check_branch
      %166 = sbr.rel (0) target = $region101
    $region100: #{seq2seq_forward.1} parent=1 // pred_region
      %s168 = ssub.s32 16, 16
      %169 = vsyncadd [#allocation12], %s168
      %s171 = sshll.u32 [#allocation11], 4
      %s172 = int_to_ptr.vmem [resolvable:$true] %s171
      %174 = dma.hbm_to_vmem [thread:$0]  %s49, 16, %s172, [#allocation12]
    $region101: #{seq2seq_forward.1} parent=1 // pred_fallthru
      _
    // Predicated region
    $region102: #{seq2seq_forward.1} parent=1 // pred_check
      _
    $region103: #{seq2seq_forward.1} parent=1 // pred_check_branch
      %176 = sbr.rel (0) target = $region105
    $region104: #{seq2seq_forward.1} parent=1 // pred_region
      %s178 = ssub.s32 16, 16
      %179 = vsyncadd [#allocation12], %s178
      %s181 = sshll.u32 [#allocation13], 4
      %s182 = int_to_ptr.vmem [resolvable:$true] %s181
      %184 = dma.hbm_to_vmem [thread:$0]  %s51, 16, %s182, [#allocation12]
    $region105: #{seq2seq_forward.1} parent=1 // pred_fallthru
      _
    // Predicated region
    $region106: #{seq2seq_forward.1} parent=1 // pred_check
      _
    $region107: #{seq2seq_forward.1} parent=1 // pred_check_branch
      %186 = sbr.rel (0) target = $region109
    $region108: #{seq2seq_forward.1} parent=1 // pred_region
      _
    $region109: #{seq2seq_forward.1} parent=1 // pred_fallthru
      _
    // Predicated region
    $region110: #{seq2seq_forward.1} parent=1 // pred_check
      _
    $region111: #{seq2seq_forward.1} parent=1 // pred_check_branch
      %188 = sbr.rel (0) target = $region113
    $region112: #{seq2seq_forward.1} parent=1 // pred_region
      %s190 = ssub.s32 512, 512
      %191 = vsyncadd [#allocation15], %s190
      %s192 = sshll.u32 [#allocation14], 4
      %s193 = int_to_ptr.vmem [resolvable:$true] %s192
      %198 = dma.hbm_to_vmem [thread:$0]  %s55, 512, %s193, [#allocation15], 128, 128, 8
    $region113: #{seq2seq_forward.1} parent=1 // pred_fallthru
      _
    // Predicated region
    $region114: #{seq2seq_forward.1} parent=1 // pred_check
      _
    $region115: #{seq2seq_forward.1} parent=1 // pred_check_branch
      %200 = sbr.rel (0) target = $region117
    $region116: #{seq2seq_forward.1} parent=1 // pred_region
      %s202 = ssub.s32 512, 512
      %203 = vsyncadd [#allocation15], %s202
      %s204 = sshll.u32 [#allocation16], 4
      %s205 = int_to_ptr.vmem [resolvable:$true] %s204
      %210 = dma.hbm_to_vmem [thread:$0]  %s57, 512, %s205, [#allocation15], 128, 128, 8
    $region117: #{seq2seq_forward.1} parent=1 // pred_fallthru
      _
    // Predicated region
    $region118: #{seq2seq_forward.1} parent=1 // pred_check
      _
    $region119: #{seq2seq_forward.1} parent=1 // pred_check_branch
      %212 = sbr.rel (0) target = $region121
    $region120: #{seq2seq_forward.1} parent=1 // pred_region
      %s214 = ssub.s32 16, 16
      %215 = vsyncadd [#allocation18], %s214
      %s217 = sshll.u32 [#allocation17], 4
      %s218 = int_to_ptr.vmem [resolvable:$true] %s217
      %220 = dma.hbm_to_vmem [thread:$0]  %s59, 16, %s218, [#allocation18]
    $region121: #{seq2seq_forward.1} parent=1 // pred_fallthru
      _
    // Predicated region
    $region122: #{seq2seq_forward.1} parent=1 // pred_check
      _
    $region123: #{seq2seq_forward.1} parent=1 // pred_check_branch
      %222 = sbr.rel (0) target = $region125
    $region124: #{seq2seq_forward.1} parent=1 // pred_region
      %223 = dma.done [#allocation3], 16
    $region125: #{seq2seq_forward.1} parent=1 // pred_fallthru
      _
    // Predicated region
    $region126: #{seq2seq_forward.1} parent=1 // pred_check
      _
    $region127: #{seq2seq_forward.1} parent=1 // pred_check_branch
      %225 = sbr.rel (0) target = $region129
    $region128: #{seq2seq_forward.1} parent=1 // pred_region
      %226 = dma.done [#allocation6], 16
    $region129: #{seq2seq_forward.1} parent=1 // pred_fallthru
      _
    // Predicated region
    $region130: #{seq2seq_forward.1} parent=1 // pred_check
      _
    $region131: #{seq2seq_forward.1} parent=1 // pred_check_branch
      %228 = sbr.rel (0) target = $region133
    $region132: #{seq2seq_forward.1} parent=1 // pred_region
      %229 = dma.done [#allocation6], 512
    $region133: #{seq2seq_forward.1} parent=1 // pred_fallthru
      _
    // Predicated region
    $region134: #{seq2seq_forward.1} parent=1 // pred_check
      _
    $region135: #{seq2seq_forward.1} parent=1 // pred_check_branch
      %231 = sbr.rel (0) target = $region137
    $region136: #{seq2seq_forward.1} parent=1 // pred_region
      %232 = dma.done [#allocation9], 512
    $region137: #{seq2seq_forward.1} parent=1 // pred_fallthru
      _
    // Predicated region
    $region138: #{seq2seq_forward.1} parent=1 // pred_check
      _
    $region139: #{seq2seq_forward.1} parent=1 // pred_check_branch
      %234 = sbr.rel (0) target = $region141
    $region140: #{seq2seq_forward.1} parent=1 // pred_region
      %235 = dma.done [#allocation9], 16
    $region141: #{seq2seq_forward.1} parent=1 // pred_fallthru
      _
    // Predicated region
    $region142: #{seq2seq_forward.1} parent=1 // pred_check
      _
    $region143: #{seq2seq_forward.1} parent=1 // pred_check_branch
      %237 = sbr.rel (0) target = $region145
    $region144: #{seq2seq_forward.1} parent=1 // pred_region
      %238 = dma.done [#allocation12], 16
    $region145: #{seq2seq_forward.1} parent=1 // pred_fallthru
      _
    // Predicated region
    $region146: #{seq2seq_forward.1} parent=1 // pred_check
      _
    $region147: #{seq2seq_forward.1} parent=1 // pred_check_branch
      %240 = sbr.rel (0) target = $region149
    $region148: #{seq2seq_forward.1} parent=1 // pred_region
      %241 = dma.done [#allocation12], 16
    $region149: #{seq2seq_forward.1} parent=1 // pred_fallthru
      _
    // Predicated region
    $region150: #{seq2seq_forward.1} parent=1 // pred_check
      _
    $region151: #{seq2seq_forward.1} parent=1 // pred_check_branch
      %243 = sbr.rel (0) target = $region153
    $region152: #{seq2seq_forward.1} parent=1 // pred_region
      %244 = dma.done [#allocation15], 512
    $region153: #{seq2seq_forward.1} parent=1 // pred_fallthru
      _
    // Predicated region
    $region154: #{seq2seq_forward.1} parent=1 // pred_check
      _
    $region155: #{seq2seq_forward.1} parent=1 // pred_check_branch
      %246 = sbr.rel (0) target = $region157
    $region156: #{seq2seq_forward.1} parent=1 // pred_region
      %247 = dma.done [#allocation15], 512
    $region157: #{seq2seq_forward.1} parent=1 // pred_fallthru
      _
    // Predicated region
    $region158: #{seq2seq_forward.1} parent=1 // pred_check
      _
    $region159: #{seq2seq_forward.1} parent=1 // pred_check_branch
      %249 = sbr.rel (0) target = $region161
    $region160: #{seq2seq_forward.1} parent=1 // pred_region
      %250 = dma.done [#allocation18], 16
    $region161: #{seq2seq_forward.1} parent=1 // pred_fallthru
      _
    %v251 = vld [vmem:[%s1] sm:$0xff]
    %v252 = vld [vmem:[%s1 + $0x8] sm:$0xff]
    %v253 = vlaneseq
    %v254 = vand.u32 %v253, 127
    %255 = vset.pattern.permute.xlu0 0
    %256 = vperm.xlu0 %255, %v251
    %v257 = vpop.permute.xlu0 %256
    %258 = vset.pattern.permute.xlu0 0
    %259 = vperm.xlu0 %258, %v252
    %v260 = vpop.permute.xlu0 %259
    %vm261 = vcmp.eq.s32.totalorder %v254, %v257
    %vm262 = vcmp.eq.s32.totalorder %v254, %v260
    %v263 = vsel %vm261, 1, 0
    %v264 = vsel %vm262, 1, 0
    %v265 = vcvt.s32.f32 %v263
    %v266 = vcvt.s32.f32 %v264
    %v267 = vld [vmem:[%s11] sm:$0xff]
    %v268 = vld [vmem:[%s11 + $0x8] sm:$0xff]
    %v269 = vld [vmem:[%s11 + $0x10] sm:$0xff]
    %v270 = vld [vmem:[%s11 + $0x18] sm:$0xff]
    %v271 = vld [vmem:[%s11 + $0x20] sm:$0xff]
    %v272 = vld [vmem:[%s11 + $0x28] sm:$0xff]
    %v273 = vld [vmem:[%s11 + $0x30] sm:$0xff]
    %v274 = vld [vmem:[%s11 + $0x38] sm:$0xff]
    %v275 = vld [vmem:[%s11 + $0x40] sm:$0xff]
    %v276 = vld [vmem:[%s11 + $0x48] sm:$0xff]
    %v277 = vld [vmem:[%s11 + $0x50] sm:$0xff]
    %v278 = vld [vmem:[%s11 + $0x58] sm:$0xff]
    %v279 = vld [vmem:[%s11 + $0x60] sm:$0xff]
    %v280 = vld [vmem:[%s11 + $0x68] sm:$0xff]
    %v281 = vld [vmem:[%s11 + $0x70] sm:$0xff]
    %v282 = vld [vmem:[%s11 + $0x78] sm:$0xff]
    %v283 = vld [vmem:[%s13] sm:$0x3]
    %v284 = vld [vmem:[%s3] sm:$0xff]
    %v285 = vld [vmem:[%s3 + $0x8] sm:$0xff]
    %v286 = vcvt.s32.f32 %v284
    %v287 = vcvt.s32.f32 %v285
    %v288 = vsub.f32 1.0, %v286
    %v289 = vsub.f32 1.0, %v287
    %291 = vset.pattern.permute.xlu0 0
    %292 = vperm.xlu0 %291, %v288
    %v293 = vpop.permute.xlu0 %292
    %296 = vset.pattern.permute.xlu0 0
    %297 = vperm.xlu0 %296, %v289
    %v298 = vpop.permute.xlu0 %297
    %v300 = vlaneseq
    %v301 = vshrl.u32 %v300, 7
    %v302 = vsub.s32 0, %v301
    %v303 = vrot.slane %v283, %v302
    %v304 = vmul.f32 %v293, %v303
    %v305 = vmul.f32 %v298, %v303
    %307 = vset.pattern.permute.xlu0 0
    %308 = vperm.xlu0 %307, %v286
    %v309 = vpop.permute.xlu0 %308
    %312 = vset.pattern.permute.xlu0 0
    %313 = vperm.xlu0 %312, %v287
    %v314 = vpop.permute.xlu0 %313
    %v316 = vlaneseq
    %v317 = vshrl.u32 %v316, 7
    %v318 = vsub.s32 1, %v317
    %v319 = vrot.slane %v283, %v318
    %v320 = vmul.f32 %v309, %v319
    %v321 = vmul.f32 %v314, %v319
    %v322 = vadd.f32 %v304, %v320
    %v323 = vadd.f32 %v305, %v321
    %324 = vmatprep.subr.mxu0 0.0
    %325 = vmatpush1.msra.mxu0 %v267
    %326 = vmatprep.subr.mxu0 0.0
    %327 = vmatpush1.msra.mxu0 %v268
    %328 = vmatprep.subr.mxu0 0.0
    %329 = vmatpush1.msra.mxu0 %v269
    %330 = vmatprep.subr.mxu0 0.0
    %331 = vmatpush1.msra.mxu0 %v270
    %332 = vmatprep.subr.mxu0 0.0
    %333 = vmatpush1.msra.mxu0 %v271
    %334 = vmatprep.subr.mxu0 0.0
    %335 = vmatpush1.msra.mxu0 %v272
    %336 = vmatprep.subr.mxu0 0.0
    %337 = vmatpush1.msra.mxu0 %v273
    %338 = vmatprep.subr.mxu0 0.0
    %339 = vmatpush1.msra.mxu0 %v274
    %340 = vmatprep.subr.mxu0 0.0
    %341 = vmatpush1.msra.mxu0 %v275
    %342 = vmatprep.subr.mxu0 0.0
    %343 = vmatpush1.msra.mxu0 %v276
    %344 = vmatprep.subr.mxu0 0.0
    %345 = vmatpush1.msra.mxu0 %v277
    %346 = vmatprep.subr.mxu0 0.0
    %347 = vmatpush1.msra.mxu0 %v278
    %348 = vmatprep.subr.mxu0 0.0
    %349 = vmatpush1.msra.mxu0 %v279
    %350 = vmatprep.subr.mxu0 0.0
    %351 = vmatpush1.msra.mxu0 %v280
    %352 = vmatprep.subr.mxu0 0.0
    %353 = vmatpush1.msra.mxu0 %v281
    %354 = vmatprep.subr.mxu0 0.0
    %355 = vmatpush1.msra.mxu0 %v282
    %356 = vmatprep.subr.mxu0 0.0
    %357 = vmatpush1.msra.mxu0 0.0
    %358 = vmatprep.subr.mxu0 0.0
    %359 = vmatpush1.msra.mxu0 0.0
    %360 = vmatprep.subr.mxu0 0.0
    %361 = vmatpush1.msra.mxu0 0.0
    %362 = vmatprep.subr.mxu0 0.0
    %363 = vmatpush1.msra.mxu0 0.0
    %364 = vmatprep.subr.mxu0 0.0
    %365 = vmatpush1.msra.mxu0 0.0
    %366 = vmatprep.subr.mxu0 0.0
    %367 = vmatpush1.msra.mxu0 0.0
    %368 = vmatprep.subr.mxu0 0.0
    %369 = vmatpush1.msra.mxu0 0.0
    %370 = vmatprep.subr.mxu0 0.0
    %371 = vmatpush1.msra.mxu0 0.0
    %372 = vmatprep.subr.mxu0 0.0
    %373 = vmatpush1.msra.mxu0 0.0
    %374 = vmatprep.subr.mxu0 0.0
    %375 = vmatpush1.msra.mxu0 0.0
    %376 = vmatprep.subr.mxu0 0.0
    %377 = vmatpush1.msra.mxu0 0.0
    %378 = vmatprep.subr.mxu0 0.0
    %379 = vmatpush1.msra.mxu0 0.0
    %380 = vmatprep.subr.mxu0 0.0
    %381 = vmatpush1.msra.mxu0 0.0
    %382 = vmatprep.subr.mxu0 0.0
    %383 = vmatpush1.msra.mxu0 0.0
    %384 = vmatprep.subr.mxu0 0.0
    %385 = vmatpush1.msra.mxu0 0.0
    %386 = vmatprep.subr.mxu0 0.0
    %387 = vmatpush1.msra.mxu0 0.0
    %388 = vmatprep.mubr.f32.mxu0 0.0
    %389 = vmatmul.mubr.f32.gmra.mrb[0].mxu0 %v265
    %v390 = vpop.f32.mrb[0].mxu0
    %v391 = vadd.f32 %v322, %v390
    %v392 = vpop.f32.mrb[0].mxu0
    %393 = vmatprep.mubr.f32.mxu0 0.0
    %394 = vmatmul.mubr.f32.gmra.mrb[0].mxu0 %v266
    %v395 = vpop.f32.mrb[0].mxu0
    %v396 = vadd.f32 %v323, %v395
    %v397 = vpop.f32.mrb[0].mxu0
    %398 = vdwg.mxu0
    %v399 = vld [vmem:[%s15] sm:$0xff]
    %v400 = vld [vmem:[%s15 + $0x8] sm:$0xff]
    %v401 = vld [vmem:[%s15 + $0x10] sm:$0xff]
    %v402 = vld [vmem:[%s15 + $0x18] sm:$0xff]
    %v403 = vld [vmem:[%s17] sm:$0x1]
    %v405 = vlaneseq
    %v406 = vshrl.u32 %v405, 7
    %v407 = vsub.s32 0, %v406
    %v408 = vrot.slane %v403, %v407
    %vm410 = vcmask 261120
    %v412 = vsel %vm410, %v391, 0
    %v415 = vsel %vm410, %v396, 0
    %417 = vmatprep.subr.mxu0 0.0
    %418 = vmatpush1.msra.mxu0 %v399
    %419 = vmatprep.subr.mxu0 0.0
    %420 = vmatpush1.msra.mxu0 %v400
    %421 = vmatprep.subr.mxu0 0.0
    %422 = vmatpush1.msra.mxu0 %v401
    %423 = vmatprep.subr.mxu0 0.0
    %424 = vmatpush1.msra.mxu0 %v402
    %425 = vmatprep.subr.mxu0 0.0
    %426 = vmatpush1.msra.mxu0 0.0
    %427 = vmatprep.subr.mxu0 0.0
    %428 = vmatpush1.msra.mxu0 0.0
    %429 = vmatprep.subr.mxu0 0.0
    %430 = vmatpush1.msra.mxu0 0.0
    %431 = vmatprep.subr.mxu0 0.0
    %432 = vmatpush1.msra.mxu0 0.0
    %433 = vmatprep.subr.mxu0 0.0
    %434 = vmatpush1.msra.mxu0 0.0
    %435 = vmatprep.subr.mxu0 0.0
    %436 = vmatpush1.msra.mxu0 0.0
    %437 = vmatprep.subr.mxu0 0.0
    %438 = vmatpush1.msra.mxu0 0.0
    %439 = vmatprep.subr.mxu0 0.0
    %440 = vmatpush1.msra.mxu0 0.0
    %441 = vmatprep.subr.mxu0 0.0
    %442 = vmatpush1.msra.mxu0 0.0
    %443 = vmatprep.subr.mxu0 0.0
    %444 = vmatpush1.msra.mxu0 0.0
    %445 = vmatprep.subr.mxu0 0.0
    %446 = vmatpush1.msra.mxu0 0.0
    %447 = vmatprep.subr.mxu0 0.0
    %448 = vmatpush1.msra.mxu0 0.0
    %449 = vmatprep.subr.mxu0 0.0
    %450 = vmatpush1.msra.mxu0 0.0
    %451 = vmatprep.subr.mxu0 0.0
    %452 = vmatpush1.msra.mxu0 0.0
    %453 = vmatprep.subr.mxu0 0.0
    %454 = vmatpush1.msra.mxu0 0.0
    %455 = vmatprep.subr.mxu0 0.0
    %456 = vmatpush1.msra.mxu0 0.0
    %457 = vmatprep.subr.mxu0 0.0
    %458 = vmatpush1.msra.mxu0 0.0
    %459 = vmatprep.subr.mxu0 0.0
    %460 = vmatpush1.msra.mxu0 0.0
    %461 = vmatprep.subr.mxu0 0.0
    %462 = vmatpush1.msra.mxu0 0.0
    %463 = vmatprep.subr.mxu0 0.0
    %464 = vmatpush1.msra.mxu0 0.0
    %465 = vmatprep.subr.mxu0 0.0
    %466 = vmatpush1.msra.mxu0 0.0
    %467 = vmatprep.subr.mxu0 0.0
    %468 = vmatpush1.msra.mxu0 0.0
    %469 = vmatprep.subr.mxu0 0.0
    %470 = vmatpush1.msra.mxu0 0.0
    %471 = vmatprep.subr.mxu0 0.0
    %472 = vmatpush1.msra.mxu0 0.0
    %473 = vmatprep.subr.mxu0 0.0
    %474 = vmatpush1.msra.mxu0 0.0
    %475 = vmatprep.subr.mxu0 0.0
    %476 = vmatpush1.msra.mxu0 0.0
    %477 = vmatprep.subr.mxu0 0.0
    %478 = vmatpush1.msra.mxu0 0.0
    %479 = vmatprep.subr.mxu0 0.0
    %480 = vmatpush1.msra.mxu0 0.0
    %481 = vmatprep.mubr.f32.mxu0 0.0
    %482 = vmatmul.mubr.f32.gmra.mrb[0].mxu0 %v412
    %v483 = vpop.f32.mrb[0].mxu0
    %v484 = vadd.f32 %v408, %v483
    %v485 = vpop.f32.mrb[0].mxu0
    %486 = vmatprep.mubr.f32.mxu0 0.0
    %487 = vmatmul.mubr.f32.gmra.mrb[0].mxu0 %v415
    %v488 = vpop.f32.mrb[0].mxu0
    %v489 = vadd.f32 %v408, %v488
    %v490 = vpop.f32.mrb[0].mxu0
    %491 = vdwg.mxu0
    %v492 = vtanh.pop %v484
    %v493 = vtanh.pop %v489
    %v494 = vld [vmem:[%s5] sm:$0xff]
    %v495 = vld [vmem:[%s5 + $0x8] sm:$0xff]
    %497 = vset.pattern.permute.xlu0 0
    %498 = vperm.xlu0 %497, %v494
    %v499 = vpop.permute.xlu0 %498
    %502 = vset.pattern.permute.xlu0 0
    %503 = vperm.xlu0 %502, %v495
    %v504 = vpop.permute.xlu0 %503
    %v506 = vmul.f32 %v492, %v499
    %v507 = vmul.f32 %v493, %v504
    %v508 = vld [vmem:[%s19] sm:$0xff]
    %v509 = vld [vmem:[%s19 + $0x8] sm:$0xff]
    %v510 = vld [vmem:[%s19 + $0x10] sm:$0xff]
    %v511 = vld [vmem:[%s19 + $0x18] sm:$0xff]
    %v512 = vld [vmem:[#allocation2] sm:$0x1]
    %v514 = vlaneseq
    %v515 = vshrl.u32 %v514, 7
    %v516 = vsub.s32 0, %v515
    %v517 = vrot.slane %v512, %v516
    %v520 = vsel %vm410, %v506, 0
    %v523 = vsel %vm410, %v507, 0
    %525 = vmatprep.subr.mxu0 0.0
    %526 = vmatpush1.msra.mxu0 %v508
    %527 = vmatprep.subr.mxu0 0.0
    %528 = vmatpush1.msra.mxu0 %v509
    %529 = vmatprep.subr.mxu0 0.0
    %530 = vmatpush1.msra.mxu0 %v510
    %531 = vmatprep.subr.mxu0 0.0
    %532 = vmatpush1.msra.mxu0 %v511
    %533 = vmatprep.subr.mxu0 0.0
    %534 = vmatpush1.msra.mxu0 0.0
    %535 = vmatprep.subr.mxu0 0.0
    %536 = vmatpush1.msra.mxu0 0.0
    %537 = vmatprep.subr.mxu0 0.0
    %538 = vmatpush1.msra.mxu0 0.0
    %539 = vmatprep.subr.mxu0 0.0
    %540 = vmatpush1.msra.mxu0 0.0
    %541 = vmatprep.subr.mxu0 0.0
    %542 = vmatpush1.msra.mxu0 0.0
    %543 = vmatprep.subr.mxu0 0.0
    %544 = vmatpush1.msra.mxu0 0.0
    %545 = vmatprep.subr.mxu0 0.0
    %546 = vmatpush1.msra.mxu0 0.0
    %547 = vmatprep.subr.mxu0 0.0
    %548 = vmatpush1.msra.mxu0 0.0
    %549 = vmatprep.subr.mxu0 0.0
    %550 = vmatpush1.msra.mxu0 0.0
    %551 = vmatprep.subr.mxu0 0.0
    %552 = vmatpush1.msra.mxu0 0.0
    %553 = vmatprep.subr.mxu0 0.0
    %554 = vmatpush1.msra.mxu0 0.0
    %555 = vmatprep.subr.mxu0 0.0
    %556 = vmatpush1.msra.mxu0 0.0
    %557 = vmatprep.subr.mxu0 0.0
    %558 = vmatpush1.msra.mxu0 0.0
    %559 = vmatprep.subr.mxu0 0.0
    %560 = vmatpush1.msra.mxu0 0.0
    %561 = vmatprep.subr.mxu0 0.0
    %562 = vmatpush1.msra.mxu0 0.0
    %563 = vmatprep.subr.mxu0 0.0
    %564 = vmatpush1.msra.mxu0 0.0
    %565 = vmatprep.subr.mxu0 0.0
    %566 = vmatpush1.msra.mxu0 0.0
    %567 = vmatprep.subr.mxu0 0.0
    %568 = vmatpush1.msra.mxu0 0.0
    %569 = vmatprep.subr.mxu0 0.0
    %570 = vmatpush1.msra.mxu0 0.0
    %571 = vmatprep.subr.mxu0 0.0
    %572 = vmatpush1.msra.mxu0 0.0
    %573 = vmatprep.subr.mxu0 0.0
    %574 = vmatpush1.msra.mxu0 0.0
    %575 = vmatprep.subr.mxu0 0.0
    %576 = vmatpush1.msra.mxu0 0.0
    %577 = vmatprep.subr.mxu0 0.0
    %578 = vmatpush1.msra.mxu0 0.0
    %579 = vmatprep.subr.mxu0 0.0
    %580 = vmatpush1.msra.mxu0 0.0
    %581 = vmatprep.subr.mxu0 0.0
    %582 = vmatpush1.msra.mxu0 0.0
    %583 = vmatprep.subr.mxu0 0.0
    %584 = vmatpush1.msra.mxu0 0.0
    %585 = vmatprep.subr.mxu0 0.0
    %586 = vmatpush1.msra.mxu0 0.0
    %587 = vmatprep.subr.mxu0 0.0
    %588 = vmatpush1.msra.mxu0 0.0
    %589 = vmatprep.mubr.f32.mxu0 0.0
    %590 = vmatmul.mubr.f32.gmra.mrb[0].mxu0 %v520
    %v591 = vpop.f32.mrb[0].mxu0
    %v592 = vadd.f32 %v517, %v591
    %v593 = vpop.f32.mrb[0].mxu0
    %594 = vmatprep.mubr.f32.mxu0 0.0
    %595 = vmatmul.mubr.f32.gmra.mrb[0].mxu0 %v523
    %v596 = vpop.f32.mrb[0].mxu0
    %v597 = vadd.f32 %v517, %v596
    %v598 = vpop.f32.mrb[0].mxu0
    %599 = vdwg.mxu0
    %v600 = vld [vmem:[%s27] sm:$0xff]
    %v601 = vld [vmem:[%s27 + $0x8] sm:$0xff]
    %v602 = vld [vmem:[%s27 + $0x10] sm:$0xff]
    %v603 = vld [vmem:[%s27 + $0x18] sm:$0xff]
    %v604 = vld [vmem:[%s27 + $0x20] sm:$0xff]
    %v605 = vld [vmem:[%s27 + $0x28] sm:$0xff]
    %v606 = vld [vmem:[%s27 + $0x30] sm:$0xff]
    %v607 = vld [vmem:[%s27 + $0x38] sm:$0xff]
    %v608 = vld [vmem:[#allocation5] sm:$0x1]
    %609 = vst [vmem:[#allocation19] sm:$0x3] 0.0
    %v610 = vld [vmem:[%s7] sm:$0x3]
    %611 = vset.pattern.permute.xlu0 0
    %612 = vperm.xlu0 %611, %v610
    %v613 = vpop.permute.xlu0 %612
    %vm614 = vcmp.eq.s32.totalorder %v254, %v613
    %v615 = vsel %vm614, 1, 0
    %v616 = vcvt.s32.f32 %v615
    %vm617 = vcmask 523264
    %v619 = vsel %vm617, %v616, 0
    %621 = vmatprep.subr.mxu0 0.0
    %622 = vmatpush1.msra.mxu0 %v600
    %623 = vmatprep.subr.mxu0 0.0
    %624 = vmatpush1.msra.mxu0 %v601
    %625 = vmatprep.subr.mxu0 0.0
    %626 = vmatpush1.msra.mxu0 %v602
    %627 = vmatprep.subr.mxu0 0.0
    %628 = vmatpush1.msra.mxu0 %v603
    %629 = vmatprep.subr.mxu0 0.0
    %630 = vmatpush1.msra.mxu0 %v604
    %631 = vmatprep.subr.mxu0 0.0
    %632 = vmatpush1.msra.mxu0 %v605
    %633 = vmatprep.subr.mxu0 0.0
    %634 = vmatpush1.msra.mxu0 %v606
    %635 = vmatprep.subr.mxu0 0.0
    %636 = vmatpush1.msra.mxu0 %v607
    %637 = vmatprep.subr.mxu0 0.0
    %638 = vmatpush1.msra.mxu0 0.0
    %639 = vmatprep.subr.mxu0 0.0
    %640 = vmatpush1.msra.mxu0 0.0
    %641 = vmatprep.subr.mxu0 0.0
    %642 = vmatpush1.msra.mxu0 0.0
    %643 = vmatprep.subr.mxu0 0.0
    %644 = vmatpush1.msra.mxu0 0.0
    %645 = vmatprep.subr.mxu0 0.0
    %646 = vmatpush1.msra.mxu0 0.0
    %647 = vmatprep.subr.mxu0 0.0
    %648 = vmatpush1.msra.mxu0 0.0
    %649 = vmatprep.subr.mxu0 0.0
    %650 = vmatpush1.msra.mxu0 0.0
    %651 = vmatprep.subr.mxu0 0.0
    %652 = vmatpush1.msra.mxu0 0.0
    %653 = vmatprep.subr.mxu0 0.0
    %654 = vmatpush1.msra.mxu0 0.0
    %655 = vmatprep.subr.mxu0 0.0
    %656 = vmatpush1.msra.mxu0 0.0
    %657 = vmatprep.subr.mxu0 0.0
    %658 = vmatpush1.msra.mxu0 0.0
    %659 = vmatprep.subr.mxu0 0.0
    %660 = vmatpush1.msra.mxu0 0.0
    %661 = vmatprep.subr.mxu0 0.0
    %662 = vmatpush1.msra.mxu0 0.0
    %663 = vmatprep.subr.mxu0 0.0
    %664 = vmatpush1.msra.mxu0 0.0
    %665 = vmatprep.subr.mxu0 0.0
    %666 = vmatpush1.msra.mxu0 0.0
    %667 = vmatprep.subr.mxu0 0.0
    %668 = vmatpush1.msra.mxu0 0.0
    %669 = vmatprep.subr.mxu0 0.0
    %670 = vmatpush1.msra.mxu0 0.0
    %671 = vmatprep.subr.mxu0 0.0
    %672 = vmatpush1.msra.mxu0 0.0
    %673 = vmatprep.subr.mxu0 0.0
    %674 = vmatpush1.msra.mxu0 0.0
    %675 = vmatprep.subr.mxu0 0.0
    %676 = vmatpush1.msra.mxu0 0.0
    %677 = vmatprep.subr.mxu0 0.0
    %678 = vmatpush1.msra.mxu0 0.0
    %679 = vmatprep.subr.mxu0 0.0
    %680 = vmatpush1.msra.mxu0 0.0
    %681 = vmatprep.subr.mxu0 0.0
    %682 = vmatpush1.msra.mxu0 0.0
    %683 = vmatprep.subr.mxu0 0.0
    %684 = vmatpush1.msra.mxu0 0.0
    %685 = vmatprep.mubr.f32.mxu0 0.0
    %686 = vmatmul.mubr.f32.gmra.mrb[0].mxu0 %v619
    %v687 = vpop.f32.mrb[0].mxu0
    %v688 = vadd.f32 0.0, %v687
    %v689 = vpop.f32.mrb[0].mxu0
    %690 = vdwg.mxu0
    %v691 = vld [vmem:[%s23] sm:$0xff]
    %v692 = vld [vmem:[%s23 + $0x8] sm:$0xff]
    %v693 = vld [vmem:[%s23 + $0x10] sm:$0xff]
    %v694 = vld [vmem:[%s23 + $0x18] sm:$0xff]
    %v696 = vsel %vm410, 0.0, 0
    %698 = vmatprep.subr.mxu0 0.0
    %699 = vmatpush1.msra.mxu0 %v691
    %700 = vmatprep.subr.mxu0 0.0
    %701 = vmatpush1.msra.mxu0 %v692
    %702 = vmatprep.subr.mxu0 0.0
    %703 = vmatpush1.msra.mxu0 %v693
    %704 = vmatprep.subr.mxu0 0.0
    %705 = vmatpush1.msra.mxu0 %v694
    %706 = vmatprep.subr.mxu0 0.0
    %707 = vmatpush1.msra.mxu0 0.0
    %708 = vmatprep.subr.mxu0 0.0
    %709 = vmatpush1.msra.mxu0 0.0
    %710 = vmatprep.subr.mxu0 0.0
    %711 = vmatpush1.msra.mxu0 0.0
    %712 = vmatprep.subr.mxu0 0.0
    %713 = vmatpush1.msra.mxu0 0.0
    %714 = vmatprep.subr.mxu0 0.0
    %715 = vmatpush1.msra.mxu0 0.0
    %716 = vmatprep.subr.mxu0 0.0
    %717 = vmatpush1.msra.mxu0 0.0
    %718 = vmatprep.subr.mxu0 0.0
    %719 = vmatpush1.msra.mxu0 0.0
    %720 = vmatprep.subr.mxu0 0.0
    %721 = vmatpush1.msra.mxu0 0.0
    %722 = vmatprep.subr.mxu0 0.0
    %723 = vmatpush1.msra.mxu0 0.0
    %724 = vmatprep.subr.mxu0 0.0
    %725 = vmatpush1.msra.mxu0 0.0
    %726 = vmatprep.subr.mxu0 0.0
    %727 = vmatpush1.msra.mxu0 0.0
    %728 = vmatprep.subr.mxu0 0.0
    %729 = vmatpush1.msra.mxu0 0.0
    %730 = vmatprep.subr.mxu0 0.0
    %731 = vmatpush1.msra.mxu0 0.0
    %732 = vmatprep.subr.mxu0 0.0
    %733 = vmatpush1.msra.mxu0 0.0
    %734 = vmatprep.subr.mxu0 0.0
    %735 = vmatpush1.msra.mxu0 0.0
    %736 = vmatprep.subr.mxu0 0.0
    %737 = vmatpush1.msra.mxu0 0.0
    %738 = vmatprep.subr.mxu0 0.0
    %739 = vmatpush1.msra.mxu0 0.0
    %740 = vmatprep.subr.mxu0 0.0
    %741 = vmatpush1.msra.mxu0 0.0
    %742 = vmatprep.subr.mxu0 0.0
    %743 = vmatpush1.msra.mxu0 0.0
    %744 = vmatprep.subr.mxu0 0.0
    %745 = vmatpush1.msra.mxu0 0.0
    %746 = vmatprep.subr.mxu0 0.0
    %747 = vmatpush1.msra.mxu0 0.0
    %748 = vmatprep.subr.mxu0 0.0
    %749 = vmatpush1.msra.mxu0 0.0
    %750 = vmatprep.subr.mxu0 0.0
    %751 = vmatpush1.msra.mxu0 0.0
    %752 = vmatprep.subr.mxu0 0.0
    %753 = vmatpush1.msra.mxu0 0.0
    %754 = vmatprep.subr.mxu0 0.0
    %755 = vmatpush1.msra.mxu0 0.0
    %756 = vmatprep.subr.mxu0 0.0
    %757 = vmatpush1.msra.mxu0 0.0
    %758 = vmatprep.subr.mxu0 0.0
    %759 = vmatpush1.msra.mxu0 0.0
    %760 = vmatprep.subr.mxu0 0.0
    %761 = vmatpush1.msra.mxu0 0.0
    %762 = vmatprep.mubr.f32.mxu0 0.0
    %763 = vmatmul.mubr.f32.gmra.mrb[0].mxu0 %v696
    %v764 = vpop.f32.mrb[0].mxu0
    %v765 = vadd.f32 0.0, %v764
    %v766 = vpop.f32.mrb[0].mxu0
    %767 = vdwg.mxu0
    %v770 = vunpack.c.l.s4 1966171168
    %v771 = vunpack.c.0.s8 %v770
    %v772 = vlaneseq
    %v773 = vshrl.u32 %v772, 7
    %v774 = vsub.s32 %v771, %v773
    %v775 = vrot.slane %v765, %v774
    %v776 = vcombine.high %v775, %v775
    %v778 = vunpack.c.l.s4 1966171168
    %v779 = vunpack.c.0.s8 %v778
    %v780 = vlaneseq
    %v781 = vshrl.u32 %v780, 7
    %v782 = vsub.s32 %v779, %v781
    %v783 = vrot.slane %v775, %v782
    %v785 = vunpack.c.l.s4 1966171168
    %v786 = vunpack.c.0.s8 %v785
    %v787 = vlaneseq
    %v788 = vshrl.u32 %v787, 7
    %v789 = vsub.s32 %v786, %v788
    %v790 = vrot.slane %v776, %v789
    %v791 = vlaneseq
    %v792 = vshrl.u32 %v791, 7
    %v793 = vsub.s32 0, %v792
    %v794 = vrot.slane %v783, %v793
    %v795 = vlaneseq
    %v796 = vshrl.u32 %v795, 7
    %v797 = vsub.s32 0, %v796
    %v798 = vrot.slane %v790, %v797
    %v801 = vadd.f32 %v592, %v794
    %v802 = vadd.f32 %v597, %v798
    %v803 = vtanh.pop %v801
    %v804 = vtanh.pop %v802
    %v806 = vlaneseq
    %v807 = vshrl.u32 %v806, 7
    %v808 = vsub.s32 0, %v807
    %v809 = vrot.slane %v608, %v808
    %v811 = vmul.f32 %v803, %v809
    %v812 = vmul.f32 %v804, %v809
    %v813 = vsel %vm410, %v811, 0.0
    %814 = vadd.xlane.f32.xlu0 %v813
    %v815 = vpop.xlane.xlu0 %814
    %v816 = vsel %vm410, %v812, 0.0
    %817 = vadd.xlane.f32.xlu0 %v816
    %v818 = vpop.xlane.xlu0 %817
    %v821 = vlaneseq
    %v822 = vshrl.u32 %v821, 7
    %v823 = vsub.s32 %v254, %v822
    %v824 = vrot.slane %v815, %v823
    %v825 = vlaneseq
    %v826 = vshrl.u32 %v825, 7
    %v827 = vsub.s32 %v254, %v826
    %v828 = vrot.slane %v818, %v827
    %vm829 = vcmask 1041409
    %v830 = vsel %vm829, %v828, %v824
    %vm832 = vcmask 58368
    %v833 = vsel %vm832, %v830, -inf
    %834 = vmax.xlane.f32.xlu0 %v833
    %v835 = vpop.xlane.xlu0 %834
    %v837 = vlaneseq
    %v838 = vshrl.u32 %v837, 7
    %v839 = vsub.s32 0, %v838
    %v840 = vrot.slane %v835, %v839
    %v841 = vlaneseq
    %v842 = vshrl.u32 %v841, 7
    %v843 = vsub.s32 1, %v842
    %v844 = vrot.slane %v835, %v843
    %v847 = vsub.f32 %v815, %v840
    %v848 = vsub.f32 %v818, %v844
    %v849 = vmul.f32 %v847, 1.442695
    %v850 = vpow.pop %v849
    %v851 = vmul.f32 %v848, 1.442695
    %v852 = vpow.pop %v851
    %855 = vset.pattern.permute.xlu0 0
    %856 = vperm.xlu0 %855, %v850
    %v857 = vpop.permute.xlu0 %856
    %858 = vset.pattern.permute.xlu0 0
    %859 = vperm.xlu0 %858, %v852
    %v860 = vpop.permute.xlu0 %859
    %v861 = vlaneseq
    %v862 = vshrl.u32 %v861, 7
    %v863 = vsub.s32 %v254, %v862
    %v864 = vrot.slane %v857, %v863
    %v865 = vlaneseq
    %v866 = vshrl.u32 %v865, 7
    %v867 = vsub.s32 %v254, %v866
    %v868 = vrot.slane %v860, %v867
    %v869 = vsel %vm829, %v868, %v864
    %v871 = vsel %vm832, %v869, 0.0
    %872 = vadd.xlane.f32.xlu0 %v871
    %v873 = vpop.xlane.xlu0 %872
    %v874 = vrcp.pop %v873
    %v876 = vlaneseq
    %v877 = vshrl.u32 %v876, 7
    %v878 = vsub.s32 0, %v877
    %v879 = vrot.slane %v874, %v878
    %v880 = vlaneseq
    %v881 = vshrl.u32 %v880, 7
    %v882 = vsub.s32 1, %v881
    %v883 = vrot.slane %v874, %v882
    %v886 = vmul.f32 %v850, %v879
    %v887 = vmul.f32 %v852, %v883
    %889 = vset.pattern.permute.xlu0 0
    %890 = vperm.xlu0 %889, %v886
    %v891 = vpop.permute.xlu0 %890
    %894 = vset.pattern.permute.xlu0 0
    %895 = vperm.xlu0 %894, %v887
    %v896 = vpop.permute.xlu0 %895
    %v898 = vmul.f32 %v891, %v506
    %v899 = vmul.f32 %v896, %v507
    %v900 = vsel %vm410, %v898, 0.0
    %v901 = vrot.slane %v900, 4
    %v902 = vadd.f32 %v900, %v901
    %v903 = vrot.slane %v902, 2
    %v904 = vadd.f32 %v902, %v903
    %v905 = vrot.slane %v904, 1
    %v906 = vadd.f32 %v904, %v905
    %v907 = vsel %vm410, %v899, 0.0
    %v908 = vrot.slane %v907, 4
    %v909 = vadd.f32 %v907, %v908
    %v910 = vrot.slane %v909, 2
    %v911 = vadd.f32 %v909, %v910
    %v912 = vrot.slane %v911, 1
    %v913 = vadd.f32 %v911, %v912
    %v914 = vld [vmem:[%s29] sm:$0xff]
    %v915 = vld [vmem:[%s29 + $0x8] sm:$0xff]
    %v916 = vld [vmem:[%s29 + $0x10] sm:$0xff]
    %v917 = vld [vmem:[%s29 + $0x18] sm:$0xff]
    %v918 = vld [vmem:[%s35] sm:$0xff]
    %v919 = vld [vmem:[%s35 + $0x8] sm:$0xff]
    %v920 = vld [vmem:[%s35 + $0x10] sm:$0xff]
    %v921 = vld [vmem:[%s35 + $0x18] sm:$0xff]
    %v924 = vsel %vm829, %v913, %v906
    %v925 = vsel %vm410, %v924, 0
    %927 = vmatprep.subr.mxu0 0.0
    %928 = vmatpush1.msra.mxu0 %v918
    %929 = vmatprep.subr.mxu0 0.0
    %930 = vmatpush1.msra.mxu0 %v919
    %931 = vmatprep.subr.mxu0 0.0
    %932 = vmatpush1.msra.mxu0 %v920
    %933 = vmatprep.subr.mxu0 0.0
    %934 = vmatpush1.msra.mxu0 %v921
    %935 = vmatprep.subr.mxu0 0.0
    %936 = vmatpush1.msra.mxu0 0.0
    %937 = vmatprep.subr.mxu0 0.0
    %938 = vmatpush1.msra.mxu0 0.0
    %939 = vmatprep.subr.mxu0 0.0
    %940 = vmatpush1.msra.mxu0 0.0
    %941 = vmatprep.subr.mxu0 0.0
    %942 = vmatpush1.msra.mxu0 0.0
    %943 = vmatprep.subr.mxu0 0.0
    %944 = vmatpush1.msra.mxu0 0.0
    %945 = vmatprep.subr.mxu0 0.0
    %946 = vmatpush1.msra.mxu0 0.0
    %947 = vmatprep.subr.mxu0 0.0
    %948 = vmatpush1.msra.mxu0 0.0
    %949 = vmatprep.subr.mxu0 0.0
    %950 = vmatpush1.msra.mxu0 0.0
    %951 = vmatprep.subr.mxu0 0.0
    %952 = vmatpush1.msra.mxu0 0.0
    %953 = vmatprep.subr.mxu0 0.0
    %954 = vmatpush1.msra.mxu0 0.0
    %955 = vmatprep.subr.mxu0 0.0
    %956 = vmatpush1.msra.mxu0 0.0
    %957 = vmatprep.subr.mxu0 0.0
    %958 = vmatpush1.msra.mxu0 0.0
    %959 = vmatprep.subr.mxu0 0.0
    %960 = vmatpush1.msra.mxu0 0.0
    %961 = vmatprep.subr.mxu0 0.0
    %962 = vmatpush1.msra.mxu0 0.0
    %963 = vmatprep.subr.mxu0 0.0
    %964 = vmatpush1.msra.mxu0 0.0
    %965 = vmatprep.subr.mxu0 0.0
    %966 = vmatpush1.msra.mxu0 0.0
    %967 = vmatprep.subr.mxu0 0.0
    %968 = vmatpush1.msra.mxu0 0.0
    %969 = vmatprep.subr.mxu0 0.0
    %970 = vmatpush1.msra.mxu0 0.0
    %971 = vmatprep.subr.mxu0 0.0
    %972 = vmatpush1.msra.mxu0 0.0
    %973 = vmatprep.subr.mxu0 0.0
    %974 = vmatpush1.msra.mxu0 0.0
    %975 = vmatprep.subr.mxu0 0.0
    %976 = vmatpush1.msra.mxu0 0.0
    %977 = vmatprep.subr.mxu0 0.0
    %978 = vmatpush1.msra.mxu0 0.0
    %979 = vmatprep.subr.mxu0 0.0
    %980 = vmatpush1.msra.mxu0 0.0
    %981 = vmatprep.subr.mxu0 0.0
    %982 = vmatpush1.msra.mxu0 0.0
    %983 = vmatprep.subr.mxu0 0.0
    %984 = vmatpush1.msra.mxu0 0.0
    %985 = vmatprep.subr.mxu0 0.0
    %986 = vmatpush1.msra.mxu0 0.0
    %987 = vmatprep.subr.mxu0 0.0
    %988 = vmatpush1.msra.mxu0 0.0
    %989 = vmatprep.subr.mxu0 0.0
    %990 = vmatpush1.msra.mxu0 0.0
    %991 = vmatprep.mubr.f32.mxu0 0.0
    %992 = vmatmul.mubr.f32.gmra.mrb[0].mxu0 %v925
    %v993 = vpop.f32.mrb[0].mxu0
    %v994 = vadd.f32 0.0, %v993
    %v995 = vpop.f32.mrb[0].mxu0
    %996 = vdwg.mxu0
    %v998 = vsel %vm410, %v688, 0
    %1000 = vmatprep.subr.mxu0 0.0
    %1001 = vmatpush1.msra.mxu0 %v914
    %1002 = vmatprep.subr.mxu0 0.0
    %1003 = vmatpush1.msra.mxu0 %v915
    %1004 = vmatprep.subr.mxu0 0.0
    %1005 = vmatpush1.msra.mxu0 %v916
    %1006 = vmatprep.subr.mxu0 0.0
    %1007 = vmatpush1.msra.mxu0 %v917
    %1008 = vmatprep.subr.mxu0 0.0
    %1009 = vmatpush1.msra.mxu0 0.0
    %1010 = vmatprep.subr.mxu0 0.0
    %1011 = vmatpush1.msra.mxu0 0.0
    %1012 = vmatprep.subr.mxu0 0.0
    %1013 = vmatpush1.msra.mxu0 0.0
    %1014 = vmatprep.subr.mxu0 0.0
    %1015 = vmatpush1.msra.mxu0 0.0
    %1016 = vmatprep.subr.mxu0 0.0
    %1017 = vmatpush1.msra.mxu0 0.0
    %1018 = vmatprep.subr.mxu0 0.0
    %1019 = vmatpush1.msra.mxu0 0.0
    %1020 = vmatprep.subr.mxu0 0.0
    %1021 = vmatpush1.msra.mxu0 0.0
    %1022 = vmatprep.subr.mxu0 0.0
    %1023 = vmatpush1.msra.mxu0 0.0
    %1024 = vmatprep.subr.mxu0 0.0
    %1025 = vmatpush1.msra.mxu0 0.0
    %1026 = vmatprep.subr.mxu0 0.0
    %1027 = vmatpush1.msra.mxu0 0.0
    %1028 = vmatprep.subr.mxu0 0.0
    %1029 = vmatpush1.msra.mxu0 0.0
    %1030 = vmatprep.subr.mxu0 0.0
    %1031 = vmatpush1.msra.mxu0 0.0
    %1032 = vmatprep.subr.mxu0 0.0
    %1033 = vmatpush1.msra.mxu0 0.0
    %1034 = vmatprep.subr.mxu0 0.0
    %1035 = vmatpush1.msra.mxu0 0.0
    %1036 = vmatprep.subr.mxu0 0.0
    %1037 = vmatpush1.msra.mxu0 0.0
    %1038 = vmatprep.subr.mxu0 0.0
    %1039 = vmatpush1.msra.mxu0 0.0
    %1040 = vmatprep.subr.mxu0 0.0
    %1041 = vmatpush1.msra.mxu0 0.0
    %1042 = vmatprep.subr.mxu0 0.0
    %1043 = vmatpush1.msra.mxu0 0.0
    %1044 = vmatprep.subr.mxu0 0.0
    %1045 = vmatpush1.msra.mxu0 0.0
    %1046 = vmatprep.subr.mxu0 0.0
    %1047 = vmatpush1.msra.mxu0 0.0
    %1048 = vmatprep.subr.mxu0 0.0
    %1049 = vmatpush1.msra.mxu0 0.0
    %1050 = vmatprep.subr.mxu0 0.0
    %1051 = vmatpush1.msra.mxu0 0.0
    %1052 = vmatprep.subr.mxu0 0.0
    %1053 = vmatpush1.msra.mxu0 0.0
    %1054 = vmatprep.subr.mxu0 0.0
    %1055 = vmatpush1.msra.mxu0 0.0
    %1056 = vmatprep.subr.mxu0 0.0
    %1057 = vmatpush1.msra.mxu0 0.0
    %1058 = vmatprep.subr.mxu0 0.0
    %1059 = vmatpush1.msra.mxu0 0.0
    %1060 = vmatprep.subr.mxu0 0.0
    %1061 = vmatpush1.msra.mxu0 0.0
    %1062 = vmatprep.subr.mxu0 0.0
    %1063 = vmatpush1.msra.mxu0 0.0
    %1064 = vmatprep.mubr.f32.mxu0 0.0
    %1065 = vmatmul.mubr.f32.gmra.mrb[0].mxu0 %v998
    %v1066 = vpop.f32.mrb[0].mxu0
    %v1067 = vadd.f32 %v994, %v1066
    %v1068 = vpop.f32.mrb[0].mxu0
    %1069 = vdwg.mxu0
    %v1070 = vld [vmem:[#allocation10] sm:$0x1]
    %v1072 = vlaneseq
    %v1073 = vshrl.u32 %v1072, 7
    %v1074 = vsub.s32 0, %v1073
    %v1075 = vrot.slane %v1070, %v1074
    %v1077 = vadd.f32 %v1067, %v1075
    %v1078 = vld [vmem:[%s41] sm:$0xff]
    %v1079 = vld [vmem:[%s41 + $0x8] sm:$0xff]
    %v1080 = vld [vmem:[%s41 + $0x10] sm:$0xff]
    %v1081 = vld [vmem:[%s41 + $0x18] sm:$0xff]
    %1082 = vmatprep.subr.mxu0 0.0
    %1083 = vmatpush1.msra.mxu0 %v1078
    %1084 = vmatprep.subr.mxu0 0.0
    %1085 = vmatpush1.msra.mxu0 %v1079
    %1086 = vmatprep.subr.mxu0 0.0
    %1087 = vmatpush1.msra.mxu0 %v1080
    %1088 = vmatprep.subr.mxu0 0.0
    %1089 = vmatpush1.msra.mxu0 %v1081
    %1090 = vmatprep.subr.mxu0 0.0
    %1091 = vmatpush1.msra.mxu0 0.0
    %1092 = vmatprep.subr.mxu0 0.0
    %1093 = vmatpush1.msra.mxu0 0.0
    %1094 = vmatprep.subr.mxu0 0.0
    %1095 = vmatpush1.msra.mxu0 0.0
    %1096 = vmatprep.subr.mxu0 0.0
    %1097 = vmatpush1.msra.mxu0 0.0
    %1098 = vmatprep.subr.mxu0 0.0
    %1099 = vmatpush1.msra.mxu0 0.0
    %1100 = vmatprep.subr.mxu0 0.0
    %1101 = vmatpush1.msra.mxu0 0.0
    %1102 = vmatprep.subr.mxu0 0.0
    %1103 = vmatpush1.msra.mxu0 0.0
    %1104 = vmatprep.subr.mxu0 0.0
    %1105 = vmatpush1.msra.mxu0 0.0
    %1106 = vmatprep.subr.mxu0 0.0
    %1107 = vmatpush1.msra.mxu0 0.0
    %1108 = vmatprep.subr.mxu0 0.0
    %1109 = vmatpush1.msra.mxu0 0.0
    %1110 = vmatprep.subr.mxu0 0.0
    %1111 = vmatpush1.msra.mxu0 0.0
    %1112 = vmatprep.subr.mxu0 0.0
    %1113 = vmatpush1.msra.mxu0 0.0
    %1114 = vmatprep.subr.mxu0 0.0
    %1115 = vmatpush1.msra.mxu0 0.0
    %1116 = vmatprep.subr.mxu0 0.0
    %1117 = vmatpush1.msra.mxu0 0.0
    %1118 = vmatprep.subr.mxu0 0.0
    %1119 = vmatpush1.msra.mxu0 0.0
    %1120 = vmatprep.subr.mxu0 0.0
    %1121 = vmatpush1.msra.mxu0 0.0
    %1122 = vmatprep.subr.mxu0 0.0
    %1123 = vmatpush1.msra.mxu0 0.0
    %1124 = vmatprep.subr.mxu0 0.0
    %1125 = vmatpush1.msra.mxu0 0.0
    %1126 = vmatprep.subr.mxu0 0.0
    %1127 = vmatpush1.msra.mxu0 0.0
    %1128 = vmatprep.subr.mxu0 0.0
    %1129 = vmatpush1.msra.mxu0 0.0
    %1130 = vmatprep.subr.mxu0 0.0
    %1131 = vmatpush1.msra.mxu0 0.0
    %1132 = vmatprep.subr.mxu0 0.0
    %1133 = vmatpush1.msra.mxu0 0.0
    %1134 = vmatprep.subr.mxu0 0.0
    %1135 = vmatpush1.msra.mxu0 0.0
    %1136 = vmatprep.subr.mxu0 0.0
    %1137 = vmatpush1.msra.mxu0 0.0
    %1138 = vmatprep.subr.mxu0 0.0
    %1139 = vmatpush1.msra.mxu0 0.0
    %1140 = vmatprep.subr.mxu0 0.0
    %1141 = vmatpush1.msra.mxu0 0.0
    %1142 = vmatprep.subr.mxu0 0.0
    %1143 = vmatpush1.msra.mxu0 0.0
    %1144 = vmatprep.subr.mxu0 0.0
    %1145 = vmatpush1.msra.mxu0 0.0
    %1146 = vmatprep.mubr.f32.mxu0 0.0
    %1147 = vmatmul.mubr.f32.gmra.mrb[0].mxu0 %v696
    %v1148 = vpop.f32.mrb[0].mxu0
    %v1149 = vadd.f32 0.0, %v1148
    %v1150 = vpop.f32.mrb[0].mxu0
    %1151 = vdwg.mxu0
    %v1152 = vadd.f32 %v1077, %v1149
    %v1153 = vxor.u32 %v1152, 2147483648
    %v1154 = vmul.f32 %v1153, 1.442695
    %v1155 = vpow.pop %v1154
    %v1156 = vadd.f32 %v1155, 1.0
    %v1157 = vrcp.pop %v1156
    %v1158 = vmul.f32 1.0, %v1157
    %v1159 = vld [vmem:[%s31] sm:$0xff]
    %v1160 = vld [vmem:[%s31 + $0x8] sm:$0xff]
    %v1161 = vld [vmem:[%s31 + $0x10] sm:$0xff]
    %v1162 = vld [vmem:[%s31 + $0x18] sm:$0xff]
    %v1163 = vld [vmem:[%s37] sm:$0xff]
    %v1164 = vld [vmem:[%s37 + $0x8] sm:$0xff]
    %v1165 = vld [vmem:[%s37 + $0x10] sm:$0xff]
    %v1166 = vld [vmem:[%s37 + $0x18] sm:$0xff]
    %1167 = vmatprep.subr.mxu0 0.0
    %1168 = vmatpush1.msra.mxu0 %v1163
    %1169 = vmatprep.subr.mxu0 0.0
    %1170 = vmatpush1.msra.mxu0 %v1164
    %1171 = vmatprep.subr.mxu0 0.0
    %1172 = vmatpush1.msra.mxu0 %v1165
    %1173 = vmatprep.subr.mxu0 0.0
    %1174 = vmatpush1.msra.mxu0 %v1166
    %1175 = vmatprep.subr.mxu0 0.0
    %1176 = vmatpush1.msra.mxu0 0.0
    %1177 = vmatprep.subr.mxu0 0.0
    %1178 = vmatpush1.msra.mxu0 0.0
    %1179 = vmatprep.subr.mxu0 0.0
    %1180 = vmatpush1.msra.mxu0 0.0
    %1181 = vmatprep.subr.mxu0 0.0
    %1182 = vmatpush1.msra.mxu0 0.0
    %1183 = vmatprep.subr.mxu0 0.0
    %1184 = vmatpush1.msra.mxu0 0.0
    %1185 = vmatprep.subr.mxu0 0.0
    %1186 = vmatpush1.msra.mxu0 0.0
    %1187 = vmatprep.subr.mxu0 0.0
    %1188 = vmatpush1.msra.mxu0 0.0
    %1189 = vmatprep.subr.mxu0 0.0
    %1190 = vmatpush1.msra.mxu0 0.0
    %1191 = vmatprep.subr.mxu0 0.0
    %1192 = vmatpush1.msra.mxu0 0.0
    %1193 = vmatprep.subr.mxu0 0.0
    %1194 = vmatpush1.msra.mxu0 0.0
    %1195 = vmatprep.subr.mxu0 0.0
    %1196 = vmatpush1.msra.mxu0 0.0
    %1197 = vmatprep.subr.mxu0 0.0
    %1198 = vmatpush1.msra.mxu0 0.0
    %1199 = vmatprep.subr.mxu0 0.0
    %1200 = vmatpush1.msra.mxu0 0.0
    %1201 = vmatprep.subr.mxu0 0.0
    %1202 = vmatpush1.msra.mxu0 0.0
    %1203 = vmatprep.subr.mxu0 0.0
    %1204 = vmatpush1.msra.mxu0 0.0
    %1205 = vmatprep.subr.mxu0 0.0
    %1206 = vmatpush1.msra.mxu0 0.0
    %1207 = vmatprep.subr.mxu0 0.0
    %1208 = vmatpush1.msra.mxu0 0.0
    %1209 = vmatprep.subr.mxu0 0.0
    %1210 = vmatpush1.msra.mxu0 0.0
    %1211 = vmatprep.subr.mxu0 0.0
    %1212 = vmatpush1.msra.mxu0 0.0
    %1213 = vmatprep.subr.mxu0 0.0
    %1214 = vmatpush1.msra.mxu0 0.0
    %1215 = vmatprep.subr.mxu0 0.0
    %1216 = vmatpush1.msra.mxu0 0.0
    %1217 = vmatprep.subr.mxu0 0.0
    %1218 = vmatpush1.msra.mxu0 0.0
    %1219 = vmatprep.subr.mxu0 0.0
    %1220 = vmatpush1.msra.mxu0 0.0
    %1221 = vmatprep.subr.mxu0 0.0
    %1222 = vmatpush1.msra.mxu0 0.0
    %1223 = vmatprep.subr.mxu0 0.0
    %1224 = vmatpush1.msra.mxu0 0.0
    %1225 = vmatprep.subr.mxu0 0.0
    %1226 = vmatpush1.msra.mxu0 0.0
    %1227 = vmatprep.subr.mxu0 0.0
    %1228 = vmatpush1.msra.mxu0 0.0
    %1229 = vmatprep.subr.mxu0 0.0
    %1230 = vmatpush1.msra.mxu0 0.0
    %1231 = vmatprep.mubr.f32.mxu0 0.0
    %1232 = vmatmul.mubr.f32.gmra.mrb[0].mxu0 %v925
    %v1233 = vpop.f32.mrb[0].mxu0
    %v1234 = vadd.f32 0.0, %v1233
    %v1235 = vpop.f32.mrb[0].mxu0
    %1236 = vdwg.mxu0
    %1237 = vmatprep.subr.mxu0 0.0
    %1238 = vmatpush1.msra.mxu0 %v1159
    %1239 = vmatprep.subr.mxu0 0.0
    %1240 = vmatpush1.msra.mxu0 %v1160
    %1241 = vmatprep.subr.mxu0 0.0
    %1242 = vmatpush1.msra.mxu0 %v1161
    %1243 = vmatprep.subr.mxu0 0.0
    %1244 = vmatpush1.msra.mxu0 %v1162
    %1245 = vmatprep.subr.mxu0 0.0
    %1246 = vmatpush1.msra.mxu0 0.0
    %1247 = vmatprep.subr.mxu0 0.0
    %1248 = vmatpush1.msra.mxu0 0.0
    %1249 = vmatprep.subr.mxu0 0.0
    %1250 = vmatpush1.msra.mxu0 0.0
    %1251 = vmatprep.subr.mxu0 0.0
    %1252 = vmatpush1.msra.mxu0 0.0
    %1253 = vmatprep.subr.mxu0 0.0
    %1254 = vmatpush1.msra.mxu0 0.0
    %1255 = vmatprep.subr.mxu0 0.0
    %1256 = vmatpush1.msra.mxu0 0.0
    %1257 = vmatprep.subr.mxu0 0.0
    %1258 = vmatpush1.msra.mxu0 0.0
    %1259 = vmatprep.subr.mxu0 0.0
    %1260 = vmatpush1.msra.mxu0 0.0
    %1261 = vmatprep.subr.mxu0 0.0
    %1262 = vmatpush1.msra.mxu0 0.0
    %1263 = vmatprep.subr.mxu0 0.0
    %1264 = vmatpush1.msra.mxu0 0.0
    %1265 = vmatprep.subr.mxu0 0.0
    %1266 = vmatpush1.msra.mxu0 0.0
    %1267 = vmatprep.subr.mxu0 0.0
    %1268 = vmatpush1.msra.mxu0 0.0
    %1269 = vmatprep.subr.mxu0 0.0
    %1270 = vmatpush1.msra.mxu0 0.0
    %1271 = vmatprep.subr.mxu0 0.0
    %1272 = vmatpush1.msra.mxu0 0.0
    %1273 = vmatprep.subr.mxu0 0.0
    %1274 = vmatpush1.msra.mxu0 0.0
    %1275 = vmatprep.subr.mxu0 0.0
    %1276 = vmatpush1.msra.mxu0 0.0
    %1277 = vmatprep.subr.mxu0 0.0
    %1278 = vmatpush1.msra.mxu0 0.0
    %1279 = vmatprep.subr.mxu0 0.0
    %1280 = vmatpush1.msra.mxu0 0.0
    %1281 = vmatprep.subr.mxu0 0.0
    %1282 = vmatpush1.msra.mxu0 0.0
    %1283 = vmatprep.subr.mxu0 0.0
    %1284 = vmatpush1.msra.mxu0 0.0
    %1285 = vmatprep.subr.mxu0 0.0
    %1286 = vmatpush1.msra.mxu0 0.0
    %1287 = vmatprep.subr.mxu0 0.0
    %1288 = vmatpush1.msra.mxu0 0.0
    %1289 = vmatprep.subr.mxu0 0.0
    %1290 = vmatpush1.msra.mxu0 0.0
    %1291 = vmatprep.subr.mxu0 0.0
    %1292 = vmatpush1.msra.mxu0 0.0
    %1293 = vmatprep.subr.mxu0 0.0
    %1294 = vmatpush1.msra.mxu0 0.0
    %1295 = vmatprep.subr.mxu0 0.0
    %1296 = vmatpush1.msra.mxu0 0.0
    %1297 = vmatprep.subr.mxu0 0.0
    %1298 = vmatpush1.msra.mxu0 0.0
    %1299 = vmatprep.subr.mxu0 0.0
    %1300 = vmatpush1.msra.mxu0 0.0
    %1301 = vmatprep.mubr.f32.mxu0 0.0
    %1302 = vmatmul.mubr.f32.gmra.mrb[0].mxu0 %v998
    %v1303 = vpop.f32.mrb[0].mxu0
    %v1304 = vadd.f32 %v1234, %v1303
    %v1305 = vpop.f32.mrb[0].mxu0
    %1306 = vdwg.mxu0
    %v1307 = vld [vmem:[#allocation11] sm:$0x1]
    %v1309 = vlaneseq
    %v1310 = vshrl.u32 %v1309, 7
    %v1311 = vsub.s32 0, %v1310
    %v1312 = vrot.slane %v1307, %v1311
    %v1314 = vadd.f32 %v1304, %v1312
    %v1315 = vld [vmem:[#allocation7] sm:$0xff]
    %v1316 = vld [vmem:[#allocation7 + $0x8] sm:$0xff]
    %v1317 = vld [vmem:[#allocation7 + $0x10] sm:$0xff]
    %v1318 = vld [vmem:[#allocation7 + $0x18] sm:$0xff]
    %1319 = vmatprep.subr.mxu0 0.0
    %1320 = vmatpush1.msra.mxu0 %v1315
    %1321 = vmatprep.subr.mxu0 0.0
    %1322 = vmatpush1.msra.mxu0 %v1316
    %1323 = vmatprep.subr.mxu0 0.0
    %1324 = vmatpush1.msra.mxu0 %v1317
    %1325 = vmatprep.subr.mxu0 0.0
    %1326 = vmatpush1.msra.mxu0 %v1318
    %1327 = vmatprep.subr.mxu0 0.0
    %1328 = vmatpush1.msra.mxu0 0.0
    %1329 = vmatprep.subr.mxu0 0.0
    %1330 = vmatpush1.msra.mxu0 0.0
    %1331 = vmatprep.subr.mxu0 0.0
    %1332 = vmatpush1.msra.mxu0 0.0
    %1333 = vmatprep.subr.mxu0 0.0
    %1334 = vmatpush1.msra.mxu0 0.0
    %1335 = vmatprep.subr.mxu0 0.0
    %1336 = vmatpush1.msra.mxu0 0.0
    %1337 = vmatprep.subr.mxu0 0.0
    %1338 = vmatpush1.msra.mxu0 0.0
    %1339 = vmatprep.subr.mxu0 0.0
    %1340 = vmatpush1.msra.mxu0 0.0
    %1341 = vmatprep.subr.mxu0 0.0
    %1342 = vmatpush1.msra.mxu0 0.0
    %1343 = vmatprep.subr.mxu0 0.0
    %1344 = vmatpush1.msra.mxu0 0.0
    %1345 = vmatprep.subr.mxu0 0.0
    %1346 = vmatpush1.msra.mxu0 0.0
    %1347 = vmatprep.subr.mxu0 0.0
    %1348 = vmatpush1.msra.mxu0 0.0
    %1349 = vmatprep.subr.mxu0 0.0
    %1350 = vmatpush1.msra.mxu0 0.0
    %1351 = vmatprep.subr.mxu0 0.0
    %1352 = vmatpush1.msra.mxu0 0.0
    %1353 = vmatprep.subr.mxu0 0.0
    %1354 = vmatpush1.msra.mxu0 0.0
    %1355 = vmatprep.subr.mxu0 0.0
    %1356 = vmatpush1.msra.mxu0 0.0
    %1357 = vmatprep.subr.mxu0 0.0
    %1358 = vmatpush1.msra.mxu0 0.0
    %1359 = vmatprep.subr.mxu0 0.0
    %1360 = vmatpush1.msra.mxu0 0.0
    %1361 = vmatprep.subr.mxu0 0.0
    %1362 = vmatpush1.msra.mxu0 0.0
    %1363 = vmatprep.subr.mxu0 0.0
    %1364 = vmatpush1.msra.mxu0 0.0
    %1365 = vmatprep.subr.mxu0 0.0
    %1366 = vmatpush1.msra.mxu0 0.0
    %1367 = vmatprep.subr.mxu0 0.0
    %1368 = vmatpush1.msra.mxu0 0.0
    %1369 = vmatprep.subr.mxu0 0.0
    %1370 = vmatpush1.msra.mxu0 0.0
    %1371 = vmatprep.subr.mxu0 0.0
    %1372 = vmatpush1.msra.mxu0 0.0
    %1373 = vmatprep.subr.mxu0 0.0
    %1374 = vmatpush1.msra.mxu0 0.0
    %1375 = vmatprep.subr.mxu0 0.0
    %1376 = vmatpush1.msra.mxu0 0.0
    %1377 = vmatprep.subr.mxu0 0.0
    %1378 = vmatpush1.msra.mxu0 0.0
    %1379 = vmatprep.subr.mxu0 0.0
    %1380 = vmatpush1.msra.mxu0 0.0
    %1381 = vmatprep.subr.mxu0 0.0
    %1382 = vmatpush1.msra.mxu0 0.0
    %1383 = vmatprep.mubr.f32.mxu0 0.0
    %1384 = vmatmul.mubr.f32.gmra.mrb[0].mxu0 %v696
    %v1385 = vpop.f32.mrb[0].mxu0
    %v1386 = vadd.f32 0.0, %v1385
    %v1387 = vpop.f32.mrb[0].mxu0
    %1388 = vdwg.mxu0
    %v1389 = vadd.f32 %v1314, %v1386
    %v1390 = vxor.u32 %v1389, 2147483648
    %v1391 = vmul.f32 %v1390, 1.442695
    %v1392 = vpow.pop %v1391
    %v1393 = vadd.f32 %v1392, 1.0
    %v1394 = vrcp.pop %v1393
    %v1395 = vmul.f32 1.0, %v1394
    %v1396 = vld [vmem:[%s33] sm:$0xff]
    %v1397 = vld [vmem:[%s33 + $0x8] sm:$0xff]
    %v1398 = vld [vmem:[%s33 + $0x10] sm:$0xff]
    %v1399 = vld [vmem:[%s33 + $0x18] sm:$0xff]
    %v1400 = vld [vmem:[%s39] sm:$0xff]
    %v1401 = vld [vmem:[%s39 + $0x8] sm:$0xff]
    %v1402 = vld [vmem:[%s39 + $0x10] sm:$0xff]
    %v1403 = vld [vmem:[%s39 + $0x18] sm:$0xff]
    %1404 = vmatprep.subr.mxu0 0.0
    %1405 = vmatpush1.msra.mxu0 %v1400
    %1406 = vmatprep.subr.mxu0 0.0
    %1407 = vmatpush1.msra.mxu0 %v1401
    %1408 = vmatprep.subr.mxu0 0.0
    %1409 = vmatpush1.msra.mxu0 %v1402
    %1410 = vmatprep.subr.mxu0 0.0
    %1411 = vmatpush1.msra.mxu0 %v1403
    %1412 = vmatprep.subr.mxu0 0.0
    %1413 = vmatpush1.msra.mxu0 0.0
    %1414 = vmatprep.subr.mxu0 0.0
    %1415 = vmatpush1.msra.mxu0 0.0
    %1416 = vmatprep.subr.mxu0 0.0
    %1417 = vmatpush1.msra.mxu0 0.0
    %1418 = vmatprep.subr.mxu0 0.0
    %1419 = vmatpush1.msra.mxu0 0.0
    %1420 = vmatprep.subr.mxu0 0.0
    %1421 = vmatpush1.msra.mxu0 0.0
    %1422 = vmatprep.subr.mxu0 0.0
    %1423 = vmatpush1.msra.mxu0 0.0
    %1424 = vmatprep.subr.mxu0 0.0
    %1425 = vmatpush1.msra.mxu0 0.0
    %1426 = vmatprep.subr.mxu0 0.0
    %1427 = vmatpush1.msra.mxu0 0.0
    %1428 = vmatprep.subr.mxu0 0.0
    %1429 = vmatpush1.msra.mxu0 0.0
    %1430 = vmatprep.subr.mxu0 0.0
    %1431 = vmatpush1.msra.mxu0 0.0
    %1432 = vmatprep.subr.mxu0 0.0
    %1433 = vmatpush1.msra.mxu0 0.0
    %1434 = vmatprep.subr.mxu0 0.0
    %1435 = vmatpush1.msra.mxu0 0.0
    %1436 = vmatprep.subr.mxu0 0.0
    %1437 = vmatpush1.msra.mxu0 0.0
    %1438 = vmatprep.subr.mxu0 0.0
    %1439 = vmatpush1.msra.mxu0 0.0
    %1440 = vmatprep.subr.mxu0 0.0
    %1441 = vmatpush1.msra.mxu0 0.0
    %1442 = vmatprep.subr.mxu0 0.0
    %1443 = vmatpush1.msra.mxu0 0.0
    %1444 = vmatprep.subr.mxu0 0.0
    %1445 = vmatpush1.msra.mxu0 0.0
    %1446 = vmatprep.subr.mxu0 0.0
    %1447 = vmatpush1.msra.mxu0 0.0
    %1448 = vmatprep.subr.mxu0 0.0
    %1449 = vmatpush1.msra.mxu0 0.0
    %1450 = vmatprep.subr.mxu0 0.0
    %1451 = vmatpush1.msra.mxu0 0.0
    %1452 = vmatprep.subr.mxu0 0.0
    %1453 = vmatpush1.msra.mxu0 0.0
    %1454 = vmatprep.subr.mxu0 0.0
    %1455 = vmatpush1.msra.mxu0 0.0
    %1456 = vmatprep.subr.mxu0 0.0
    %1457 = vmatpush1.msra.mxu0 0.0
    %1458 = vmatprep.subr.mxu0 0.0
    %1459 = vmatpush1.msra.mxu0 0.0
    %1460 = vmatprep.subr.mxu0 0.0
    %1461 = vmatpush1.msra.mxu0 0.0
    %1462 = vmatprep.subr.mxu0 0.0
    %1463 = vmatpush1.msra.mxu0 0.0
    %1464 = vmatprep.subr.mxu0 0.0
    %1465 = vmatpush1.msra.mxu0 0.0
    %1466 = vmatprep.subr.mxu0 0.0
    %1467 = vmatpush1.msra.mxu0 0.0
    %1468 = vmatprep.mubr.f32.mxu0 0.0
    %1469 = vmatmul.mubr.f32.gmra.mrb[0].mxu0 %v925
    %v1470 = vpop.f32.mrb[0].mxu0
    %v1471 = vadd.f32 0.0, %v1470
    %v1472 = vpop.f32.mrb[0].mxu0
    %1473 = vdwg.mxu0
    %1474 = vmatprep.subr.mxu0 0.0
    %1475 = vmatpush1.msra.mxu0 %v1396
    %1476 = vmatprep.subr.mxu0 0.0
    %1477 = vmatpush1.msra.mxu0 %v1397
    %1478 = vmatprep.subr.mxu0 0.0
    %1479 = vmatpush1.msra.mxu0 %v1398
    %1480 = vmatprep.subr.mxu0 0.0
    %1481 = vmatpush1.msra.mxu0 %v1399
    %1482 = vmatprep.subr.mxu0 0.0
    %1483 = vmatpush1.msra.mxu0 0.0
    %1484 = vmatprep.subr.mxu0 0.0
    %1485 = vmatpush1.msra.mxu0 0.0
    %1486 = vmatprep.subr.mxu0 0.0
    %1487 = vmatpush1.msra.mxu0 0.0
    %1488 = vmatprep.subr.mxu0 0.0
    %1489 = vmatpush1.msra.mxu0 0.0
    %1490 = vmatprep.subr.mxu0 0.0
    %1491 = vmatpush1.msra.mxu0 0.0
    %1492 = vmatprep.subr.mxu0 0.0
    %1493 = vmatpush1.msra.mxu0 0.0
    %1494 = vmatprep.subr.mxu0 0.0
    %1495 = vmatpush1.msra.mxu0 0.0
    %1496 = vmatprep.subr.mxu0 0.0
    %1497 = vmatpush1.msra.mxu0 0.0
    %1498 = vmatprep.subr.mxu0 0.0
    %1499 = vmatpush1.msra.mxu0 0.0
    %1500 = vmatprep.subr.mxu0 0.0
    %1501 = vmatpush1.msra.mxu0 0.0
    %1502 = vmatprep.subr.mxu0 0.0
    %1503 = vmatpush1.msra.mxu0 0.0
    %1504 = vmatprep.subr.mxu0 0.0
    %1505 = vmatpush1.msra.mxu0 0.0
    %1506 = vmatprep.subr.mxu0 0.0
    %1507 = vmatpush1.msra.mxu0 0.0
    %1508 = vmatprep.subr.mxu0 0.0
    %1509 = vmatpush1.msra.mxu0 0.0
    %1510 = vmatprep.subr.mxu0 0.0
    %1511 = vmatpush1.msra.mxu0 0.0
    %1512 = vmatprep.subr.mxu0 0.0
    %1513 = vmatpush1.msra.mxu0 0.0
    %1514 = vmatprep.subr.mxu0 0.0
    %1515 = vmatpush1.msra.mxu0 0.0
    %1516 = vmatprep.subr.mxu0 0.0
    %1517 = vmatpush1.msra.mxu0 0.0
    %1518 = vmatprep.subr.mxu0 0.0
    %1519 = vmatpush1.msra.mxu0 0.0
    %1520 = vmatprep.subr.mxu0 0.0
    %1521 = vmatpush1.msra.mxu0 0.0
    %1522 = vmatprep.subr.mxu0 0.0
    %1523 = vmatpush1.msra.mxu0 0.0
    %1524 = vmatprep.subr.mxu0 0.0
    %1525 = vmatpush1.msra.mxu0 0.0
    %1526 = vmatprep.subr.mxu0 0.0
    %1527 = vmatpush1.msra.mxu0 0.0
    %1528 = vmatprep.subr.mxu0 0.0
    %1529 = vmatpush1.msra.mxu0 0.0
    %1530 = vmatprep.subr.mxu0 0.0
    %1531 = vmatpush1.msra.mxu0 0.0
    %1532 = vmatprep.subr.mxu0 0.0
    %1533 = vmatpush1.msra.mxu0 0.0
    %1534 = vmatprep.subr.mxu0 0.0
    %1535 = vmatpush1.msra.mxu0 0.0
    %1536 = vmatprep.subr.mxu0 0.0
    %1537 = vmatpush1.msra.mxu0 0.0
    %1538 = vmatprep.mubr.f32.mxu0 0.0
    %1539 = vmatmul.mubr.f32.gmra.mrb[0].mxu0 %v998
    %v1540 = vpop.f32.mrb[0].mxu0
    %v1541 = vadd.f32 %v1471, %v1540
    %v1542 = vpop.f32.mrb[0].mxu0
    %1543 = vdwg.mxu0
    %v1544 = vld [vmem:[#allocation13] sm:$0x1]
    %v1546 = vlaneseq
    %v1547 = vshrl.u32 %v1546, 7
    %v1548 = vsub.s32 0, %v1547
    %v1549 = vrot.slane %v1544, %v1548
    %v1551 = vadd.f32 %v1541, %v1549
    %v1552 = vld [vmem:[#allocation8] sm:$0xff]
    %v1553 = vld [vmem:[#allocation8 + $0x8] sm:$0xff]
    %v1554 = vld [vmem:[#allocation8 + $0x10] sm:$0xff]
    %v1555 = vld [vmem:[#allocation8 + $0x18] sm:$0xff]
    %1556 = vmatprep.subr.mxu0 0.0
    %1557 = vmatpush1.msra.mxu0 %v1552
    %1558 = vmatprep.subr.mxu0 0.0
    %1559 = vmatpush1.msra.mxu0 %v1553
    %1560 = vmatprep.subr.mxu0 0.0
    %1561 = vmatpush1.msra.mxu0 %v1554
    %1562 = vmatprep.subr.mxu0 0.0
    %1563 = vmatpush1.msra.mxu0 %v1555
    %1564 = vmatprep.subr.mxu0 0.0
    %1565 = vmatpush1.msra.mxu0 0.0
    %1566 = vmatprep.subr.mxu0 0.0
    %1567 = vmatpush1.msra.mxu0 0.0
    %1568 = vmatprep.subr.mxu0 0.0
    %1569 = vmatpush1.msra.mxu0 0.0
    %1570 = vmatprep.subr.mxu0 0.0
    %1571 = vmatpush1.msra.mxu0 0.0
    %1572 = vmatprep.subr.mxu0 0.0
    %1573 = vmatpush1.msra.mxu0 0.0
    %1574 = vmatprep.subr.mxu0 0.0
    %1575 = vmatpush1.msra.mxu0 0.0
    %1576 = vmatprep.subr.mxu0 0.0
    %1577 = vmatpush1.msra.mxu0 0.0
    %1578 = vmatprep.subr.mxu0 0.0
    %1579 = vmatpush1.msra.mxu0 0.0
    %1580 = vmatprep.subr.mxu0 0.0
    %1581 = vmatpush1.msra.mxu0 0.0
    %1582 = vmatprep.subr.mxu0 0.0
    %1583 = vmatpush1.msra.mxu0 0.0
    %1584 = vmatprep.subr.mxu0 0.0
    %1585 = vmatpush1.msra.mxu0 0.0
    %1586 = vmatprep.subr.mxu0 0.0
    %1587 = vmatpush1.msra.mxu0 0.0
    %1588 = vmatprep.subr.mxu0 0.0
    %1589 = vmatpush1.msra.mxu0 0.0
    %1590 = vmatprep.subr.mxu0 0.0
    %1591 = vmatpush1.msra.mxu0 0.0
    %1592 = vmatprep.subr.mxu0 0.0
    %1593 = vmatpush1.msra.mxu0 0.0
    %1594 = vmatprep.subr.mxu0 0.0
    %1595 = vmatpush1.msra.mxu0 0.0
    %1596 = vmatprep.subr.mxu0 0.0
    %1597 = vmatpush1.msra.mxu0 0.0
    %1598 = vmatprep.subr.mxu0 0.0
    %1599 = vmatpush1.msra.mxu0 0.0
    %1600 = vmatprep.subr.mxu0 0.0
    %1601 = vmatpush1.msra.mxu0 0.0
    %1602 = vmatprep.subr.mxu0 0.0
    %1603 = vmatpush1.msra.mxu0 0.0
    %1604 = vmatprep.subr.mxu0 0.0
    %1605 = vmatpush1.msra.mxu0 0.0
    %1606 = vmatprep.subr.mxu0 0.0
    %1607 = vmatpush1.msra.mxu0 0.0
    %1608 = vmatprep.subr.mxu0 0.0
    %1609 = vmatpush1.msra.mxu0 0.0
    %1610 = vmatprep.subr.mxu0 0.0
    %1611 = vmatpush1.msra.mxu0 0.0
    %1612 = vmatprep.subr.mxu0 0.0
    %1613 = vmatpush1.msra.mxu0 0.0
    %1614 = vmatprep.subr.mxu0 0.0
    %1615 = vmatpush1.msra.mxu0 0.0
    %1616 = vmatprep.subr.mxu0 0.0
    %1617 = vmatpush1.msra.mxu0 0.0
    %1618 = vmatprep.subr.mxu0 0.0
    %1619 = vmatpush1.msra.mxu0 0.0
    %1620 = vmatprep.mubr.f32.mxu0 0.0
    %1621 = vmatmul.mubr.f32.gmra.mrb[0].mxu0 %v696
    %v1622 = vpop.f32.mrb[0].mxu0
    %v1623 = vadd.f32 0.0, %v1622
    %v1624 = vpop.f32.mrb[0].mxu0
    %1625 = vdwg.mxu0
    %v1626 = vmul.f32 %v1158, %v1623
    %v1627 = vadd.f32 %v1551, %v1626
    %v1628 = vtanh.pop %v1627
    %v1629 = vsub.f32 1.0, %v1395
    %v1630 = vmul.f32 %v1629, %v1628
    %v1631 = vmul.f32 %v1395, 0.0
    %v1632 = vadd.f32 %v1630, %v1631
    %v1633 = vld [vmem:[%s53] sm:$0xff]
    %v1634 = vld [vmem:[%s53 + $0x8] sm:$0xff]
    %v1635 = vld [vmem:[%s53 + $0x10] sm:$0xff]
    %v1636 = vld [vmem:[%s53 + $0x18] sm:$0xff]
    %v1637 = vld [vmem:[#allocation14] sm:$0xff]
    %v1638 = vld [vmem:[#allocation14 + $0x8] sm:$0xff]
    %v1639 = vld [vmem:[#allocation14 + $0x10] sm:$0xff]
    %v1640 = vld [vmem:[#allocation14 + $0x18] sm:$0xff]
    %1641 = vmatprep.subr.mxu0 0.0
    %1642 = vmatpush1.msra.mxu0 %v1637
    %1643 = vmatprep.subr.mxu0 0.0
    %1644 = vmatpush1.msra.mxu0 %v1638
    %1645 = vmatprep.subr.mxu0 0.0
    %1646 = vmatpush1.msra.mxu0 %v1639
    %1647 = vmatprep.subr.mxu0 0.0
    %1648 = vmatpush1.msra.mxu0 %v1640
    %1649 = vmatprep.subr.mxu0 0.0
    %1650 = vmatpush1.msra.mxu0 0.0
    %1651 = vmatprep.subr.mxu0 0.0
    %1652 = vmatpush1.msra.mxu0 0.0
    %1653 = vmatprep.subr.mxu0 0.0
    %1654 = vmatpush1.msra.mxu0 0.0
    %1655 = vmatprep.subr.mxu0 0.0
    %1656 = vmatpush1.msra.mxu0 0.0
    %1657 = vmatprep.subr.mxu0 0.0
    %1658 = vmatpush1.msra.mxu0 0.0
    %1659 = vmatprep.subr.mxu0 0.0
    %1660 = vmatpush1.msra.mxu0 0.0
    %1661 = vmatprep.subr.mxu0 0.0
    %1662 = vmatpush1.msra.mxu0 0.0
    %1663 = vmatprep.subr.mxu0 0.0
    %1664 = vmatpush1.msra.mxu0 0.0
    %1665 = vmatprep.subr.mxu0 0.0
    %1666 = vmatpush1.msra.mxu0 0.0
    %1667 = vmatprep.subr.mxu0 0.0
    %1668 = vmatpush1.msra.mxu0 0.0
    %1669 = vmatprep.subr.mxu0 0.0
    %1670 = vmatpush1.msra.mxu0 0.0
    %1671 = vmatprep.subr.mxu0 0.0
    %1672 = vmatpush1.msra.mxu0 0.0
    %1673 = vmatprep.subr.mxu0 0.0
    %1674 = vmatpush1.msra.mxu0 0.0
    %1675 = vmatprep.subr.mxu0 0.0
    %1676 = vmatpush1.msra.mxu0 0.0
    %1677 = vmatprep.subr.mxu0 0.0
    %1678 = vmatpush1.msra.mxu0 0.0
    %1679 = vmatprep.subr.mxu0 0.0
    %1680 = vmatpush1.msra.mxu0 0.0
    %1681 = vmatprep.subr.mxu0 0.0
    %1682 = vmatpush1.msra.mxu0 0.0
    %1683 = vmatprep.subr.mxu0 0.0
    %1684 = vmatpush1.msra.mxu0 0.0
    %1685 = vmatprep.subr.mxu0 0.0
    %1686 = vmatpush1.msra.mxu0 0.0
    %1687 = vmatprep.subr.mxu0 0.0
    %1688 = vmatpush1.msra.mxu0 0.0
    %1689 = vmatprep.subr.mxu0 0.0
    %1690 = vmatpush1.msra.mxu0 0.0
    %1691 = vmatprep.subr.mxu0 0.0
    %1692 = vmatpush1.msra.mxu0 0.0
    %1693 = vmatprep.subr.mxu0 0.0
    %1694 = vmatpush1.msra.mxu0 0.0
    %1695 = vmatprep.subr.mxu0 0.0
    %1696 = vmatpush1.msra.mxu0 0.0
    %1697 = vmatprep.subr.mxu0 0.0
    %1698 = vmatpush1.msra.mxu0 0.0
    %1699 = vmatprep.subr.mxu0 0.0
    %1700 = vmatpush1.msra.mxu0 0.0
    %1701 = vmatprep.subr.mxu0 0.0
    %1702 = vmatpush1.msra.mxu0 0.0
    %1703 = vmatprep.subr.mxu0 0.0
    %1704 = vmatpush1.msra.mxu0 0.0
    %1705 = vmatprep.mubr.f32.mxu0 0.0
    %1706 = vmatmul.mubr.f32.gmra.mrb[0].mxu0 %v925
    %v1707 = vpop.f32.mrb[0].mxu0
    %v1708 = vadd.f32 0.0, %v1707
    %v1709 = vpop.f32.mrb[0].mxu0
    %1710 = vdwg.mxu0
    %v1712 = vsel %vm410, %v1632, 0
    %1714 = vmatprep.subr.mxu0 0.0
    %1715 = vmatpush1.msra.mxu0 %v1633
    %1716 = vmatprep.subr.mxu0 0.0
    %1717 = vmatpush1.msra.mxu0 %v1634
    %1718 = vmatprep.subr.mxu0 0.0
    %1719 = vmatpush1.msra.mxu0 %v1635
    %1720 = vmatprep.subr.mxu0 0.0
    %1721 = vmatpush1.msra.mxu0 %v1636
    %1722 = vmatprep.subr.mxu0 0.0
    %1723 = vmatpush1.msra.mxu0 0.0
    %1724 = vmatprep.subr.mxu0 0.0
    %1725 = vmatpush1.msra.mxu0 0.0
    %1726 = vmatprep.subr.mxu0 0.0
    %1727 = vmatpush1.msra.mxu0 0.0
    %1728 = vmatprep.subr.mxu0 0.0
    %1729 = vmatpush1.msra.mxu0 0.0
    %1730 = vmatprep.subr.mxu0 0.0
    %1731 = vmatpush1.msra.mxu0 0.0
    %1732 = vmatprep.subr.mxu0 0.0
    %1733 = vmatpush1.msra.mxu0 0.0
    %1734 = vmatprep.subr.mxu0 0.0
    %1735 = vmatpush1.msra.mxu0 0.0
    %1736 = vmatprep.subr.mxu0 0.0
    %1737 = vmatpush1.msra.mxu0 0.0
    %1738 = vmatprep.subr.mxu0 0.0
    %1739 = vmatpush1.msra.mxu0 0.0
    %1740 = vmatprep.subr.mxu0 0.0
    %1741 = vmatpush1.msra.mxu0 0.0
    %1742 = vmatprep.subr.mxu0 0.0
    %1743 = vmatpush1.msra.mxu0 0.0
    %1744 = vmatprep.subr.mxu0 0.0
    %1745 = vmatpush1.msra.mxu0 0.0
    %1746 = vmatprep.subr.mxu0 0.0
    %1747 = vmatpush1.msra.mxu0 0.0
    %1748 = vmatprep.subr.mxu0 0.0
    %1749 = vmatpush1.msra.mxu0 0.0
    %1750 = vmatprep.subr.mxu0 0.0
    %1751 = vmatpush1.msra.mxu0 0.0
    %1752 = vmatprep.subr.mxu0 0.0
    %1753 = vmatpush1.msra.mxu0 0.0
    %1754 = vmatprep.subr.mxu0 0.0
    %1755 = vmatpush1.msra.mxu0 0.0
    %1756 = vmatprep.subr.mxu0 0.0
    %1757 = vmatpush1.msra.mxu0 0.0
    %1758 = vmatprep.subr.mxu0 0.0
    %1759 = vmatpush1.msra.mxu0 0.0
    %1760 = vmatprep.subr.mxu0 0.0
    %1761 = vmatpush1.msra.mxu0 0.0
    %1762 = vmatprep.subr.mxu0 0.0
    %1763 = vmatpush1.msra.mxu0 0.0
    %1764 = vmatprep.subr.mxu0 0.0
    %1765 = vmatpush1.msra.mxu0 0.0
    %1766 = vmatprep.subr.mxu0 0.0
    %1767 = vmatpush1.msra.mxu0 0.0
    %1768 = vmatprep.subr.mxu0 0.0
    %1769 = vmatpush1.msra.mxu0 0.0
    %1770 = vmatprep.subr.mxu0 0.0
    %1771 = vmatpush1.msra.mxu0 0.0
    %1772 = vmatprep.subr.mxu0 0.0
    %1773 = vmatpush1.msra.mxu0 0.0
    %1774 = vmatprep.subr.mxu0 0.0
    %1775 = vmatpush1.msra.mxu0 0.0
    %1776 = vmatprep.subr.mxu0 0.0
    %1777 = vmatpush1.msra.mxu0 0.0
    %1778 = vmatprep.mubr.f32.mxu0 0.0
    %1779 = vmatmul.mubr.f32.gmra.mrb[0].mxu0 %v1712
    %v1780 = vpop.f32.mrb[0].mxu0
    %v1781 = vadd.f32 %v1708, %v1780
    %v1782 = vpop.f32.mrb[0].mxu0
    %1783 = vdwg.mxu0
    %v1784 = vld [vmem:[#allocation16] sm:$0xff]
    %v1785 = vld [vmem:[#allocation16 + $0x8] sm:$0xff]
    %v1786 = vld [vmem:[#allocation16 + $0x10] sm:$0xff]
    %v1787 = vld [vmem:[#allocation16 + $0x18] sm:$0xff]
    %1788 = vmatprep.subr.mxu0 0.0
    %1789 = vmatpush1.msra.mxu0 %v1784
    %1790 = vmatprep.subr.mxu0 0.0
    %1791 = vmatpush1.msra.mxu0 %v1785
    %1792 = vmatprep.subr.mxu0 0.0
    %1793 = vmatpush1.msra.mxu0 %v1786
    %1794 = vmatprep.subr.mxu0 0.0
    %1795 = vmatpush1.msra.mxu0 %v1787
    %1796 = vmatprep.subr.mxu0 0.0
    %1797 = vmatpush1.msra.mxu0 0.0
    %1798 = vmatprep.subr.mxu0 0.0
    %1799 = vmatpush1.msra.mxu0 0.0
    %1800 = vmatprep.subr.mxu0 0.0
    %1801 = vmatpush1.msra.mxu0 0.0
    %1802 = vmatprep.subr.mxu0 0.0
    %1803 = vmatpush1.msra.mxu0 0.0
    %1804 = vmatprep.subr.mxu0 0.0
    %1805 = vmatpush1.msra.mxu0 0.0
    %1806 = vmatprep.subr.mxu0 0.0
    %1807 = vmatpush1.msra.mxu0 0.0
    %1808 = vmatprep.subr.mxu0 0.0
    %1809 = vmatpush1.msra.mxu0 0.0
    %1810 = vmatprep.subr.mxu0 0.0
    %1811 = vmatpush1.msra.mxu0 0.0
    %1812 = vmatprep.subr.mxu0 0.0
    %1813 = vmatpush1.msra.mxu0 0.0
    %1814 = vmatprep.subr.mxu0 0.0
    %1815 = vmatpush1.msra.mxu0 0.0
    %1816 = vmatprep.subr.mxu0 0.0
    %1817 = vmatpush1.msra.mxu0 0.0
    %1818 = vmatprep.subr.mxu0 0.0
    %1819 = vmatpush1.msra.mxu0 0.0
    %1820 = vmatprep.subr.mxu0 0.0
    %1821 = vmatpush1.msra.mxu0 0.0
    %1822 = vmatprep.subr.mxu0 0.0
    %1823 = vmatpush1.msra.mxu0 0.0
    %1824 = vmatprep.subr.mxu0 0.0
    %1825 = vmatpush1.msra.mxu0 0.0
    %1826 = vmatprep.subr.mxu0 0.0
    %1827 = vmatpush1.msra.mxu0 0.0
    %1828 = vmatprep.subr.mxu0 0.0
    %1829 = vmatpush1.msra.mxu0 0.0
    %1830 = vmatprep.subr.mxu0 0.0
    %1831 = vmatpush1.msra.mxu0 0.0
    %1832 = vmatprep.subr.mxu0 0.0
    %1833 = vmatpush1.msra.mxu0 0.0
    %1834 = vmatprep.subr.mxu0 0.0
    %1835 = vmatpush1.msra.mxu0 0.0
    %1836 = vmatprep.subr.mxu0 0.0
    %1837 = vmatpush1.msra.mxu0 0.0
    %1838 = vmatprep.subr.mxu0 0.0
    %1839 = vmatpush1.msra.mxu0 0.0
    %1840 = vmatprep.subr.mxu0 0.0
    %1841 = vmatpush1.msra.mxu0 0.0
    %1842 = vmatprep.subr.mxu0 0.0
    %1843 = vmatpush1.msra.mxu0 0.0
    %1844 = vmatprep.subr.mxu0 0.0
    %1845 = vmatpush1.msra.mxu0 0.0
    %1846 = vmatprep.subr.mxu0 0.0
    %1847 = vmatpush1.msra.mxu0 0.0
    %1848 = vmatprep.subr.mxu0 0.0
    %1849 = vmatpush1.msra.mxu0 0.0
    %1850 = vmatprep.subr.mxu0 0.0
    %1851 = vmatpush1.msra.mxu0 0.0
    %1852 = vmatprep.mubr.f32.mxu0 0.0
    %1853 = vmatmul.mubr.f32.gmra.mrb[0].mxu0 %v998
    %v1854 = vpop.f32.mrb[0].mxu0
    %v1855 = vadd.f32 0.0, %v1854
    %v1856 = vpop.f32.mrb[0].mxu0
    %1857 = vdwg.mxu0
    %v1858 = vadd.f32 %v1781, %v1855
    %v1859 = vld [vmem:[#allocation17] sm:$0x1]
    %v1861 = vlaneseq
    %v1862 = vshrl.u32 %v1861, 7
    %v1863 = vsub.s32 0, %v1862
    %v1864 = vrot.slane %v1859, %v1863
    %v1866 = vadd.f32 %v1858, %v1864
    %s1867 = scalar_lea.vmem [#allocation19], 2
    %1868 = vst [vmem:[%s1867] sm:$0x3] %v1866
    %vm1869 = vcmask 517120
    %v1870 = vsel %vm1869, %v1866, -inf
    %1871 = vmax.xlane.f32.xlu0 %v1870
    %v1872 = vpop.xlane.xlu0 %1871
    %vm1873 = vcmp.eq.f32.partialorder %v1866, %v1872
    %v1874 = vsel %vm1873, %v254, 64
    %v1875 = vsel %vm1869, %v1874, 2147483647
    %v1876 = vand.u32 %v1875, 65535
    %v1877 = vshra.s32 %v1875, 16
    %v1878 = vcvt.s32.f32 %v1876
    %v1879 = vcvt.s32.f32 %v1877
    %1880 = vmin.xlane.f32.xlu0 %v1879
    %v1881 = vpop.xlane.xlu0 %1880
    %vm1882 = vcmp.eq.f32.partialorder %v1879, %v1881
    %v1883 = vsel %vm1882, %v1878, inf
    %1884 = vmin.xlane.f32.xlu0 %v1883
    %v1885 = vpop.xlane.xlu0 %1884
    %v1886 = vcvt.f32.s32 %v1885
    %v1887 = vcvt.f32.s32 %v1881
    %v1888 = vshll.u32 %v1887, 16
    %v1889 = vadd.s32 %v1888, %v1886
    %vm1890 = vcmp.eq.s32.totalorder %v254, %v1889
    %v1891 = vsel %vm1890, 1, 0
    %v1892 = vcvt.s32.f32 %v1891
    %v1894 = vsel %vm617, %v1892, 0
    %1896 = vmatprep.subr.mxu0 0.0
    %1897 = vmatpush1.msra.mxu0 %v600
    %1898 = vmatprep.subr.mxu0 0.0
    %1899 = vmatpush1.msra.mxu0 %v601
    %1900 = vmatprep.subr.mxu0 0.0
    %1901 = vmatpush1.msra.mxu0 %v602
    %1902 = vmatprep.subr.mxu0 0.0
    %1903 = vmatpush1.msra.mxu0 %v603
    %1904 = vmatprep.subr.mxu0 0.0
    %1905 = vmatpush1.msra.mxu0 %v604
    %1906 = vmatprep.subr.mxu0 0.0
    %1907 = vmatpush1.msra.mxu0 %v605
    %1908 = vmatprep.subr.mxu0 0.0
    %1909 = vmatpush1.msra.mxu0 %v606
    %1910 = vmatprep.subr.mxu0 0.0
    %1911 = vmatpush1.msra.mxu0 %v607
    %1912 = vmatprep.subr.mxu0 0.0
    %1913 = vmatpush1.msra.mxu0 0.0
    %1914 = vmatprep.subr.mxu0 0.0
    %1915 = vmatpush1.msra.mxu0 0.0
    %1916 = vmatprep.subr.mxu0 0.0
    %1917 = vmatpush1.msra.mxu0 0.0
    %1918 = vmatprep.subr.mxu0 0.0
    %1919 = vmatpush1.msra.mxu0 0.0
    %1920 = vmatprep.subr.mxu0 0.0
    %1921 = vmatpush1.msra.mxu0 0.0
    %1922 = vmatprep.subr.mxu0 0.0
    %1923 = vmatpush1.msra.mxu0 0.0
    %1924 = vmatprep.subr.mxu0 0.0
    %1925 = vmatpush1.msra.mxu0 0.0
    %1926 = vmatprep.subr.mxu0 0.0
    %1927 = vmatpush1.msra.mxu0 0.0
    %1928 = vmatprep.subr.mxu0 0.0
    %1929 = vmatpush1.msra.mxu0 0.0
    %1930 = vmatprep.subr.mxu0 0.0
    %1931 = vmatpush1.msra.mxu0 0.0
    %1932 = vmatprep.subr.mxu0 0.0
    %1933 = vmatpush1.msra.mxu0 0.0
    %1934 = vmatprep.subr.mxu0 0.0
    %1935 = vmatpush1.msra.mxu0 0.0
    %1936 = vmatprep.subr.mxu0 0.0
    %1937 = vmatpush1.msra.mxu0 0.0
    %1938 = vmatprep.subr.mxu0 0.0
    %1939 = vmatpush1.msra.mxu0 0.0
    %1940 = vmatprep.subr.mxu0 0.0
    %1941 = vmatpush1.msra.mxu0 0.0
    %1942 = vmatprep.subr.mxu0 0.0
    %1943 = vmatpush1.msra.mxu0 0.0
    %1944 = vmatprep.subr.mxu0 0.0
    %1945 = vmatpush1.msra.mxu0 0.0
    %1946 = vmatprep.subr.mxu0 0.0
    %1947 = vmatpush1.msra.mxu0 0.0
    %1948 = vmatprep.subr.mxu0 0.0
    %1949 = vmatpush1.msra.mxu0 0.0
    %1950 = vmatprep.subr.mxu0 0.0
    %1951 = vmatpush1.msra.mxu0 0.0
    %1952 = vmatprep.subr.mxu0 0.0
    %1953 = vmatpush1.msra.mxu0 0.0
    %1954 = vmatprep.subr.mxu0 0.0
    %1955 = vmatpush1.msra.mxu0 0.0
    %1956 = vmatprep.subr.mxu0 0.0
    %1957 = vmatpush1.msra.mxu0 0.0
    %1958 = vmatprep.subr.mxu0 0.0
    %1959 = vmatpush1.msra.mxu0 0.0
    %1960 = vmatprep.mubr.f32.mxu0 0.0
    %1961 = vmatmul.mubr.f32.gmra.mrb[0].mxu0 %v1894
    %v1962 = vpop.f32.mrb[0].mxu0
    %v1963 = vadd.f32 0.0, %v1962
    %v1964 = vpop.f32.mrb[0].mxu0
    %1965 = vdwg.mxu0
    %s1966 = scalar_lea.vmem %s7, 2
    %v1967 = vld [vmem:[%s1966] sm:$0x3]
    %1968 = vset.pattern.permute.xlu0 0
    %1969 = vperm.xlu0 %1968, %v1967
    %v1970 = vpop.permute.xlu0 %1969
    %vm1971 = vcmp.eq.s32.totalorder %v254, %v1970
    %v1972 = vsel %vm1971, 1, 0
    %v1973 = vcvt.s32.f32 %v1972
    %v1975 = vsel %vm617, %v1973, 0
    %1977 = vmatprep.subr.mxu0 0.0
    %1978 = vmatpush1.msra.mxu0 %v600
    %1979 = vmatprep.subr.mxu0 0.0
    %1980 = vmatpush1.msra.mxu0 %v601
    %1981 = vmatprep.subr.mxu0 0.0
    %1982 = vmatpush1.msra.mxu0 %v602
    %1983 = vmatprep.subr.mxu0 0.0
    %1984 = vmatpush1.msra.mxu0 %v603
    %1985 = vmatprep.subr.mxu0 0.0
    %1986 = vmatpush1.msra.mxu0 %v604
    %1987 = vmatprep.subr.mxu0 0.0
    %1988 = vmatpush1.msra.mxu0 %v605
    %1989 = vmatprep.subr.mxu0 0.0
    %1990 = vmatpush1.msra.mxu0 %v606
    %1991 = vmatprep.subr.mxu0 0.0
    %1992 = vmatpush1.msra.mxu0 %v607
    %1993 = vmatprep.subr.mxu0 0.0
    %1994 = vmatpush1.msra.mxu0 0.0
    %1995 = vmatprep.subr.mxu0 0.0
    %1996 = vmatpush1.msra.mxu0 0.0
    %1997 = vmatprep.subr.mxu0 0.0
    %1998 = vmatpush1.msra.mxu0 0.0
    %1999 = vmatprep.subr.mxu0 0.0
    %2000 = vmatpush1.msra.mxu0 0.0
    %2001 = vmatprep.subr.mxu0 0.0
    %2002 = vmatpush1.msra.mxu0 0.0
    %2003 = vmatprep.subr.mxu0 0.0
    %2004 = vmatpush1.msra.mxu0 0.0
    %2005 = vmatprep.subr.mxu0 0.0
    %2006 = vmatpush1.msra.mxu0 0.0
    %2007 = vmatprep.subr.mxu0 0.0
    %2008 = vmatpush1.msra.mxu0 0.0
    %2009 = vmatprep.subr.mxu0 0.0
    %2010 = vmatpush1.msra.mxu0 0.0
    %2011 = vmatprep.subr.mxu0 0.0
    %2012 = vmatpush1.msra.mxu0 0.0
    %2013 = vmatprep.subr.mxu0 0.0
    %2014 = vmatpush1.msra.mxu0 0.0
    %2015 = vmatprep.subr.mxu0 0.0
    %2016 = vmatpush1.msra.mxu0 0.0
    %2017 = vmatprep.subr.mxu0 0.0
    %2018 = vmatpush1.msra.mxu0 0.0
    %2019 = vmatprep.subr.mxu0 0.0
    %2020 = vmatpush1.msra.mxu0 0.0
    %2021 = vmatprep.subr.mxu0 0.0
    %2022 = vmatpush1.msra.mxu0 0.0
    %2023 = vmatprep.subr.mxu0 0.0
    %2024 = vmatpush1.msra.mxu0 0.0
    %2025 = vmatprep.subr.mxu0 0.0
    %2026 = vmatpush1.msra.mxu0 0.0
    %2027 = vmatprep.subr.mxu0 0.0
    %2028 = vmatpush1.msra.mxu0 0.0
    %2029 = vmatprep.subr.mxu0 0.0
    %2030 = vmatpush1.msra.mxu0 0.0
    %2031 = vmatprep.subr.mxu0 0.0
    %2032 = vmatpush1.msra.mxu0 0.0
    %2033 = vmatprep.subr.mxu0 0.0
    %2034 = vmatpush1.msra.mxu0 0.0
    %2035 = vmatprep.subr.mxu0 0.0
    %2036 = vmatpush1.msra.mxu0 0.0
    %2037 = vmatprep.subr.mxu0 0.0
    %2038 = vmatpush1.msra.mxu0 0.0
    %2039 = vmatprep.subr.mxu0 0.0
    %2040 = vmatpush1.msra.mxu0 0.0
    %2041 = vmatprep.mubr.f32.mxu0 0.0
    %2042 = vmatmul.mubr.f32.gmra.mrb[0].mxu0 %v1975
    %v2043 = vpop.f32.mrb[0].mxu0
    %v2044 = vadd.f32 0.0, %v2043
    %v2045 = vpop.f32.mrb[0].mxu0
    %2046 = vdwg.mxu0
    %s2047 = scalar_lea.vmem %s9, 2
    %v2048 = vld [vmem:[%s2047] sm:$0x3]
    %2050 = vset.pattern.permute.xlu0 0
    %2051 = vperm.xlu0 %2050, %v2048
    %v2052 = vpop.permute.xlu0 %2051
    %v2054 = vmul.f32 %v2052, %v2044
    %v2055 = vsub.f32 1.0, %v2048
    %2057 = vset.pattern.permute.xlu0 0
    %2058 = vperm.xlu0 %2057, %v2055
    %v2059 = vpop.permute.xlu0 %2058
    %v2061 = vmul.f32 %v2059, %v1963
    %v2062 = vadd.f32 %v2054, %v2061
    %v2063 = vld [vmem:[%s23] sm:$0xff]
    %v2064 = vld [vmem:[%s23 + $0x8] sm:$0xff]
    %v2065 = vld [vmem:[%s23 + $0x10] sm:$0xff]
    %v2066 = vld [vmem:[%s23 + $0x18] sm:$0xff]
    %2067 = vmatprep.subr.mxu0 0.0
    %2068 = vmatpush1.msra.mxu0 %v2063
    %2069 = vmatprep.subr.mxu0 0.0
    %2070 = vmatpush1.msra.mxu0 %v2064
    %2071 = vmatprep.subr.mxu0 0.0
    %2072 = vmatpush1.msra.mxu0 %v2065
    %2073 = vmatprep.subr.mxu0 0.0
    %2074 = vmatpush1.msra.mxu0 %v2066
    %2075 = vmatprep.subr.mxu0 0.0
    %2076 = vmatpush1.msra.mxu0 0.0
    %2077 = vmatprep.subr.mxu0 0.0
    %2078 = vmatpush1.msra.mxu0 0.0
    %2079 = vmatprep.subr.mxu0 0.0
    %2080 = vmatpush1.msra.mxu0 0.0
    %2081 = vmatprep.subr.mxu0 0.0
    %2082 = vmatpush1.msra.mxu0 0.0
    %2083 = vmatprep.subr.mxu0 0.0
    %2084 = vmatpush1.msra.mxu0 0.0
    %2085 = vmatprep.subr.mxu0 0.0
    %2086 = vmatpush1.msra.mxu0 0.0
    %2087 = vmatprep.subr.mxu0 0.0
    %2088 = vmatpush1.msra.mxu0 0.0
    %2089 = vmatprep.subr.mxu0 0.0
    %2090 = vmatpush1.msra.mxu0 0.0
    %2091 = vmatprep.subr.mxu0 0.0
    %2092 = vmatpush1.msra.mxu0 0.0
    %2093 = vmatprep.subr.mxu0 0.0
    %2094 = vmatpush1.msra.mxu0 0.0
    %2095 = vmatprep.subr.mxu0 0.0
    %2096 = vmatpush1.msra.mxu0 0.0
    %2097 = vmatprep.subr.mxu0 0.0
    %2098 = vmatpush1.msra.mxu0 0.0
    %2099 = vmatprep.subr.mxu0 0.0
    %2100 = vmatpush1.msra.mxu0 0.0
    %2101 = vmatprep.subr.mxu0 0.0
    %2102 = vmatpush1.msra.mxu0 0.0
    %2103 = vmatprep.subr.mxu0 0.0
    %2104 = vmatpush1.msra.mxu0 0.0
    %2105 = vmatprep.subr.mxu0 0.0
    %2106 = vmatpush1.msra.mxu0 0.0
    %2107 = vmatprep.subr.mxu0 0.0
    %2108 = vmatpush1.msra.mxu0 0.0
    %2109 = vmatprep.subr.mxu0 0.0
    %2110 = vmatpush1.msra.mxu0 0.0
    %2111 = vmatprep.subr.mxu0 0.0
    %2112 = vmatpush1.msra.mxu0 0.0
    %2113 = vmatprep.subr.mxu0 0.0
    %2114 = vmatpush1.msra.mxu0 0.0
    %2115 = vmatprep.subr.mxu0 0.0
    %2116 = vmatpush1.msra.mxu0 0.0
    %2117 = vmatprep.subr.mxu0 0.0
    %2118 = vmatpush1.msra.mxu0 0.0
    %2119 = vmatprep.subr.mxu0 0.0
    %2120 = vmatpush1.msra.mxu0 0.0
    %2121 = vmatprep.subr.mxu0 0.0
    %2122 = vmatpush1.msra.mxu0 0.0
    %2123 = vmatprep.subr.mxu0 0.0
    %2124 = vmatpush1.msra.mxu0 0.0
    %2125 = vmatprep.subr.mxu0 0.0
    %2126 = vmatpush1.msra.mxu0 0.0
    %2127 = vmatprep.subr.mxu0 0.0
    %2128 = vmatpush1.msra.mxu0 0.0
    %2129 = vmatprep.subr.mxu0 0.0
    %2130 = vmatpush1.msra.mxu0 0.0
    %2131 = vmatprep.mubr.f32.mxu0 0.0
    %2132 = vmatmul.mubr.f32.gmra.mrb[0].mxu0 %v1712
    %v2133 = vpop.f32.mrb[0].mxu0
    %v2134 = vadd.f32 0.0, %v2133
    %v2135 = vpop.f32.mrb[0].mxu0
    %2136 = vdwg.mxu0
    %v2139 = vunpack.c.l.s4 1966171168
    %v2140 = vunpack.c.0.s8 %v2139
    %v2141 = vlaneseq
    %v2142 = vshrl.u32 %v2141, 7
    %v2143 = vsub.s32 %v2140, %v2142
    %v2144 = vrot.slane %v2134, %v2143
    %v2145 = vcombine.high %v2144, %v2144
    %v2147 = vunpack.c.l.s4 1966171168
    %v2148 = vunpack.c.0.s8 %v2147
    %v2149 = vlaneseq
    %v2150 = vshrl.u32 %v2149, 7
    %v2151 = vsub.s32 %v2148, %v2150
    %v2152 = vrot.slane %v2144, %v2151
    %v2154 = vunpack.c.l.s4 1966171168
    %v2155 = vunpack.c.0.s8 %v2154
    %v2156 = vlaneseq
    %v2157 = vshrl.u32 %v2156, 7
    %v2158 = vsub.s32 %v2155, %v2157
    %v2159 = vrot.slane %v2145, %v2158
    %v2160 = vlaneseq
    %v2161 = vshrl.u32 %v2160, 7
    %v2162 = vsub.s32 0, %v2161
    %v2163 = vrot.slane %v2152, %v2162
    %v2164 = vlaneseq
    %v2165 = vshrl.u32 %v2164, 7
    %v2166 = vsub.s32 0, %v2165
    %v2167 = vrot.slane %v2159, %v2166
    %v2170 = vadd.f32 %v592, %v2163
    %v2171 = vadd.f32 %v597, %v2167
    %v2172 = vtanh.pop %v2170
    %v2173 = vtanh.pop %v2171
    %v2174 = vmul.f32 %v2172, %v809
    %v2175 = vmul.f32 %v2173, %v809
    %v2176 = vsel %vm410, %v2174, 0.0
    %2177 = vadd.xlane.f32.xlu0 %v2176
    %v2178 = vpop.xlane.xlu0 %2177
    %v2179 = vsel %vm410, %v2175, 0.0
    %2180 = vadd.xlane.f32.xlu0 %v2179
    %v2181 = vpop.xlane.xlu0 %2180
    %v2184 = vlaneseq
    %v2185 = vshrl.u32 %v2184, 7
    %v2186 = vsub.s32 %v254, %v2185
    %v2187 = vrot.slane %v2178, %v2186
    %v2188 = vlaneseq
    %v2189 = vshrl.u32 %v2188, 7
    %v2190 = vsub.s32 %v254, %v2189
    %v2191 = vrot.slane %v2181, %v2190
    %v2192 = vsel %vm829, %v2191, %v2187
    %v2194 = vsel %vm832, %v2192, -inf
    %2195 = vmax.xlane.f32.xlu0 %v2194
    %v2196 = vpop.xlane.xlu0 %2195
    %v2198 = vlaneseq
    %v2199 = vshrl.u32 %v2198, 7
    %v2200 = vsub.s32 0, %v2199
    %v2201 = vrot.slane %v2196, %v2200
    %v2202 = vlaneseq
    %v2203 = vshrl.u32 %v2202, 7
    %v2204 = vsub.s32 1, %v2203
    %v2205 = vrot.slane %v2196, %v2204
    %v2208 = vsub.f32 %v2178, %v2201
    %v2209 = vsub.f32 %v2181, %v2205
    %v2210 = vmul.f32 %v2208, 1.442695
    %v2211 = vpow.pop %v2210
    %v2212 = vmul.f32 %v2209, 1.442695
    %v2213 = vpow.pop %v2212
    %2216 = vset.pattern.permute.xlu0 0
    %2217 = vperm.xlu0 %2216, %v2211
    %v2218 = vpop.permute.xlu0 %2217
    %2219 = vset.pattern.permute.xlu0 0
    %2220 = vperm.xlu0 %2219, %v2213
    %v2221 = vpop.permute.xlu0 %2220
    %v2222 = vlaneseq
    %v2223 = vshrl.u32 %v2222, 7
    %v2224 = vsub.s32 %v254, %v2223
    %v2225 = vrot.slane %v2218, %v2224
    %v2226 = vlaneseq
    %v2227 = vshrl.u32 %v2226, 7
    %v2228 = vsub.s32 %v254, %v2227
    %v2229 = vrot.slane %v2221, %v2228
    %v2230 = vsel %vm829, %v2229, %v2225
    %v2232 = vsel %vm832, %v2230, 0.0
    %2233 = vadd.xlane.f32.xlu0 %v2232
    %v2234 = vpop.xlane.xlu0 %2233
    %v2235 = vrcp.pop %v2234
    %v2237 = vlaneseq
    %v2238 = vshrl.u32 %v2237, 7
    %v2239 = vsub.s32 0, %v2238
    %v2240 = vrot.slane %v2235, %v2239
    %v2241 = vlaneseq
    %v2242 = vshrl.u32 %v2241, 7
    %v2243 = vsub.s32 1, %v2242
    %v2244 = vrot.slane %v2235, %v2243
    %v2247 = vmul.f32 %v2211, %v2240
    %v2248 = vmul.f32 %v2213, %v2244
    %2250 = vset.pattern.permute.xlu0 0
    %2251 = vperm.xlu0 %2250, %v2247
    %v2252 = vpop.permute.xlu0 %2251
    %2255 = vset.pattern.permute.xlu0 0
    %2256 = vperm.xlu0 %2255, %v2248
    %v2257 = vpop.permute.xlu0 %2256
    %v2259 = vmul.f32 %v2252, %v506
    %v2260 = vmul.f32 %v2257, %v507
    %v2261 = vsel %vm410, %v2259, 0.0
    %v2262 = vrot.slane %v2261, 4
    %v2263 = vadd.f32 %v2261, %v2262
    %v2264 = vrot.slane %v2263, 2
    %v2265 = vadd.f32 %v2263, %v2264
    %v2266 = vrot.slane %v2265, 1
    %v2267 = vadd.f32 %v2265, %v2266
    %v2268 = vsel %vm410, %v2260, 0.0
    %v2269 = vrot.slane %v2268, 4
    %v2270 = vadd.f32 %v2268, %v2269
    %v2271 = vrot.slane %v2270, 2
    %v2272 = vadd.f32 %v2270, %v2271
    %v2273 = vrot.slane %v2272, 1
    %v2274 = vadd.f32 %v2272, %v2273
    %v2275 = vld [vmem:[%s29] sm:$0xff]
    %v2276 = vld [vmem:[%s29 + $0x8] sm:$0xff]
    %v2277 = vld [vmem:[%s29 + $0x10] sm:$0xff]
    %v2278 = vld [vmem:[%s29 + $0x18] sm:$0xff]
    %v2279 = vld [vmem:[%s35] sm:$0xff]
    %v2280 = vld [vmem:[%s35 + $0x8] sm:$0xff]
    %v2281 = vld [vmem:[%s35 + $0x10] sm:$0xff]
    %v2282 = vld [vmem:[%s35 + $0x18] sm:$0xff]
    %v2285 = vsel %vm829, %v2274, %v2267
    %v2286 = vsel %vm410, %v2285, 0
    %2288 = vmatprep.subr.mxu0 0.0
    %2289 = vmatpush1.msra.mxu0 %v2279
    %2290 = vmatprep.subr.mxu0 0.0
    %2291 = vmatpush1.msra.mxu0 %v2280
    %2292 = vmatprep.subr.mxu0 0.0
    %2293 = vmatpush1.msra.mxu0 %v2281
    %2294 = vmatprep.subr.mxu0 0.0
    %2295 = vmatpush1.msra.mxu0 %v2282
    %2296 = vmatprep.subr.mxu0 0.0
    %2297 = vmatpush1.msra.mxu0 0.0
    %2298 = vmatprep.subr.mxu0 0.0
    %2299 = vmatpush1.msra.mxu0 0.0
    %2300 = vmatprep.subr.mxu0 0.0
    %2301 = vmatpush1.msra.mxu0 0.0
    %2302 = vmatprep.subr.mxu0 0.0
    %2303 = vmatpush1.msra.mxu0 0.0
    %2304 = vmatprep.subr.mxu0 0.0
    %2305 = vmatpush1.msra.mxu0 0.0
    %2306 = vmatprep.subr.mxu0 0.0
    %2307 = vmatpush1.msra.mxu0 0.0
    %2308 = vmatprep.subr.mxu0 0.0
    %2309 = vmatpush1.msra.mxu0 0.0
    %2310 = vmatprep.subr.mxu0 0.0
    %2311 = vmatpush1.msra.mxu0 0.0
    %2312 = vmatprep.subr.mxu0 0.0
    %2313 = vmatpush1.msra.mxu0 0.0
    %2314 = vmatprep.subr.mxu0 0.0
    %2315 = vmatpush1.msra.mxu0 0.0
    %2316 = vmatprep.subr.mxu0 0.0
    %2317 = vmatpush1.msra.mxu0 0.0
    %2318 = vmatprep.subr.mxu0 0.0
    %2319 = vmatpush1.msra.mxu0 0.0
    %2320 = vmatprep.subr.mxu0 0.0
    %2321 = vmatpush1.msra.mxu0 0.0
    %2322 = vmatprep.subr.mxu0 0.0
    %2323 = vmatpush1.msra.mxu0 0.0
    %2324 = vmatprep.subr.mxu0 0.0
    %2325 = vmatpush1.msra.mxu0 0.0
    %2326 = vmatprep.subr.mxu0 0.0
    %2327 = vmatpush1.msra.mxu0 0.0
    %2328 = vmatprep.subr.mxu0 0.0
    %2329 = vmatpush1.msra.mxu0 0.0
    %2330 = vmatprep.subr.mxu0 0.0
    %2331 = vmatpush1.msra.mxu0 0.0
    %2332 = vmatprep.subr.mxu0 0.0
    %2333 = vmatpush1.msra.mxu0 0.0
    %2334 = vmatprep.subr.mxu0 0.0
    %2335 = vmatpush1.msra.mxu0 0.0
    %2336 = vmatprep.subr.mxu0 0.0
    %2337 = vmatpush1.msra.mxu0 0.0
    %2338 = vmatprep.subr.mxu0 0.0
    %2339 = vmatpush1.msra.mxu0 0.0
    %2340 = vmatprep.subr.mxu0 0.0
    %2341 = vmatpush1.msra.mxu0 0.0
    %2342 = vmatprep.subr.mxu0 0.0
    %2343 = vmatpush1.msra.mxu0 0.0
    %2344 = vmatprep.subr.mxu0 0.0
    %2345 = vmatpush1.msra.mxu0 0.0
    %2346 = vmatprep.subr.mxu0 0.0
    %2347 = vmatpush1.msra.mxu0 0.0
    %2348 = vmatprep.subr.mxu0 0.0
    %2349 = vmatpush1.msra.mxu0 0.0
    %2350 = vmatprep.subr.mxu0 0.0
    %2351 = vmatpush1.msra.mxu0 0.0
    %2352 = vmatprep.mubr.f32.mxu0 0.0
    %2353 = vmatmul.mubr.f32.gmra.mrb[0].mxu0 %v2286
    %v2354 = vpop.f32.mrb[0].mxu0
    %v2355 = vadd.f32 0.0, %v2354
    %v2356 = vpop.f32.mrb[0].mxu0
    %2357 = vdwg.mxu0
    %v2359 = vsel %vm410, %v2062, 0
    %2361 = vmatprep.subr.mxu0 0.0
    %2362 = vmatpush1.msra.mxu0 %v2275
    %2363 = vmatprep.subr.mxu0 0.0
    %2364 = vmatpush1.msra.mxu0 %v2276
    %2365 = vmatprep.subr.mxu0 0.0
    %2366 = vmatpush1.msra.mxu0 %v2277
    %2367 = vmatprep.subr.mxu0 0.0
    %2368 = vmatpush1.msra.mxu0 %v2278
    %2369 = vmatprep.subr.mxu0 0.0
    %2370 = vmatpush1.msra.mxu0 0.0
    %2371 = vmatprep.subr.mxu0 0.0
    %2372 = vmatpush1.msra.mxu0 0.0
    %2373 = vmatprep.subr.mxu0 0.0
    %2374 = vmatpush1.msra.mxu0 0.0
    %2375 = vmatprep.subr.mxu0 0.0
    %2376 = vmatpush1.msra.mxu0 0.0
    %2377 = vmatprep.subr.mxu0 0.0
    %2378 = vmatpush1.msra.mxu0 0.0
    %2379 = vmatprep.subr.mxu0 0.0
    %2380 = vmatpush1.msra.mxu0 0.0
    %2381 = vmatprep.subr.mxu0 0.0
    %2382 = vmatpush1.msra.mxu0 0.0
    %2383 = vmatprep.subr.mxu0 0.0
    %2384 = vmatpush1.msra.mxu0 0.0
    %2385 = vmatprep.subr.mxu0 0.0
    %2386 = vmatpush1.msra.mxu0 0.0
    %2387 = vmatprep.subr.mxu0 0.0
    %2388 = vmatpush1.msra.mxu0 0.0
    %2389 = vmatprep.subr.mxu0 0.0
    %2390 = vmatpush1.msra.mxu0 0.0
    %2391 = vmatprep.subr.mxu0 0.0
    %2392 = vmatpush1.msra.mxu0 0.0
    %2393 = vmatprep.subr.mxu0 0.0
    %2394 = vmatpush1.msra.mxu0 0.0
    %2395 = vmatprep.subr.mxu0 0.0
    %2396 = vmatpush1.msra.mxu0 0.0
    %2397 = vmatprep.subr.mxu0 0.0
    %2398 = vmatpush1.msra.mxu0 0.0
    %2399 = vmatprep.subr.mxu0 0.0
    %2400 = vmatpush1.msra.mxu0 0.0
    %2401 = vmatprep.subr.mxu0 0.0
    %2402 = vmatpush1.msra.mxu0 0.0
    %2403 = vmatprep.subr.mxu0 0.0
    %2404 = vmatpush1.msra.mxu0 0.0
    %2405 = vmatprep.subr.mxu0 0.0
    %2406 = vmatpush1.msra.mxu0 0.0
    %2407 = vmatprep.subr.mxu0 0.0
    %2408 = vmatpush1.msra.mxu0 0.0
    %2409 = vmatprep.subr.mxu0 0.0
    %2410 = vmatpush1.msra.mxu0 0.0
    %2411 = vmatprep.subr.mxu0 0.0
    %2412 = vmatpush1.msra.mxu0 0.0
    %2413 = vmatprep.subr.mxu0 0.0
    %2414 = vmatpush1.msra.mxu0 0.0
    %2415 = vmatprep.subr.mxu0 0.0
    %2416 = vmatpush1.msra.mxu0 0.0
    %2417 = vmatprep.subr.mxu0 0.0
    %2418 = vmatpush1.msra.mxu0 0.0
    %2419 = vmatprep.subr.mxu0 0.0
    %2420 = vmatpush1.msra.mxu0 0.0
    %2421 = vmatprep.subr.mxu0 0.0
    %2422 = vmatpush1.msra.mxu0 0.0
    %2423 = vmatprep.subr.mxu0 0.0
    %2424 = vmatpush1.msra.mxu0 0.0
    %2425 = vmatprep.mubr.f32.mxu0 0.0
    %2426 = vmatmul.mubr.f32.gmra.mrb[0].mxu0 %v2359
    %v2427 = vpop.f32.mrb[0].mxu0
    %v2428 = vadd.f32 %v2355, %v2427
    %v2429 = vpop.f32.mrb[0].mxu0
    %2430 = vdwg.mxu0
    %v2431 = vld [vmem:[#allocation10] sm:$0x1]
    %v2433 = vlaneseq
    %v2434 = vshrl.u32 %v2433, 7
    %v2435 = vsub.s32 0, %v2434
    %v2436 = vrot.slane %v2431, %v2435
    %v2438 = vadd.f32 %v2428, %v2436
    %v2439 = vld [vmem:[%s41] sm:$0xff]
    %v2440 = vld [vmem:[%s41 + $0x8] sm:$0xff]
    %v2441 = vld [vmem:[%s41 + $0x10] sm:$0xff]
    %v2442 = vld [vmem:[%s41 + $0x18] sm:$0xff]
    %2443 = vmatprep.subr.mxu0 0.0
    %2444 = vmatpush1.msra.mxu0 %v2439
    %2445 = vmatprep.subr.mxu0 0.0
    %2446 = vmatpush1.msra.mxu0 %v2440
    %2447 = vmatprep.subr.mxu0 0.0
    %2448 = vmatpush1.msra.mxu0 %v2441
    %2449 = vmatprep.subr.mxu0 0.0
    %2450 = vmatpush1.msra.mxu0 %v2442
    %2451 = vmatprep.subr.mxu0 0.0
    %2452 = vmatpush1.msra.mxu0 0.0
    %2453 = vmatprep.subr.mxu0 0.0
    %2454 = vmatpush1.msra.mxu0 0.0
    %2455 = vmatprep.subr.mxu0 0.0
    %2456 = vmatpush1.msra.mxu0 0.0
    %2457 = vmatprep.subr.mxu0 0.0
    %2458 = vmatpush1.msra.mxu0 0.0
    %2459 = vmatprep.subr.mxu0 0.0
    %2460 = vmatpush1.msra.mxu0 0.0
    %2461 = vmatprep.subr.mxu0 0.0
    %2462 = vmatpush1.msra.mxu0 0.0
    %2463 = vmatprep.subr.mxu0 0.0
    %2464 = vmatpush1.msra.mxu0 0.0
    %2465 = vmatprep.subr.mxu0 0.0
    %2466 = vmatpush1.msra.mxu0 0.0
    %2467 = vmatprep.subr.mxu0 0.0
    %2468 = vmatpush1.msra.mxu0 0.0
    %2469 = vmatprep.subr.mxu0 0.0
    %2470 = vmatpush1.msra.mxu0 0.0
    %2471 = vmatprep.subr.mxu0 0.0
    %2472 = vmatpush1.msra.mxu0 0.0
    %2473 = vmatprep.subr.mxu0 0.0
    %2474 = vmatpush1.msra.mxu0 0.0
    %2475 = vmatprep.subr.mxu0 0.0
    %2476 = vmatpush1.msra.mxu0 0.0
    %2477 = vmatprep.subr.mxu0 0.0
    %2478 = vmatpush1.msra.mxu0 0.0
    %2479 = vmatprep.subr.mxu0 0.0
    %2480 = vmatpush1.msra.mxu0 0.0
    %2481 = vmatprep.subr.mxu0 0.0
    %2482 = vmatpush1.msra.mxu0 0.0
    %2483 = vmatprep.subr.mxu0 0.0
    %2484 = vmatpush1.msra.mxu0 0.0
    %2485 = vmatprep.subr.mxu0 0.0
    %2486 = vmatpush1.msra.mxu0 0.0
    %2487 = vmatprep.subr.mxu0 0.0
    %2488 = vmatpush1.msra.mxu0 0.0
    %2489 = vmatprep.subr.mxu0 0.0
    %2490 = vmatpush1.msra.mxu0 0.0
    %2491 = vmatprep.subr.mxu0 0.0
    %2492 = vmatpush1.msra.mxu0 0.0
    %2493 = vmatprep.subr.mxu0 0.0
    %2494 = vmatpush1.msra.mxu0 0.0
    %2495 = vmatprep.subr.mxu0 0.0
    %2496 = vmatpush1.msra.mxu0 0.0
    %2497 = vmatprep.subr.mxu0 0.0
    %2498 = vmatpush1.msra.mxu0 0.0
    %2499 = vmatprep.subr.mxu0 0.0
    %2500 = vmatpush1.msra.mxu0 0.0
    %2501 = vmatprep.subr.mxu0 0.0
    %2502 = vmatpush1.msra.mxu0 0.0
    %2503 = vmatprep.subr.mxu0 0.0
    %2504 = vmatpush1.msra.mxu0 0.0
    %2505 = vmatprep.subr.mxu0 0.0
    %2506 = vmatpush1.msra.mxu0 0.0
    %2507 = vmatprep.mubr.f32.mxu0 0.0
    %2508 = vmatmul.mubr.f32.gmra.mrb[0].mxu0 %v1712
    %v2509 = vpop.f32.mrb[0].mxu0
    %v2510 = vadd.f32 0.0, %v2509
    %v2511 = vpop.f32.mrb[0].mxu0
    %2512 = vdwg.mxu0
    %v2513 = vadd.f32 %v2438, %v2510
    %v2514 = vxor.u32 %v2513, 2147483648
    %v2515 = vmul.f32 %v2514, 1.442695
    %v2516 = vpow.pop %v2515
    %v2517 = vadd.f32 %v2516, 1.0
    %v2518 = vrcp.pop %v2517
    %v2519 = vmul.f32 1.0, %v2518
    %v2520 = vld [vmem:[%s31] sm:$0xff]
    %v2521 = vld [vmem:[%s31 + $0x8] sm:$0xff]
    %v2522 = vld [vmem:[%s31 + $0x10] sm:$0xff]
    %v2523 = vld [vmem:[%s31 + $0x18] sm:$0xff]
    %v2524 = vld [vmem:[%s37] sm:$0xff]
    %v2525 = vld [vmem:[%s37 + $0x8] sm:$0xff]
    %v2526 = vld [vmem:[%s37 + $0x10] sm:$0xff]
    %v2527 = vld [vmem:[%s37 + $0x18] sm:$0xff]
    %2528 = vmatprep.subr.mxu0 0.0
    %2529 = vmatpush1.msra.mxu0 %v2524
    %2530 = vmatprep.subr.mxu0 0.0
    %2531 = vmatpush1.msra.mxu0 %v2525
    %2532 = vmatprep.subr.mxu0 0.0
    %2533 = vmatpush1.msra.mxu0 %v2526
    %2534 = vmatprep.subr.mxu0 0.0
    %2535 = vmatpush1.msra.mxu0 %v2527
    %2536 = vmatprep.subr.mxu0 0.0
    %2537 = vmatpush1.msra.mxu0 0.0
    %2538 = vmatprep.subr.mxu0 0.0
    %2539 = vmatpush1.msra.mxu0 0.0
    %2540 = vmatprep.subr.mxu0 0.0
    %2541 = vmatpush1.msra.mxu0 0.0
    %2542 = vmatprep.subr.mxu0 0.0
    %2543 = vmatpush1.msra.mxu0 0.0
    %2544 = vmatprep.subr.mxu0 0.0
    %2545 = vmatpush1.msra.mxu0 0.0
    %2546 = vmatprep.subr.mxu0 0.0
    %2547 = vmatpush1.msra.mxu0 0.0
    %2548 = vmatprep.subr.mxu0 0.0
    %2549 = vmatpush1.msra.mxu0 0.0
    %2550 = vmatprep.subr.mxu0 0.0
    %2551 = vmatpush1.msra.mxu0 0.0
    %2552 = vmatprep.subr.mxu0 0.0
    %2553 = vmatpush1.msra.mxu0 0.0
    %2554 = vmatprep.subr.mxu0 0.0
    %2555 = vmatpush1.msra.mxu0 0.0
    %2556 = vmatprep.subr.mxu0 0.0
    %2557 = vmatpush1.msra.mxu0 0.0
    %2558 = vmatprep.subr.mxu0 0.0
    %2559 = vmatpush1.msra.mxu0 0.0
    %2560 = vmatprep.subr.mxu0 0.0
    %2561 = vmatpush1.msra.mxu0 0.0
    %2562 = vmatprep.subr.mxu0 0.0
    %2563 = vmatpush1.msra.mxu0 0.0
    %2564 = vmatprep.subr.mxu0 0.0
    %2565 = vmatpush1.msra.mxu0 0.0
    %2566 = vmatprep.subr.mxu0 0.0
    %2567 = vmatpush1.msra.mxu0 0.0
    %2568 = vmatprep.subr.mxu0 0.0
    %2569 = vmatpush1.msra.mxu0 0.0
    %2570 = vmatprep.subr.mxu0 0.0
    %2571 = vmatpush1.msra.mxu0 0.0
    %2572 = vmatprep.subr.mxu0 0.0
    %2573 = vmatpush1.msra.mxu0 0.0
    %2574 = vmatprep.subr.mxu0 0.0
    %2575 = vmatpush1.msra.mxu0 0.0
    %2576 = vmatprep.subr.mxu0 0.0
    %2577 = vmatpush1.msra.mxu0 0.0
    %2578 = vmatprep.subr.mxu0 0.0
    %2579 = vmatpush1.msra.mxu0 0.0
    %2580 = vmatprep.subr.mxu0 0.0
    %2581 = vmatpush1.msra.mxu0 0.0
    %2582 = vmatprep.subr.mxu0 0.0
    %2583 = vmatpush1.msra.mxu0 0.0
    %2584 = vmatprep.subr.mxu0 0.0
    %2585 = vmatpush1.msra.mxu0 0.0
    %2586 = vmatprep.subr.mxu0 0.0
    %2587 = vmatpush1.msra.mxu0 0.0
    %2588 = vmatprep.subr.mxu0 0.0
    %2589 = vmatpush1.msra.mxu0 0.0
    %2590 = vmatprep.subr.mxu0 0.0
    %2591 = vmatpush1.msra.mxu0 0.0
    %2592 = vmatprep.mubr.f32.mxu0 0.0
    %2593 = vmatmul.mubr.f32.gmra.mrb[0].mxu0 %v2286
    %v2594 = vpop.f32.mrb[0].mxu0
    %v2595 = vadd.f32 0.0, %v2594
    %v2596 = vpop.f32.mrb[0].mxu0
    %2597 = vdwg.mxu0
    %2598 = vmatprep.subr.mxu0 0.0
    %2599 = vmatpush1.msra.mxu0 %v2520
    %2600 = vmatprep.subr.mxu0 0.0
    %2601 = vmatpush1.msra.mxu0 %v2521
    %2602 = vmatprep.subr.mxu0 0.0
    %2603 = vmatpush1.msra.mxu0 %v2522
    %2604 = vmatprep.subr.mxu0 0.0
    %2605 = vmatpush1.msra.mxu0 %v2523
    %2606 = vmatprep.subr.mxu0 0.0
    %2607 = vmatpush1.msra.mxu0 0.0
    %2608 = vmatprep.subr.mxu0 0.0
    %2609 = vmatpush1.msra.mxu0 0.0
    %2610 = vmatprep.subr.mxu0 0.0
    %2611 = vmatpush1.msra.mxu0 0.0
    %2612 = vmatprep.subr.mxu0 0.0
    %2613 = vmatpush1.msra.mxu0 0.0
    %2614 = vmatprep.subr.mxu0 0.0
    %2615 = vmatpush1.msra.mxu0 0.0
    %2616 = vmatprep.subr.mxu0 0.0
    %2617 = vmatpush1.msra.mxu0 0.0
    %2618 = vmatprep.subr.mxu0 0.0
    %2619 = vmatpush1.msra.mxu0 0.0
    %2620 = vmatprep.subr.mxu0 0.0
    %2621 = vmatpush1.msra.mxu0 0.0
    %2622 = vmatprep.subr.mxu0 0.0
    %2623 = vmatpush1.msra.mxu0 0.0
    %2624 = vmatprep.subr.mxu0 0.0
    %2625 = vmatpush1.msra.mxu0 0.0
    %2626 = vmatprep.subr.mxu0 0.0
    %2627 = vmatpush1.msra.mxu0 0.0
    %2628 = vmatprep.subr.mxu0 0.0
    %2629 = vmatpush1.msra.mxu0 0.0
    %2630 = vmatprep.subr.mxu0 0.0
    %2631 = vmatpush1.msra.mxu0 0.0
    %2632 = vmatprep.subr.mxu0 0.0
    %2633 = vmatpush1.msra.mxu0 0.0
    %2634 = vmatprep.subr.mxu0 0.0
    %2635 = vmatpush1.msra.mxu0 0.0
    %2636 = vmatprep.subr.mxu0 0.0
    %2637 = vmatpush1.msra.mxu0 0.0
    %2638 = vmatprep.subr.mxu0 0.0
    %2639 = vmatpush1.msra.mxu0 0.0
    %2640 = vmatprep.subr.mxu0 0.0
    %2641 = vmatpush1.msra.mxu0 0.0
    %2642 = vmatprep.subr.mxu0 0.0
    %2643 = vmatpush1.msra.mxu0 0.0
    %2644 = vmatprep.subr.mxu0 0.0
    %2645 = vmatpush1.msra.mxu0 0.0
    %2646 = vmatprep.subr.mxu0 0.0
    %2647 = vmatpush1.msra.mxu0 0.0
    %2648 = vmatprep.subr.mxu0 0.0
    %2649 = vmatpush1.msra.mxu0 0.0
    %2650 = vmatprep.subr.mxu0 0.0
    %2651 = vmatpush1.msra.mxu0 0.0
    %2652 = vmatprep.subr.mxu0 0.0
    %2653 = vmatpush1.msra.mxu0 0.0
    %2654 = vmatprep.subr.mxu0 0.0
    %2655 = vmatpush1.msra.mxu0 0.0
    %2656 = vmatprep.subr.mxu0 0.0
    %2657 = vmatpush1.msra.mxu0 0.0
    %2658 = vmatprep.subr.mxu0 0.0
    %2659 = vmatpush1.msra.mxu0 0.0
    %2660 = vmatprep.subr.mxu0 0.0
    %2661 = vmatpush1.msra.mxu0 0.0
    %2662 = vmatprep.mubr.f32.mxu0 0.0
    %2663 = vmatmul.mubr.f32.gmra.mrb[0].mxu0 %v2359
    %v2664 = vpop.f32.mrb[0].mxu0
    %v2665 = vadd.f32 %v2595, %v2664
    %v2666 = vpop.f32.mrb[0].mxu0
    %2667 = vdwg.mxu0
    %v2668 = vld [vmem:[#allocation11] sm:$0x1]
    %v2670 = vlaneseq
    %v2671 = vshrl.u32 %v2670, 7
    %v2672 = vsub.s32 0, %v2671
    %v2673 = vrot.slane %v2668, %v2672
    %v2675 = vadd.f32 %v2665, %v2673
    %v2676 = vld [vmem:[#allocation7] sm:$0xff]
    %v2677 = vld [vmem:[#allocation7 + $0x8] sm:$0xff]
    %v2678 = vld [vmem:[#allocation7 + $0x10] sm:$0xff]
    %v2679 = vld [vmem:[#allocation7 + $0x18] sm:$0xff]
    %2680 = vmatprep.subr.mxu0 0.0
    %2681 = vmatpush1.msra.mxu0 %v2676
    %2682 = vmatprep.subr.mxu0 0.0
    %2683 = vmatpush1.msra.mxu0 %v2677
    %2684 = vmatprep.subr.mxu0 0.0
    %2685 = vmatpush1.msra.mxu0 %v2678
    %2686 = vmatprep.subr.mxu0 0.0
    %2687 = vmatpush1.msra.mxu0 %v2679
    %2688 = vmatprep.subr.mxu0 0.0
    %2689 = vmatpush1.msra.mxu0 0.0
    %2690 = vmatprep.subr.mxu0 0.0
    %2691 = vmatpush1.msra.mxu0 0.0
    %2692 = vmatprep.subr.mxu0 0.0
    %2693 = vmatpush1.msra.mxu0 0.0
    %2694 = vmatprep.subr.mxu0 0.0
    %2695 = vmatpush1.msra.mxu0 0.0
    %2696 = vmatprep.subr.mxu0 0.0
    %2697 = vmatpush1.msra.mxu0 0.0
    %2698 = vmatprep.subr.mxu0 0.0
    %2699 = vmatpush1.msra.mxu0 0.0
    %2700 = vmatprep.subr.mxu0 0.0
    %2701 = vmatpush1.msra.mxu0 0.0
    %2702 = vmatprep.subr.mxu0 0.0
    %2703 = vmatpush1.msra.mxu0 0.0
    %2704 = vmatprep.subr.mxu0 0.0
    %2705 = vmatpush1.msra.mxu0 0.0
    %2706 = vmatprep.subr.mxu0 0.0
    %2707 = vmatpush1.msra.mxu0 0.0
    %2708 = vmatprep.subr.mxu0 0.0
    %2709 = vmatpush1.msra.mxu0 0.0
    %2710 = vmatprep.subr.mxu0 0.0
    %2711 = vmatpush1.msra.mxu0 0.0
    %2712 = vmatprep.subr.mxu0 0.0
    %2713 = vmatpush1.msra.mxu0 0.0
    %2714 = vmatprep.subr.mxu0 0.0
    %2715 = vmatpush1.msra.mxu0 0.0
    %2716 = vmatprep.subr.mxu0 0.0
    %2717 = vmatpush1.msra.mxu0 0.0
    %2718 = vmatprep.subr.mxu0 0.0
    %2719 = vmatpush1.msra.mxu0 0.0
    %2720 = vmatprep.subr.mxu0 0.0
    %2721 = vmatpush1.msra.mxu0 0.0
    %2722 = vmatprep.subr.mxu0 0.0
    %2723 = vmatpush1.msra.mxu0 0.0
    %2724 = vmatprep.subr.mxu0 0.0
    %2725 = vmatpush1.msra.mxu0 0.0
    %2726 = vmatprep.subr.mxu0 0.0
    %2727 = vmatpush1.msra.mxu0 0.0
    %2728 = vmatprep.subr.mxu0 0.0
    %2729 = vmatpush1.msra.mxu0 0.0
    %2730 = vmatprep.subr.mxu0 0.0
    %2731 = vmatpush1.msra.mxu0 0.0
    %2732 = vmatprep.subr.mxu0 0.0
    %2733 = vmatpush1.msra.mxu0 0.0
    %2734 = vmatprep.subr.mxu0 0.0
    %2735 = vmatpush1.msra.mxu0 0.0
    %2736 = vmatprep.subr.mxu0 0.0
    %2737 = vmatpush1.msra.mxu0 0.0
    %2738 = vmatprep.subr.mxu0 0.0
    %2739 = vmatpush1.msra.mxu0 0.0
    %2740 = vmatprep.subr.mxu0 0.0
    %2741 = vmatpush1.msra.mxu0 0.0
    %2742 = vmatprep.subr.mxu0 0.0
    %2743 = vmatpush1.msra.mxu0 0.0
    %2744 = vmatprep.mubr.f32.mxu0 0.0
    %2745 = vmatmul.mubr.f32.gmra.mrb[0].mxu0 %v1712
    %v2746 = vpop.f32.mrb[0].mxu0
    %v2747 = vadd.f32 0.0, %v2746
    %v2748 = vpop.f32.mrb[0].mxu0
    %2749 = vdwg.mxu0
    %v2750 = vadd.f32 %v2675, %v2747
    %v2751 = vxor.u32 %v2750, 2147483648
    %v2752 = vmul.f32 %v2751, 1.442695
    %v2753 = vpow.pop %v2752
    %v2754 = vadd.f32 %v2753, 1.0
    %v2755 = vrcp.pop %v2754
    %v2756 = vmul.f32 1.0, %v2755
    %v2757 = vld [vmem:[%s33] sm:$0xff]
    %v2758 = vld [vmem:[%s33 + $0x8] sm:$0xff]
    %v2759 = vld [vmem:[%s33 + $0x10] sm:$0xff]
    %v2760 = vld [vmem:[%s33 + $0x18] sm:$0xff]
    %v2761 = vld [vmem:[%s39] sm:$0xff]
    %v2762 = vld [vmem:[%s39 + $0x8] sm:$0xff]
    %v2763 = vld [vmem:[%s39 + $0x10] sm:$0xff]
    %v2764 = vld [vmem:[%s39 + $0x18] sm:$0xff]
    %2765 = vmatprep.subr.mxu0 0.0
    %2766 = vmatpush1.msra.mxu0 %v2761
    %2767 = vmatprep.subr.mxu0 0.0
    %2768 = vmatpush1.msra.mxu0 %v2762
    %2769 = vmatprep.subr.mxu0 0.0
    %2770 = vmatpush1.msra.mxu0 %v2763
    %2771 = vmatprep.subr.mxu0 0.0
    %2772 = vmatpush1.msra.mxu0 %v2764
    %2773 = vmatprep.subr.mxu0 0.0
    %2774 = vmatpush1.msra.mxu0 0.0
    %2775 = vmatprep.subr.mxu0 0.0
    %2776 = vmatpush1.msra.mxu0 0.0
    %2777 = vmatprep.subr.mxu0 0.0
    %2778 = vmatpush1.msra.mxu0 0.0
    %2779 = vmatprep.subr.mxu0 0.0
    %2780 = vmatpush1.msra.mxu0 0.0
    %2781 = vmatprep.subr.mxu0 0.0
    %2782 = vmatpush1.msra.mxu0 0.0
    %2783 = vmatprep.subr.mxu0 0.0
    %2784 = vmatpush1.msra.mxu0 0.0
    %2785 = vmatprep.subr.mxu0 0.0
    %2786 = vmatpush1.msra.mxu0 0.0
    %2787 = vmatprep.subr.mxu0 0.0
    %2788 = vmatpush1.msra.mxu0 0.0
    %2789 = vmatprep.subr.mxu0 0.0
    %2790 = vmatpush1.msra.mxu0 0.0
    %2791 = vmatprep.subr.mxu0 0.0
    %2792 = vmatpush1.msra.mxu0 0.0
    %2793 = vmatprep.subr.mxu0 0.0
    %2794 = vmatpush1.msra.mxu0 0.0
    %2795 = vmatprep.subr.mxu0 0.0
    %2796 = vmatpush1.msra.mxu0 0.0
    %2797 = vmatprep.subr.mxu0 0.0
    %2798 = vmatpush1.msra.mxu0 0.0
    %2799 = vmatprep.subr.mxu0 0.0
    %2800 = vmatpush1.msra.mxu0 0.0
    %2801 = vmatprep.subr.mxu0 0.0
    %2802 = vmatpush1.msra.mxu0 0.0
    %2803 = vmatprep.subr.mxu0 0.0
    %2804 = vmatpush1.msra.mxu0 0.0
    %2805 = vmatprep.subr.mxu0 0.0
    %2806 = vmatpush1.msra.mxu0 0.0
    %2807 = vmatprep.subr.mxu0 0.0
    %2808 = vmatpush1.msra.mxu0 0.0
    %2809 = vmatprep.subr.mxu0 0.0
    %2810 = vmatpush1.msra.mxu0 0.0
    %2811 = vmatprep.subr.mxu0 0.0
    %2812 = vmatpush1.msra.mxu0 0.0
    %2813 = vmatprep.subr.mxu0 0.0
    %2814 = vmatpush1.msra.mxu0 0.0
    %2815 = vmatprep.subr.mxu0 0.0
    %2816 = vmatpush1.msra.mxu0 0.0
    %2817 = vmatprep.subr.mxu0 0.0
    %2818 = vmatpush1.msra.mxu0 0.0
    %2819 = vmatprep.subr.mxu0 0.0
    %2820 = vmatpush1.msra.mxu0 0.0
    %2821 = vmatprep.subr.mxu0 0.0
    %2822 = vmatpush1.msra.mxu0 0.0
    %2823 = vmatprep.subr.mxu0 0.0
    %2824 = vmatpush1.msra.mxu0 0.0
    %2825 = vmatprep.subr.mxu0 0.0
    %2826 = vmatpush1.msra.mxu0 0.0
    %2827 = vmatprep.subr.mxu0 0.0
    %2828 = vmatpush1.msra.mxu0 0.0
    %2829 = vmatprep.mubr.f32.mxu0 0.0
    %2830 = vmatmul.mubr.f32.gmra.mrb[0].mxu0 %v2286
    %v2831 = vpop.f32.mrb[0].mxu0
    %v2832 = vadd.f32 0.0, %v2831
    %v2833 = vpop.f32.mrb[0].mxu0
    %2834 = vdwg.mxu0
    %2835 = vmatprep.subr.mxu0 0.0
    %2836 = vmatpush1.msra.mxu0 %v2757
    %2837 = vmatprep.subr.mxu0 0.0
    %2838 = vmatpush1.msra.mxu0 %v2758
    %2839 = vmatprep.subr.mxu0 0.0
    %2840 = vmatpush1.msra.mxu0 %v2759
    %2841 = vmatprep.subr.mxu0 0.0
    %2842 = vmatpush1.msra.mxu0 %v2760
    %2843 = vmatprep.subr.mxu0 0.0
    %2844 = vmatpush1.msra.mxu0 0.0
    %2845 = vmatprep.subr.mxu0 0.0
    %2846 = vmatpush1.msra.mxu0 0.0
    %2847 = vmatprep.subr.mxu0 0.0
    %2848 = vmatpush1.msra.mxu0 0.0
    %2849 = vmatprep.subr.mxu0 0.0
    %2850 = vmatpush1.msra.mxu0 0.0
    %2851 = vmatprep.subr.mxu0 0.0
    %2852 = vmatpush1.msra.mxu0 0.0
    %2853 = vmatprep.subr.mxu0 0.0
    %2854 = vmatpush1.msra.mxu0 0.0
    %2855 = vmatprep.subr.mxu0 0.0
    %2856 = vmatpush1.msra.mxu0 0.0
    %2857 = vmatprep.subr.mxu0 0.0
    %2858 = vmatpush1.msra.mxu0 0.0
    %2859 = vmatprep.subr.mxu0 0.0
    %2860 = vmatpush1.msra.mxu0 0.0
    %2861 = vmatprep.subr.mxu0 0.0
    %2862 = vmatpush1.msra.mxu0 0.0
    %2863 = vmatprep.subr.mxu0 0.0
    %2864 = vmatpush1.msra.mxu0 0.0
    %2865 = vmatprep.subr.mxu0 0.0
    %2866 = vmatpush1.msra.mxu0 0.0
    %2867 = vmatprep.subr.mxu0 0.0
    %2868 = vmatpush1.msra.mxu0 0.0
    %2869 = vmatprep.subr.mxu0 0.0
    %2870 = vmatpush1.msra.mxu0 0.0
    %2871 = vmatprep.subr.mxu0 0.0
    %2872 = vmatpush1.msra.mxu0 0.0
    %2873 = vmatprep.subr.mxu0 0.0
    %2874 = vmatpush1.msra.mxu0 0.0
    %2875 = vmatprep.subr.mxu0 0.0
    %2876 = vmatpush1.msra.mxu0 0.0
    %2877 = vmatprep.subr.mxu0 0.0
    %2878 = vmatpush1.msra.mxu0 0.0
    %2879 = vmatprep.subr.mxu0 0.0
    %2880 = vmatpush1.msra.mxu0 0.0
    %2881 = vmatprep.subr.mxu0 0.0
    %2882 = vmatpush1.msra.mxu0 0.0
    %2883 = vmatprep.subr.mxu0 0.0
    %2884 = vmatpush1.msra.mxu0 0.0
    %2885 = vmatprep.subr.mxu0 0.0
    %2886 = vmatpush1.msra.mxu0 0.0
    %2887 = vmatprep.subr.mxu0 0.0
    %2888 = vmatpush1.msra.mxu0 0.0
    %2889 = vmatprep.subr.mxu0 0.0
    %2890 = vmatpush1.msra.mxu0 0.0
    %2891 = vmatprep.subr.mxu0 0.0
    %2892 = vmatpush1.msra.mxu0 0.0
    %2893 = vmatprep.subr.mxu0 0.0
    %2894 = vmatpush1.msra.mxu0 0.0
    %2895 = vmatprep.subr.mxu0 0.0
    %2896 = vmatpush1.msra.mxu0 0.0
    %2897 = vmatprep.subr.mxu0 0.0
    %2898 = vmatpush1.msra.mxu0 0.0
    %2899 = vmatprep.mubr.f32.mxu0 0.0
    %2900 = vmatmul.mubr.f32.gmra.mrb[0].mxu0 %v2359
    %v2901 = vpop.f32.mrb[0].mxu0
    %v2902 = vadd.f32 %v2832, %v2901
    %v2903 = vpop.f32.mrb[0].mxu0
    %2904 = vdwg.mxu0
    %v2905 = vld [vmem:[#allocation13] sm:$0x1]
    %v2907 = vlaneseq
    %v2908 = vshrl.u32 %v2907, 7
    %v2909 = vsub.s32 0, %v2908
    %v2910 = vrot.slane %v2905, %v2909
    %v2912 = vadd.f32 %v2902, %v2910
    %v2913 = vld [vmem:[#allocation8] sm:$0xff]
    %v2914 = vld [vmem:[#allocation8 + $0x8] sm:$0xff]
    %v2915 = vld [vmem:[#allocation8 + $0x10] sm:$0xff]
    %v2916 = vld [vmem:[#allocation8 + $0x18] sm:$0xff]
    %2917 = vmatprep.subr.mxu0 0.0
    %2918 = vmatpush1.msra.mxu0 %v2913
    %2919 = vmatprep.subr.mxu0 0.0
    %2920 = vmatpush1.msra.mxu0 %v2914
    %2921 = vmatprep.subr.mxu0 0.0
    %2922 = vmatpush1.msra.mxu0 %v2915
    %2923 = vmatprep.subr.mxu0 0.0
    %2924 = vmatpush1.msra.mxu0 %v2916
    %2925 = vmatprep.subr.mxu0 0.0
    %2926 = vmatpush1.msra.mxu0 0.0
    %2927 = vmatprep.subr.mxu0 0.0
    %2928 = vmatpush1.msra.mxu0 0.0
    %2929 = vmatprep.subr.mxu0 0.0
    %2930 = vmatpush1.msra.mxu0 0.0
    %2931 = vmatprep.subr.mxu0 0.0
    %2932 = vmatpush1.msra.mxu0 0.0
    %2933 = vmatprep.subr.mxu0 0.0
    %2934 = vmatpush1.msra.mxu0 0.0
    %2935 = vmatprep.subr.mxu0 0.0
    %2936 = vmatpush1.msra.mxu0 0.0
    %2937 = vmatprep.subr.mxu0 0.0
    %2938 = vmatpush1.msra.mxu0 0.0
    %2939 = vmatprep.subr.mxu0 0.0
    %2940 = vmatpush1.msra.mxu0 0.0
    %2941 = vmatprep.subr.mxu0 0.0
    %2942 = vmatpush1.msra.mxu0 0.0
    %2943 = vmatprep.subr.mxu0 0.0
    %2944 = vmatpush1.msra.mxu0 0.0
    %2945 = vmatprep.subr.mxu0 0.0
    %2946 = vmatpush1.msra.mxu0 0.0
    %2947 = vmatprep.subr.mxu0 0.0
    %2948 = vmatpush1.msra.mxu0 0.0
    %2949 = vmatprep.subr.mxu0 0.0
    %2950 = vmatpush1.msra.mxu0 0.0
    %2951 = vmatprep.subr.mxu0 0.0
    %2952 = vmatpush1.msra.mxu0 0.0
    %2953 = vmatprep.subr.mxu0 0.0
    %2954 = vmatpush1.msra.mxu0 0.0
    %2955 = vmatprep.subr.mxu0 0.0
    %2956 = vmatpush1.msra.mxu0 0.0
    %2957 = vmatprep.subr.mxu0 0.0
    %2958 = vmatpush1.msra.mxu0 0.0
    %2959 = vmatprep.subr.mxu0 0.0
    %2960 = vmatpush1.msra.mxu0 0.0
    %2961 = vmatprep.subr.mxu0 0.0
    %2962 = vmatpush1.msra.mxu0 0.0
    %2963 = vmatprep.subr.mxu0 0.0
    %2964 = vmatpush1.msra.mxu0 0.0
    %2965 = vmatprep.subr.mxu0 0.0
    %2966 = vmatpush1.msra.mxu0 0.0
    %2967 = vmatprep.subr.mxu0 0.0
    %2968 = vmatpush1.msra.mxu0 0.0
    %2969 = vmatprep.subr.mxu0 0.0
    %2970 = vmatpush1.msra.mxu0 0.0
    %2971 = vmatprep.subr.mxu0 0.0
    %2972 = vmatpush1.msra.mxu0 0.0
    %2973 = vmatprep.subr.mxu0 0.0
    %2974 = vmatpush1.msra.mxu0 0.0
    %2975 = vmatprep.subr.mxu0 0.0
    %2976 = vmatpush1.msra.mxu0 0.0
    %2977 = vmatprep.subr.mxu0 0.0
    %2978 = vmatpush1.msra.mxu0 0.0
    %2979 = vmatprep.subr.mxu0 0.0
    %2980 = vmatpush1.msra.mxu0 0.0
    %2981 = vmatprep.mubr.f32.mxu0 0.0
    %2982 = vmatmul.mubr.f32.gmra.mrb[0].mxu0 %v1712
    %v2983 = vpop.f32.mrb[0].mxu0
    %v2984 = vadd.f32 0.0, %v2983
    %v2985 = vpop.f32.mrb[0].mxu0
    %2986 = vdwg.mxu0
    %v2987 = vmul.f32 %v2519, %v2984
    %v2988 = vadd.f32 %v2912, %v2987
    %v2989 = vtanh.pop %v2988
    %v2990 = vsub.f32 1.0, %v2756
    %v2991 = vmul.f32 %v2990, %v2989
    %v2992 = vmul.f32 %v2756, %v1632
    %v2993 = vadd.f32 %v2991, %v2992
    %v2994 = vld [vmem:[%s53] sm:$0xff]
    %v2995 = vld [vmem:[%s53 + $0x8] sm:$0xff]
    %v2996 = vld [vmem:[%s53 + $0x10] sm:$0xff]
    %v2997 = vld [vmem:[%s53 + $0x18] sm:$0xff]
    %v2998 = vld [vmem:[#allocation14] sm:$0xff]
    %v2999 = vld [vmem:[#allocation14 + $0x8] sm:$0xff]
    %v3000 = vld [vmem:[#allocation14 + $0x10] sm:$0xff]
    %v3001 = vld [vmem:[#allocation14 + $0x18] sm:$0xff]
    %3002 = vmatprep.subr.mxu0 0.0
    %3003 = vmatpush1.msra.mxu0 %v2998
    %3004 = vmatprep.subr.mxu0 0.0
    %3005 = vmatpush1.msra.mxu0 %v2999
    %3006 = vmatprep.subr.mxu0 0.0
    %3007 = vmatpush1.msra.mxu0 %v3000
    %3008 = vmatprep.subr.mxu0 0.0
    %3009 = vmatpush1.msra.mxu0 %v3001
    %3010 = vmatprep.subr.mxu0 0.0
    %3011 = vmatpush1.msra.mxu0 0.0
    %3012 = vmatprep.subr.mxu0 0.0
    %3013 = vmatpush1.msra.mxu0 0.0
    %3014 = vmatprep.subr.mxu0 0.0
    %3015 = vmatpush1.msra.mxu0 0.0
    %3016 = vmatprep.subr.mxu0 0.0
    %3017 = vmatpush1.msra.mxu0 0.0
    %3018 = vmatprep.subr.mxu0 0.0
    %3019 = vmatpush1.msra.mxu0 0.0
    %3020 = vmatprep.subr.mxu0 0.0
    %3021 = vmatpush1.msra.mxu0 0.0
    %3022 = vmatprep.subr.mxu0 0.0
    %3023 = vmatpush1.msra.mxu0 0.0
    %3024 = vmatprep.subr.mxu0 0.0
    %3025 = vmatpush1.msra.mxu0 0.0
    %3026 = vmatprep.subr.mxu0 0.0
    %3027 = vmatpush1.msra.mxu0 0.0
    %3028 = vmatprep.subr.mxu0 0.0
    %3029 = vmatpush1.msra.mxu0 0.0
    %3030 = vmatprep.subr.mxu0 0.0
    %3031 = vmatpush1.msra.mxu0 0.0
    %3032 = vmatprep.subr.mxu0 0.0
    %3033 = vmatpush1.msra.mxu0 0.0
    %3034 = vmatprep.subr.mxu0 0.0
    %3035 = vmatpush1.msra.mxu0 0.0
    %3036 = vmatprep.subr.mxu0 0.0
    %3037 = vmatpush1.msra.mxu0 0.0
    %3038 = vmatprep.subr.mxu0 0.0
    %3039 = vmatpush1.msra.mxu0 0.0
    %3040 = vmatprep.subr.mxu0 0.0
    %3041 = vmatpush1.msra.mxu0 0.0
    %3042 = vmatprep.subr.mxu0 0.0
    %3043 = vmatpush1.msra.mxu0 0.0
    %3044 = vmatprep.subr.mxu0 0.0
    %3045 = vmatpush1.msra.mxu0 0.0
    %3046 = vmatprep.subr.mxu0 0.0
    %3047 = vmatpush1.msra.mxu0 0.0
    %3048 = vmatprep.subr.mxu0 0.0
    %3049 = vmatpush1.msra.mxu0 0.0
    %3050 = vmatprep.subr.mxu0 0.0
    %3051 = vmatpush1.msra.mxu0 0.0
    %3052 = vmatprep.subr.mxu0 0.0
    %3053 = vmatpush1.msra.mxu0 0.0
    %3054 = vmatprep.subr.mxu0 0.0
    %3055 = vmatpush1.msra.mxu0 0.0
    %3056 = vmatprep.subr.mxu0 0.0
    %3057 = vmatpush1.msra.mxu0 0.0
    %3058 = vmatprep.subr.mxu0 0.0
    %3059 = vmatpush1.msra.mxu0 0.0
    %3060 = vmatprep.subr.mxu0 0.0
    %3061 = vmatpush1.msra.mxu0 0.0
    %3062 = vmatprep.subr.mxu0 0.0
    %3063 = vmatpush1.msra.mxu0 0.0
    %3064 = vmatprep.subr.mxu0 0.0
    %3065 = vmatpush1.msra.mxu0 0.0
    %3066 = vmatprep.mubr.f32.mxu0 0.0
    %3067 = vmatmul.mubr.f32.gmra.mrb[0].mxu0 %v2286
    %v3068 = vpop.f32.mrb[0].mxu0
    %v3069 = vadd.f32 0.0, %v3068
    %v3070 = vpop.f32.mrb[0].mxu0
    %3071 = vdwg.mxu0
    %v3073 = vsel %vm410, %v2993, 0
    %3075 = vmatprep.subr.mxu0 0.0
    %3076 = vmatpush1.msra.mxu0 %v2994
    %3077 = vmatprep.subr.mxu0 0.0
    %3078 = vmatpush1.msra.mxu0 %v2995
    %3079 = vmatprep.subr.mxu0 0.0
    %3080 = vmatpush1.msra.mxu0 %v2996
    %3081 = vmatprep.subr.mxu0 0.0
    %3082 = vmatpush1.msra.mxu0 %v2997
    %3083 = vmatprep.subr.mxu0 0.0
    %3084 = vmatpush1.msra.mxu0 0.0
    %3085 = vmatprep.subr.mxu0 0.0
    %3086 = vmatpush1.msra.mxu0 0.0
    %3087 = vmatprep.subr.mxu0 0.0
    %3088 = vmatpush1.msra.mxu0 0.0
    %3089 = vmatprep.subr.mxu0 0.0
    %3090 = vmatpush1.msra.mxu0 0.0
    %3091 = vmatprep.subr.mxu0 0.0
    %3092 = vmatpush1.msra.mxu0 0.0
    %3093 = vmatprep.subr.mxu0 0.0
    %3094 = vmatpush1.msra.mxu0 0.0
    %3095 = vmatprep.subr.mxu0 0.0
    %3096 = vmatpush1.msra.mxu0 0.0
    %3097 = vmatprep.subr.mxu0 0.0
    %3098 = vmatpush1.msra.mxu0 0.0
    %3099 = vmatprep.subr.mxu0 0.0
    %3100 = vmatpush1.msra.mxu0 0.0
    %3101 = vmatprep.subr.mxu0 0.0
    %3102 = vmatpush1.msra.mxu0 0.0
    %3103 = vmatprep.subr.mxu0 0.0
    %3104 = vmatpush1.msra.mxu0 0.0
    %3105 = vmatprep.subr.mxu0 0.0
    %3106 = vmatpush1.msra.mxu0 0.0
    %3107 = vmatprep.subr.mxu0 0.0
    %3108 = vmatpush1.msra.mxu0 0.0
    %3109 = vmatprep.subr.mxu0 0.0
    %3110 = vmatpush1.msra.mxu0 0.0
    %3111 = vmatprep.subr.mxu0 0.0
    %3112 = vmatpush1.msra.mxu0 0.0
    %3113 = vmatprep.subr.mxu0 0.0
    %3114 = vmatpush1.msra.mxu0 0.0
    %3115 = vmatprep.subr.mxu0 0.0
    %3116 = vmatpush1.msra.mxu0 0.0
    %3117 = vmatprep.subr.mxu0 0.0
    %3118 = vmatpush1.msra.mxu0 0.0
    %3119 = vmatprep.subr.mxu0 0.0
    %3120 = vmatpush1.msra.mxu0 0.0
    %3121 = vmatprep.subr.mxu0 0.0
    %3122 = vmatpush1.msra.mxu0 0.0
    %3123 = vmatprep.subr.mxu0 0.0
    %3124 = vmatpush1.msra.mxu0 0.0
    %3125 = vmatprep.subr.mxu0 0.0
    %3126 = vmatpush1.msra.mxu0 0.0
    %3127 = vmatprep.subr.mxu0 0.0
    %3128 = vmatpush1.msra.mxu0 0.0
    %3129 = vmatprep.subr.mxu0 0.0
    %3130 = vmatpush1.msra.mxu0 0.0
    %3131 = vmatprep.subr.mxu0 0.0
    %3132 = vmatpush1.msra.mxu0 0.0
    %3133 = vmatprep.subr.mxu0 0.0
    %3134 = vmatpush1.msra.mxu0 0.0
    %3135 = vmatprep.subr.mxu0 0.0
    %3136 = vmatpush1.msra.mxu0 0.0
    %3137 = vmatprep.subr.mxu0 0.0
    %3138 = vmatpush1.msra.mxu0 0.0
    %3139 = vmatprep.mubr.f32.mxu0 0.0
    %3140 = vmatmul.mubr.f32.gmra.mrb[0].mxu0 %v3073
    %v3141 = vpop.f32.mrb[0].mxu0
    %v3142 = vadd.f32 %v3069, %v3141
    %v3143 = vpop.f32.mrb[0].mxu0
    %3144 = vdwg.mxu0
    %v3145 = vld [vmem:[#allocation16] sm:$0xff]
    %v3146 = vld [vmem:[#allocation16 + $0x8] sm:$0xff]
    %v3147 = vld [vmem:[#allocation16 + $0x10] sm:$0xff]
    %v3148 = vld [vmem:[#allocation16 + $0x18] sm:$0xff]
    %3149 = vmatprep.subr.mxu0 0.0
    %3150 = vmatpush1.msra.mxu0 %v3145
    %3151 = vmatprep.subr.mxu0 0.0
    %3152 = vmatpush1.msra.mxu0 %v3146
    %3153 = vmatprep.subr.mxu0 0.0
    %3154 = vmatpush1.msra.mxu0 %v3147
    %3155 = vmatprep.subr.mxu0 0.0
    %3156 = vmatpush1.msra.mxu0 %v3148
    %3157 = vmatprep.subr.mxu0 0.0
    %3158 = vmatpush1.msra.mxu0 0.0
    %3159 = vmatprep.subr.mxu0 0.0
    %3160 = vmatpush1.msra.mxu0 0.0
    %3161 = vmatprep.subr.mxu0 0.0
    %3162 = vmatpush1.msra.mxu0 0.0
    %3163 = vmatprep.subr.mxu0 0.0
    %3164 = vmatpush1.msra.mxu0 0.0
    %3165 = vmatprep.subr.mxu0 0.0
    %3166 = vmatpush1.msra.mxu0 0.0
    %3167 = vmatprep.subr.mxu0 0.0
    %3168 = vmatpush1.msra.mxu0 0.0
    %3169 = vmatprep.subr.mxu0 0.0
    %3170 = vmatpush1.msra.mxu0 0.0
    %3171 = vmatprep.subr.mxu0 0.0
    %3172 = vmatpush1.msra.mxu0 0.0
    %3173 = vmatprep.subr.mxu0 0.0
    %3174 = vmatpush1.msra.mxu0 0.0
    %3175 = vmatprep.subr.mxu0 0.0
    %3176 = vmatpush1.msra.mxu0 0.0
    %3177 = vmatprep.subr.mxu0 0.0
    %3178 = vmatpush1.msra.mxu0 0.0
    %3179 = vmatprep.subr.mxu0 0.0
    %3180 = vmatpush1.msra.mxu0 0.0
    %3181 = vmatprep.subr.mxu0 0.0
    %3182 = vmatpush1.msra.mxu0 0.0
    %3183 = vmatprep.subr.mxu0 0.0
    %3184 = vmatpush1.msra.mxu0 0.0
    %3185 = vmatprep.subr.mxu0 0.0
    %3186 = vmatpush1.msra.mxu0 0.0
    %3187 = vmatprep.subr.mxu0 0.0
    %3188 = vmatpush1.msra.mxu0 0.0
    %3189 = vmatprep.subr.mxu0 0.0
    %3190 = vmatpush1.msra.mxu0 0.0
    %3191 = vmatprep.subr.mxu0 0.0
    %3192 = vmatpush1.msra.mxu0 0.0
    %3193 = vmatprep.subr.mxu0 0.0
    %3194 = vmatpush1.msra.mxu0 0.0
    %3195 = vmatprep.subr.mxu0 0.0
    %3196 = vmatpush1.msra.mxu0 0.0
    %3197 = vmatprep.subr.mxu0 0.0
    %3198 = vmatpush1.msra.mxu0 0.0
    %3199 = vmatprep.subr.mxu0 0.0
    %3200 = vmatpush1.msra.mxu0 0.0
    %3201 = vmatprep.subr.mxu0 0.0
    %3202 = vmatpush1.msra.mxu0 0.0
    %3203 = vmatprep.subr.mxu0 0.0
    %3204 = vmatpush1.msra.mxu0 0.0
    %3205 = vmatprep.subr.mxu0 0.0
    %3206 = vmatpush1.msra.mxu0 0.0
    %3207 = vmatprep.subr.mxu0 0.0
    %3208 = vmatpush1.msra.mxu0 0.0
    %3209 = vmatprep.subr.mxu0 0.0
    %3210 = vmatpush1.msra.mxu0 0.0
    %3211 = vmatprep.subr.mxu0 0.0
    %3212 = vmatpush1.msra.mxu0 0.0
    %3213 = vmatprep.mubr.f32.mxu0 0.0
    %3214 = vmatmul.mubr.f32.gmra.mrb[0].mxu0 %v2359
    %v3215 = vpop.f32.mrb[0].mxu0
    %v3216 = vadd.f32 0.0, %v3215
    %v3217 = vpop.f32.mrb[0].mxu0
    %3218 = vdwg.mxu0
    %v3219 = vadd.f32 %v3142, %v3216
    %v3220 = vld [vmem:[#allocation17] sm:$0x1]
    %v3222 = vlaneseq
    %v3223 = vshrl.u32 %v3222, 7
    %v3224 = vsub.s32 0, %v3223
    %v3225 = vrot.slane %v3220, %v3224
    %v3227 = vadd.f32 %v3219, %v3225
    %s3228 = scalar_lea.vmem [#allocation19], 4
    %3229 = vst [vmem:[%s3228] sm:$0x3] %v3227
    %v3230 = vsel %vm1869, %v3227, -inf
    %3231 = vmax.xlane.f32.xlu0 %v3230
    %v3232 = vpop.xlane.xlu0 %3231
    %vm3233 = vcmp.eq.f32.partialorder %v3227, %v3232
    %v3234 = vsel %vm3233, %v254, 64
    %v3235 = vsel %vm1869, %v3234, 2147483647
    %v3236 = vand.u32 %v3235, 65535
    %v3237 = vshra.s32 %v3235, 16
    %v3238 = vcvt.s32.f32 %v3236
    %v3239 = vcvt.s32.f32 %v3237
    %3240 = vmin.xlane.f32.xlu0 %v3239
    %v3241 = vpop.xlane.xlu0 %3240
    %vm3242 = vcmp.eq.f32.partialorder %v3239, %v3241
    %v3243 = vsel %vm3242, %v3238, inf
    %3244 = vmin.xlane.f32.xlu0 %v3243
    %v3245 = vpop.xlane.xlu0 %3244
    %v3246 = vcvt.f32.s32 %v3245
    %v3247 = vcvt.f32.s32 %v3241
    %v3248 = vshll.u32 %v3247, 16
    %v3249 = vadd.s32 %v3248, %v3246
    %vm3250 = vcmp.eq.s32.totalorder %v254, %v3249
    %v3251 = vsel %vm3250, 1, 0
    %v3252 = vcvt.s32.f32 %v3251
    %v3254 = vsel %vm617, %v3252, 0
    %3256 = vmatprep.subr.mxu0 0.0
    %3257 = vmatpush1.msra.mxu0 %v600
    %3258 = vmatprep.subr.mxu0 0.0
    %3259 = vmatpush1.msra.mxu0 %v601
    %3260 = vmatprep.subr.mxu0 0.0
    %3261 = vmatpush1.msra.mxu0 %v602
    %3262 = vmatprep.subr.mxu0 0.0
    %3263 = vmatpush1.msra.mxu0 %v603
    %3264 = vmatprep.subr.mxu0 0.0
    %3265 = vmatpush1.msra.mxu0 %v604
    %3266 = vmatprep.subr.mxu0 0.0
    %3267 = vmatpush1.msra.mxu0 %v605
    %3268 = vmatprep.subr.mxu0 0.0
    %3269 = vmatpush1.msra.mxu0 %v606
    %3270 = vmatprep.subr.mxu0 0.0
    %3271 = vmatpush1.msra.mxu0 %v607
    %3272 = vmatprep.subr.mxu0 0.0
    %3273 = vmatpush1.msra.mxu0 0.0
    %3274 = vmatprep.subr.mxu0 0.0
    %3275 = vmatpush1.msra.mxu0 0.0
    %3276 = vmatprep.subr.mxu0 0.0
    %3277 = vmatpush1.msra.mxu0 0.0
    %3278 = vmatprep.subr.mxu0 0.0
    %3279 = vmatpush1.msra.mxu0 0.0
    %3280 = vmatprep.subr.mxu0 0.0
    %3281 = vmatpush1.msra.mxu0 0.0
    %3282 = vmatprep.subr.mxu0 0.0
    %3283 = vmatpush1.msra.mxu0 0.0
    %3284 = vmatprep.subr.mxu0 0.0
    %3285 = vmatpush1.msra.mxu0 0.0
    %3286 = vmatprep.subr.mxu0 0.0
    %3287 = vmatpush1.msra.mxu0 0.0
    %3288 = vmatprep.subr.mxu0 0.0
    %3289 = vmatpush1.msra.mxu0 0.0
    %3290 = vmatprep.subr.mxu0 0.0
    %3291 = vmatpush1.msra.mxu0 0.0
    %3292 = vmatprep.subr.mxu0 0.0
    %3293 = vmatpush1.msra.mxu0 0.0
    %3294 = vmatprep.subr.mxu0 0.0
    %3295 = vmatpush1.msra.mxu0 0.0
    %3296 = vmatprep.subr.mxu0 0.0
    %3297 = vmatpush1.msra.mxu0 0.0
    %3298 = vmatprep.subr.mxu0 0.0
    %3299 = vmatpush1.msra.mxu0 0.0
    %3300 = vmatprep.subr.mxu0 0.0
    %3301 = vmatpush1.msra.mxu0 0.0
    %3302 = vmatprep.subr.mxu0 0.0
    %3303 = vmatpush1.msra.mxu0 0.0
    %3304 = vmatprep.subr.mxu0 0.0
    %3305 = vmatpush1.msra.mxu0 0.0
    %3306 = vmatprep.subr.mxu0 0.0
    %3307 = vmatpush1.msra.mxu0 0.0
    %3308 = vmatprep.subr.mxu0 0.0
    %3309 = vmatpush1.msra.mxu0 0.0
    %3310 = vmatprep.subr.mxu0 0.0
    %3311 = vmatpush1.msra.mxu0 0.0
    %3312 = vmatprep.subr.mxu0 0.0
    %3313 = vmatpush1.msra.mxu0 0.0
    %3314 = vmatprep.subr.mxu0 0.0
    %3315 = vmatpush1.msra.mxu0 0.0
    %3316 = vmatprep.subr.mxu0 0.0
    %3317 = vmatpush1.msra.mxu0 0.0
    %3318 = vmatprep.subr.mxu0 0.0
    %3319 = vmatpush1.msra.mxu0 0.0
    %3320 = vmatprep.mubr.f32.mxu0 0.0
    %3321 = vmatmul.mubr.f32.gmra.mrb[0].mxu0 %v3254
    %v3322 = vpop.f32.mrb[0].mxu0
    %v3323 = vadd.f32 0.0, %v3322
    %v3324 = vpop.f32.mrb[0].mxu0
    %3325 = vdwg.mxu0
    %s3326 = scalar_lea.vmem %s7, 4
    %v3327 = vld [vmem:[%s3326] sm:$0x3]
    %3328 = vset.pattern.permute.xlu0 0
    %3329 = vperm.xlu0 %3328, %v3327
    %v3330 = vpop.permute.xlu0 %3329
    %vm3331 = vcmp.eq.s32.totalorder %v254, %v3330
    %v3332 = vsel %vm3331, 1, 0
    %v3333 = vcvt.s32.f32 %v3332
    %v3335 = vsel %vm617, %v3333, 0
    %3337 = vmatprep.subr.mxu0 0.0
    %3338 = vmatpush1.msra.mxu0 %v600
    %3339 = vmatprep.subr.mxu0 0.0
    %3340 = vmatpush1.msra.mxu0 %v601
    %3341 = vmatprep.subr.mxu0 0.0
    %3342 = vmatpush1.msra.mxu0 %v602
    %3343 = vmatprep.subr.mxu0 0.0
    %3344 = vmatpush1.msra.mxu0 %v603
    %3345 = vmatprep.subr.mxu0 0.0
    %3346 = vmatpush1.msra.mxu0 %v604
    %3347 = vmatprep.subr.mxu0 0.0
    %3348 = vmatpush1.msra.mxu0 %v605
    %3349 = vmatprep.subr.mxu0 0.0
    %3350 = vmatpush1.msra.mxu0 %v606
    %3351 = vmatprep.subr.mxu0 0.0
    %3352 = vmatpush1.msra.mxu0 %v607
    %3353 = vmatprep.subr.mxu0 0.0
    %3354 = vmatpush1.msra.mxu0 0.0
    %3355 = vmatprep.subr.mxu0 0.0
    %3356 = vmatpush1.msra.mxu0 0.0
    %3357 = vmatprep.subr.mxu0 0.0
    %3358 = vmatpush1.msra.mxu0 0.0
    %3359 = vmatprep.subr.mxu0 0.0
    %3360 = vmatpush1.msra.mxu0 0.0
    %3361 = vmatprep.subr.mxu0 0.0
    %3362 = vmatpush1.msra.mxu0 0.0
    %3363 = vmatprep.subr.mxu0 0.0
    %3364 = vmatpush1.msra.mxu0 0.0
    %3365 = vmatprep.subr.mxu0 0.0
    %3366 = vmatpush1.msra.mxu0 0.0
    %3367 = vmatprep.subr.mxu0 0.0
    %3368 = vmatpush1.msra.mxu0 0.0
    %3369 = vmatprep.subr.mxu0 0.0
    %3370 = vmatpush1.msra.mxu0 0.0
    %3371 = vmatprep.subr.mxu0 0.0
    %3372 = vmatpush1.msra.mxu0 0.0
    %3373 = vmatprep.subr.mxu0 0.0
    %3374 = vmatpush1.msra.mxu0 0.0
    %3375 = vmatprep.subr.mxu0 0.0
    %3376 = vmatpush1.msra.mxu0 0.0
    %3377 = vmatprep.subr.mxu0 0.0
    %3378 = vmatpush1.msra.mxu0 0.0
    %3379 = vmatprep.subr.mxu0 0.0
    %3380 = vmatpush1.msra.mxu0 0.0
    %3381 = vmatprep.subr.mxu0 0.0
    %3382 = vmatpush1.msra.mxu0 0.0
    %3383 = vmatprep.subr.mxu0 0.0
    %3384 = vmatpush1.msra.mxu0 0.0
    %3385 = vmatprep.subr.mxu0 0.0
    %3386 = vmatpush1.msra.mxu0 0.0
    %3387 = vmatprep.subr.mxu0 0.0
    %3388 = vmatpush1.msra.mxu0 0.0
    %3389 = vmatprep.subr.mxu0 0.0
    %3390 = vmatpush1.msra.mxu0 0.0
    %3391 = vmatprep.subr.mxu0 0.0
    %3392 = vmatpush1.msra.mxu0 0.0
    %3393 = vmatprep.subr.mxu0 0.0
    %3394 = vmatpush1.msra.mxu0 0.0
    %3395 = vmatprep.subr.mxu0 0.0
    %3396 = vmatpush1.msra.mxu0 0.0
    %3397 = vmatprep.subr.mxu0 0.0
    %3398 = vmatpush1.msra.mxu0 0.0
    %3399 = vmatprep.subr.mxu0 0.0
    %3400 = vmatpush1.msra.mxu0 0.0
    %3401 = vmatprep.mubr.f32.mxu0 0.0
    %3402 = vmatmul.mubr.f32.gmra.mrb[0].mxu0 %v3335
    %v3403 = vpop.f32.mrb[0].mxu0
    %v3404 = vadd.f32 0.0, %v3403
    %v3405 = vpop.f32.mrb[0].mxu0
    %3406 = vdwg.mxu0
    %s3407 = scalar_lea.vmem %s9, 4
    %v3408 = vld [vmem:[%s3407] sm:$0x3]
    %3410 = vset.pattern.permute.xlu0 0
    %3411 = vperm.xlu0 %3410, %v3408
    %v3412 = vpop.permute.xlu0 %3411
    %v3414 = vmul.f32 %v3412, %v3404
    %v3415 = vsub.f32 1.0, %v3408
    %3417 = vset.pattern.permute.xlu0 0
    %3418 = vperm.xlu0 %3417, %v3415
    %v3419 = vpop.permute.xlu0 %3418
    %v3421 = vmul.f32 %v3419, %v3323
    %v3422 = vadd.f32 %v3414, %v3421
    %v3423 = vld [vmem:[%s23] sm:$0xff]
    %v3424 = vld [vmem:[%s23 + $0x8] sm:$0xff]
    %v3425 = vld [vmem:[%s23 + $0x10] sm:$0xff]
    %v3426 = vld [vmem:[%s23 + $0x18] sm:$0xff]
    %3427 = vmatprep.subr.mxu0 0.0
    %3428 = vmatpush1.msra.mxu0 %v3423
    %3429 = vmatprep.subr.mxu0 0.0
    %3430 = vmatpush1.msra.mxu0 %v3424
    %3431 = vmatprep.subr.mxu0 0.0
    %3432 = vmatpush1.msra.mxu0 %v3425
    %3433 = vmatprep.subr.mxu0 0.0
    %3434 = vmatpush1.msra.mxu0 %v3426
    %3435 = vmatprep.subr.mxu0 0.0
    %3436 = vmatpush1.msra.mxu0 0.0
    %3437 = vmatprep.subr.mxu0 0.0
    %3438 = vmatpush1.msra.mxu0 0.0
    %3439 = vmatprep.subr.mxu0 0.0
    %3440 = vmatpush1.msra.mxu0 0.0
    %3441 = vmatprep.subr.mxu0 0.0
    %3442 = vmatpush1.msra.mxu0 0.0
    %3443 = vmatprep.subr.mxu0 0.0
    %3444 = vmatpush1.msra.mxu0 0.0
    %3445 = vmatprep.subr.mxu0 0.0
    %3446 = vmatpush1.msra.mxu0 0.0
    %3447 = vmatprep.subr.mxu0 0.0
    %3448 = vmatpush1.msra.mxu0 0.0
    %3449 = vmatprep.subr.mxu0 0.0
    %3450 = vmatpush1.msra.mxu0 0.0
    %3451 = vmatprep.subr.mxu0 0.0
    %3452 = vmatpush1.msra.mxu0 0.0
    %3453 = vmatprep.subr.mxu0 0.0
    %3454 = vmatpush1.msra.mxu0 0.0
    %3455 = vmatprep.subr.mxu0 0.0
    %3456 = vmatpush1.msra.mxu0 0.0
    %3457 = vmatprep.subr.mxu0 0.0
    %3458 = vmatpush1.msra.mxu0 0.0
    %3459 = vmatprep.subr.mxu0 0.0
    %3460 = vmatpush1.msra.mxu0 0.0
    %3461 = vmatprep.subr.mxu0 0.0
    %3462 = vmatpush1.msra.mxu0 0.0
    %3463 = vmatprep.subr.mxu0 0.0
    %3464 = vmatpush1.msra.mxu0 0.0
    %3465 = vmatprep.subr.mxu0 0.0
    %3466 = vmatpush1.msra.mxu0 0.0
    %3467 = vmatprep.subr.mxu0 0.0
    %3468 = vmatpush1.msra.mxu0 0.0
    %3469 = vmatprep.subr.mxu0 0.0
    %3470 = vmatpush1.msra.mxu0 0.0
    %3471 = vmatprep.subr.mxu0 0.0
    %3472 = vmatpush1.msra.mxu0 0.0
    %3473 = vmatprep.subr.mxu0 0.0
    %3474 = vmatpush1.msra.mxu0 0.0
    %3475 = vmatprep.subr.mxu0 0.0
    %3476 = vmatpush1.msra.mxu0 0.0
    %3477 = vmatprep.subr.mxu0 0.0
    %3478 = vmatpush1.msra.mxu0 0.0
    %3479 = vmatprep.subr.mxu0 0.0
    %3480 = vmatpush1.msra.mxu0 0.0
    %3481 = vmatprep.subr.mxu0 0.0
    %3482 = vmatpush1.msra.mxu0 0.0
    %3483 = vmatprep.subr.mxu0 0.0
    %3484 = vmatpush1.msra.mxu0 0.0
    %3485 = vmatprep.subr.mxu0 0.0
    %3486 = vmatpush1.msra.mxu0 0.0
    %3487 = vmatprep.subr.mxu0 0.0
    %3488 = vmatpush1.msra.mxu0 0.0
    %3489 = vmatprep.subr.mxu0 0.0
    %3490 = vmatpush1.msra.mxu0 0.0
    %3491 = vmatprep.mubr.f32.mxu0 0.0
    %3492 = vmatmul.mubr.f32.gmra.mrb[0].mxu0 %v3073
    %v3493 = vpop.f32.mrb[0].mxu0
    %v3494 = vadd.f32 0.0, %v3493
    %v3495 = vpop.f32.mrb[0].mxu0
    %3496 = vdwg.mxu0
    %v3499 = vunpack.c.l.s4 1966171168
    %v3500 = vunpack.c.0.s8 %v3499
    %v3501 = vlaneseq
    %v3502 = vshrl.u32 %v3501, 7
    %v3503 = vsub.s32 %v3500, %v3502
    %v3504 = vrot.slane %v3494, %v3503
    %v3505 = vcombine.high %v3504, %v3504
    %v3507 = vunpack.c.l.s4 1966171168
    %v3508 = vunpack.c.0.s8 %v3507
    %v3509 = vlaneseq
    %v3510 = vshrl.u32 %v3509, 7
    %v3511 = vsub.s32 %v3508, %v3510
    %v3512 = vrot.slane %v3504, %v3511
    %v3514 = vunpack.c.l.s4 1966171168
    %v3515 = vunpack.c.0.s8 %v3514
    %v3516 = vlaneseq
    %v3517 = vshrl.u32 %v3516, 7
    %v3518 = vsub.s32 %v3515, %v3517
    %v3519 = vrot.slane %v3505, %v3518
    %v3520 = vlaneseq
    %v3521 = vshrl.u32 %v3520, 7
    %v3522 = vsub.s32 0, %v3521
    %v3523 = vrot.slane %v3512, %v3522
    %v3524 = vlaneseq
    %v3525 = vshrl.u32 %v3524, 7
    %v3526 = vsub.s32 0, %v3525
    %v3527 = vrot.slane %v3519, %v3526
    %v3530 = vadd.f32 %v592, %v3523
    %v3531 = vadd.f32 %v597, %v3527
    %v3532 = vtanh.pop %v3530
    %v3533 = vtanh.pop %v3531
    %v3534 = vmul.f32 %v3532, %v809
    %v3535 = vmul.f32 %v3533, %v809
    %v3536 = vsel %vm410, %v3534, 0.0
    %3537 = vadd.xlane.f32.xlu0 %v3536
    %v3538 = vpop.xlane.xlu0 %3537
    %v3539 = vsel %vm410, %v3535, 0.0
    %3540 = vadd.xlane.f32.xlu0 %v3539
    %v3541 = vpop.xlane.xlu0 %3540
    %v3544 = vlaneseq
    %v3545 = vshrl.u32 %v3544, 7
    %v3546 = vsub.s32 %v254, %v3545
    %v3547 = vrot.slane %v3538, %v3546
    %v3548 = vlaneseq
    %v3549 = vshrl.u32 %v3548, 7
    %v3550 = vsub.s32 %v254, %v3549
    %v3551 = vrot.slane %v3541, %v3550
    %v3552 = vsel %vm829, %v3551, %v3547
    %v3554 = vsel %vm832, %v3552, -inf
    %3555 = vmax.xlane.f32.xlu0 %v3554
    %v3556 = vpop.xlane.xlu0 %3555
    %v3558 = vlaneseq
    %v3559 = vshrl.u32 %v3558, 7
    %v3560 = vsub.s32 0, %v3559
    %v3561 = vrot.slane %v3556, %v3560
    %v3562 = vlaneseq
    %v3563 = vshrl.u32 %v3562, 7
    %v3564 = vsub.s32 1, %v3563
    %v3565 = vrot.slane %v3556, %v3564
    %v3568 = vsub.f32 %v3538, %v3561
    %v3569 = vsub.f32 %v3541, %v3565
    %v3570 = vmul.f32 %v3568, 1.442695
    %v3571 = vpow.pop %v3570
    %v3572 = vmul.f32 %v3569, 1.442695
    %v3573 = vpow.pop %v3572
    %3576 = vset.pattern.permute.xlu0 0
    %3577 = vperm.xlu0 %3576, %v3571
    %v3578 = vpop.permute.xlu0 %3577
    %3579 = vset.pattern.permute.xlu0 0
    %3580 = vperm.xlu0 %3579, %v3573
    %v3581 = vpop.permute.xlu0 %3580
    %v3582 = vlaneseq
    %v3583 = vshrl.u32 %v3582, 7
    %v3584 = vsub.s32 %v254, %v3583
    %v3585 = vrot.slane %v3578, %v3584
    %v3586 = vlaneseq
    %v3587 = vshrl.u32 %v3586, 7
    %v3588 = vsub.s32 %v254, %v3587
    %v3589 = vrot.slane %v3581, %v3588
    %v3590 = vsel %vm829, %v3589, %v3585
    %v3592 = vsel %vm832, %v3590, 0.0
    %3593 = vadd.xlane.f32.xlu0 %v3592
    %v3594 = vpop.xlane.xlu0 %3593
    %v3595 = vrcp.pop %v3594
    %v3597 = vlaneseq
    %v3598 = vshrl.u32 %v3597, 7
    %v3599 = vsub.s32 0, %v3598
    %v3600 = vrot.slane %v3595, %v3599
    %v3601 = vlaneseq
    %v3602 = vshrl.u32 %v3601, 7
    %v3603 = vsub.s32 1, %v3602
    %v3604 = vrot.slane %v3595, %v3603
    %v3607 = vmul.f32 %v3571, %v3600
    %v3608 = vmul.f32 %v3573, %v3604
    %3610 = vset.pattern.permute.xlu0 0
    %3611 = vperm.xlu0 %3610, %v3607
    %v3612 = vpop.permute.xlu0 %3611
    %3615 = vset.pattern.permute.xlu0 0
    %3616 = vperm.xlu0 %3615, %v3608
    %v3617 = vpop.permute.xlu0 %3616
    %v3619 = vmul.f32 %v3612, %v506
    %v3620 = vmul.f32 %v3617, %v507
    %v3621 = vsel %vm410, %v3619, 0.0
    %v3622 = vrot.slane %v3621, 4
    %v3623 = vadd.f32 %v3621, %v3622
    %v3624 = vrot.slane %v3623, 2
    %v3625 = vadd.f32 %v3623, %v3624
    %v3626 = vrot.slane %v3625, 1
    %v3627 = vadd.f32 %v3625, %v3626
    %v3628 = vsel %vm410, %v3620, 0.0
    %v3629 = vrot.slane %v3628, 4
    %v3630 = vadd.f32 %v3628, %v3629
    %v3631 = vrot.slane %v3630, 2
    %v3632 = vadd.f32 %v3630, %v3631
    %v3633 = vrot.slane %v3632, 1
    %v3634 = vadd.f32 %v3632, %v3633
    %v3635 = vld [vmem:[%s29] sm:$0xff]
    %v3636 = vld [vmem:[%s29 + $0x8] sm:$0xff]
    %v3637 = vld [vmem:[%s29 + $0x10] sm:$0xff]
    %v3638 = vld [vmem:[%s29 + $0x18] sm:$0xff]
    %v3639 = vld [vmem:[%s35] sm:$0xff]
    %v3640 = vld [vmem:[%s35 + $0x8] sm:$0xff]
    %v3641 = vld [vmem:[%s35 + $0x10] sm:$0xff]
    %v3642 = vld [vmem:[%s35 + $0x18] sm:$0xff]
    %v3645 = vsel %vm829, %v3634, %v3627
    %v3646 = vsel %vm410, %v3645, 0
    %3648 = vmatprep.subr.mxu0 0.0
    %3649 = vmatpush1.msra.mxu0 %v3639
    %3650 = vmatprep.subr.mxu0 0.0
    %3651 = vmatpush1.msra.mxu0 %v3640
    %3652 = vmatprep.subr.mxu0 0.0
    %3653 = vmatpush1.msra.mxu0 %v3641
    %3654 = vmatprep.subr.mxu0 0.0
    %3655 = vmatpush1.msra.mxu0 %v3642
    %3656 = vmatprep.subr.mxu0 0.0
    %3657 = vmatpush1.msra.mxu0 0.0
    %3658 = vmatprep.subr.mxu0 0.0
    %3659 = vmatpush1.msra.mxu0 0.0
    %3660 = vmatprep.subr.mxu0 0.0
    %3661 = vmatpush1.msra.mxu0 0.0
    %3662 = vmatprep.subr.mxu0 0.0
    %3663 = vmatpush1.msra.mxu0 0.0
    %3664 = vmatprep.subr.mxu0 0.0
    %3665 = vmatpush1.msra.mxu0 0.0
    %3666 = vmatprep.subr.mxu0 0.0
    %3667 = vmatpush1.msra.mxu0 0.0
    %3668 = vmatprep.subr.mxu0 0.0
    %3669 = vmatpush1.msra.mxu0 0.0
    %3670 = vmatprep.subr.mxu0 0.0
    %3671 = vmatpush1.msra.mxu0 0.0
    %3672 = vmatprep.subr.mxu0 0.0
    %3673 = vmatpush1.msra.mxu0 0.0
    %3674 = vmatprep.subr.mxu0 0.0
    %3675 = vmatpush1.msra.mxu0 0.0
    %3676 = vmatprep.subr.mxu0 0.0
    %3677 = vmatpush1.msra.mxu0 0.0
    %3678 = vmatprep.subr.mxu0 0.0
    %3679 = vmatpush1.msra.mxu0 0.0
    %3680 = vmatprep.subr.mxu0 0.0
    %3681 = vmatpush1.msra.mxu0 0.0
    %3682 = vmatprep.subr.mxu0 0.0
    %3683 = vmatpush1.msra.mxu0 0.0
    %3684 = vmatprep.subr.mxu0 0.0
    %3685 = vmatpush1.msra.mxu0 0.0
    %3686 = vmatprep.subr.mxu0 0.0
    %3687 = vmatpush1.msra.mxu0 0.0
    %3688 = vmatprep.subr.mxu0 0.0
    %3689 = vmatpush1.msra.mxu0 0.0
    %3690 = vmatprep.subr.mxu0 0.0
    %3691 = vmatpush1.msra.mxu0 0.0
    %3692 = vmatprep.subr.mxu0 0.0
    %3693 = vmatpush1.msra.mxu0 0.0
    %3694 = vmatprep.subr.mxu0 0.0
    %3695 = vmatpush1.msra.mxu0 0.0
    %3696 = vmatprep.subr.mxu0 0.0
    %3697 = vmatpush1.msra.mxu0 0.0
    %3698 = vmatprep.subr.mxu0 0.0
    %3699 = vmatpush1.msra.mxu0 0.0
    %3700 = vmatprep.subr.mxu0 0.0
    %3701 = vmatpush1.msra.mxu0 0.0
    %3702 = vmatprep.subr.mxu0 0.0
    %3703 = vmatpush1.msra.mxu0 0.0
    %3704 = vmatprep.subr.mxu0 0.0
    %3705 = vmatpush1.msra.mxu0 0.0
    %3706 = vmatprep.subr.mxu0 0.0
    %3707 = vmatpush1.msra.mxu0 0.0
    %3708 = vmatprep.subr.mxu0 0.0
    %3709 = vmatpush1.msra.mxu0 0.0
    %3710 = vmatprep.subr.mxu0 0.0
    %3711 = vmatpush1.msra.mxu0 0.0
    %3712 = vmatprep.mubr.f32.mxu0 0.0
    %3713 = vmatmul.mubr.f32.gmra.mrb[0].mxu0 %v3646
    %v3714 = vpop.f32.mrb[0].mxu0
    %v3715 = vadd.f32 0.0, %v3714
    %v3716 = vpop.f32.mrb[0].mxu0
    %3717 = vdwg.mxu0
    %v3719 = vsel %vm410, %v3422, 0
    %3721 = vmatprep.subr.mxu0 0.0
    %3722 = vmatpush1.msra.mxu0 %v3635
    %3723 = vmatprep.subr.mxu0 0.0
    %3724 = vmatpush1.msra.mxu0 %v3636
    %3725 = vmatprep.subr.mxu0 0.0
    %3726 = vmatpush1.msra.mxu0 %v3637
    %3727 = vmatprep.subr.mxu0 0.0
    %3728 = vmatpush1.msra.mxu0 %v3638
    %3729 = vmatprep.subr.mxu0 0.0
    %3730 = vmatpush1.msra.mxu0 0.0
    %3731 = vmatprep.subr.mxu0 0.0
    %3732 = vmatpush1.msra.mxu0 0.0
    %3733 = vmatprep.subr.mxu0 0.0
    %3734 = vmatpush1.msra.mxu0 0.0
    %3735 = vmatprep.subr.mxu0 0.0
    %3736 = vmatpush1.msra.mxu0 0.0
    %3737 = vmatprep.subr.mxu0 0.0
    %3738 = vmatpush1.msra.mxu0 0.0
    %3739 = vmatprep.subr.mxu0 0.0
    %3740 = vmatpush1.msra.mxu0 0.0
    %3741 = vmatprep.subr.mxu0 0.0
    %3742 = vmatpush1.msra.mxu0 0.0
    %3743 = vmatprep.subr.mxu0 0.0
    %3744 = vmatpush1.msra.mxu0 0.0
    %3745 = vmatprep.subr.mxu0 0.0
    %3746 = vmatpush1.msra.mxu0 0.0
    %3747 = vmatprep.subr.mxu0 0.0
    %3748 = vmatpush1.msra.mxu0 0.0
    %3749 = vmatprep.subr.mxu0 0.0
    %3750 = vmatpush1.msra.mxu0 0.0
    %3751 = vmatprep.subr.mxu0 0.0
    %3752 = vmatpush1.msra.mxu0 0.0
    %3753 = vmatprep.subr.mxu0 0.0
    %3754 = vmatpush1.msra.mxu0 0.0
    %3755 = vmatprep.subr.mxu0 0.0
    %3756 = vmatpush1.msra.mxu0 0.0
    %3757 = vmatprep.subr.mxu0 0.0
    %3758 = vmatpush1.msra.mxu0 0.0
    %3759 = vmatprep.subr.mxu0 0.0
    %3760 = vmatpush1.msra.mxu0 0.0
    %3761 = vmatprep.subr.mxu0 0.0
    %3762 = vmatpush1.msra.mxu0 0.0
    %3763 = vmatprep.subr.mxu0 0.0
    %3764 = vmatpush1.msra.mxu0 0.0
    %3765 = vmatprep.subr.mxu0 0.0
    %3766 = vmatpush1.msra.mxu0 0.0
    %3767 = vmatprep.subr.mxu0 0.0
    %3768 = vmatpush1.msra.mxu0 0.0
    %3769 = vmatprep.subr.mxu0 0.0
    %3770 = vmatpush1.msra.mxu0 0.0
    %3771 = vmatprep.subr.mxu0 0.0
    %3772 = vmatpush1.msra.mxu0 0.0
    %3773 = vmatprep.subr.mxu0 0.0
    %3774 = vmatpush1.msra.mxu0 0.0
    %3775 = vmatprep.subr.mxu0 0.0
    %3776 = vmatpush1.msra.mxu0 0.0
    %3777 = vmatprep.subr.mxu0 0.0
    %3778 = vmatpush1.msra.mxu0 0.0
    %3779 = vmatprep.subr.mxu0 0.0
    %3780 = vmatpush1.msra.mxu0 0.0
    %3781 = vmatprep.subr.mxu0 0.0
    %3782 = vmatpush1.msra.mxu0 0.0
    %3783 = vmatprep.subr.mxu0 0.0
    %3784 = vmatpush1.msra.mxu0 0.0
    %3785 = vmatprep.mubr.f32.mxu0 0.0
    %3786 = vmatmul.mubr.f32.gmra.mrb[0].mxu0 %v3719
    %v3787 = vpop.f32.mrb[0].mxu0
    %v3788 = vadd.f32 %v3715, %v3787
    %v3789 = vpop.f32.mrb[0].mxu0
    %3790 = vdwg.mxu0
    %v3791 = vld [vmem:[#allocation10] sm:$0x1]
    %v3793 = vlaneseq
    %v3794 = vshrl.u32 %v3793, 7
    %v3795 = vsub.s32 0, %v3794
    %v3796 = vrot.slane %v3791, %v3795
    %v3798 = vadd.f32 %v3788, %v3796
    %v3799 = vld [vmem:[%s41] sm:$0xff]
    %v3800 = vld [vmem:[%s41 + $0x8] sm:$0xff]
    %v3801 = vld [vmem:[%s41 + $0x10] sm:$0xff]
    %v3802 = vld [vmem:[%s41 + $0x18] sm:$0xff]
    %3803 = vmatprep.subr.mxu0 0.0
    %3804 = vmatpush1.msra.mxu0 %v3799
    %3805 = vmatprep.subr.mxu0 0.0
    %3806 = vmatpush1.msra.mxu0 %v3800
    %3807 = vmatprep.subr.mxu0 0.0
    %3808 = vmatpush1.msra.mxu0 %v3801
    %3809 = vmatprep.subr.mxu0 0.0
    %3810 = vmatpush1.msra.mxu0 %v3802
    %3811 = vmatprep.subr.mxu0 0.0
    %3812 = vmatpush1.msra.mxu0 0.0
    %3813 = vmatprep.subr.mxu0 0.0
    %3814 = vmatpush1.msra.mxu0 0.0
    %3815 = vmatprep.subr.mxu0 0.0
    %3816 = vmatpush1.msra.mxu0 0.0
    %3817 = vmatprep.subr.mxu0 0.0
    %3818 = vmatpush1.msra.mxu0 0.0
    %3819 = vmatprep.subr.mxu0 0.0
    %3820 = vmatpush1.msra.mxu0 0.0
    %3821 = vmatprep.subr.mxu0 0.0
    %3822 = vmatpush1.msra.mxu0 0.0
    %3823 = vmatprep.subr.mxu0 0.0
    %3824 = vmatpush1.msra.mxu0 0.0
    %3825 = vmatprep.subr.mxu0 0.0
    %3826 = vmatpush1.msra.mxu0 0.0
    %3827 = vmatprep.subr.mxu0 0.0
    %3828 = vmatpush1.msra.mxu0 0.0
    %3829 = vmatprep.subr.mxu0 0.0
    %3830 = vmatpush1.msra.mxu0 0.0
    %3831 = vmatprep.subr.mxu0 0.0
    %3832 = vmatpush1.msra.mxu0 0.0
    %3833 = vmatprep.subr.mxu0 0.0
    %3834 = vmatpush1.msra.mxu0 0.0
    %3835 = vmatprep.subr.mxu0 0.0
    %3836 = vmatpush1.msra.mxu0 0.0
    %3837 = vmatprep.subr.mxu0 0.0
    %3838 = vmatpush1.msra.mxu0 0.0
    %3839 = vmatprep.subr.mxu0 0.0
    %3840 = vmatpush1.msra.mxu0 0.0
    %3841 = vmatprep.subr.mxu0 0.0
    %3842 = vmatpush1.msra.mxu0 0.0
    %3843 = vmatprep.subr.mxu0 0.0
    %3844 = vmatpush1.msra.mxu0 0.0
    %3845 = vmatprep.subr.mxu0 0.0
    %3846 = vmatpush1.msra.mxu0 0.0
    %3847 = vmatprep.subr.mxu0 0.0
    %3848 = vmatpush1.msra.mxu0 0.0
    %3849 = vmatprep.subr.mxu0 0.0
    %3850 = vmatpush1.msra.mxu0 0.0
    %3851 = vmatprep.subr.mxu0 0.0
    %3852 = vmatpush1.msra.mxu0 0.0
    %3853 = vmatprep.subr.mxu0 0.0
    %3854 = vmatpush1.msra.mxu0 0.0
    %3855 = vmatprep.subr.mxu0 0.0
    %3856 = vmatpush1.msra.mxu0 0.0
    %3857 = vmatprep.subr.mxu0 0.0
    %3858 = vmatpush1.msra.mxu0 0.0
    %3859 = vmatprep.subr.mxu0 0.0
    %3860 = vmatpush1.msra.mxu0 0.0
    %3861 = vmatprep.subr.mxu0 0.0
    %3862 = vmatpush1.msra.mxu0 0.0
    %3863 = vmatprep.subr.mxu0 0.0
    %3864 = vmatpush1.msra.mxu0 0.0
    %3865 = vmatprep.subr.mxu0 0.0
    %3866 = vmatpush1.msra.mxu0 0.0
    %3867 = vmatprep.mubr.f32.mxu0 0.0
    %3868 = vmatmul.mubr.f32.gmra.mrb[0].mxu0 %v3073
    %v3869 = vpop.f32.mrb[0].mxu0
    %v3870 = vadd.f32 0.0, %v3869
    %v3871 = vpop.f32.mrb[0].mxu0
    %3872 = vdwg.mxu0
    %v3873 = vadd.f32 %v3798, %v3870
    %v3874 = vxor.u32 %v3873, 2147483648
    %v3875 = vmul.f32 %v3874, 1.442695
    %v3876 = vpow.pop %v3875
    %v3877 = vadd.f32 %v3876, 1.0
    %v3878 = vrcp.pop %v3877
    %v3879 = vmul.f32 1.0, %v3878
    %v3880 = vld [vmem:[%s31] sm:$0xff]
    %v3881 = vld [vmem:[%s31 + $0x8] sm:$0xff]
    %v3882 = vld [vmem:[%s31 + $0x10] sm:$0xff]
    %v3883 = vld [vmem:[%s31 + $0x18] sm:$0xff]
    %v3884 = vld [vmem:[%s37] sm:$0xff]
    %v3885 = vld [vmem:[%s37 + $0x8] sm:$0xff]
    %v3886 = vld [vmem:[%s37 + $0x10] sm:$0xff]
    %v3887 = vld [vmem:[%s37 + $0x18] sm:$0xff]
    %3888 = vmatprep.subr.mxu0 0.0
    %3889 = vmatpush1.msra.mxu0 %v3884
    %3890 = vmatprep.subr.mxu0 0.0
    %3891 = vmatpush1.msra.mxu0 %v3885
    %3892 = vmatprep.subr.mxu0 0.0
    %3893 = vmatpush1.msra.mxu0 %v3886
    %3894 = vmatprep.subr.mxu0 0.0
    %3895 = vmatpush1.msra.mxu0 %v3887
    %3896 = vmatprep.subr.mxu0 0.0
    %3897 = vmatpush1.msra.mxu0 0.0
    %3898 = vmatprep.subr.mxu0 0.0
    %3899 = vmatpush1.msra.mxu0 0.0
    %3900 = vmatprep.subr.mxu0 0.0
    %3901 = vmatpush1.msra.mxu0 0.0
    %3902 = vmatprep.subr.mxu0 0.0
    %3903 = vmatpush1.msra.mxu0 0.0
    %3904 = vmatprep.subr.mxu0 0.0
    %3905 = vmatpush1.msra.mxu0 0.0
    %3906 = vmatprep.subr.mxu0 0.0
    %3907 = vmatpush1.msra.mxu0 0.0
    %3908 = vmatprep.subr.mxu0 0.0
    %3909 = vmatpush1.msra.mxu0 0.0
    %3910 = vmatprep.subr.mxu0 0.0
    %3911 = vmatpush1.msra.mxu0 0.0
    %3912 = vmatprep.subr.mxu0 0.0
    %3913 = vmatpush1.msra.mxu0 0.0
    %3914 = vmatprep.subr.mxu0 0.0
    %3915 = vmatpush1.msra.mxu0 0.0
    %3916 = vmatprep.subr.mxu0 0.0
    %3917 = vmatpush1.msra.mxu0 0.0
    %3918 = vmatprep.subr.mxu0 0.0
    %3919 = vmatpush1.msra.mxu0 0.0
    %3920 = vmatprep.subr.mxu0 0.0
    %3921 = vmatpush1.msra.mxu0 0.0
    %3922 = vmatprep.subr.mxu0 0.0
    %3923 = vmatpush1.msra.mxu0 0.0
    %3924 = vmatprep.subr.mxu0 0.0
    %3925 = vmatpush1.msra.mxu0 0.0
    %3926 = vmatprep.subr.mxu0 0.0
    %3927 = vmatpush1.msra.mxu0 0.0
    %3928 = vmatprep.subr.mxu0 0.0
    %3929 = vmatpush1.msra.mxu0 0.0
    %3930 = vmatprep.subr.mxu0 0.0
    %3931 = vmatpush1.msra.mxu0 0.0
    %3932 = vmatprep.subr.mxu0 0.0
    %3933 = vmatpush1.msra.mxu0 0.0
    %3934 = vmatprep.subr.mxu0 0.0
    %3935 = vmatpush1.msra.mxu0 0.0
    %3936 = vmatprep.subr.mxu0 0.0
    %3937 = vmatpush1.msra.mxu0 0.0
    %3938 = vmatprep.subr.mxu0 0.0
    %3939 = vmatpush1.msra.mxu0 0.0
    %3940 = vmatprep.subr.mxu0 0.0
    %3941 = vmatpush1.msra.mxu0 0.0
    %3942 = vmatprep.subr.mxu0 0.0
    %3943 = vmatpush1.msra.mxu0 0.0
    %3944 = vmatprep.subr.mxu0 0.0
    %3945 = vmatpush1.msra.mxu0 0.0
    %3946 = vmatprep.subr.mxu0 0.0
    %3947 = vmatpush1.msra.mxu0 0.0
    %3948 = vmatprep.subr.mxu0 0.0
    %3949 = vmatpush1.msra.mxu0 0.0
    %3950 = vmatprep.subr.mxu0 0.0
    %3951 = vmatpush1.msra.mxu0 0.0
    %3952 = vmatprep.mubr.f32.mxu0 0.0
    %3953 = vmatmul.mubr.f32.gmra.mrb[0].mxu0 %v3646
    %v3954 = vpop.f32.mrb[0].mxu0
    %v3955 = vadd.f32 0.0, %v3954
    %v3956 = vpop.f32.mrb[0].mxu0
    %3957 = vdwg.mxu0
    %3958 = vmatprep.subr.mxu0 0.0
    %3959 = vmatpush1.msra.mxu0 %v3880
    %3960 = vmatprep.subr.mxu0 0.0
    %3961 = vmatpush1.msra.mxu0 %v3881
    %3962 = vmatprep.subr.mxu0 0.0
    %3963 = vmatpush1.msra.mxu0 %v3882
    %3964 = vmatprep.subr.mxu0 0.0
    %3965 = vmatpush1.msra.mxu0 %v3883
    %3966 = vmatprep.subr.mxu0 0.0
    %3967 = vmatpush1.msra.mxu0 0.0
    %3968 = vmatprep.subr.mxu0 0.0
    %3969 = vmatpush1.msra.mxu0 0.0
    %3970 = vmatprep.subr.mxu0 0.0
    %3971 = vmatpush1.msra.mxu0 0.0
    %3972 = vmatprep.subr.mxu0 0.0
    %3973 = vmatpush1.msra.mxu0 0.0
    %3974 = vmatprep.subr.mxu0 0.0
    %3975 = vmatpush1.msra.mxu0 0.0
    %3976 = vmatprep.subr.mxu0 0.0
    %3977 = vmatpush1.msra.mxu0 0.0
    %3978 = vmatprep.subr.mxu0 0.0
    %3979 = vmatpush1.msra.mxu0 0.0
    %3980 = vmatprep.subr.mxu0 0.0
    %3981 = vmatpush1.msra.mxu0 0.0
    %3982 = vmatprep.subr.mxu0 0.0
    %3983 = vmatpush1.msra.mxu0 0.0
    %3984 = vmatprep.subr.mxu0 0.0
    %3985 = vmatpush1.msra.mxu0 0.0
    %3986 = vmatprep.subr.mxu0 0.0
    %3987 = vmatpush1.msra.mxu0 0.0
    %3988 = vmatprep.subr.mxu0 0.0
    %3989 = vmatpush1.msra.mxu0 0.0
    %3990 = vmatprep.subr.mxu0 0.0
    %3991 = vmatpush1.msra.mxu0 0.0
    %3992 = vmatprep.subr.mxu0 0.0
    %3993 = vmatpush1.msra.mxu0 0.0
    %3994 = vmatprep.subr.mxu0 0.0
    %3995 = vmatpush1.msra.mxu0 0.0
    %3996 = vmatprep.subr.mxu0 0.0
    %3997 = vmatpush1.msra.mxu0 0.0
    %3998 = vmatprep.subr.mxu0 0.0
    %3999 = vmatpush1.msra.mxu0 0.0
    %4000 = vmatprep.subr.mxu0 0.0
    %4001 = vmatpush1.msra.mxu0 0.0
    %4002 = vmatprep.subr.mxu0 0.0
    %4003 = vmatpush1.msra.mxu0 0.0
    %4004 = vmatprep.subr.mxu0 0.0
    %4005 = vmatpush1.msra.mxu0 0.0
    %4006 = vmatprep.subr.mxu0 0.0
    %4007 = vmatpush1.msra.mxu0 0.0
    %4008 = vmatprep.subr.mxu0 0.0
    %4009 = vmatpush1.msra.mxu0 0.0
    %4010 = vmatprep.subr.mxu0 0.0
    %4011 = vmatpush1.msra.mxu0 0.0
    %4012 = vmatprep.subr.mxu0 0.0
    %4013 = vmatpush1.msra.mxu0 0.0
    %4014 = vmatprep.subr.mxu0 0.0
    %4015 = vmatpush1.msra.mxu0 0.0
    %4016 = vmatprep.subr.mxu0 0.0
    %4017 = vmatpush1.msra.mxu0 0.0
    %4018 = vmatprep.subr.mxu0 0.0
    %4019 = vmatpush1.msra.mxu0 0.0
    %4020 = vmatprep.subr.mxu0 0.0
    %4021 = vmatpush1.msra.mxu0 0.0
    %4022 = vmatprep.mubr.f32.mxu0 0.0
    %4023 = vmatmul.mubr.f32.gmra.mrb[0].mxu0 %v3719
    %v4024 = vpop.f32.mrb[0].mxu0
    %v4025 = vadd.f32 %v3955, %v4024
    %v4026 = vpop.f32.mrb[0].mxu0
    %4027 = vdwg.mxu0
    %v4028 = vld [vmem:[#allocation11] sm:$0x1]
    %v4030 = vlaneseq
    %v4031 = vshrl.u32 %v4030, 7
    %v4032 = vsub.s32 0, %v4031
    %v4033 = vrot.slane %v4028, %v4032
    %v4035 = vadd.f32 %v4025, %v4033
    %v4036 = vld [vmem:[#allocation7] sm:$0xff]
    %v4037 = vld [vmem:[#allocation7 + $0x8] sm:$0xff]
    %v4038 = vld [vmem:[#allocation7 + $0x10] sm:$0xff]
    %v4039 = vld [vmem:[#allocation7 + $0x18] sm:$0xff]
    %4040 = vmatprep.subr.mxu0 0.0
    %4041 = vmatpush1.msra.mxu0 %v4036
    %4042 = vmatprep.subr.mxu0 0.0
    %4043 = vmatpush1.msra.mxu0 %v4037
    %4044 = vmatprep.subr.mxu0 0.0
    %4045 = vmatpush1.msra.mxu0 %v4038
    %4046 = vmatprep.subr.mxu0 0.0
    %4047 = vmatpush1.msra.mxu0 %v4039
    %4048 = vmatprep.subr.mxu0 0.0
    %4049 = vmatpush1.msra.mxu0 0.0
    %4050 = vmatprep.subr.mxu0 0.0
    %4051 = vmatpush1.msra.mxu0 0.0
    %4052 = vmatprep.subr.mxu0 0.0
    %4053 = vmatpush1.msra.mxu0 0.0
    %4054 = vmatprep.subr.mxu0 0.0
    %4055 = vmatpush1.msra.mxu0 0.0
    %4056 = vmatprep.subr.mxu0 0.0
    %4057 = vmatpush1.msra.mxu0 0.0
    %4058 = vmatprep.subr.mxu0 0.0
    %4059 = vmatpush1.msra.mxu0 0.0
    %4060 = vmatprep.subr.mxu0 0.0
    %4061 = vmatpush1.msra.mxu0 0.0
    %4062 = vmatprep.subr.mxu0 0.0
    %4063 = vmatpush1.msra.mxu0 0.0
    %4064 = vmatprep.subr.mxu0 0.0
    %4065 = vmatpush1.msra.mxu0 0.0
    %4066 = vmatprep.subr.mxu0 0.0
    %4067 = vmatpush1.msra.mxu0 0.0
    %4068 = vmatprep.subr.mxu0 0.0
    %4069 = vmatpush1.msra.mxu0 0.0
    %4070 = vmatprep.subr.mxu0 0.0
    %4071 = vmatpush1.msra.mxu0 0.0
    %4072 = vmatprep.subr.mxu0 0.0
    %4073 = vmatpush1.msra.mxu0 0.0
    %4074 = vmatprep.subr.mxu0 0.0
    %4075 = vmatpush1.msra.mxu0 0.0
    %4076 = vmatprep.subr.mxu0 0.0
    %4077 = vmatpush1.msra.mxu0 0.0
    %4078 = vmatprep.subr.mxu0 0.0
    %4079 = vmatpush1.msra.mxu0 0.0
    %4080 = vmatprep.subr.mxu0 0.0
    %4081 = vmatpush1.msra.mxu0 0.0
    %4082 = vmatprep.subr.mxu0 0.0
    %4083 = vmatpush1.msra.mxu0 0.0
    %4084 = vmatprep.subr.mxu0 0.0
    %4085 = vmatpush1.msra.mxu0 0.0
    %4086 = vmatprep.subr.mxu0 0.0
    %4087 = vmatpush1.msra.mxu0 0.0
    %4088 = vmatprep.subr.mxu0 0.0
    %4089 = vmatpush1.msra.mxu0 0.0
    %4090 = vmatprep.subr.mxu0 0.0
    %4091 = vmatpush1.msra.mxu0 0.0
    %4092 = vmatprep.subr.mxu0 0.0
    %4093 = vmatpush1.msra.mxu0 0.0
    %4094 = vmatprep.subr.mxu0 0.0
    %4095 = vmatpush1.msra.mxu0 0.0
    %4096 = vmatprep.subr.mxu0 0.0
    %4097 = vmatpush1.msra.mxu0 0.0
    %4098 = vmatprep.subr.mxu0 0.0
    %4099 = vmatpush1.msra.mxu0 0.0
    %4100 = vmatprep.subr.mxu0 0.0
    %4101 = vmatpush1.msra.mxu0 0.0
    %4102 = vmatprep.subr.mxu0 0.0
    %4103 = vmatpush1.msra.mxu0 0.0
    %4104 = vmatprep.mubr.f32.mxu0 0.0
    %4105 = vmatmul.mubr.f32.gmra.mrb[0].mxu0 %v3073
    %v4106 = vpop.f32.mrb[0].mxu0
    %v4107 = vadd.f32 0.0, %v4106
    %v4108 = vpop.f32.mrb[0].mxu0
    %4109 = vdwg.mxu0
    %v4110 = vadd.f32 %v4035, %v4107
    %v4111 = vxor.u32 %v4110, 2147483648
    %v4112 = vmul.f32 %v4111, 1.442695
    %v4113 = vpow.pop %v4112
    %v4114 = vadd.f32 %v4113, 1.0
    %v4115 = vrcp.pop %v4114
    %v4116 = vmul.f32 1.0, %v4115
    %v4117 = vld [vmem:[%s33] sm:$0xff]
    %v4118 = vld [vmem:[%s33 + $0x8] sm:$0xff]
    %v4119 = vld [vmem:[%s33 + $0x10] sm:$0xff]
    %v4120 = vld [vmem:[%s33 + $0x18] sm:$0xff]
    %v4121 = vld [vmem:[%s39] sm:$0xff]
    %v4122 = vld [vmem:[%s39 + $0x8] sm:$0xff]
    %v4123 = vld [vmem:[%s39 + $0x10] sm:$0xff]
    %v4124 = vld [vmem:[%s39 + $0x18] sm:$0xff]
    %4125 = vmatprep.subr.mxu0 0.0
    %4126 = vmatpush1.msra.mxu0 %v4121
    %4127 = vmatprep.subr.mxu0 0.0
    %4128 = vmatpush1.msra.mxu0 %v4122
    %4129 = vmatprep.subr.mxu0 0.0
    %4130 = vmatpush1.msra.mxu0 %v4123
    %4131 = vmatprep.subr.mxu0 0.0
    %4132 = vmatpush1.msra.mxu0 %v4124
    %4133 = vmatprep.subr.mxu0 0.0
    %4134 = vmatpush1.msra.mxu0 0.0
    %4135 = vmatprep.subr.mxu0 0.0
    %4136 = vmatpush1.msra.mxu0 0.0
    %4137 = vmatprep.subr.mxu0 0.0
    %4138 = vmatpush1.msra.mxu0 0.0
    %4139 = vmatprep.subr.mxu0 0.0
    %4140 = vmatpush1.msra.mxu0 0.0
    %4141 = vmatprep.subr.mxu0 0.0
    %4142 = vmatpush1.msra.mxu0 0.0
    %4143 = vmatprep.subr.mxu0 0.0
    %4144 = vmatpush1.msra.mxu0 0.0
    %4145 = vmatprep.subr.mxu0 0.0
    %4146 = vmatpush1.msra.mxu0 0.0
    %4147 = vmatprep.subr.mxu0 0.0
    %4148 = vmatpush1.msra.mxu0 0.0
    %4149 = vmatprep.subr.mxu0 0.0
    %4150 = vmatpush1.msra.mxu0 0.0
    %4151 = vmatprep.subr.mxu0 0.0
    %4152 = vmatpush1.msra.mxu0 0.0
    %4153 = vmatprep.subr.mxu0 0.0
    %4154 = vmatpush1.msra.mxu0 0.0
    %4155 = vmatprep.subr.mxu0 0.0
    %4156 = vmatpush1.msra.mxu0 0.0
    %4157 = vmatprep.subr.mxu0 0.0
    %4158 = vmatpush1.msra.mxu0 0.0
    %4159 = vmatprep.subr.mxu0 0.0
    %4160 = vmatpush1.msra.mxu0 0.0
    %4161 = vmatprep.subr.mxu0 0.0
    %4162 = vmatpush1.msra.mxu0 0.0
    %4163 = vmatprep.subr.mxu0 0.0
    %4164 = vmatpush1.msra.mxu0 0.0
    %4165 = vmatprep.subr.mxu0 0.0
    %4166 = vmatpush1.msra.mxu0 0.0
    %4167 = vmatprep.subr.mxu0 0.0
    %4168 = vmatpush1.msra.mxu0 0.0
    %4169 = vmatprep.subr.mxu0 0.0
    %4170 = vmatpush1.msra.mxu0 0.0
    %4171 = vmatprep.subr.mxu0 0.0
    %4172 = vmatpush1.msra.mxu0 0.0
    %4173 = vmatprep.subr.mxu0 0.0
    %4174 = vmatpush1.msra.mxu0 0.0
    %4175 = vmatprep.subr.mxu0 0.0
    %4176 = vmatpush1.msra.mxu0 0.0
    %4177 = vmatprep.subr.mxu0 0.0
    %4178 = vmatpush1.msra.mxu0 0.0
    %4179 = vmatprep.subr.mxu0 0.0
    %4180 = vmatpush1.msra.mxu0 0.0
    %4181 = vmatprep.subr.mxu0 0.0
    %4182 = vmatpush1.msra.mxu0 0.0
    %4183 = vmatprep.subr.mxu0 0.0
    %4184 = vmatpush1.msra.mxu0 0.0
    %4185 = vmatprep.subr.mxu0 0.0
    %4186 = vmatpush1.msra.mxu0 0.0
    %4187 = vmatprep.subr.mxu0 0.0
    %4188 = vmatpush1.msra.mxu0 0.0
    %4189 = vmatprep.mubr.f32.mxu0 0.0
    %4190 = vmatmul.mubr.f32.gmra.mrb[0].mxu0 %v3646
    %v4191 = vpop.f32.mrb[0].mxu0
    %v4192 = vadd.f32 0.0, %v4191
    %v4193 = vpop.f32.mrb[0].mxu0
    %4194 = vdwg.mxu0
    %4195 = vmatprep.subr.mxu0 0.0
    %4196 = vmatpush1.msra.mxu0 %v4117
    %4197 = vmatprep.subr.mxu0 0.0
    %4198 = vmatpush1.msra.mxu0 %v4118
    %4199 = vmatprep.subr.mxu0 0.0
    %4200 = vmatpush1.msra.mxu0 %v4119
    %4201 = vmatprep.subr.mxu0 0.0
    %4202 = vmatpush1.msra.mxu0 %v4120
    %4203 = vmatprep.subr.mxu0 0.0
    %4204 = vmatpush1.msra.mxu0 0.0
    %4205 = vmatprep.subr.mxu0 0.0
    %4206 = vmatpush1.msra.mxu0 0.0
    %4207 = vmatprep.subr.mxu0 0.0
    %4208 = vmatpush1.msra.mxu0 0.0
    %4209 = vmatprep.subr.mxu0 0.0
    %4210 = vmatpush1.msra.mxu0 0.0
    %4211 = vmatprep.subr.mxu0 0.0
    %4212 = vmatpush1.msra.mxu0 0.0
    %4213 = vmatprep.subr.mxu0 0.0
    %4214 = vmatpush1.msra.mxu0 0.0
    %4215 = vmatprep.subr.mxu0 0.0
    %4216 = vmatpush1.msra.mxu0 0.0
    %4217 = vmatprep.subr.mxu0 0.0
    %4218 = vmatpush1.msra.mxu0 0.0
    %4219 = vmatprep.subr.mxu0 0.0
    %4220 = vmatpush1.msra.mxu0 0.0
    %4221 = vmatprep.subr.mxu0 0.0
    %4222 = vmatpush1.msra.mxu0 0.0
    %4223 = vmatprep.subr.mxu0 0.0
    %4224 = vmatpush1.msra.mxu0 0.0
    %4225 = vmatprep.subr.mxu0 0.0
    %4226 = vmatpush1.msra.mxu0 0.0
    %4227 = vmatprep.subr.mxu0 0.0
    %4228 = vmatpush1.msra.mxu0 0.0
    %4229 = vmatprep.subr.mxu0 0.0
    %4230 = vmatpush1.msra.mxu0 0.0
    %4231 = vmatprep.subr.mxu0 0.0
    %4232 = vmatpush1.msra.mxu0 0.0
    %4233 = vmatprep.subr.mxu0 0.0
    %4234 = vmatpush1.msra.mxu0 0.0
    %4235 = vmatprep.subr.mxu0 0.0
    %4236 = vmatpush1.msra.mxu0 0.0
    %4237 = vmatprep.subr.mxu0 0.0
    %4238 = vmatpush1.msra.mxu0 0.0
    %4239 = vmatprep.subr.mxu0 0.0
    %4240 = vmatpush1.msra.mxu0 0.0
    %4241 = vmatprep.subr.mxu0 0.0
    %4242 = vmatpush1.msra.mxu0 0.0
    %4243 = vmatprep.subr.mxu0 0.0
    %4244 = vmatpush1.msra.mxu0 0.0
    %4245 = vmatprep.subr.mxu0 0.0
    %4246 = vmatpush1.msra.mxu0 0.0
    %4247 = vmatprep.subr.mxu0 0.0
    %4248 = vmatpush1.msra.mxu0 0.0
    %4249 = vmatprep.subr.mxu0 0.0
    %4250 = vmatpush1.msra.mxu0 0.0
    %4251 = vmatprep.subr.mxu0 0.0
    %4252 = vmatpush1.msra.mxu0 0.0
    %4253 = vmatprep.subr.mxu0 0.0
    %4254 = vmatpush1.msra.mxu0 0.0
    %4255 = vmatprep.subr.mxu0 0.0
    %4256 = vmatpush1.msra.mxu0 0.0
    %4257 = vmatprep.subr.mxu0 0.0
    %4258 = vmatpush1.msra.mxu0 0.0
    %4259 = vmatprep.mubr.f32.mxu0 0.0
    %4260 = vmatmul.mubr.f32.gmra.mrb[0].mxu0 %v3719
    %v4261 = vpop.f32.mrb[0].mxu0
    %v4262 = vadd.f32 %v4192, %v4261
    %v4263 = vpop.f32.mrb[0].mxu0
    %4264 = vdwg.mxu0
    %v4265 = vld [vmem:[#allocation13] sm:$0x1]
    %v4267 = vlaneseq
    %v4268 = vshrl.u32 %v4267, 7
    %v4269 = vsub.s32 0, %v4268
    %v4270 = vrot.slane %v4265, %v4269
    %v4272 = vadd.f32 %v4262, %v4270
    %v4273 = vld [vmem:[#allocation8] sm:$0xff]
    %v4274 = vld [vmem:[#allocation8 + $0x8] sm:$0xff]
    %v4275 = vld [vmem:[#allocation8 + $0x10] sm:$0xff]
    %v4276 = vld [vmem:[#allocation8 + $0x18] sm:$0xff]
    %4277 = vmatprep.subr.mxu0 0.0
    %4278 = vmatpush1.msra.mxu0 %v4273
    %4279 = vmatprep.subr.mxu0 0.0
    %4280 = vmatpush1.msra.mxu0 %v4274
    %4281 = vmatprep.subr.mxu0 0.0
    %4282 = vmatpush1.msra.mxu0 %v4275
    %4283 = vmatprep.subr.mxu0 0.0
    %4284 = vmatpush1.msra.mxu0 %v4276
    %4285 = vmatprep.subr.mxu0 0.0
    %4286 = vmatpush1.msra.mxu0 0.0
    %4287 = vmatprep.subr.mxu0 0.0
    %4288 = vmatpush1.msra.mxu0 0.0
    %4289 = vmatprep.subr.mxu0 0.0
    %4290 = vmatpush1.msra.mxu0 0.0
    %4291 = vmatprep.subr.mxu0 0.0
    %4292 = vmatpush1.msra.mxu0 0.0
    %4293 = vmatprep.subr.mxu0 0.0
    %4294 = vmatpush1.msra.mxu0 0.0
    %4295 = vmatprep.subr.mxu0 0.0
    %4296 = vmatpush1.msra.mxu0 0.0
    %4297 = vmatprep.subr.mxu0 0.0
    %4298 = vmatpush1.msra.mxu0 0.0
    %4299 = vmatprep.subr.mxu0 0.0
    %4300 = vmatpush1.msra.mxu0 0.0
    %4301 = vmatprep.subr.mxu0 0.0
    %4302 = vmatpush1.msra.mxu0 0.0
    %4303 = vmatprep.subr.mxu0 0.0
    %4304 = vmatpush1.msra.mxu0 0.0
    %4305 = vmatprep.subr.mxu0 0.0
    %4306 = vmatpush1.msra.mxu0 0.0
    %4307 = vmatprep.subr.mxu0 0.0
    %4308 = vmatpush1.msra.mxu0 0.0
    %4309 = vmatprep.subr.mxu0 0.0
    %4310 = vmatpush1.msra.mxu0 0.0
    %4311 = vmatprep.subr.mxu0 0.0
    %4312 = vmatpush1.msra.mxu0 0.0
    %4313 = vmatprep.subr.mxu0 0.0
    %4314 = vmatpush1.msra.mxu0 0.0
    %4315 = vmatprep.subr.mxu0 0.0
    %4316 = vmatpush1.msra.mxu0 0.0
    %4317 = vmatprep.subr.mxu0 0.0
    %4318 = vmatpush1.msra.mxu0 0.0
    %4319 = vmatprep.subr.mxu0 0.0
    %4320 = vmatpush1.msra.mxu0 0.0
    %4321 = vmatprep.subr.mxu0 0.0
    %4322 = vmatpush1.msra.mxu0 0.0
    %4323 = vmatprep.subr.mxu0 0.0
    %4324 = vmatpush1.msra.mxu0 0.0
    %4325 = vmatprep.subr.mxu0 0.0
    %4326 = vmatpush1.msra.mxu0 0.0
    %4327 = vmatprep.subr.mxu0 0.0
    %4328 = vmatpush1.msra.mxu0 0.0
    %4329 = vmatprep.subr.mxu0 0.0
    %4330 = vmatpush1.msra.mxu0 0.0
    %4331 = vmatprep.subr.mxu0 0.0
    %4332 = vmatpush1.msra.mxu0 0.0
    %4333 = vmatprep.subr.mxu0 0.0
    %4334 = vmatpush1.msra.mxu0 0.0
    %4335 = vmatprep.subr.mxu0 0.0
    %4336 = vmatpush1.msra.mxu0 0.0
    %4337 = vmatprep.subr.mxu0 0.0
    %4338 = vmatpush1.msra.mxu0 0.0
    %4339 = vmatprep.subr.mxu0 0.0
    %4340 = vmatpush1.msra.mxu0 0.0
    %4341 = vmatprep.mubr.f32.mxu0 0.0
    %4342 = vmatmul.mubr.f32.gmra.mrb[0].mxu0 %v3073
    %v4343 = vpop.f32.mrb[0].mxu0
    %v4344 = vadd.f32 0.0, %v4343
    %v4345 = vpop.f32.mrb[0].mxu0
    %4346 = vdwg.mxu0
    %v4347 = vmul.f32 %v3879, %v4344
    %v4348 = vadd.f32 %v4272, %v4347
    %v4349 = vtanh.pop %v4348
    %v4350 = vsub.f32 1.0, %v4116
    %v4351 = vmul.f32 %v4350, %v4349
    %v4352 = vmul.f32 %v4116, %v2993
    %v4353 = vadd.f32 %v4351, %v4352
    %v4354 = vld [vmem:[%s53] sm:$0xff]
    %v4355 = vld [vmem:[%s53 + $0x8] sm:$0xff]
    %v4356 = vld [vmem:[%s53 + $0x10] sm:$0xff]
    %v4357 = vld [vmem:[%s53 + $0x18] sm:$0xff]
    %v4358 = vld [vmem:[#allocation14] sm:$0xff]
    %v4359 = vld [vmem:[#allocation14 + $0x8] sm:$0xff]
    %v4360 = vld [vmem:[#allocation14 + $0x10] sm:$0xff]
    %v4361 = vld [vmem:[#allocation14 + $0x18] sm:$0xff]
    %4362 = vmatprep.subr.mxu0 0.0
    %4363 = vmatpush1.msra.mxu0 %v4358
    %4364 = vmatprep.subr.mxu0 0.0
    %4365 = vmatpush1.msra.mxu0 %v4359
    %4366 = vmatprep.subr.mxu0 0.0
    %4367 = vmatpush1.msra.mxu0 %v4360
    %4368 = vmatprep.subr.mxu0 0.0
    %4369 = vmatpush1.msra.mxu0 %v4361
    %4370 = vmatprep.subr.mxu0 0.0
    %4371 = vmatpush1.msra.mxu0 0.0
    %4372 = vmatprep.subr.mxu0 0.0
    %4373 = vmatpush1.msra.mxu0 0.0
    %4374 = vmatprep.subr.mxu0 0.0
    %4375 = vmatpush1.msra.mxu0 0.0
    %4376 = vmatprep.subr.mxu0 0.0
    %4377 = vmatpush1.msra.mxu0 0.0
    %4378 = vmatprep.subr.mxu0 0.0
    %4379 = vmatpush1.msra.mxu0 0.0
    %4380 = vmatprep.subr.mxu0 0.0
    %4381 = vmatpush1.msra.mxu0 0.0
    %4382 = vmatprep.subr.mxu0 0.0
    %4383 = vmatpush1.msra.mxu0 0.0
    %4384 = vmatprep.subr.mxu0 0.0
    %4385 = vmatpush1.msra.mxu0 0.0
    %4386 = vmatprep.subr.mxu0 0.0
    %4387 = vmatpush1.msra.mxu0 0.0
    %4388 = vmatprep.subr.mxu0 0.0
    %4389 = vmatpush1.msra.mxu0 0.0
    %4390 = vmatprep.subr.mxu0 0.0
    %4391 = vmatpush1.msra.mxu0 0.0
    %4392 = vmatprep.subr.mxu0 0.0
    %4393 = vmatpush1.msra.mxu0 0.0
    %4394 = vmatprep.subr.mxu0 0.0
    %4395 = vmatpush1.msra.mxu0 0.0
    %4396 = vmatprep.subr.mxu0 0.0
    %4397 = vmatpush1.msra.mxu0 0.0
    %4398 = vmatprep.subr.mxu0 0.0
    %4399 = vmatpush1.msra.mxu0 0.0
    %4400 = vmatprep.subr.mxu0 0.0
    %4401 = vmatpush1.msra.mxu0 0.0
    %4402 = vmatprep.subr.mxu0 0.0
    %4403 = vmatpush1.msra.mxu0 0.0
    %4404 = vmatprep.subr.mxu0 0.0
    %4405 = vmatpush1.msra.mxu0 0.0
    %4406 = vmatprep.subr.mxu0 0.0
    %4407 = vmatpush1.msra.mxu0 0.0
    %4408 = vmatprep.subr.mxu0 0.0
    %4409 = vmatpush1.msra.mxu0 0.0
    %4410 = vmatprep.subr.mxu0 0.0
    %4411 = vmatpush1.msra.mxu0 0.0
    %4412 = vmatprep.subr.mxu0 0.0
    %4413 = vmatpush1.msra.mxu0 0.0
    %4414 = vmatprep.subr.mxu0 0.0
    %4415 = vmatpush1.msra.mxu0 0.0
    %4416 = vmatprep.subr.mxu0 0.0
    %4417 = vmatpush1.msra.mxu0 0.0
    %4418 = vmatprep.subr.mxu0 0.0
    %4419 = vmatpush1.msra.mxu0 0.0
    %4420 = vmatprep.subr.mxu0 0.0
    %4421 = vmatpush1.msra.mxu0 0.0
    %4422 = vmatprep.subr.mxu0 0.0
    %4423 = vmatpush1.msra.mxu0 0.0
    %4424 = vmatprep.subr.mxu0 0.0
    %4425 = vmatpush1.msra.mxu0 0.0
    %4426 = vmatprep.mubr.f32.mxu0 0.0
    %4427 = vmatmul.mubr.f32.gmra.mrb[0].mxu0 %v3646
    %v4428 = vpop.f32.mrb[0].mxu0
    %v4429 = vadd.f32 0.0, %v4428
    %v4430 = vpop.f32.mrb[0].mxu0
    %4431 = vdwg.mxu0
    %v4433 = vsel %vm410, %v4353, 0
    %4435 = vmatprep.subr.mxu0 0.0
    %4436 = vmatpush1.msra.mxu0 %v4354
    %4437 = vmatprep.subr.mxu0 0.0
    %4438 = vmatpush1.msra.mxu0 %v4355
    %4439 = vmatprep.subr.mxu0 0.0
    %4440 = vmatpush1.msra.mxu0 %v4356
    %4441 = vmatprep.subr.mxu0 0.0
    %4442 = vmatpush1.msra.mxu0 %v4357
    %4443 = vmatprep.subr.mxu0 0.0
    %4444 = vmatpush1.msra.mxu0 0.0
    %4445 = vmatprep.subr.mxu0 0.0
    %4446 = vmatpush1.msra.mxu0 0.0
    %4447 = vmatprep.subr.mxu0 0.0
    %4448 = vmatpush1.msra.mxu0 0.0
    %4449 = vmatprep.subr.mxu0 0.0
    %4450 = vmatpush1.msra.mxu0 0.0
    %4451 = vmatprep.subr.mxu0 0.0
    %4452 = vmatpush1.msra.mxu0 0.0
    %4453 = vmatprep.subr.mxu0 0.0
    %4454 = vmatpush1.msra.mxu0 0.0
    %4455 = vmatprep.subr.mxu0 0.0
    %4456 = vmatpush1.msra.mxu0 0.0
    %4457 = vmatprep.subr.mxu0 0.0
    %4458 = vmatpush1.msra.mxu0 0.0
    %4459 = vmatprep.subr.mxu0 0.0
    %4460 = vmatpush1.msra.mxu0 0.0
    %4461 = vmatprep.subr.mxu0 0.0
    %4462 = vmatpush1.msra.mxu0 0.0
    %4463 = vmatprep.subr.mxu0 0.0
    %4464 = vmatpush1.msra.mxu0 0.0
    %4465 = vmatprep.subr.mxu0 0.0
    %4466 = vmatpush1.msra.mxu0 0.0
    %4467 = vmatprep.subr.mxu0 0.0
    %4468 = vmatpush1.msra.mxu0 0.0
    %4469 = vmatprep.subr.mxu0 0.0
    %4470 = vmatpush1.msra.mxu0 0.0
    %4471 = vmatprep.subr.mxu0 0.0
    %4472 = vmatpush1.msra.mxu0 0.0
    %4473 = vmatprep.subr.mxu0 0.0
    %4474 = vmatpush1.msra.mxu0 0.0
    %4475 = vmatprep.subr.mxu0 0.0
    %4476 = vmatpush1.msra.mxu0 0.0
    %4477 = vmatprep.subr.mxu0 0.0
    %4478 = vmatpush1.msra.mxu0 0.0
    %4479 = vmatprep.subr.mxu0 0.0
    %4480 = vmatpush1.msra.mxu0 0.0
    %4481 = vmatprep.subr.mxu0 0.0
    %4482 = vmatpush1.msra.mxu0 0.0
    %4483 = vmatprep.subr.mxu0 0.0
    %4484 = vmatpush1.msra.mxu0 0.0
    %4485 = vmatprep.subr.mxu0 0.0
    %4486 = vmatpush1.msra.mxu0 0.0
    %4487 = vmatprep.subr.mxu0 0.0
    %4488 = vmatpush1.msra.mxu0 0.0
    %4489 = vmatprep.subr.mxu0 0.0
    %4490 = vmatpush1.msra.mxu0 0.0
    %4491 = vmatprep.subr.mxu0 0.0
    %4492 = vmatpush1.msra.mxu0 0.0
    %4493 = vmatprep.subr.mxu0 0.0
    %4494 = vmatpush1.msra.mxu0 0.0
    %4495 = vmatprep.subr.mxu0 0.0
    %4496 = vmatpush1.msra.mxu0 0.0
    %4497 = vmatprep.subr.mxu0 0.0
    %4498 = vmatpush1.msra.mxu0 0.0
    %4499 = vmatprep.mubr.f32.mxu0 0.0
    %4500 = vmatmul.mubr.f32.gmra.mrb[0].mxu0 %v4433
    %v4501 = vpop.f32.mrb[0].mxu0
    %v4502 = vadd.f32 %v4429, %v4501
    %v4503 = vpop.f32.mrb[0].mxu0
    %4504 = vdwg.mxu0
    %v4505 = vld [vmem:[#allocation16] sm:$0xff]
    %v4506 = vld [vmem:[#allocation16 + $0x8] sm:$0xff]
    %v4507 = vld [vmem:[#allocation16 + $0x10] sm:$0xff]
    %v4508 = vld [vmem:[#allocation16 + $0x18] sm:$0xff]
    %4509 = vmatprep.subr.mxu0 0.0
    %4510 = vmatpush1.msra.mxu0 %v4505
    %4511 = vmatprep.subr.mxu0 0.0
    %4512 = vmatpush1.msra.mxu0 %v4506
    %4513 = vmatprep.subr.mxu0 0.0
    %4514 = vmatpush1.msra.mxu0 %v4507
    %4515 = vmatprep.subr.mxu0 0.0
    %4516 = vmatpush1.msra.mxu0 %v4508
    %4517 = vmatprep.subr.mxu0 0.0
    %4518 = vmatpush1.msra.mxu0 0.0
    %4519 = vmatprep.subr.mxu0 0.0
    %4520 = vmatpush1.msra.mxu0 0.0
    %4521 = vmatprep.subr.mxu0 0.0
    %4522 = vmatpush1.msra.mxu0 0.0
    %4523 = vmatprep.subr.mxu0 0.0
    %4524 = vmatpush1.msra.mxu0 0.0
    %4525 = vmatprep.subr.mxu0 0.0
    %4526 = vmatpush1.msra.mxu0 0.0
    %4527 = vmatprep.subr.mxu0 0.0
    %4528 = vmatpush1.msra.mxu0 0.0
    %4529 = vmatprep.subr.mxu0 0.0
    %4530 = vmatpush1.msra.mxu0 0.0
    %4531 = vmatprep.subr.mxu0 0.0
    %4532 = vmatpush1.msra.mxu0 0.0
    %4533 = vmatprep.subr.mxu0 0.0
    %4534 = vmatpush1.msra.mxu0 0.0
    %4535 = vmatprep.subr.mxu0 0.0
    %4536 = vmatpush1.msra.mxu0 0.0
    %4537 = vmatprep.subr.mxu0 0.0
    %4538 = vmatpush1.msra.mxu0 0.0
    %4539 = vmatprep.subr.mxu0 0.0
    %4540 = vmatpush1.msra.mxu0 0.0
    %4541 = vmatprep.subr.mxu0 0.0
    %4542 = vmatpush1.msra.mxu0 0.0
    %4543 = vmatprep.subr.mxu0 0.0
    %4544 = vmatpush1.msra.mxu0 0.0
    %4545 = vmatprep.subr.mxu0 0.0
    %4546 = vmatpush1.msra.mxu0 0.0
    %4547 = vmatprep.subr.mxu0 0.0
    %4548 = vmatpush1.msra.mxu0 0.0
    %4549 = vmatprep.subr.mxu0 0.0
    %4550 = vmatpush1.msra.mxu0 0.0
    %4551 = vmatprep.subr.mxu0 0.0
    %4552 = vmatpush1.msra.mxu0 0.0
    %4553 = vmatprep.subr.mxu0 0.0
    %4554 = vmatpush1.msra.mxu0 0.0
    %4555 = vmatprep.subr.mxu0 0.0
    %4556 = vmatpush1.msra.mxu0 0.0
    %4557 = vmatprep.subr.mxu0 0.0
    %4558 = vmatpush1.msra.mxu0 0.0
    %4559 = vmatprep.subr.mxu0 0.0
    %4560 = vmatpush1.msra.mxu0 0.0
    %4561 = vmatprep.subr.mxu0 0.0
    %4562 = vmatpush1.msra.mxu0 0.0
    %4563 = vmatprep.subr.mxu0 0.0
    %4564 = vmatpush1.msra.mxu0 0.0
    %4565 = vmatprep.subr.mxu0 0.0
    %4566 = vmatpush1.msra.mxu0 0.0
    %4567 = vmatprep.subr.mxu0 0.0
    %4568 = vmatpush1.msra.mxu0 0.0
    %4569 = vmatprep.subr.mxu0 0.0
    %4570 = vmatpush1.msra.mxu0 0.0
    %4571 = vmatprep.subr.mxu0 0.0
    %4572 = vmatpush1.msra.mxu0 0.0
    %4573 = vmatprep.mubr.f32.mxu0 0.0
    %4574 = vmatmul.mubr.f32.gmra.mrb[0].mxu0 %v3719
    %v4575 = vpop.f32.mrb[0].mxu0
    %v4576 = vadd.f32 0.0, %v4575
    %v4577 = vpop.f32.mrb[0].mxu0
    %4578 = vdwg.mxu0
    %v4579 = vadd.f32 %v4502, %v4576
    %v4580 = vld [vmem:[#allocation17] sm:$0x1]
    %v4582 = vlaneseq
    %v4583 = vshrl.u32 %v4582, 7
    %v4584 = vsub.s32 0, %v4583
    %v4585 = vrot.slane %v4580, %v4584
    %v4587 = vadd.f32 %v4579, %v4585
    %s4588 = scalar_lea.vmem [#allocation19], 6
    %4589 = vst [vmem:[%s4588] sm:$0x3] %v4587
    %v4590 = vsel %vm1869, %v4587, -inf
    %4591 = vmax.xlane.f32.xlu0 %v4590
    %v4592 = vpop.xlane.xlu0 %4591
    %vm4593 = vcmp.eq.f32.partialorder %v4587, %v4592
    %v4594 = vsel %vm4593, %v254, 64
    %v4595 = vsel %vm1869, %v4594, 2147483647
    %v4596 = vand.u32 %v4595, 65535
    %v4597 = vshra.s32 %v4595, 16
    %v4598 = vcvt.s32.f32 %v4596
    %v4599 = vcvt.s32.f32 %v4597
    %4600 = vmin.xlane.f32.xlu0 %v4599
    %v4601 = vpop.xlane.xlu0 %4600
    %vm4602 = vcmp.eq.f32.partialorder %v4599, %v4601
    %v4603 = vsel %vm4602, %v4598, inf
    %4604 = vmin.xlane.f32.xlu0 %v4603
    %v4605 = vpop.xlane.xlu0 %4604
    %v4606 = vcvt.f32.s32 %v4605
    %v4607 = vcvt.f32.s32 %v4601
    %v4608 = vshll.u32 %v4607, 16
    %v4609 = vadd.s32 %v4608, %v4606
    %vm4610 = vcmp.eq.s32.totalorder %v254, %v4609
    %v4611 = vsel %vm4610, 1, 0
    %v4612 = vcvt.s32.f32 %v4611
    %v4614 = vsel %vm617, %v4612, 0
    %4616 = vmatprep.subr.mxu0 0.0
    %4617 = vmatpush1.msra.mxu0 %v600
    %4618 = vmatprep.subr.mxu0 0.0
    %4619 = vmatpush1.msra.mxu0 %v601
    %4620 = vmatprep.subr.mxu0 0.0
    %4621 = vmatpush1.msra.mxu0 %v602
    %4622 = vmatprep.subr.mxu0 0.0
    %4623 = vmatpush1.msra.mxu0 %v603
    %4624 = vmatprep.subr.mxu0 0.0
    %4625 = vmatpush1.msra.mxu0 %v604
    %4626 = vmatprep.subr.mxu0 0.0
    %4627 = vmatpush1.msra.mxu0 %v605
    %4628 = vmatprep.subr.mxu0 0.0
    %4629 = vmatpush1.msra.mxu0 %v606
    %4630 = vmatprep.subr.mxu0 0.0
    %4631 = vmatpush1.msra.mxu0 %v607
    %4632 = vmatprep.subr.mxu0 0.0
    %4633 = vmatpush1.msra.mxu0 0.0
    %4634 = vmatprep.subr.mxu0 0.0
    %4635 = vmatpush1.msra.mxu0 0.0
    %4636 = vmatprep.subr.mxu0 0.0
    %4637 = vmatpush1.msra.mxu0 0.0
    %4638 = vmatprep.subr.mxu0 0.0
    %4639 = vmatpush1.msra.mxu0 0.0
    %4640 = vmatprep.subr.mxu0 0.0
    %4641 = vmatpush1.msra.mxu0 0.0
    %4642 = vmatprep.subr.mxu0 0.0
    %4643 = vmatpush1.msra.mxu0 0.0
    %4644 = vmatprep.subr.mxu0 0.0
    %4645 = vmatpush1.msra.mxu0 0.0
    %4646 = vmatprep.subr.mxu0 0.0
    %4647 = vmatpush1.msra.mxu0 0.0
    %4648 = vmatprep.subr.mxu0 0.0
    %4649 = vmatpush1.msra.mxu0 0.0
    %4650 = vmatprep.subr.mxu0 0.0
    %4651 = vmatpush1.msra.mxu0 0.0
    %4652 = vmatprep.subr.mxu0 0.0
    %4653 = vmatpush1.msra.mxu0 0.0
    %4654 = vmatprep.subr.mxu0 0.0
    %4655 = vmatpush1.msra.mxu0 0.0
    %4656 = vmatprep.subr.mxu0 0.0
    %4657 = vmatpush1.msra.mxu0 0.0
    %4658 = vmatprep.subr.mxu0 0.0
    %4659 = vmatpush1.msra.mxu0 0.0
    %4660 = vmatprep.subr.mxu0 0.0
    %4661 = vmatpush1.msra.mxu0 0.0
    %4662 = vmatprep.subr.mxu0 0.0
    %4663 = vmatpush1.msra.mxu0 0.0
    %4664 = vmatprep.subr.mxu0 0.0
    %4665 = vmatpush1.msra.mxu0 0.0
    %4666 = vmatprep.subr.mxu0 0.0
    %4667 = vmatpush1.msra.mxu0 0.0
    %4668 = vmatprep.subr.mxu0 0.0
    %4669 = vmatpush1.msra.mxu0 0.0
    %4670 = vmatprep.subr.mxu0 0.0
    %4671 = vmatpush1.msra.mxu0 0.0
    %4672 = vmatprep.subr.mxu0 0.0
    %4673 = vmatpush1.msra.mxu0 0.0
    %4674 = vmatprep.subr.mxu0 0.0
    %4675 = vmatpush1.msra.mxu0 0.0
    %4676 = vmatprep.subr.mxu0 0.0
    %4677 = vmatpush1.msra.mxu0 0.0
    %4678 = vmatprep.subr.mxu0 0.0
    %4679 = vmatpush1.msra.mxu0 0.0
    %4680 = vmatprep.mubr.f32.mxu0 0.0
    %4681 = vmatmul.mubr.f32.gmra.mrb[0].mxu0 %v4614
    %v4682 = vpop.f32.mrb[0].mxu0
    %v4683 = vadd.f32 0.0, %v4682
    %v4684 = vpop.f32.mrb[0].mxu0
    %4685 = vdwg.mxu0
    %s4686 = scalar_lea.vmem %s7, 6
    %v4687 = vld [vmem:[%s4686] sm:$0x3]
    %4688 = vset.pattern.permute.xlu0 0
    %4689 = vperm.xlu0 %4688, %v4687
    %v4690 = vpop.permute.xlu0 %4689
    %vm4691 = vcmp.eq.s32.totalorder %v254, %v4690
    %v4692 = vsel %vm4691, 1, 0
    %v4693 = vcvt.s32.f32 %v4692
    %v4695 = vsel %vm617, %v4693, 0
    %4697 = vmatprep.subr.mxu0 0.0
    %4698 = vmatpush1.msra.mxu0 %v600
    %4699 = vmatprep.subr.mxu0 0.0
    %4700 = vmatpush1.msra.mxu0 %v601
    %4701 = vmatprep.subr.mxu0 0.0
    %4702 = vmatpush1.msra.mxu0 %v602
    %4703 = vmatprep.subr.mxu0 0.0
    %4704 = vmatpush1.msra.mxu0 %v603
    %4705 = vmatprep.subr.mxu0 0.0
    %4706 = vmatpush1.msra.mxu0 %v604
    %4707 = vmatprep.subr.mxu0 0.0
    %4708 = vmatpush1.msra.mxu0 %v605
    %4709 = vmatprep.subr.mxu0 0.0
    %4710 = vmatpush1.msra.mxu0 %v606
    %4711 = vmatprep.subr.mxu0 0.0
    %4712 = vmatpush1.msra.mxu0 %v607
    %4713 = vmatprep.subr.mxu0 0.0
    %4714 = vmatpush1.msra.mxu0 0.0
    %4715 = vmatprep.subr.mxu0 0.0
    %4716 = vmatpush1.msra.mxu0 0.0
    %4717 = vmatprep.subr.mxu0 0.0
    %4718 = vmatpush1.msra.mxu0 0.0
    %4719 = vmatprep.subr.mxu0 0.0
    %4720 = vmatpush1.msra.mxu0 0.0
    %4721 = vmatprep.subr.mxu0 0.0
    %4722 = vmatpush1.msra.mxu0 0.0
    %4723 = vmatprep.subr.mxu0 0.0
    %4724 = vmatpush1.msra.mxu0 0.0
    %4725 = vmatprep.subr.mxu0 0.0
    %4726 = vmatpush1.msra.mxu0 0.0
    %4727 = vmatprep.subr.mxu0 0.0
    %4728 = vmatpush1.msra.mxu0 0.0
    %4729 = vmatprep.subr.mxu0 0.0
    %4730 = vmatpush1.msra.mxu0 0.0
    %4731 = vmatprep.subr.mxu0 0.0
    %4732 = vmatpush1.msra.mxu0 0.0
    %4733 = vmatprep.subr.mxu0 0.0
    %4734 = vmatpush1.msra.mxu0 0.0
    %4735 = vmatprep.subr.mxu0 0.0
    %4736 = vmatpush1.msra.mxu0 0.0
    %4737 = vmatprep.subr.mxu0 0.0
    %4738 = vmatpush1.msra.mxu0 0.0
    %4739 = vmatprep.subr.mxu0 0.0
    %4740 = vmatpush1.msra.mxu0 0.0
    %4741 = vmatprep.subr.mxu0 0.0
    %4742 = vmatpush1.msra.mxu0 0.0
    %4743 = vmatprep.subr.mxu0 0.0
    %4744 = vmatpush1.msra.mxu0 0.0
    %4745 = vmatprep.subr.mxu0 0.0
    %4746 = vmatpush1.msra.mxu0 0.0
    %4747 = vmatprep.subr.mxu0 0.0
    %4748 = vmatpush1.msra.mxu0 0.0
    %4749 = vmatprep.subr.mxu0 0.0
    %4750 = vmatpush1.msra.mxu0 0.0
    %4751 = vmatprep.subr.mxu0 0.0
    %4752 = vmatpush1.msra.mxu0 0.0
    %4753 = vmatprep.subr.mxu0 0.0
    %4754 = vmatpush1.msra.mxu0 0.0
    %4755 = vmatprep.subr.mxu0 0.0
    %4756 = vmatpush1.msra.mxu0 0.0
    %4757 = vmatprep.subr.mxu0 0.0
    %4758 = vmatpush1.msra.mxu0 0.0
    %4759 = vmatprep.subr.mxu0 0.0
    %4760 = vmatpush1.msra.mxu0 0.0
    %4761 = vmatprep.mubr.f32.mxu0 0.0
    %4762 = vmatmul.mubr.f32.gmra.mrb[0].mxu0 %v4695
    %v4763 = vpop.f32.mrb[0].mxu0
    %v4764 = vadd.f32 0.0, %v4763
    %v4765 = vpop.f32.mrb[0].mxu0
    %4766 = vdwg.mxu0
    %s4767 = scalar_lea.vmem %s9, 6
    %v4768 = vld [vmem:[%s4767] sm:$0x3]
    %4770 = vset.pattern.permute.xlu0 0
    %4771 = vperm.xlu0 %4770, %v4768
    %v4772 = vpop.permute.xlu0 %4771
    %v4774 = vmul.f32 %v4772, %v4764
    %v4775 = vsub.f32 1.0, %v4768
    %4777 = vset.pattern.permute.xlu0 0
    %4778 = vperm.xlu0 %4777, %v4775
    %v4779 = vpop.permute.xlu0 %4778
    %v4781 = vmul.f32 %v4779, %v4683
    %v4782 = vadd.f32 %v4774, %v4781
    %v4783 = vld [vmem:[%s23] sm:$0xff]
    %v4784 = vld [vmem:[%s23 + $0x8] sm:$0xff]
    %v4785 = vld [vmem:[%s23 + $0x10] sm:$0xff]
    %v4786 = vld [vmem:[%s23 + $0x18] sm:$0xff]
    %4787 = vmatprep.subr.mxu0 0.0
    %4788 = vmatpush1.msra.mxu0 %v4783
    %4789 = vmatprep.subr.mxu0 0.0
    %4790 = vmatpush1.msra.mxu0 %v4784
    %4791 = vmatprep.subr.mxu0 0.0
    %4792 = vmatpush1.msra.mxu0 %v4785
    %4793 = vmatprep.subr.mxu0 0.0
    %4794 = vmatpush1.msra.mxu0 %v4786
    %4795 = vmatprep.subr.mxu0 0.0
    %4796 = vmatpush1.msra.mxu0 0.0
    %4797 = vmatprep.subr.mxu0 0.0
    %4798 = vmatpush1.msra.mxu0 0.0
    %4799 = vmatprep.subr.mxu0 0.0
    %4800 = vmatpush1.msra.mxu0 0.0
    %4801 = vmatprep.subr.mxu0 0.0
    %4802 = vmatpush1.msra.mxu0 0.0
    %4803 = vmatprep.subr.mxu0 0.0
    %4804 = vmatpush1.msra.mxu0 0.0
    %4805 = vmatprep.subr.mxu0 0.0
    %4806 = vmatpush1.msra.mxu0 0.0
    %4807 = vmatprep.subr.mxu0 0.0
    %4808 = vmatpush1.msra.mxu0 0.0
    %4809 = vmatprep.subr.mxu0 0.0
    %4810 = vmatpush1.msra.mxu0 0.0
    %4811 = vmatprep.subr.mxu0 0.0
    %4812 = vmatpush1.msra.mxu0 0.0
    %4813 = vmatprep.subr.mxu0 0.0
    %4814 = vmatpush1.msra.mxu0 0.0
    %4815 = vmatprep.subr.mxu0 0.0
    %4816 = vmatpush1.msra.mxu0 0.0
    %4817 = vmatprep.subr.mxu0 0.0
    %4818 = vmatpush1.msra.mxu0 0.0
    %4819 = vmatprep.subr.mxu0 0.0
    %4820 = vmatpush1.msra.mxu0 0.0
    %4821 = vmatprep.subr.mxu0 0.0
    %4822 = vmatpush1.msra.mxu0 0.0
    %4823 = vmatprep.subr.mxu0 0.0
    %4824 = vmatpush1.msra.mxu0 0.0
    %4825 = vmatprep.subr.mxu0 0.0
    %4826 = vmatpush1.msra.mxu0 0.0
    %4827 = vmatprep.subr.mxu0 0.0
    %4828 = vmatpush1.msra.mxu0 0.0
    %4829 = vmatprep.subr.mxu0 0.0
    %4830 = vmatpush1.msra.mxu0 0.0
    %4831 = vmatprep.subr.mxu0 0.0
    %4832 = vmatpush1.msra.mxu0 0.0
    %4833 = vmatprep.subr.mxu0 0.0
    %4834 = vmatpush1.msra.mxu0 0.0
    %4835 = vmatprep.subr.mxu0 0.0
    %4836 = vmatpush1.msra.mxu0 0.0
    %4837 = vmatprep.subr.mxu0 0.0
    %4838 = vmatpush1.msra.mxu0 0.0
    %4839 = vmatprep.subr.mxu0 0.0
    %4840 = vmatpush1.msra.mxu0 0.0
    %4841 = vmatprep.subr.mxu0 0.0
    %4842 = vmatpush1.msra.mxu0 0.0
    %4843 = vmatprep.subr.mxu0 0.0
    %4844 = vmatpush1.msra.mxu0 0.0
    %4845 = vmatprep.subr.mxu0 0.0
    %4846 = vmatpush1.msra.mxu0 0.0
    %4847 = vmatprep.subr.mxu0 0.0
    %4848 = vmatpush1.msra.mxu0 0.0
    %4849 = vmatprep.subr.mxu0 0.0
    %4850 = vmatpush1.msra.mxu0 0.0
    %4851 = vmatprep.mubr.f32.mxu0 0.0
    %4852 = vmatmul.mubr.f32.gmra.mrb[0].mxu0 %v4433
    %v4853 = vpop.f32.mrb[0].mxu0
    %v4854 = vadd.f32 0.0, %v4853
    %v4855 = vpop.f32.mrb[0].mxu0
    %4856 = vdwg.mxu0
    %v4859 = vunpack.c.l.s4 1966171168
    %v4860 = vunpack.c.0.s8 %v4859
    %v4861 = vlaneseq
    %v4862 = vshrl.u32 %v4861, 7
    %v4863 = vsub.s32 %v4860, %v4862
    %v4864 = vrot.slane %v4854, %v4863
    %v4865 = vcombine.high %v4864, %v4864
    %v4867 = vunpack.c.l.s4 1966171168
    %v4868 = vunpack.c.0.s8 %v4867
    %v4869 = vlaneseq
    %v4870 = vshrl.u32 %v4869, 7
    %v4871 = vsub.s32 %v4868, %v4870
    %v4872 = vrot.slane %v4864, %v4871
    %v4874 = vunpack.c.l.s4 1966171168
    %v4875 = vunpack.c.0.s8 %v4874
    %v4876 = vlaneseq
    %v4877 = vshrl.u32 %v4876, 7
    %v4878 = vsub.s32 %v4875, %v4877
    %v4879 = vrot.slane %v4865, %v4878
    %v4880 = vlaneseq
    %v4881 = vshrl.u32 %v4880, 7
    %v4882 = vsub.s32 0, %v4881
    %v4883 = vrot.slane %v4872, %v4882
    %v4884 = vlaneseq
    %v4885 = vshrl.u32 %v4884, 7
    %v4886 = vsub.s32 0, %v4885
    %v4887 = vrot.slane %v4879, %v4886
    %v4890 = vadd.f32 %v592, %v4883
    %v4891 = vadd.f32 %v597, %v4887
    %v4892 = vtanh.pop %v4890
    %v4893 = vtanh.pop %v4891
    %v4894 = vmul.f32 %v4892, %v809
    %v4895 = vmul.f32 %v4893, %v809
    %v4896 = vsel %vm410, %v4894, 0.0
    %4897 = vadd.xlane.f32.xlu0 %v4896
    %v4898 = vpop.xlane.xlu0 %4897
    %v4899 = vsel %vm410, %v4895, 0.0
    %4900 = vadd.xlane.f32.xlu0 %v4899
    %v4901 = vpop.xlane.xlu0 %4900
    %v4904 = vlaneseq
    %v4905 = vshrl.u32 %v4904, 7
    %v4906 = vsub.s32 %v254, %v4905
    %v4907 = vrot.slane %v4898, %v4906
    %v4908 = vlaneseq
    %v4909 = vshrl.u32 %v4908, 7
    %v4910 = vsub.s32 %v254, %v4909
    %v4911 = vrot.slane %v4901, %v4910
    %v4912 = vsel %vm829, %v4911, %v4907
    %v4914 = vsel %vm832, %v4912, -inf
    %4915 = vmax.xlane.f32.xlu0 %v4914
    %v4916 = vpop.xlane.xlu0 %4915
    %v4918 = vlaneseq
    %v4919 = vshrl.u32 %v4918, 7
    %v4920 = vsub.s32 0, %v4919
    %v4921 = vrot.slane %v4916, %v4920
    %v4922 = vlaneseq
    %v4923 = vshrl.u32 %v4922, 7
    %v4924 = vsub.s32 1, %v4923
    %v4925 = vrot.slane %v4916, %v4924
    %v4928 = vsub.f32 %v4898, %v4921
    %v4929 = vsub.f32 %v4901, %v4925
    %v4930 = vmul.f32 %v4928, 1.442695
    %v4931 = vpow.pop %v4930
    %v4932 = vmul.f32 %v4929, 1.442695
    %v4933 = vpow.pop %v4932
    %4936 = vset.pattern.permute.xlu0 0
    %4937 = vperm.xlu0 %4936, %v4931
    %v4938 = vpop.permute.xlu0 %4937
    %4939 = vset.pattern.permute.xlu0 0
    %4940 = vperm.xlu0 %4939, %v4933
    %v4941 = vpop.permute.xlu0 %4940
    %v4942 = vlaneseq
    %v4943 = vshrl.u32 %v4942, 7
    %v4944 = vsub.s32 %v254, %v4943
    %v4945 = vrot.slane %v4938, %v4944
    %v4946 = vlaneseq
    %v4947 = vshrl.u32 %v4946, 7
    %v4948 = vsub.s32 %v254, %v4947
    %v4949 = vrot.slane %v4941, %v4948
    %v4950 = vsel %vm829, %v4949, %v4945
    %v4952 = vsel %vm832, %v4950, 0.0
    %4953 = vadd.xlane.f32.xlu0 %v4952
    %v4954 = vpop.xlane.xlu0 %4953
    %v4955 = vrcp.pop %v4954
    %v4957 = vlaneseq
    %v4958 = vshrl.u32 %v4957, 7
    %v4959 = vsub.s32 0, %v4958
    %v4960 = vrot.slane %v4955, %v4959
    %v4961 = vlaneseq
    %v4962 = vshrl.u32 %v4961, 7
    %v4963 = vsub.s32 1, %v4962
    %v4964 = vrot.slane %v4955, %v4963
    %v4967 = vmul.f32 %v4931, %v4960
    %v4968 = vmul.f32 %v4933, %v4964
    %4970 = vset.pattern.permute.xlu0 0
    %4971 = vperm.xlu0 %4970, %v4967
    %v4972 = vpop.permute.xlu0 %4971
    %4975 = vset.pattern.permute.xlu0 0
    %4976 = vperm.xlu0 %4975, %v4968
    %v4977 = vpop.permute.xlu0 %4976
    %v4979 = vmul.f32 %v4972, %v506
    %v4980 = vmul.f32 %v4977, %v507
    %v4981 = vsel %vm410, %v4979, 0.0
    %v4982 = vrot.slane %v4981, 4
    %v4983 = vadd.f32 %v4981, %v4982
    %v4984 = vrot.slane %v4983, 2
    %v4985 = vadd.f32 %v4983, %v4984
    %v4986 = vrot.slane %v4985, 1
    %v4987 = vadd.f32 %v4985, %v4986
    %v4988 = vsel %vm410, %v4980, 0.0
    %v4989 = vrot.slane %v4988, 4
    %v4990 = vadd.f32 %v4988, %v4989
    %v4991 = vrot.slane %v4990, 2
    %v4992 = vadd.f32 %v4990, %v4991
    %v4993 = vrot.slane %v4992, 1
    %v4994 = vadd.f32 %v4992, %v4993
    %v4995 = vld [vmem:[%s29] sm:$0xff]
    %v4996 = vld [vmem:[%s29 + $0x8] sm:$0xff]
    %v4997 = vld [vmem:[%s29 + $0x10] sm:$0xff]
    %v4998 = vld [vmem:[%s29 + $0x18] sm:$0xff]
    %v4999 = vld [vmem:[%s35] sm:$0xff]
    %v5000 = vld [vmem:[%s35 + $0x8] sm:$0xff]
    %v5001 = vld [vmem:[%s35 + $0x10] sm:$0xff]
    %v5002 = vld [vmem:[%s35 + $0x18] sm:$0xff]
    %v5005 = vsel %vm829, %v4994, %v4987
    %v5006 = vsel %vm410, %v5005, 0
    %5008 = vmatprep.subr.mxu0 0.0
    %5009 = vmatpush1.msra.mxu0 %v4999
    %5010 = vmatprep.subr.mxu0 0.0
    %5011 = vmatpush1.msra.mxu0 %v5000
    %5012 = vmatprep.subr.mxu0 0.0
    %5013 = vmatpush1.msra.mxu0 %v5001
    %5014 = vmatprep.subr.mxu0 0.0
    %5015 = vmatpush1.msra.mxu0 %v5002
    %5016 = vmatprep.subr.mxu0 0.0
    %5017 = vmatpush1.msra.mxu0 0.0
    %5018 = vmatprep.subr.mxu0 0.0
    %5019 = vmatpush1.msra.mxu0 0.0
    %5020 = vmatprep.subr.mxu0 0.0
    %5021 = vmatpush1.msra.mxu0 0.0
    %5022 = vmatprep.subr.mxu0 0.0
    %5023 = vmatpush1.msra.mxu0 0.0
    %5024 = vmatprep.subr.mxu0 0.0
    %5025 = vmatpush1.msra.mxu0 0.0
    %5026 = vmatprep.subr.mxu0 0.0
    %5027 = vmatpush1.msra.mxu0 0.0
    %5028 = vmatprep.subr.mxu0 0.0
    %5029 = vmatpush1.msra.mxu0 0.0
    %5030 = vmatprep.subr.mxu0 0.0
    %5031 = vmatpush1.msra.mxu0 0.0
    %5032 = vmatprep.subr.mxu0 0.0
    %5033 = vmatpush1.msra.mxu0 0.0
    %5034 = vmatprep.subr.mxu0 0.0
    %5035 = vmatpush1.msra.mxu0 0.0
    %5036 = vmatprep.subr.mxu0 0.0
    %5037 = vmatpush1.msra.mxu0 0.0
    %5038 = vmatprep.subr.mxu0 0.0
    %5039 = vmatpush1.msra.mxu0 0.0
    %5040 = vmatprep.subr.mxu0 0.0
    %5041 = vmatpush1.msra.mxu0 0.0
    %5042 = vmatprep.subr.mxu0 0.0
    %5043 = vmatpush1.msra.mxu0 0.0
    %5044 = vmatprep.subr.mxu0 0.0
    %5045 = vmatpush1.msra.mxu0 0.0
    %5046 = vmatprep.subr.mxu0 0.0
    %5047 = vmatpush1.msra.mxu0 0.0
    %5048 = vmatprep.subr.mxu0 0.0
    %5049 = vmatpush1.msra.mxu0 0.0
    %5050 = vmatprep.subr.mxu0 0.0
    %5051 = vmatpush1.msra.mxu0 0.0
    %5052 = vmatprep.subr.mxu0 0.0
    %5053 = vmatpush1.msra.mxu0 0.0
    %5054 = vmatprep.subr.mxu0 0.0
    %5055 = vmatpush1.msra.mxu0 0.0
    %5056 = vmatprep.subr.mxu0 0.0
    %5057 = vmatpush1.msra.mxu0 0.0
    %5058 = vmatprep.subr.mxu0 0.0
    %5059 = vmatpush1.msra.mxu0 0.0
    %5060 = vmatprep.subr.mxu0 0.0
    %5061 = vmatpush1.msra.mxu0 0.0
    %5062 = vmatprep.subr.mxu0 0.0
    %5063 = vmatpush1.msra.mxu0 0.0
    %5064 = vmatprep.subr.mxu0 0.0
    %5065 = vmatpush1.msra.mxu0 0.0
    %5066 = vmatprep.subr.mxu0 0.0
    %5067 = vmatpush1.msra.mxu0 0.0
    %5068 = vmatprep.subr.mxu0 0.0
    %5069 = vmatpush1.msra.mxu0 0.0
    %5070 = vmatprep.subr.mxu0 0.0
    %5071 = vmatpush1.msra.mxu0 0.0
    %5072 = vmatprep.mubr.f32.mxu0 0.0
    %5073 = vmatmul.mubr.f32.gmra.mrb[0].mxu0 %v5006
    %v5074 = vpop.f32.mrb[0].mxu0
    %v5075 = vadd.f32 0.0, %v5074
    %v5076 = vpop.f32.mrb[0].mxu0
    %5077 = vdwg.mxu0
    %v5079 = vsel %vm410, %v4782, 0
    %5081 = vmatprep.subr.mxu0 0.0
    %5082 = vmatpush1.msra.mxu0 %v4995
    %5083 = vmatprep.subr.mxu0 0.0
    %5084 = vmatpush1.msra.mxu0 %v4996
    %5085 = vmatprep.subr.mxu0 0.0
    %5086 = vmatpush1.msra.mxu0 %v4997
    %5087 = vmatprep.subr.mxu0 0.0
    %5088 = vmatpush1.msra.mxu0 %v4998
    %5089 = vmatprep.subr.mxu0 0.0
    %5090 = vmatpush1.msra.mxu0 0.0
    %5091 = vmatprep.subr.mxu0 0.0
    %5092 = vmatpush1.msra.mxu0 0.0
    %5093 = vmatprep.subr.mxu0 0.0
    %5094 = vmatpush1.msra.mxu0 0.0
    %5095 = vmatprep.subr.mxu0 0.0
    %5096 = vmatpush1.msra.mxu0 0.0
    %5097 = vmatprep.subr.mxu0 0.0
    %5098 = vmatpush1.msra.mxu0 0.0
    %5099 = vmatprep.subr.mxu0 0.0
    %5100 = vmatpush1.msra.mxu0 0.0
    %5101 = vmatprep.subr.mxu0 0.0
    %5102 = vmatpush1.msra.mxu0 0.0
    %5103 = vmatprep.subr.mxu0 0.0
    %5104 = vmatpush1.msra.mxu0 0.0
    %5105 = vmatprep.subr.mxu0 0.0
    %5106 = vmatpush1.msra.mxu0 0.0
    %5107 = vmatprep.subr.mxu0 0.0
    %5108 = vmatpush1.msra.mxu0 0.0
    %5109 = vmatprep.subr.mxu0 0.0
    %5110 = vmatpush1.msra.mxu0 0.0
    %5111 = vmatprep.subr.mxu0 0.0
    %5112 = vmatpush1.msra.mxu0 0.0
    %5113 = vmatprep.subr.mxu0 0.0
    %5114 = vmatpush1.msra.mxu0 0.0
    %5115 = vmatprep.subr.mxu0 0.0
    %5116 = vmatpush1.msra.mxu0 0.0
    %5117 = vmatprep.subr.mxu0 0.0
    %5118 = vmatpush1.msra.mxu0 0.0
    %5119 = vmatprep.subr.mxu0 0.0
    %5120 = vmatpush1.msra.mxu0 0.0
    %5121 = vmatprep.subr.mxu0 0.0
    %5122 = vmatpush1.msra.mxu0 0.0
    %5123 = vmatprep.subr.mxu0 0.0
    %5124 = vmatpush1.msra.mxu0 0.0
    %5125 = vmatprep.subr.mxu0 0.0
    %5126 = vmatpush1.msra.mxu0 0.0
    %5127 = vmatprep.subr.mxu0 0.0
    %5128 = vmatpush1.msra.mxu0 0.0
    %5129 = vmatprep.subr.mxu0 0.0
    %5130 = vmatpush1.msra.mxu0 0.0
    %5131 = vmatprep.subr.mxu0 0.0
    %5132 = vmatpush1.msra.mxu0 0.0
    %5133 = vmatprep.subr.mxu0 0.0
    %5134 = vmatpush1.msra.mxu0 0.0
    %5135 = vmatprep.subr.mxu0 0.0
    %5136 = vmatpush1.msra.mxu0 0.0
    %5137 = vmatprep.subr.mxu0 0.0
    %5138 = vmatpush1.msra.mxu0 0.0
    %5139 = vmatprep.subr.mxu0 0.0
    %5140 = vmatpush1.msra.mxu0 0.0
    %5141 = vmatprep.subr.mxu0 0.0
    %5142 = vmatpush1.msra.mxu0 0.0
    %5143 = vmatprep.subr.mxu0 0.0
    %5144 = vmatpush1.msra.mxu0 0.0
    %5145 = vmatprep.mubr.f32.mxu0 0.0
    %5146 = vmatmul.mubr.f32.gmra.mrb[0].mxu0 %v5079
    %v5147 = vpop.f32.mrb[0].mxu0
    %v5148 = vadd.f32 %v5075, %v5147
    %v5149 = vpop.f32.mrb[0].mxu0
    %5150 = vdwg.mxu0
    %v5151 = vld [vmem:[#allocation10] sm:$0x1]
    %v5153 = vlaneseq
    %v5154 = vshrl.u32 %v5153, 7
    %v5155 = vsub.s32 0, %v5154
    %v5156 = vrot.slane %v5151, %v5155
    %v5158 = vadd.f32 %v5148, %v5156
    %v5159 = vld [vmem:[%s41] sm:$0xff]
    %v5160 = vld [vmem:[%s41 + $0x8] sm:$0xff]
    %v5161 = vld [vmem:[%s41 + $0x10] sm:$0xff]
    %v5162 = vld [vmem:[%s41 + $0x18] sm:$0xff]
    %5163 = vmatprep.subr.mxu0 0.0
    %5164 = vmatpush1.msra.mxu0 %v5159
    %5165 = vmatprep.subr.mxu0 0.0
    %5166 = vmatpush1.msra.mxu0 %v5160
    %5167 = vmatprep.subr.mxu0 0.0
    %5168 = vmatpush1.msra.mxu0 %v5161
    %5169 = vmatprep.subr.mxu0 0.0
    %5170 = vmatpush1.msra.mxu0 %v5162
    %5171 = vmatprep.subr.mxu0 0.0
    %5172 = vmatpush1.msra.mxu0 0.0
    %5173 = vmatprep.subr.mxu0 0.0
    %5174 = vmatpush1.msra.mxu0 0.0
    %5175 = vmatprep.subr.mxu0 0.0
    %5176 = vmatpush1.msra.mxu0 0.0
    %5177 = vmatprep.subr.mxu0 0.0
    %5178 = vmatpush1.msra.mxu0 0.0
    %5179 = vmatprep.subr.mxu0 0.0
    %5180 = vmatpush1.msra.mxu0 0.0
    %5181 = vmatprep.subr.mxu0 0.0
    %5182 = vmatpush1.msra.mxu0 0.0
    %5183 = vmatprep.subr.mxu0 0.0
    %5184 = vmatpush1.msra.mxu0 0.0
    %5185 = vmatprep.subr.mxu0 0.0
    %5186 = vmatpush1.msra.mxu0 0.0
    %5187 = vmatprep.subr.mxu0 0.0
    %5188 = vmatpush1.msra.mxu0 0.0
    %5189 = vmatprep.subr.mxu0 0.0
    %5190 = vmatpush1.msra.mxu0 0.0
    %5191 = vmatprep.subr.mxu0 0.0
    %5192 = vmatpush1.msra.mxu0 0.0
    %5193 = vmatprep.subr.mxu0 0.0
    %5194 = vmatpush1.msra.mxu0 0.0
    %5195 = vmatprep.subr.mxu0 0.0
    %5196 = vmatpush1.msra.mxu0 0.0
    %5197 = vmatprep.subr.mxu0 0.0
    %5198 = vmatpush1.msra.mxu0 0.0
    %5199 = vmatprep.subr.mxu0 0.0
    %5200 = vmatpush1.msra.mxu0 0.0
    %5201 = vmatprep.subr.mxu0 0.0
    %5202 = vmatpush1.msra.mxu0 0.0
    %5203 = vmatprep.subr.mxu0 0.0
    %5204 = vmatpush1.msra.mxu0 0.0
    %5205 = vmatprep.subr.mxu0 0.0
    %5206 = vmatpush1.msra.mxu0 0.0
    %5207 = vmatprep.subr.mxu0 0.0
    %5208 = vmatpush1.msra.mxu0 0.0
    %5209 = vmatprep.subr.mxu0 0.0
    %5210 = vmatpush1.msra.mxu0 0.0
    %5211 = vmatprep.subr.mxu0 0.0
    %5212 = vmatpush1.msra.mxu0 0.0
    %5213 = vmatprep.subr.mxu0 0.0
    %5214 = vmatpush1.msra.mxu0 0.0
    %5215 = vmatprep.subr.mxu0 0.0
    %5216 = vmatpush1.msra.mxu0 0.0
    %5217 = vmatprep.subr.mxu0 0.0
    %5218 = vmatpush1.msra.mxu0 0.0
    %5219 = vmatprep.subr.mxu0 0.0
    %5220 = vmatpush1.msra.mxu0 0.0
    %5221 = vmatprep.subr.mxu0 0.0
    %5222 = vmatpush1.msra.mxu0 0.0
    %5223 = vmatprep.subr.mxu0 0.0
    %5224 = vmatpush1.msra.mxu0 0.0
    %5225 = vmatprep.subr.mxu0 0.0
    %5226 = vmatpush1.msra.mxu0 0.0
    %5227 = vmatprep.mubr.f32.mxu0 0.0
    %5228 = vmatmul.mubr.f32.gmra.mrb[0].mxu0 %v4433
    %v5229 = vpop.f32.mrb[0].mxu0
    %v5230 = vadd.f32 0.0, %v5229
    %v5231 = vpop.f32.mrb[0].mxu0
    %5232 = vdwg.mxu0
    %v5233 = vadd.f32 %v5158, %v5230
    %v5234 = vxor.u32 %v5233, 2147483648
    %v5235 = vmul.f32 %v5234, 1.442695
    %v5236 = vpow.pop %v5235
    %v5237 = vadd.f32 %v5236, 1.0
    %v5238 = vrcp.pop %v5237
    %v5239 = vmul.f32 1.0, %v5238
    %v5240 = vld [vmem:[%s31] sm:$0xff]
    %v5241 = vld [vmem:[%s31 + $0x8] sm:$0xff]
    %v5242 = vld [vmem:[%s31 + $0x10] sm:$0xff]
    %v5243 = vld [vmem:[%s31 + $0x18] sm:$0xff]
    %v5244 = vld [vmem:[%s37] sm:$0xff]
    %v5245 = vld [vmem:[%s37 + $0x8] sm:$0xff]
    %v5246 = vld [vmem:[%s37 + $0x10] sm:$0xff]
    %v5247 = vld [vmem:[%s37 + $0x18] sm:$0xff]
    %5248 = vmatprep.subr.mxu0 0.0
    %5249 = vmatpush1.msra.mxu0 %v5244
    %5250 = vmatprep.subr.mxu0 0.0
    %5251 = vmatpush1.msra.mxu0 %v5245
    %5252 = vmatprep.subr.mxu0 0.0
    %5253 = vmatpush1.msra.mxu0 %v5246
    %5254 = vmatprep.subr.mxu0 0.0
    %5255 = vmatpush1.msra.mxu0 %v5247
    %5256 = vmatprep.subr.mxu0 0.0
    %5257 = vmatpush1.msra.mxu0 0.0
    %5258 = vmatprep.subr.mxu0 0.0
    %5259 = vmatpush1.msra.mxu0 0.0
    %5260 = vmatprep.subr.mxu0 0.0
    %5261 = vmatpush1.msra.mxu0 0.0
    %5262 = vmatprep.subr.mxu0 0.0
    %5263 = vmatpush1.msra.mxu0 0.0
    %5264 = vmatprep.subr.mxu0 0.0
    %5265 = vmatpush1.msra.mxu0 0.0
    %5266 = vmatprep.subr.mxu0 0.0
    %5267 = vmatpush1.msra.mxu0 0.0
    %5268 = vmatprep.subr.mxu0 0.0
    %5269 = vmatpush1.msra.mxu0 0.0
    %5270 = vmatprep.subr.mxu0 0.0
    %5271 = vmatpush1.msra.mxu0 0.0
    %5272 = vmatprep.subr.mxu0 0.0
    %5273 = vmatpush1.msra.mxu0 0.0
    %5274 = vmatprep.subr.mxu0 0.0
    %5275 = vmatpush1.msra.mxu0 0.0
    %5276 = vmatprep.subr.mxu0 0.0
    %5277 = vmatpush1.msra.mxu0 0.0
    %5278 = vmatprep.subr.mxu0 0.0
    %5279 = vmatpush1.msra.mxu0 0.0
    %5280 = vmatprep.subr.mxu0 0.0
    %5281 = vmatpush1.msra.mxu0 0.0
    %5282 = vmatprep.subr.mxu0 0.0
    %5283 = vmatpush1.msra.mxu0 0.0
    %5284 = vmatprep.subr.mxu0 0.0
    %5285 = vmatpush1.msra.mxu0 0.0
    %5286 = vmatprep.subr.mxu0 0.0
    %5287 = vmatpush1.msra.mxu0 0.0
    %5288 = vmatprep.subr.mxu0 0.0
    %5289 = vmatpush1.msra.mxu0 0.0
    %5290 = vmatprep.subr.mxu0 0.0
    %5291 = vmatpush1.msra.mxu0 0.0
    %5292 = vmatprep.subr.mxu0 0.0
    %5293 = vmatpush1.msra.mxu0 0.0
    %5294 = vmatprep.subr.mxu0 0.0
    %5295 = vmatpush1.msra.mxu0 0.0
    %5296 = vmatprep.subr.mxu0 0.0
    %5297 = vmatpush1.msra.mxu0 0.0
    %5298 = vmatprep.subr.mxu0 0.0
    %5299 = vmatpush1.msra.mxu0 0.0
    %5300 = vmatprep.subr.mxu0 0.0
    %5301 = vmatpush1.msra.mxu0 0.0
    %5302 = vmatprep.subr.mxu0 0.0
    %5303 = vmatpush1.msra.mxu0 0.0
    %5304 = vmatprep.subr.mxu0 0.0
    %5305 = vmatpush1.msra.mxu0 0.0
    %5306 = vmatprep.subr.mxu0 0.0
    %5307 = vmatpush1.msra.mxu0 0.0
    %5308 = vmatprep.subr.mxu0 0.0
    %5309 = vmatpush1.msra.mxu0 0.0
    %5310 = vmatprep.subr.mxu0 0.0
    %5311 = vmatpush1.msra.mxu0 0.0
    %5312 = vmatprep.mubr.f32.mxu0 0.0
    %5313 = vmatmul.mubr.f32.gmra.mrb[0].mxu0 %v5006
    %v5314 = vpop.f32.mrb[0].mxu0
    %v5315 = vadd.f32 0.0, %v5314
    %v5316 = vpop.f32.mrb[0].mxu0
    %5317 = vdwg.mxu0
    %5318 = vmatprep.subr.mxu0 0.0
    %5319 = vmatpush1.msra.mxu0 %v5240
    %5320 = vmatprep.subr.mxu0 0.0
    %5321 = vmatpush1.msra.mxu0 %v5241
    %5322 = vmatprep.subr.mxu0 0.0
    %5323 = vmatpush1.msra.mxu0 %v5242
    %5324 = vmatprep.subr.mxu0 0.0
    %5325 = vmatpush1.msra.mxu0 %v5243
    %5326 = vmatprep.subr.mxu0 0.0
    %5327 = vmatpush1.msra.mxu0 0.0
    %5328 = vmatprep.subr.mxu0 0.0
    %5329 = vmatpush1.msra.mxu0 0.0
    %5330 = vmatprep.subr.mxu0 0.0
    %5331 = vmatpush1.msra.mxu0 0.0
    %5332 = vmatprep.subr.mxu0 0.0
    %5333 = vmatpush1.msra.mxu0 0.0
    %5334 = vmatprep.subr.mxu0 0.0
    %5335 = vmatpush1.msra.mxu0 0.0
    %5336 = vmatprep.subr.mxu0 0.0
    %5337 = vmatpush1.msra.mxu0 0.0
    %5338 = vmatprep.subr.mxu0 0.0
    %5339 = vmatpush1.msra.mxu0 0.0
    %5340 = vmatprep.subr.mxu0 0.0
    %5341 = vmatpush1.msra.mxu0 0.0
    %5342 = vmatprep.subr.mxu0 0.0
    %5343 = vmatpush1.msra.mxu0 0.0
    %5344 = vmatprep.subr.mxu0 0.0
    %5345 = vmatpush1.msra.mxu0 0.0
    %5346 = vmatprep.subr.mxu0 0.0
    %5347 = vmatpush1.msra.mxu0 0.0
    %5348 = vmatprep.subr.mxu0 0.0
    %5349 = vmatpush1.msra.mxu0 0.0
    %5350 = vmatprep.subr.mxu0 0.0
    %5351 = vmatpush1.msra.mxu0 0.0
    %5352 = vmatprep.subr.mxu0 0.0
    %5353 = vmatpush1.msra.mxu0 0.0
    %5354 = vmatprep.subr.mxu0 0.0
    %5355 = vmatpush1.msra.mxu0 0.0
    %5356 = vmatprep.subr.mxu0 0.0
    %5357 = vmatpush1.msra.mxu0 0.0
    %5358 = vmatprep.subr.mxu0 0.0
    %5359 = vmatpush1.msra.mxu0 0.0
    %5360 = vmatprep.subr.mxu0 0.0
    %5361 = vmatpush1.msra.mxu0 0.0
    %5362 = vmatprep.subr.mxu0 0.0
    %5363 = vmatpush1.msra.mxu0 0.0
    %5364 = vmatprep.subr.mxu0 0.0
    %5365 = vmatpush1.msra.mxu0 0.0
    %5366 = vmatprep.subr.mxu0 0.0
    %5367 = vmatpush1.msra.mxu0 0.0
    %5368 = vmatprep.subr.mxu0 0.0
    %5369 = vmatpush1.msra.mxu0 0.0
    %5370 = vmatprep.subr.mxu0 0.0
    %5371 = vmatpush1.msra.mxu0 0.0
    %5372 = vmatprep.subr.mxu0 0.0
    %5373 = vmatpush1.msra.mxu0 0.0
    %5374 = vmatprep.subr.mxu0 0.0
    %5375 = vmatpush1.msra.mxu0 0.0
    %5376 = vmatprep.subr.mxu0 0.0
    %5377 = vmatpush1.msra.mxu0 0.0
    %5378 = vmatprep.subr.mxu0 0.0
    %5379 = vmatpush1.msra.mxu0 0.0
    %5380 = vmatprep.subr.mxu0 0.0
    %5381 = vmatpush1.msra.mxu0 0.0
    %5382 = vmatprep.mubr.f32.mxu0 0.0
    %5383 = vmatmul.mubr.f32.gmra.mrb[0].mxu0 %v5079
    %v5384 = vpop.f32.mrb[0].mxu0
    %v5385 = vadd.f32 %v5315, %v5384
    %v5386 = vpop.f32.mrb[0].mxu0
    %5387 = vdwg.mxu0
    %v5388 = vld [vmem:[#allocation11] sm:$0x1]
    %v5390 = vlaneseq
    %v5391 = vshrl.u32 %v5390, 7
    %v5392 = vsub.s32 0, %v5391
    %v5393 = vrot.slane %v5388, %v5392
    %v5395 = vadd.f32 %v5385, %v5393
    %v5396 = vld [vmem:[#allocation7] sm:$0xff]
    %v5397 = vld [vmem:[#allocation7 + $0x8] sm:$0xff]
    %v5398 = vld [vmem:[#allocation7 + $0x10] sm:$0xff]
    %v5399 = vld [vmem:[#allocation7 + $0x18] sm:$0xff]
    %5400 = vmatprep.subr.mxu0 0.0
    %5401 = vmatpush1.msra.mxu0 %v5396
    %5402 = vmatprep.subr.mxu0 0.0
    %5403 = vmatpush1.msra.mxu0 %v5397
    %5404 = vmatprep.subr.mxu0 0.0
    %5405 = vmatpush1.msra.mxu0 %v5398
    %5406 = vmatprep.subr.mxu0 0.0
    %5407 = vmatpush1.msra.mxu0 %v5399
    %5408 = vmatprep.subr.mxu0 0.0
    %5409 = vmatpush1.msra.mxu0 0.0
    %5410 = vmatprep.subr.mxu0 0.0
    %5411 = vmatpush1.msra.mxu0 0.0
    %5412 = vmatprep.subr.mxu0 0.0
    %5413 = vmatpush1.msra.mxu0 0.0
    %5414 = vmatprep.subr.mxu0 0.0
    %5415 = vmatpush1.msra.mxu0 0.0
    %5416 = vmatprep.subr.mxu0 0.0
    %5417 = vmatpush1.msra.mxu0 0.0
    %5418 = vmatprep.subr.mxu0 0.0
    %5419 = vmatpush1.msra.mxu0 0.0
    %5420 = vmatprep.subr.mxu0 0.0
    %5421 = vmatpush1.msra.mxu0 0.0
    %5422 = vmatprep.subr.mxu0 0.0
    %5423 = vmatpush1.msra.mxu0 0.0
    %5424 = vmatprep.subr.mxu0 0.0
    %5425 = vmatpush1.msra.mxu0 0.0
    %5426 = vmatprep.subr.mxu0 0.0
    %5427 = vmatpush1.msra.mxu0 0.0
    %5428 = vmatprep.subr.mxu0 0.0
    %5429 = vmatpush1.msra.mxu0 0.0
    %5430 = vmatprep.subr.mxu0 0.0
    %5431 = vmatpush1.msra.mxu0 0.0
    %5432 = vmatprep.subr.mxu0 0.0
    %5433 = vmatpush1.msra.mxu0 0.0
    %5434 = vmatprep.subr.mxu0 0.0
    %5435 = vmatpush1.msra.mxu0 0.0
    %5436 = vmatprep.subr.mxu0 0.0
    %5437 = vmatpush1.msra.mxu0 0.0
    %5438 = vmatprep.subr.mxu0 0.0
    %5439 = vmatpush1.msra.mxu0 0.0
    %5440 = vmatprep.subr.mxu0 0.0
    %5441 = vmatpush1.msra.mxu0 0.0
    %5442 = vmatprep.subr.mxu0 0.0
    %5443 = vmatpush1.msra.mxu0 0.0
    %5444 = vmatprep.subr.mxu0 0.0
    %5445 = vmatpush1.msra.mxu0 0.0
    %5446 = vmatprep.subr.mxu0 0.0
    %5447 = vmatpush1.msra.mxu0 0.0
    %5448 = vmatprep.subr.mxu0 0.0
    %5449 = vmatpush1.msra.mxu0 0.0
    %5450 = vmatprep.subr.mxu0 0.0
    %5451 = vmatpush1.msra.mxu0 0.0
    %5452 = vmatprep.subr.mxu0 0.0
    %5453 = vmatpush1.msra.mxu0 0.0
    %5454 = vmatprep.subr.mxu0 0.0
    %5455 = vmatpush1.msra.mxu0 0.0
    %5456 = vmatprep.subr.mxu0 0.0
    %5457 = vmatpush1.msra.mxu0 0.0
    %5458 = vmatprep.subr.mxu0 0.0
    %5459 = vmatpush1.msra.mxu0 0.0
    %5460 = vmatprep.subr.mxu0 0.0
    %5461 = vmatpush1.msra.mxu0 0.0
    %5462 = vmatprep.subr.mxu0 0.0
    %5463 = vmatpush1.msra.mxu0 0.0
    %5464 = vmatprep.mubr.f32.mxu0 0.0
    %5465 = vmatmul.mubr.f32.gmra.mrb[0].mxu0 %v4433
    %v5466 = vpop.f32.mrb[0].mxu0
    %v5467 = vadd.f32 0.0, %v5466
    %v5468 = vpop.f32.mrb[0].mxu0
    %5469 = vdwg.mxu0
    %v5470 = vadd.f32 %v5395, %v5467
    %v5471 = vxor.u32 %v5470, 2147483648
    %v5472 = vmul.f32 %v5471, 1.442695
    %v5473 = vpow.pop %v5472
    %v5474 = vadd.f32 %v5473, 1.0
    %v5475 = vrcp.pop %v5474
    %v5476 = vmul.f32 1.0, %v5475
    %v5477 = vld [vmem:[%s33] sm:$0xff]
    %v5478 = vld [vmem:[%s33 + $0x8] sm:$0xff]
    %v5479 = vld [vmem:[%s33 + $0x10] sm:$0xff]
    %v5480 = vld [vmem:[%s33 + $0x18] sm:$0xff]
    %v5481 = vld [vmem:[%s39] sm:$0xff]
    %v5482 = vld [vmem:[%s39 + $0x8] sm:$0xff]
    %v5483 = vld [vmem:[%s39 + $0x10] sm:$0xff]
    %v5484 = vld [vmem:[%s39 + $0x18] sm:$0xff]
    %5485 = vmatprep.subr.mxu0 0.0
    %5486 = vmatpush1.msra.mxu0 %v5481
    %5487 = vmatprep.subr.mxu0 0.0
    %5488 = vmatpush1.msra.mxu0 %v5482
    %5489 = vmatprep.subr.mxu0 0.0
    %5490 = vmatpush1.msra.mxu0 %v5483
    %5491 = vmatprep.subr.mxu0 0.0
    %5492 = vmatpush1.msra.mxu0 %v5484
    %5493 = vmatprep.subr.mxu0 0.0
    %5494 = vmatpush1.msra.mxu0 0.0
    %5495 = vmatprep.subr.mxu0 0.0
    %5496 = vmatpush1.msra.mxu0 0.0
    %5497 = vmatprep.subr.mxu0 0.0
    %5498 = vmatpush1.msra.mxu0 0.0
    %5499 = vmatprep.subr.mxu0 0.0
    %5500 = vmatpush1.msra.mxu0 0.0
    %5501 = vmatprep.subr.mxu0 0.0
    %5502 = vmatpush1.msra.mxu0 0.0
    %5503 = vmatprep.subr.mxu0 0.0
    %5504 = vmatpush1.msra.mxu0 0.0
    %5505 = vmatprep.subr.mxu0 0.0
    %5506 = vmatpush1.msra.mxu0 0.0
    %5507 = vmatprep.subr.mxu0 0.0
    %5508 = vmatpush1.msra.mxu0 0.0
    %5509 = vmatprep.subr.mxu0 0.0
    %5510 = vmatpush1.msra.mxu0 0.0
    %5511 = vmatprep.subr.mxu0 0.0
    %5512 = vmatpush1.msra.mxu0 0.0
    %5513 = vmatprep.subr.mxu0 0.0
    %5514 = vmatpush1.msra.mxu0 0.0
    %5515 = vmatprep.subr.mxu0 0.0
    %5516 = vmatpush1.msra.mxu0 0.0
    %5517 = vmatprep.subr.mxu0 0.0
    %5518 = vmatpush1.msra.mxu0 0.0
    %5519 = vmatprep.subr.mxu0 0.0
    %5520 = vmatpush1.msra.mxu0 0.0
    %5521 = vmatprep.subr.mxu0 0.0
    %5522 = vmatpush1.msra.mxu0 0.0
    %5523 = vmatprep.subr.mxu0 0.0
    %5524 = vmatpush1.msra.mxu0 0.0
    %5525 = vmatprep.subr.mxu0 0.0
    %5526 = vmatpush1.msra.mxu0 0.0
    %5527 = vmatprep.subr.mxu0 0.0
    %5528 = vmatpush1.msra.mxu0 0.0
    %5529 = vmatprep.subr.mxu0 0.0
    %5530 = vmatpush1.msra.mxu0 0.0
    %5531 = vmatprep.subr.mxu0 0.0
    %5532 = vmatpush1.msra.mxu0 0.0
    %5533 = vmatprep.subr.mxu0 0.0
    %5534 = vmatpush1.msra.mxu0 0.0
    %5535 = vmatprep.subr.mxu0 0.0
    %5536 = vmatpush1.msra.mxu0 0.0
    %5537 = vmatprep.subr.mxu0 0.0
    %5538 = vmatpush1.msra.mxu0 0.0
    %5539 = vmatprep.subr.mxu0 0.0
    %5540 = vmatpush1.msra.mxu0 0.0
    %5541 = vmatprep.subr.mxu0 0.0
    %5542 = vmatpush1.msra.mxu0 0.0
    %5543 = vmatprep.subr.mxu0 0.0
    %5544 = vmatpush1.msra.mxu0 0.0
    %5545 = vmatprep.subr.mxu0 0.0
    %5546 = vmatpush1.msra.mxu0 0.0
    %5547 = vmatprep.subr.mxu0 0.0
    %5548 = vmatpush1.msra.mxu0 0.0
    %5549 = vmatprep.mubr.f32.mxu0 0.0
    %5550 = vmatmul.mubr.f32.gmra.mrb[0].mxu0 %v5006
    %v5551 = vpop.f32.mrb[0].mxu0
    %v5552 = vadd.f32 0.0, %v5551
    %v5553 = vpop.f32.mrb[0].mxu0
    %5554 = vdwg.mxu0
    %5555 = vmatprep.subr.mxu0 0.0
    %5556 = vmatpush1.msra.mxu0 %v5477
    %5557 = vmatprep.subr.mxu0 0.0
    %5558 = vmatpush1.msra.mxu0 %v5478
    %5559 = vmatprep.subr.mxu0 0.0
    %5560 = vmatpush1.msra.mxu0 %v5479
    %5561 = vmatprep.subr.mxu0 0.0
    %5562 = vmatpush1.msra.mxu0 %v5480
    %5563 = vmatprep.subr.mxu0 0.0
    %5564 = vmatpush1.msra.mxu0 0.0
    %5565 = vmatprep.subr.mxu0 0.0
    %5566 = vmatpush1.msra.mxu0 0.0
    %5567 = vmatprep.subr.mxu0 0.0
    %5568 = vmatpush1.msra.mxu0 0.0
    %5569 = vmatprep.subr.mxu0 0.0
    %5570 = vmatpush1.msra.mxu0 0.0
    %5571 = vmatprep.subr.mxu0 0.0
    %5572 = vmatpush1.msra.mxu0 0.0
    %5573 = vmatprep.subr.mxu0 0.0
    %5574 = vmatpush1.msra.mxu0 0.0
    %5575 = vmatprep.subr.mxu0 0.0
    %5576 = vmatpush1.msra.mxu0 0.0
    %5577 = vmatprep.subr.mxu0 0.0
    %5578 = vmatpush1.msra.mxu0 0.0
    %5579 = vmatprep.subr.mxu0 0.0
    %5580 = vmatpush1.msra.mxu0 0.0
    %5581 = vmatprep.subr.mxu0 0.0
    %5582 = vmatpush1.msra.mxu0 0.0
    %5583 = vmatprep.subr.mxu0 0.0
    %5584 = vmatpush1.msra.mxu0 0.0
    %5585 = vmatprep.subr.mxu0 0.0
    %5586 = vmatpush1.msra.mxu0 0.0
    %5587 = vmatprep.subr.mxu0 0.0
    %5588 = vmatpush1.msra.mxu0 0.0
    %5589 = vmatprep.subr.mxu0 0.0
    %5590 = vmatpush1.msra.mxu0 0.0
    %5591 = vmatprep.subr.mxu0 0.0
    %5592 = vmatpush1.msra.mxu0 0.0
    %5593 = vmatprep.subr.mxu0 0.0
    %5594 = vmatpush1.msra.mxu0 0.0
    %5595 = vmatprep.subr.mxu0 0.0
    %5596 = vmatpush1.msra.mxu0 0.0
    %5597 = vmatprep.subr.mxu0 0.0
    %5598 = vmatpush1.msra.mxu0 0.0
    %5599 = vmatprep.subr.mxu0 0.0
    %5600 = vmatpush1.msra.mxu0 0.0
    %5601 = vmatprep.subr.mxu0 0.0
    %5602 = vmatpush1.msra.mxu0 0.0
    %5603 = vmatprep.subr.mxu0 0.0
    %5604 = vmatpush1.msra.mxu0 0.0
    %5605 = vmatprep.subr.mxu0 0.0
    %5606 = vmatpush1.msra.mxu0 0.0
    %5607 = vmatprep.subr.mxu0 0.0
    %5608 = vmatpush1.msra.mxu0 0.0
    %5609 = vmatprep.subr.mxu0 0.0
    %5610 = vmatpush1.msra.mxu0 0.0
    %5611 = vmatprep.subr.mxu0 0.0
    %5612 = vmatpush1.msra.mxu0 0.0
    %5613 = vmatprep.subr.mxu0 0.0
    %5614 = vmatpush1.msra.mxu0 0.0
    %5615 = vmatprep.subr.mxu0 0.0
    %5616 = vmatpush1.msra.mxu0 0.0
    %5617 = vmatprep.subr.mxu0 0.0
    %5618 = vmatpush1.msra.mxu0 0.0
    %5619 = vmatprep.mubr.f32.mxu0 0.0
    %5620 = vmatmul.mubr.f32.gmra.mrb[0].mxu0 %v5079
    %v5621 = vpop.f32.mrb[0].mxu0
    %v5622 = vadd.f32 %v5552, %v5621
    %v5623 = vpop.f32.mrb[0].mxu0
    %5624 = vdwg.mxu0
    %v5625 = vld [vmem:[#allocation13] sm:$0x1]
    %v5627 = vlaneseq
    %v5628 = vshrl.u32 %v5627, 7
    %v5629 = vsub.s32 0, %v5628
    %v5630 = vrot.slane %v5625, %v5629
    %v5632 = vadd.f32 %v5622, %v5630
    %v5633 = vld [vmem:[#allocation8] sm:$0xff]
    %v5634 = vld [vmem:[#allocation8 + $0x8] sm:$0xff]
    %v5635 = vld [vmem:[#allocation8 + $0x10] sm:$0xff]
    %v5636 = vld [vmem:[#allocation8 + $0x18] sm:$0xff]
    %5637 = vmatprep.subr.mxu0 0.0
    %5638 = vmatpush1.msra.mxu0 %v5633
    %5639 = vmatprep.subr.mxu0 0.0
    %5640 = vmatpush1.msra.mxu0 %v5634
    %5641 = vmatprep.subr.mxu0 0.0
    %5642 = vmatpush1.msra.mxu0 %v5635
    %5643 = vmatprep.subr.mxu0 0.0
    %5644 = vmatpush1.msra.mxu0 %v5636
    %5645 = vmatprep.subr.mxu0 0.0
    %5646 = vmatpush1.msra.mxu0 0.0
    %5647 = vmatprep.subr.mxu0 0.0
    %5648 = vmatpush1.msra.mxu0 0.0
    %5649 = vmatprep.subr.mxu0 0.0
    %5650 = vmatpush1.msra.mxu0 0.0
    %5651 = vmatprep.subr.mxu0 0.0
    %5652 = vmatpush1.msra.mxu0 0.0
    %5653 = vmatprep.subr.mxu0 0.0
    %5654 = vmatpush1.msra.mxu0 0.0
    %5655 = vmatprep.subr.mxu0 0.0
    %5656 = vmatpush1.msra.mxu0 0.0
    %5657 = vmatprep.subr.mxu0 0.0
    %5658 = vmatpush1.msra.mxu0 0.0
    %5659 = vmatprep.subr.mxu0 0.0
    %5660 = vmatpush1.msra.mxu0 0.0
    %5661 = vmatprep.subr.mxu0 0.0
    %5662 = vmatpush1.msra.mxu0 0.0
    %5663 = vmatprep.subr.mxu0 0.0
    %5664 = vmatpush1.msra.mxu0 0.0
    %5665 = vmatprep.subr.mxu0 0.0
    %5666 = vmatpush1.msra.mxu0 0.0
    %5667 = vmatprep.subr.mxu0 0.0
    %5668 = vmatpush1.msra.mxu0 0.0
    %5669 = vmatprep.subr.mxu0 0.0
    %5670 = vmatpush1.msra.mxu0 0.0
    %5671 = vmatprep.subr.mxu0 0.0
    %5672 = vmatpush1.msra.mxu0 0.0
    %5673 = vmatprep.subr.mxu0 0.0
    %5674 = vmatpush1.msra.mxu0 0.0
    %5675 = vmatprep.subr.mxu0 0.0
    %5676 = vmatpush1.msra.mxu0 0.0
    %5677 = vmatprep.subr.mxu0 0.0
    %5678 = vmatpush1.msra.mxu0 0.0
    %5679 = vmatprep.subr.mxu0 0.0
    %5680 = vmatpush1.msra.mxu0 0.0
    %5681 = vmatprep.subr.mxu0 0.0
    %5682 = vmatpush1.msra.mxu0 0.0
    %5683 = vmatprep.subr.mxu0 0.0
    %5684 = vmatpush1.msra.mxu0 0.0
    %5685 = vmatprep.subr.mxu0 0.0
    %5686 = vmatpush1.msra.mxu0 0.0
    %5687 = vmatprep.subr.mxu0 0.0
    %5688 = vmatpush1.msra.mxu0 0.0
    %5689 = vmatprep.subr.mxu0 0.0
    %5690 = vmatpush1.msra.mxu0 0.0
    %5691 = vmatprep.subr.mxu0 0.0
    %5692 = vmatpush1.msra.mxu0 0.0
    %5693 = vmatprep.subr.mxu0 0.0
    %5694 = vmatpush1.msra.mxu0 0.0
    %5695 = vmatprep.subr.mxu0 0.0
    %5696 = vmatpush1.msra.mxu0 0.0
    %5697 = vmatprep.subr.mxu0 0.0
    %5698 = vmatpush1.msra.mxu0 0.0
    %5699 = vmatprep.subr.mxu0 0.0
    %5700 = vmatpush1.msra.mxu0 0.0
    %5701 = vmatprep.mubr.f32.mxu0 0.0
    %5702 = vmatmul.mubr.f32.gmra.mrb[0].mxu0 %v4433
    %v5703 = vpop.f32.mrb[0].mxu0
    %v5704 = vadd.f32 0.0, %v5703
    %v5705 = vpop.f32.mrb[0].mxu0
    %5706 = vdwg.mxu0
    %v5707 = vmul.f32 %v5239, %v5704
    %v5708 = vadd.f32 %v5632, %v5707
    %v5709 = vtanh.pop %v5708
    %v5710 = vsub.f32 1.0, %v5476
    %v5711 = vmul.f32 %v5710, %v5709
    %v5712 = vmul.f32 %v5476, %v4353
    %v5713 = vadd.f32 %v5711, %v5712
    %v5714 = vld [vmem:[%s53] sm:$0xff]
    %v5715 = vld [vmem:[%s53 + $0x8] sm:$0xff]
    %v5716 = vld [vmem:[%s53 + $0x10] sm:$0xff]
    %v5717 = vld [vmem:[%s53 + $0x18] sm:$0xff]
    %v5718 = vld [vmem:[#allocation14] sm:$0xff]
    %v5719 = vld [vmem:[#allocation14 + $0x8] sm:$0xff]
    %v5720 = vld [vmem:[#allocation14 + $0x10] sm:$0xff]
    %v5721 = vld [vmem:[#allocation14 + $0x18] sm:$0xff]
    %5722 = vmatprep.subr.mxu0 0.0
    %5723 = vmatpush1.msra.mxu0 %v5718
    %5724 = vmatprep.subr.mxu0 0.0
    %5725 = vmatpush1.msra.mxu0 %v5719
    %5726 = vmatprep.subr.mxu0 0.0
    %5727 = vmatpush1.msra.mxu0 %v5720
    %5728 = vmatprep.subr.mxu0 0.0
    %5729 = vmatpush1.msra.mxu0 %v5721
    %5730 = vmatprep.subr.mxu0 0.0
    %5731 = vmatpush1.msra.mxu0 0.0
    %5732 = vmatprep.subr.mxu0 0.0
    %5733 = vmatpush1.msra.mxu0 0.0
    %5734 = vmatprep.subr.mxu0 0.0
    %5735 = vmatpush1.msra.mxu0 0.0
    %5736 = vmatprep.subr.mxu0 0.0
    %5737 = vmatpush1.msra.mxu0 0.0
    %5738 = vmatprep.subr.mxu0 0.0
    %5739 = vmatpush1.msra.mxu0 0.0
    %5740 = vmatprep.subr.mxu0 0.0
    %5741 = vmatpush1.msra.mxu0 0.0
    %5742 = vmatprep.subr.mxu0 0.0
    %5743 = vmatpush1.msra.mxu0 0.0
    %5744 = vmatprep.subr.mxu0 0.0
    %5745 = vmatpush1.msra.mxu0 0.0
    %5746 = vmatprep.subr.mxu0 0.0
    %5747 = vmatpush1.msra.mxu0 0.0
    %5748 = vmatprep.subr.mxu0 0.0
    %5749 = vmatpush1.msra.mxu0 0.0
    %5750 = vmatprep.subr.mxu0 0.0
    %5751 = vmatpush1.msra.mxu0 0.0
    %5752 = vmatprep.subr.mxu0 0.0
    %5753 = vmatpush1.msra.mxu0 0.0
    %5754 = vmatprep.subr.mxu0 0.0
    %5755 = vmatpush1.msra.mxu0 0.0
    %5756 = vmatprep.subr.mxu0 0.0
    %5757 = vmatpush1.msra.mxu0 0.0
    %5758 = vmatprep.subr.mxu0 0.0
    %5759 = vmatpush1.msra.mxu0 0.0
    %5760 = vmatprep.subr.mxu0 0.0
    %5761 = vmatpush1.msra.mxu0 0.0
    %5762 = vmatprep.subr.mxu0 0.0
    %5763 = vmatpush1.msra.mxu0 0.0
    %5764 = vmatprep.subr.mxu0 0.0
    %5765 = vmatpush1.msra.mxu0 0.0
    %5766 = vmatprep.subr.mxu0 0.0
    %5767 = vmatpush1.msra.mxu0 0.0
    %5768 = vmatprep.subr.mxu0 0.0
    %5769 = vmatpush1.msra.mxu0 0.0
    %5770 = vmatprep.subr.mxu0 0.0
    %5771 = vmatpush1.msra.mxu0 0.0
    %5772 = vmatprep.subr.mxu0 0.0
    %5773 = vmatpush1.msra.mxu0 0.0
    %5774 = vmatprep.subr.mxu0 0.0
    %5775 = vmatpush1.msra.mxu0 0.0
    %5776 = vmatprep.subr.mxu0 0.0
    %5777 = vmatpush1.msra.mxu0 0.0
    %5778 = vmatprep.subr.mxu0 0.0
    %5779 = vmatpush1.msra.mxu0 0.0
    %5780 = vmatprep.subr.mxu0 0.0
    %5781 = vmatpush1.msra.mxu0 0.0
    %5782 = vmatprep.subr.mxu0 0.0
    %5783 = vmatpush1.msra.mxu0 0.0
    %5784 = vmatprep.subr.mxu0 0.0
    %5785 = vmatpush1.msra.mxu0 0.0
    %5786 = vmatprep.mubr.f32.mxu0 0.0
    %5787 = vmatmul.mubr.f32.gmra.mrb[0].mxu0 %v5006
    %v5788 = vpop.f32.mrb[0].mxu0
    %v5789 = vadd.f32 0.0, %v5788
    %v5790 = vpop.f32.mrb[0].mxu0
    %5791 = vdwg.mxu0
    %v5793 = vsel %vm410, %v5713, 0
    %5795 = vmatprep.subr.mxu0 0.0
    %5796 = vmatpush1.msra.mxu0 %v5714
    %5797 = vmatprep.subr.mxu0 0.0
    %5798 = vmatpush1.msra.mxu0 %v5715
    %5799 = vmatprep.subr.mxu0 0.0
    %5800 = vmatpush1.msra.mxu0 %v5716
    %5801 = vmatprep.subr.mxu0 0.0
    %5802 = vmatpush1.msra.mxu0 %v5717
    %5803 = vmatprep.subr.mxu0 0.0
    %5804 = vmatpush1.msra.mxu0 0.0
    %5805 = vmatprep.subr.mxu0 0.0
    %5806 = vmatpush1.msra.mxu0 0.0
    %5807 = vmatprep.subr.mxu0 0.0
    %5808 = vmatpush1.msra.mxu0 0.0
    %5809 = vmatprep.subr.mxu0 0.0
    %5810 = vmatpush1.msra.mxu0 0.0
    %5811 = vmatprep.subr.mxu0 0.0
    %5812 = vmatpush1.msra.mxu0 0.0
    %5813 = vmatprep.subr.mxu0 0.0
    %5814 = vmatpush1.msra.mxu0 0.0
    %5815 = vmatprep.subr.mxu0 0.0
    %5816 = vmatpush1.msra.mxu0 0.0
    %5817 = vmatprep.subr.mxu0 0.0
    %5818 = vmatpush1.msra.mxu0 0.0
    %5819 = vmatprep.subr.mxu0 0.0
    %5820 = vmatpush1.msra.mxu0 0.0
    %5821 = vmatprep.subr.mxu0 0.0
    %5822 = vmatpush1.msra.mxu0 0.0
    %5823 = vmatprep.subr.mxu0 0.0
    %5824 = vmatpush1.msra.mxu0 0.0
    %5825 = vmatprep.subr.mxu0 0.0
    %5826 = vmatpush1.msra.mxu0 0.0
    %5827 = vmatprep.subr.mxu0 0.0
    %5828 = vmatpush1.msra.mxu0 0.0
    %5829 = vmatprep.subr.mxu0 0.0
    %5830 = vmatpush1.msra.mxu0 0.0
    %5831 = vmatprep.subr.mxu0 0.0
    %5832 = vmatpush1.msra.mxu0 0.0
    %5833 = vmatprep.subr.mxu0 0.0
    %5834 = vmatpush1.msra.mxu0 0.0
    %5835 = vmatprep.subr.mxu0 0.0
    %5836 = vmatpush1.msra.mxu0 0.0
    %5837 = vmatprep.subr.mxu0 0.0
    %5838 = vmatpush1.msra.mxu0 0.0
    %5839 = vmatprep.subr.mxu0 0.0
    %5840 = vmatpush1.msra.mxu0 0.0
    %5841 = vmatprep.subr.mxu0 0.0
    %5842 = vmatpush1.msra.mxu0 0.0
    %5843 = vmatprep.subr.mxu0 0.0
    %5844 = vmatpush1.msra.mxu0 0.0
    %5845 = vmatprep.subr.mxu0 0.0
    %5846 = vmatpush1.msra.mxu0 0.0
    %5847 = vmatprep.subr.mxu0 0.0
    %5848 = vmatpush1.msra.mxu0 0.0
    %5849 = vmatprep.subr.mxu0 0.0
    %5850 = vmatpush1.msra.mxu0 0.0
    %5851 = vmatprep.subr.mxu0 0.0
    %5852 = vmatpush1.msra.mxu0 0.0
    %5853 = vmatprep.subr.mxu0 0.0
    %5854 = vmatpush1.msra.mxu0 0.0
    %5855 = vmatprep.subr.mxu0 0.0
    %5856 = vmatpush1.msra.mxu0 0.0
    %5857 = vmatprep.subr.mxu0 0.0
    %5858 = vmatpush1.msra.mxu0 0.0
    %5859 = vmatprep.mubr.f32.mxu0 0.0
    %5860 = vmatmul.mubr.f32.gmra.mrb[0].mxu0 %v5793
    %v5861 = vpop.f32.mrb[0].mxu0
    %v5862 = vadd.f32 %v5789, %v5861
    %v5863 = vpop.f32.mrb[0].mxu0
    %5864 = vdwg.mxu0
    %v5865 = vld [vmem:[#allocation16] sm:$0xff]
    %v5866 = vld [vmem:[#allocation16 + $0x8] sm:$0xff]
    %v5867 = vld [vmem:[#allocation16 + $0x10] sm:$0xff]
    %v5868 = vld [vmem:[#allocation16 + $0x18] sm:$0xff]
    %5869 = vmatprep.subr.mxu0 0.0
    %5870 = vmatpush1.msra.mxu0 %v5865
    %5871 = vmatprep.subr.mxu0 0.0
    %5872 = vmatpush1.msra.mxu0 %v5866
    %5873 = vmatprep.subr.mxu0 0.0
    %5874 = vmatpush1.msra.mxu0 %v5867
    %5875 = vmatprep.subr.mxu0 0.0
    %5876 = vmatpush1.msra.mxu0 %v5868
    %5877 = vmatprep.subr.mxu0 0.0
    %5878 = vmatpush1.msra.mxu0 0.0
    %5879 = vmatprep.subr.mxu0 0.0
    %5880 = vmatpush1.msra.mxu0 0.0
    %5881 = vmatprep.subr.mxu0 0.0
    %5882 = vmatpush1.msra.mxu0 0.0
    %5883 = vmatprep.subr.mxu0 0.0
    %5884 = vmatpush1.msra.mxu0 0.0
    %5885 = vmatprep.subr.mxu0 0.0
    %5886 = vmatpush1.msra.mxu0 0.0
    %5887 = vmatprep.subr.mxu0 0.0
    %5888 = vmatpush1.msra.mxu0 0.0
    %5889 = vmatprep.subr.mxu0 0.0
    %5890 = vmatpush1.msra.mxu0 0.0
    %5891 = vmatprep.subr.mxu0 0.0
    %5892 = vmatpush1.msra.mxu0 0.0
    %5893 = vmatprep.subr.mxu0 0.0
    %5894 = vmatpush1.msra.mxu0 0.0
    %5895 = vmatprep.subr.mxu0 0.0
    %5896 = vmatpush1.msra.mxu0 0.0
    %5897 = vmatprep.subr.mxu0 0.0
    %5898 = vmatpush1.msra.mxu0 0.0
    %5899 = vmatprep.subr.mxu0 0.0
    %5900 = vmatpush1.msra.mxu0 0.0
    %5901 = vmatprep.subr.mxu0 0.0
    %5902 = vmatpush1.msra.mxu0 0.0
    %5903 = vmatprep.subr.mxu0 0.0
    %5904 = vmatpush1.msra.mxu0 0.0
    %5905 = vmatprep.subr.mxu0 0.0
    %5906 = vmatpush1.msra.mxu0 0.0
    %5907 = vmatprep.subr.mxu0 0.0
    %5908 = vmatpush1.msra.mxu0 0.0
    %5909 = vmatprep.subr.mxu0 0.0
    %5910 = vmatpush1.msra.mxu0 0.0
    %5911 = vmatprep.subr.mxu0 0.0
    %5912 = vmatpush1.msra.mxu0 0.0
    %5913 = vmatprep.subr.mxu0 0.0
    %5914 = vmatpush1.msra.mxu0 0.0
    %5915 = vmatprep.subr.mxu0 0.0
    %5916 = vmatpush1.msra.mxu0 0.0
    %5917 = vmatprep.subr.mxu0 0.0
    %5918 = vmatpush1.msra.mxu0 0.0
    %5919 = vmatprep.subr.mxu0 0.0
    %5920 = vmatpush1.msra.mxu0 0.0
    %5921 = vmatprep.subr.mxu0 0.0
    %5922 = vmatpush1.msra.mxu0 0.0
    %5923 = vmatprep.subr.mxu0 0.0
    %5924 = vmatpush1.msra.mxu0 0.0
    %5925 = vmatprep.subr.mxu0 0.0
    %5926 = vmatpush1.msra.mxu0 0.0
    %5927 = vmatprep.subr.mxu0 0.0
    %5928 = vmatpush1.msra.mxu0 0.0
    %5929 = vmatprep.subr.mxu0 0.0
    %5930 = vmatpush1.msra.mxu0 0.0
    %5931 = vmatprep.subr.mxu0 0.0
    %5932 = vmatpush1.msra.mxu0 0.0
    %5933 = vmatprep.mubr.f32.mxu0 0.0
    %5934 = vmatmul.mubr.f32.gmra.mrb[0].mxu0 %v5079
    %v5935 = vpop.f32.mrb[0].mxu0
    %v5936 = vadd.f32 0.0, %v5935
    %v5937 = vpop.f32.mrb[0].mxu0
    %5938 = vdwg.mxu0
    %v5939 = vadd.f32 %v5862, %v5936
    %v5940 = vld [vmem:[#allocation17] sm:$0x1]
    %v5942 = vlaneseq
    %v5943 = vshrl.u32 %v5942, 7
    %v5944 = vsub.s32 0, %v5943
    %v5945 = vrot.slane %v5940, %v5944
    %v5947 = vadd.f32 %v5939, %v5945
    %s5948 = scalar_lea.vmem [#allocation19], 8
    %5949 = vst [vmem:[%s5948] sm:$0x3] %v5947
    %v5950 = vsel %vm1869, %v5947, -inf
    %5951 = vmax.xlane.f32.xlu0 %v5950
    %v5952 = vpop.xlane.xlu0 %5951
    %vm5953 = vcmp.eq.f32.partialorder %v5947, %v5952
    %v5954 = vsel %vm5953, %v254, 64
    %v5955 = vsel %vm1869, %v5954, 2147483647
    %v5956 = vand.u32 %v5955, 65535
    %v5957 = vshra.s32 %v5955, 16
    %v5958 = vcvt.s32.f32 %v5956
    %v5959 = vcvt.s32.f32 %v5957
    %5960 = vmin.xlane.f32.xlu0 %v5959
    %v5961 = vpop.xlane.xlu0 %5960
    %vm5962 = vcmp.eq.f32.partialorder %v5959, %v5961
    %v5963 = vsel %vm5962, %v5958, inf
    %5964 = vmin.xlane.f32.xlu0 %v5963
    %v5965 = vpop.xlane.xlu0 %5964
    %v5966 = vcvt.f32.s32 %v5965
    %v5967 = vcvt.f32.s32 %v5961
    %v5968 = vshll.u32 %v5967, 16
    %v5969 = vadd.s32 %v5968, %v5966
    %vm5970 = vcmp.eq.s32.totalorder %v254, %v5969
    %v5971 = vsel %vm5970, 1, 0
    %v5972 = vcvt.s32.f32 %v5971
    %v5974 = vsel %vm617, %v5972, 0
    %5976 = vmatprep.subr.mxu0 0.0
    %5977 = vmatpush1.msra.mxu0 %v600
    %5978 = vmatprep.subr.mxu0 0.0
    %5979 = vmatpush1.msra.mxu0 %v601
    %5980 = vmatprep.subr.mxu0 0.0
    %5981 = vmatpush1.msra.mxu0 %v602
    %5982 = vmatprep.subr.mxu0 0.0
    %5983 = vmatpush1.msra.mxu0 %v603
    %5984 = vmatprep.subr.mxu0 0.0
    %5985 = vmatpush1.msra.mxu0 %v604
    %5986 = vmatprep.subr.mxu0 0.0
    %5987 = vmatpush1.msra.mxu0 %v605
    %5988 = vmatprep.subr.mxu0 0.0
    %5989 = vmatpush1.msra.mxu0 %v606
    %5990 = vmatprep.subr.mxu0 0.0
    %5991 = vmatpush1.msra.mxu0 %v607
    %5992 = vmatprep.subr.mxu0 0.0
    %5993 = vmatpush1.msra.mxu0 0.0
    %5994 = vmatprep.subr.mxu0 0.0
    %5995 = vmatpush1.msra.mxu0 0.0
    %5996 = vmatprep.subr.mxu0 0.0
    %5997 = vmatpush1.msra.mxu0 0.0
    %5998 = vmatprep.subr.mxu0 0.0
    %5999 = vmatpush1.msra.mxu0 0.0
    %6000 = vmatprep.subr.mxu0 0.0
    %6001 = vmatpush1.msra.mxu0 0.0
    %6002 = vmatprep.subr.mxu0 0.0
    %6003 = vmatpush1.msra.mxu0 0.0
    %6004 = vmatprep.subr.mxu0 0.0
    %6005 = vmatpush1.msra.mxu0 0.0
    %6006 = vmatprep.subr.mxu0 0.0
    %6007 = vmatpush1.msra.mxu0 0.0
    %6008 = vmatprep.subr.mxu0 0.0
    %6009 = vmatpush1.msra.mxu0 0.0
    %6010 = vmatprep.subr.mxu0 0.0
    %6011 = vmatpush1.msra.mxu0 0.0
    %6012 = vmatprep.subr.mxu0 0.0
    %6013 = vmatpush1.msra.mxu0 0.0
    %6014 = vmatprep.subr.mxu0 0.0
    %6015 = vmatpush1.msra.mxu0 0.0
    %6016 = vmatprep.subr.mxu0 0.0
    %6017 = vmatpush1.msra.mxu0 0.0
    %6018 = vmatprep.subr.mxu0 0.0
    %6019 = vmatpush1.msra.mxu0 0.0
    %6020 = vmatprep.subr.mxu0 0.0
    %6021 = vmatpush1.msra.mxu0 0.0
    %6022 = vmatprep.subr.mxu0 0.0
    %6023 = vmatpush1.msra.mxu0 0.0
    %6024 = vmatprep.subr.mxu0 0.0
    %6025 = vmatpush1.msra.mxu0 0.0
    %6026 = vmatprep.subr.mxu0 0.0
    %6027 = vmatpush1.msra.mxu0 0.0
    %6028 = vmatprep.subr.mxu0 0.0
    %6029 = vmatpush1.msra.mxu0 0.0
    %6030 = vmatprep.subr.mxu0 0.0
    %6031 = vmatpush1.msra.mxu0 0.0
    %6032 = vmatprep.subr.mxu0 0.0
    %6033 = vmatpush1.msra.mxu0 0.0
    %6034 = vmatprep.subr.mxu0 0.0
    %6035 = vmatpush1.msra.mxu0 0.0
    %6036 = vmatprep.subr.mxu0 0.0
    %6037 = vmatpush1.msra.mxu0 0.0
    %6038 = vmatprep.subr.mxu0 0.0
    %6039 = vmatpush1.msra.mxu0 0.0
    %6040 = vmatprep.mubr.f32.mxu0 0.0
    %6041 = vmatmul.mubr.f32.gmra.mrb[0].mxu0 %v5974
    %v6042 = vpop.f32.mrb[0].mxu0
    %v6043 = vadd.f32 0.0, %v6042
    %v6044 = vpop.f32.mrb[0].mxu0
    %6045 = vdwg.mxu0
    %s6046 = scalar_lea.vmem %s7, 8
    %v6047 = vld [vmem:[%s6046] sm:$0x3]
    %6048 = vset.pattern.permute.xlu0 0
    %6049 = vperm.xlu0 %6048, %v6047
    %v6050 = vpop.permute.xlu0 %6049
    %vm6051 = vcmp.eq.s32.totalorder %v254, %v6050
    %v6052 = vsel %vm6051, 1, 0
    %v6053 = vcvt.s32.f32 %v6052
    %v6055 = vsel %vm617, %v6053, 0
    %6057 = vmatprep.subr.mxu0 0.0
    %6058 = vmatpush1.msra.mxu0 %v600
    %6059 = vmatprep.subr.mxu0 0.0
    %6060 = vmatpush1.msra.mxu0 %v601
    %6061 = vmatprep.subr.mxu0 0.0
    %6062 = vmatpush1.msra.mxu0 %v602
    %6063 = vmatprep.subr.mxu0 0.0
    %6064 = vmatpush1.msra.mxu0 %v603
    %6065 = vmatprep.subr.mxu0 0.0
    %6066 = vmatpush1.msra.mxu0 %v604
    %6067 = vmatprep.subr.mxu0 0.0
    %6068 = vmatpush1.msra.mxu0 %v605
    %6069 = vmatprep.subr.mxu0 0.0
    %6070 = vmatpush1.msra.mxu0 %v606
    %6071 = vmatprep.subr.mxu0 0.0
    %6072 = vmatpush1.msra.mxu0 %v607
    %6073 = vmatprep.subr.mxu0 0.0
    %6074 = vmatpush1.msra.mxu0 0.0
    %6075 = vmatprep.subr.mxu0 0.0
    %6076 = vmatpush1.msra.mxu0 0.0
    %6077 = vmatprep.subr.mxu0 0.0
    %6078 = vmatpush1.msra.mxu0 0.0
    %6079 = vmatprep.subr.mxu0 0.0
    %6080 = vmatpush1.msra.mxu0 0.0
    %6081 = vmatprep.subr.mxu0 0.0
    %6082 = vmatpush1.msra.mxu0 0.0
    %6083 = vmatprep.subr.mxu0 0.0
    %6084 = vmatpush1.msra.mxu0 0.0
    %6085 = vmatprep.subr.mxu0 0.0
    %6086 = vmatpush1.msra.mxu0 0.0
    %6087 = vmatprep.subr.mxu0 0.0
    %6088 = vmatpush1.msra.mxu0 0.0
    %6089 = vmatprep.subr.mxu0 0.0
    %6090 = vmatpush1.msra.mxu0 0.0
    %6091 = vmatprep.subr.mxu0 0.0
    %6092 = vmatpush1.msra.mxu0 0.0
    %6093 = vmatprep.subr.mxu0 0.0
    %6094 = vmatpush1.msra.mxu0 0.0
    %6095 = vmatprep.subr.mxu0 0.0
    %6096 = vmatpush1.msra.mxu0 0.0
    %6097 = vmatprep.subr.mxu0 0.0
    %6098 = vmatpush1.msra.mxu0 0.0
    %6099 = vmatprep.subr.mxu0 0.0
    %6100 = vmatpush1.msra.mxu0 0.0
    %6101 = vmatprep.subr.mxu0 0.0
    %6102 = vmatpush1.msra.mxu0 0.0
    %6103 = vmatprep.subr.mxu0 0.0
    %6104 = vmatpush1.msra.mxu0 0.0
    %6105 = vmatprep.subr.mxu0 0.0
    %6106 = vmatpush1.msra.mxu0 0.0
    %6107 = vmatprep.subr.mxu0 0.0
    %6108 = vmatpush1.msra.mxu0 0.0
    %6109 = vmatprep.subr.mxu0 0.0
    %6110 = vmatpush1.msra.mxu0 0.0
    %6111 = vmatprep.subr.mxu0 0.0
    %6112 = vmatpush1.msra.mxu0 0.0
    %6113 = vmatprep.subr.mxu0 0.0
    %6114 = vmatpush1.msra.mxu0 0.0
    %6115 = vmatprep.subr.mxu0 0.0
    %6116 = vmatpush1.msra.mxu0 0.0
    %6117 = vmatprep.subr.mxu0 0.0
    %6118 = vmatpush1.msra.mxu0 0.0
    %6119 = vmatprep.subr.mxu0 0.0
    %6120 = vmatpush1.msra.mxu0 0.0
    %6121 = vmatprep.mubr.f32.mxu0 0.0
    %6122 = vmatmul.mubr.f32.gmra.mrb[0].mxu0 %v6055
    %v6123 = vpop.f32.mrb[0].mxu0
    %v6124 = vadd.f32 0.0, %v6123
    %v6125 = vpop.f32.mrb[0].mxu0
    %6126 = vdwg.mxu0
    %s6127 = scalar_lea.vmem %s9, 8
    %v6128 = vld [vmem:[%s6127] sm:$0x3]
    %6130 = vset.pattern.permute.xlu0 0
    %6131 = vperm.xlu0 %6130, %v6128
    %v6132 = vpop.permute.xlu0 %6131
    %v6134 = vmul.f32 %v6132, %v6124
    %v6135 = vsub.f32 1.0, %v6128
    %6137 = vset.pattern.permute.xlu0 0
    %6138 = vperm.xlu0 %6137, %v6135
    %v6139 = vpop.permute.xlu0 %6138
    %v6141 = vmul.f32 %v6139, %v6043
    %v6142 = vadd.f32 %v6134, %v6141
    %v6143 = vld [vmem:[%s23] sm:$0xff]
    %v6144 = vld [vmem:[%s23 + $0x8] sm:$0xff]
    %v6145 = vld [vmem:[%s23 + $0x10] sm:$0xff]
    %v6146 = vld [vmem:[%s23 + $0x18] sm:$0xff]
    %6147 = vmatprep.subr.mxu0 0.0
    %6148 = vmatpush1.msra.mxu0 %v6143
    %6149 = vmatprep.subr.mxu0 0.0
    %6150 = vmatpush1.msra.mxu0 %v6144
    %6151 = vmatprep.subr.mxu0 0.0
    %6152 = vmatpush1.msra.mxu0 %v6145
    %6153 = vmatprep.subr.mxu0 0.0
    %6154 = vmatpush1.msra.mxu0 %v6146
    %6155 = vmatprep.subr.mxu0 0.0
    %6156 = vmatpush1.msra.mxu0 0.0
    %6157 = vmatprep.subr.mxu0 0.0
    %6158 = vmatpush1.msra.mxu0 0.0
    %6159 = vmatprep.subr.mxu0 0.0
    %6160 = vmatpush1.msra.mxu0 0.0
    %6161 = vmatprep.subr.mxu0 0.0
    %6162 = vmatpush1.msra.mxu0 0.0
    %6163 = vmatprep.subr.mxu0 0.0
    %6164 = vmatpush1.msra.mxu0 0.0
    %6165 = vmatprep.subr.mxu0 0.0
    %6166 = vmatpush1.msra.mxu0 0.0
    %6167 = vmatprep.subr.mxu0 0.0
    %6168 = vmatpush1.msra.mxu0 0.0
    %6169 = vmatprep.subr.mxu0 0.0
    %6170 = vmatpush1.msra.mxu0 0.0
    %6171 = vmatprep.subr.mxu0 0.0
    %6172 = vmatpush1.msra.mxu0 0.0
    %6173 = vmatprep.subr.mxu0 0.0
    %6174 = vmatpush1.msra.mxu0 0.0
    %6175 = vmatprep.subr.mxu0 0.0
    %6176 = vmatpush1.msra.mxu0 0.0
    %6177 = vmatprep.subr.mxu0 0.0
    %6178 = vmatpush1.msra.mxu0 0.0
    %6179 = vmatprep.subr.mxu0 0.0
    %6180 = vmatpush1.msra.mxu0 0.0
    %6181 = vmatprep.subr.mxu0 0.0
    %6182 = vmatpush1.msra.mxu0 0.0
    %6183 = vmatprep.subr.mxu0 0.0
    %6184 = vmatpush1.msra.mxu0 0.0
    %6185 = vmatprep.subr.mxu0 0.0
    %6186 = vmatpush1.msra.mxu0 0.0
    %6187 = vmatprep.subr.mxu0 0.0
    %6188 = vmatpush1.msra.mxu0 0.0
    %6189 = vmatprep.subr.mxu0 0.0
    %6190 = vmatpush1.msra.mxu0 0.0
    %6191 = vmatprep.subr.mxu0 0.0
    %6192 = vmatpush1.msra.mxu0 0.0
    %6193 = vmatprep.subr.mxu0 0.0
    %6194 = vmatpush1.msra.mxu0 0.0
    %6195 = vmatprep.subr.mxu0 0.0
    %6196 = vmatpush1.msra.mxu0 0.0
    %6197 = vmatprep.subr.mxu0 0.0
    %6198 = vmatpush1.msra.mxu0 0.0
    %6199 = vmatprep.subr.mxu0 0.0
    %6200 = vmatpush1.msra.mxu0 0.0
    %6201 = vmatprep.subr.mxu0 0.0
    %6202 = vmatpush1.msra.mxu0 0.0
    %6203 = vmatprep.subr.mxu0 0.0
    %6204 = vmatpush1.msra.mxu0 0.0
    %6205 = vmatprep.subr.mxu0 0.0
    %6206 = vmatpush1.msra.mxu0 0.0
    %6207 = vmatprep.subr.mxu0 0.0
    %6208 = vmatpush1.msra.mxu0 0.0
    %6209 = vmatprep.subr.mxu0 0.0
    %6210 = vmatpush1.msra.mxu0 0.0
    %6211 = vmatprep.mubr.f32.mxu0 0.0
    %6212 = vmatmul.mubr.f32.gmra.mrb[0].mxu0 %v5793
    %v6213 = vpop.f32.mrb[0].mxu0
    %v6214 = vadd.f32 0.0, %v6213
    %v6215 = vpop.f32.mrb[0].mxu0
    %6216 = vdwg.mxu0
    %v6219 = vunpack.c.l.s4 1966171168
    %v6220 = vunpack.c.0.s8 %v6219
    %v6221 = vlaneseq
    %v6222 = vshrl.u32 %v6221, 7
    %v6223 = vsub.s32 %v6220, %v6222
    %v6224 = vrot.slane %v6214, %v6223
    %v6225 = vcombine.high %v6224, %v6224
    %v6227 = vunpack.c.l.s4 1966171168
    %v6228 = vunpack.c.0.s8 %v6227
    %v6229 = vlaneseq
    %v6230 = vshrl.u32 %v6229, 7
    %v6231 = vsub.s32 %v6228, %v6230
    %v6232 = vrot.slane %v6224, %v6231
    %v6234 = vunpack.c.l.s4 1966171168
    %v6235 = vunpack.c.0.s8 %v6234
    %v6236 = vlaneseq
    %v6237 = vshrl.u32 %v6236, 7
    %v6238 = vsub.s32 %v6235, %v6237
    %v6239 = vrot.slane %v6225, %v6238
    %v6240 = vlaneseq
    %v6241 = vshrl.u32 %v6240, 7
    %v6242 = vsub.s32 0, %v6241
    %v6243 = vrot.slane %v6232, %v6242
    %v6244 = vlaneseq
    %v6245 = vshrl.u32 %v6244, 7
    %v6246 = vsub.s32 0, %v6245
    %v6247 = vrot.slane %v6239, %v6246
    %v6250 = vadd.f32 %v592, %v6243
    %v6251 = vadd.f32 %v597, %v6247
    %v6252 = vtanh.pop %v6250
    %v6253 = vtanh.pop %v6251
    %v6254 = vmul.f32 %v6252, %v809
    %v6255 = vmul.f32 %v6253, %v809
    %v6256 = vsel %vm410, %v6254, 0.0
    %6257 = vadd.xlane.f32.xlu0 %v6256
    %v6258 = vpop.xlane.xlu0 %6257
    %v6259 = vsel %vm410, %v6255, 0.0
    %6260 = vadd.xlane.f32.xlu0 %v6259
    %v6261 = vpop.xlane.xlu0 %6260
    %v6264 = vlaneseq
    %v6265 = vshrl.u32 %v6264, 7
    %v6266 = vsub.s32 %v254, %v6265
    %v6267 = vrot.slane %v6258, %v6266
    %v6268 = vlaneseq
    %v6269 = vshrl.u32 %v6268, 7
    %v6270 = vsub.s32 %v254, %v6269
    %v6271 = vrot.slane %v6261, %v6270
    %v6272 = vsel %vm829, %v6271, %v6267
    %v6274 = vsel %vm832, %v6272, -inf
    %6275 = vmax.xlane.f32.xlu0 %v6274
    %v6276 = vpop.xlane.xlu0 %6275
    %v6278 = vlaneseq
    %v6279 = vshrl.u32 %v6278, 7
    %v6280 = vsub.s32 0, %v6279
    %v6281 = vrot.slane %v6276, %v6280
    %v6282 = vlaneseq
    %v6283 = vshrl.u32 %v6282, 7
    %v6284 = vsub.s32 1, %v6283
    %v6285 = vrot.slane %v6276, %v6284
    %v6288 = vsub.f32 %v6258, %v6281
    %v6289 = vsub.f32 %v6261, %v6285
    %v6290 = vmul.f32 %v6288, 1.442695
    %v6291 = vpow.pop %v6290
    %v6292 = vmul.f32 %v6289, 1.442695
    %v6293 = vpow.pop %v6292
    %6296 = vset.pattern.permute.xlu0 0
    %6297 = vperm.xlu0 %6296, %v6291
    %v6298 = vpop.permute.xlu0 %6297
    %6299 = vset.pattern.permute.xlu0 0
    %6300 = vperm.xlu0 %6299, %v6293
    %v6301 = vpop.permute.xlu0 %6300
    %v6302 = vlaneseq
    %v6303 = vshrl.u32 %v6302, 7
    %v6304 = vsub.s32 %v254, %v6303
    %v6305 = vrot.slane %v6298, %v6304
    %v6306 = vlaneseq
    %v6307 = vshrl.u32 %v6306, 7
    %v6308 = vsub.s32 %v254, %v6307
    %v6309 = vrot.slane %v6301, %v6308
    %v6310 = vsel %vm829, %v6309, %v6305
    %v6312 = vsel %vm832, %v6310, 0.0
    %6313 = vadd.xlane.f32.xlu0 %v6312
    %v6314 = vpop.xlane.xlu0 %6313
    %v6315 = vrcp.pop %v6314
    %v6317 = vlaneseq
    %v6318 = vshrl.u32 %v6317, 7
    %v6319 = vsub.s32 0, %v6318
    %v6320 = vrot.slane %v6315, %v6319
    %v6321 = vlaneseq
    %v6322 = vshrl.u32 %v6321, 7
    %v6323 = vsub.s32 1, %v6322
    %v6324 = vrot.slane %v6315, %v6323
    %v6327 = vmul.f32 %v6291, %v6320
    %v6328 = vmul.f32 %v6293, %v6324
    %6330 = vset.pattern.permute.xlu0 0
    %6331 = vperm.xlu0 %6330, %v6327
    %v6332 = vpop.permute.xlu0 %6331
    %6335 = vset.pattern.permute.xlu0 0
    %6336 = vperm.xlu0 %6335, %v6328
    %v6337 = vpop.permute.xlu0 %6336
    %v6339 = vmul.f32 %v6332, %v506
    %v6340 = vmul.f32 %v6337, %v507
    %v6341 = vsel %vm410, %v6339, 0.0
    %v6342 = vrot.slane %v6341, 4
    %v6343 = vadd.f32 %v6341, %v6342
    %v6344 = vrot.slane %v6343, 2
    %v6345 = vadd.f32 %v6343, %v6344
    %v6346 = vrot.slane %v6345, 1
    %v6347 = vadd.f32 %v6345, %v6346
    %v6348 = vsel %vm410, %v6340, 0.0
    %v6349 = vrot.slane %v6348, 4
    %v6350 = vadd.f32 %v6348, %v6349
    %v6351 = vrot.slane %v6350, 2
    %v6352 = vadd.f32 %v6350, %v6351
    %v6353 = vrot.slane %v6352, 1
    %v6354 = vadd.f32 %v6352, %v6353
    %v6355 = vld [vmem:[%s29] sm:$0xff]
    %v6356 = vld [vmem:[%s29 + $0x8] sm:$0xff]
    %v6357 = vld [vmem:[%s29 + $0x10] sm:$0xff]
    %v6358 = vld [vmem:[%s29 + $0x18] sm:$0xff]
    %v6359 = vld [vmem:[%s35] sm:$0xff]
    %v6360 = vld [vmem:[%s35 + $0x8] sm:$0xff]
    %v6361 = vld [vmem:[%s35 + $0x10] sm:$0xff]
    %v6362 = vld [vmem:[%s35 + $0x18] sm:$0xff]
    %v6365 = vsel %vm829, %v6354, %v6347
    %v6366 = vsel %vm410, %v6365, 0
    %6368 = vmatprep.subr.mxu0 0.0
    %6369 = vmatpush1.msra.mxu0 %v6359
    %6370 = vmatprep.subr.mxu0 0.0
    %6371 = vmatpush1.msra.mxu0 %v6360
    %6372 = vmatprep.subr.mxu0 0.0
    %6373 = vmatpush1.msra.mxu0 %v6361
    %6374 = vmatprep.subr.mxu0 0.0
    %6375 = vmatpush1.msra.mxu0 %v6362
    %6376 = vmatprep.subr.mxu0 0.0
    %6377 = vmatpush1.msra.mxu0 0.0
    %6378 = vmatprep.subr.mxu0 0.0
    %6379 = vmatpush1.msra.mxu0 0.0
    %6380 = vmatprep.subr.mxu0 0.0
    %6381 = vmatpush1.msra.mxu0 0.0
    %6382 = vmatprep.subr.mxu0 0.0
    %6383 = vmatpush1.msra.mxu0 0.0
    %6384 = vmatprep.subr.mxu0 0.0
    %6385 = vmatpush1.msra.mxu0 0.0
    %6386 = vmatprep.subr.mxu0 0.0
    %6387 = vmatpush1.msra.mxu0 0.0
    %6388 = vmatprep.subr.mxu0 0.0
    %6389 = vmatpush1.msra.mxu0 0.0
    %6390 = vmatprep.subr.mxu0 0.0
    %6391 = vmatpush1.msra.mxu0 0.0
    %6392 = vmatprep.subr.mxu0 0.0
    %6393 = vmatpush1.msra.mxu0 0.0
    %6394 = vmatprep.subr.mxu0 0.0
    %6395 = vmatpush1.msra.mxu0 0.0
    %6396 = vmatprep.subr.mxu0 0.0
    %6397 = vmatpush1.msra.mxu0 0.0
    %6398 = vmatprep.subr.mxu0 0.0
    %6399 = vmatpush1.msra.mxu0 0.0
    %6400 = vmatprep.subr.mxu0 0.0
    %6401 = vmatpush1.msra.mxu0 0.0
    %6402 = vmatprep.subr.mxu0 0.0
    %6403 = vmatpush1.msra.mxu0 0.0
    %6404 = vmatprep.subr.mxu0 0.0
    %6405 = vmatpush1.msra.mxu0 0.0
    %6406 = vmatprep.subr.mxu0 0.0
    %6407 = vmatpush1.msra.mxu0 0.0
    %6408 = vmatprep.subr.mxu0 0.0
    %6409 = vmatpush1.msra.mxu0 0.0
    %6410 = vmatprep.subr.mxu0 0.0
    %6411 = vmatpush1.msra.mxu0 0.0
    %6412 = vmatprep.subr.mxu0 0.0
    %6413 = vmatpush1.msra.mxu0 0.0
    %6414 = vmatprep.subr.mxu0 0.0
    %6415 = vmatpush1.msra.mxu0 0.0
    %6416 = vmatprep.subr.mxu0 0.0
    %6417 = vmatpush1.msra.mxu0 0.0
    %6418 = vmatprep.subr.mxu0 0.0
    %6419 = vmatpush1.msra.mxu0 0.0
    %6420 = vmatprep.subr.mxu0 0.0
    %6421 = vmatpush1.msra.mxu0 0.0
    %6422 = vmatprep.subr.mxu0 0.0
    %6423 = vmatpush1.msra.mxu0 0.0
    %6424 = vmatprep.subr.mxu0 0.0
    %6425 = vmatpush1.msra.mxu0 0.0
    %6426 = vmatprep.subr.mxu0 0.0
    %6427 = vmatpush1.msra.mxu0 0.0
    %6428 = vmatprep.subr.mxu0 0.0
    %6429 = vmatpush1.msra.mxu0 0.0
    %6430 = vmatprep.subr.mxu0 0.0
    %6431 = vmatpush1.msra.mxu0 0.0
    %6432 = vmatprep.mubr.f32.mxu0 0.0
    %6433 = vmatmul.mubr.f32.gmra.mrb[0].mxu0 %v6366
    %v6434 = vpop.f32.mrb[0].mxu0
    %v6435 = vadd.f32 0.0, %v6434
    %v6436 = vpop.f32.mrb[0].mxu0
    %6437 = vdwg.mxu0
    %v6439 = vsel %vm410, %v6142, 0
    %6441 = vmatprep.subr.mxu0 0.0
    %6442 = vmatpush1.msra.mxu0 %v6355
    %6443 = vmatprep.subr.mxu0 0.0
    %6444 = vmatpush1.msra.mxu0 %v6356
    %6445 = vmatprep.subr.mxu0 0.0
    %6446 = vmatpush1.msra.mxu0 %v6357
    %6447 = vmatprep.subr.mxu0 0.0
    %6448 = vmatpush1.msra.mxu0 %v6358
    %6449 = vmatprep.subr.mxu0 0.0
    %6450 = vmatpush1.msra.mxu0 0.0
    %6451 = vmatprep.subr.mxu0 0.0
    %6452 = vmatpush1.msra.mxu0 0.0
    %6453 = vmatprep.subr.mxu0 0.0
    %6454 = vmatpush1.msra.mxu0 0.0
    %6455 = vmatprep.subr.mxu0 0.0
    %6456 = vmatpush1.msra.mxu0 0.0
    %6457 = vmatprep.subr.mxu0 0.0
    %6458 = vmatpush1.msra.mxu0 0.0
    %6459 = vmatprep.subr.mxu0 0.0
    %6460 = vmatpush1.msra.mxu0 0.0
    %6461 = vmatprep.subr.mxu0 0.0
    %6462 = vmatpush1.msra.mxu0 0.0
    %6463 = vmatprep.subr.mxu0 0.0
    %6464 = vmatpush1.msra.mxu0 0.0
    %6465 = vmatprep.subr.mxu0 0.0
    %6466 = vmatpush1.msra.mxu0 0.0
    %6467 = vmatprep.subr.mxu0 0.0
    %6468 = vmatpush1.msra.mxu0 0.0
    %6469 = vmatprep.subr.mxu0 0.0
    %6470 = vmatpush1.msra.mxu0 0.0
    %6471 = vmatprep.subr.mxu0 0.0
    %6472 = vmatpush1.msra.mxu0 0.0
    %6473 = vmatprep.subr.mxu0 0.0
    %6474 = vmatpush1.msra.mxu0 0.0
    %6475 = vmatprep.subr.mxu0 0.0
    %6476 = vmatpush1.msra.mxu0 0.0
    %6477 = vmatprep.subr.mxu0 0.0
    %6478 = vmatpush1.msra.mxu0 0.0
    %6479 = vmatprep.subr.mxu0 0.0
    %6480 = vmatpush1.msra.mxu0 0.0
    %6481 = vmatprep.subr.mxu0 0.0
    %6482 = vmatpush1.msra.mxu0 0.0
    %6483 = vmatprep.subr.mxu0 0.0
    %6484 = vmatpush1.msra.mxu0 0.0
    %6485 = vmatprep.subr.mxu0 0.0
    %6486 = vmatpush1.msra.mxu0 0.0
    %6487 = vmatprep.subr.mxu0 0.0
    %6488 = vmatpush1.msra.mxu0 0.0
    %6489 = vmatprep.subr.mxu0 0.0
    %6490 = vmatpush1.msra.mxu0 0.0
    %6491 = vmatprep.subr.mxu0 0.0
    %6492 = vmatpush1.msra.mxu0 0.0
    %6493 = vmatprep.subr.mxu0 0.0
    %6494 = vmatpush1.msra.mxu0 0.0
    %6495 = vmatprep.subr.mxu0 0.0
    %6496 = vmatpush1.msra.mxu0 0.0
    %6497 = vmatprep.subr.mxu0 0.0
    %6498 = vmatpush1.msra.mxu0 0.0
    %6499 = vmatprep.subr.mxu0 0.0
    %6500 = vmatpush1.msra.mxu0 0.0
    %6501 = vmatprep.subr.mxu0 0.0
    %6502 = vmatpush1.msra.mxu0 0.0
    %6503 = vmatprep.subr.mxu0 0.0
    %6504 = vmatpush1.msra.mxu0 0.0
    %6505 = vmatprep.mubr.f32.mxu0 0.0
    %6506 = vmatmul.mubr.f32.gmra.mrb[0].mxu0 %v6439
    %v6507 = vpop.f32.mrb[0].mxu0
    %v6508 = vadd.f32 %v6435, %v6507
    %v6509 = vpop.f32.mrb[0].mxu0
    %6510 = vdwg.mxu0
    %v6511 = vld [vmem:[#allocation10] sm:$0x1]
    %v6513 = vlaneseq
    %v6514 = vshrl.u32 %v6513, 7
    %v6515 = vsub.s32 0, %v6514
    %v6516 = vrot.slane %v6511, %v6515
    %v6518 = vadd.f32 %v6508, %v6516
    %v6519 = vld [vmem:[%s41] sm:$0xff]
    %v6520 = vld [vmem:[%s41 + $0x8] sm:$0xff]
    %v6521 = vld [vmem:[%s41 + $0x10] sm:$0xff]
    %v6522 = vld [vmem:[%s41 + $0x18] sm:$0xff]
    %6523 = vmatprep.subr.mxu0 0.0
    %6524 = vmatpush1.msra.mxu0 %v6519
    %6525 = vmatprep.subr.mxu0 0.0
    %6526 = vmatpush1.msra.mxu0 %v6520
    %6527 = vmatprep.subr.mxu0 0.0
    %6528 = vmatpush1.msra.mxu0 %v6521
    %6529 = vmatprep.subr.mxu0 0.0
    %6530 = vmatpush1.msra.mxu0 %v6522
    %6531 = vmatprep.subr.mxu0 0.0
    %6532 = vmatpush1.msra.mxu0 0.0
    %6533 = vmatprep.subr.mxu0 0.0
    %6534 = vmatpush1.msra.mxu0 0.0
    %6535 = vmatprep.subr.mxu0 0.0
    %6536 = vmatpush1.msra.mxu0 0.0
    %6537 = vmatprep.subr.mxu0 0.0
    %6538 = vmatpush1.msra.mxu0 0.0
    %6539 = vmatprep.subr.mxu0 0.0
    %6540 = vmatpush1.msra.mxu0 0.0
    %6541 = vmatprep.subr.mxu0 0.0
    %6542 = vmatpush1.msra.mxu0 0.0
    %6543 = vmatprep.subr.mxu0 0.0
    %6544 = vmatpush1.msra.mxu0 0.0
    %6545 = vmatprep.subr.mxu0 0.0
    %6546 = vmatpush1.msra.mxu0 0.0
    %6547 = vmatprep.subr.mxu0 0.0
    %6548 = vmatpush1.msra.mxu0 0.0
    %6549 = vmatprep.subr.mxu0 0.0
    %6550 = vmatpush1.msra.mxu0 0.0
    %6551 = vmatprep.subr.mxu0 0.0
    %6552 = vmatpush1.msra.mxu0 0.0
    %6553 = vmatprep.subr.mxu0 0.0
    %6554 = vmatpush1.msra.mxu0 0.0
    %6555 = vmatprep.subr.mxu0 0.0
    %6556 = vmatpush1.msra.mxu0 0.0
    %6557 = vmatprep.subr.mxu0 0.0
    %6558 = vmatpush1.msra.mxu0 0.0
    %6559 = vmatprep.subr.mxu0 0.0
    %6560 = vmatpush1.msra.mxu0 0.0
    %6561 = vmatprep.subr.mxu0 0.0
    %6562 = vmatpush1.msra.mxu0 0.0
    %6563 = vmatprep.subr.mxu0 0.0
    %6564 = vmatpush1.msra.mxu0 0.0
    %6565 = vmatprep.subr.mxu0 0.0
    %6566 = vmatpush1.msra.mxu0 0.0
    %6567 = vmatprep.subr.mxu0 0.0
    %6568 = vmatpush1.msra.mxu0 0.0
    %6569 = vmatprep.subr.mxu0 0.0
    %6570 = vmatpush1.msra.mxu0 0.0
    %6571 = vmatprep.subr.mxu0 0.0
    %6572 = vmatpush1.msra.mxu0 0.0
    %6573 = vmatprep.subr.mxu0 0.0
    %6574 = vmatpush1.msra.mxu0 0.0
    %6575 = vmatprep.subr.mxu0 0.0
    %6576 = vmatpush1.msra.mxu0 0.0
    %6577 = vmatprep.subr.mxu0 0.0
    %6578 = vmatpush1.msra.mxu0 0.0
    %6579 = vmatprep.subr.mxu0 0.0
    %6580 = vmatpush1.msra.mxu0 0.0
    %6581 = vmatprep.subr.mxu0 0.0
    %6582 = vmatpush1.msra.mxu0 0.0
    %6583 = vmatprep.subr.mxu0 0.0
    %6584 = vmatpush1.msra.mxu0 0.0
    %6585 = vmatprep.subr.mxu0 0.0
    %6586 = vmatpush1.msra.mxu0 0.0
    %6587 = vmatprep.mubr.f32.mxu0 0.0
    %6588 = vmatmul.mubr.f32.gmra.mrb[0].mxu0 %v5793
    %v6589 = vpop.f32.mrb[0].mxu0
    %v6590 = vadd.f32 0.0, %v6589
    %v6591 = vpop.f32.mrb[0].mxu0
    %6592 = vdwg.mxu0
    %v6593 = vadd.f32 %v6518, %v6590
    %v6594 = vxor.u32 %v6593, 2147483648
    %v6595 = vmul.f32 %v6594, 1.442695
    %v6596 = vpow.pop %v6595
    %v6597 = vadd.f32 %v6596, 1.0
    %v6598 = vrcp.pop %v6597
    %v6599 = vmul.f32 1.0, %v6598
    %v6600 = vld [vmem:[%s31] sm:$0xff]
    %v6601 = vld [vmem:[%s31 + $0x8] sm:$0xff]
    %v6602 = vld [vmem:[%s31 + $0x10] sm:$0xff]
    %v6603 = vld [vmem:[%s31 + $0x18] sm:$0xff]
    %v6604 = vld [vmem:[%s37] sm:$0xff]
    %v6605 = vld [vmem:[%s37 + $0x8] sm:$0xff]
    %v6606 = vld [vmem:[%s37 + $0x10] sm:$0xff]
    %v6607 = vld [vmem:[%s37 + $0x18] sm:$0xff]
    %6608 = vmatprep.subr.mxu0 0.0
    %6609 = vmatpush1.msra.mxu0 %v6604
    %6610 = vmatprep.subr.mxu0 0.0
    %6611 = vmatpush1.msra.mxu0 %v6605
    %6612 = vmatprep.subr.mxu0 0.0
    %6613 = vmatpush1.msra.mxu0 %v6606
    %6614 = vmatprep.subr.mxu0 0.0
    %6615 = vmatpush1.msra.mxu0 %v6607
    %6616 = vmatprep.subr.mxu0 0.0
    %6617 = vmatpush1.msra.mxu0 0.0
    %6618 = vmatprep.subr.mxu0 0.0
    %6619 = vmatpush1.msra.mxu0 0.0
    %6620 = vmatprep.subr.mxu0 0.0
    %6621 = vmatpush1.msra.mxu0 0.0
    %6622 = vmatprep.subr.mxu0 0.0
    %6623 = vmatpush1.msra.mxu0 0.0
    %6624 = vmatprep.subr.mxu0 0.0
    %6625 = vmatpush1.msra.mxu0 0.0
    %6626 = vmatprep.subr.mxu0 0.0
    %6627 = vmatpush1.msra.mxu0 0.0
    %6628 = vmatprep.subr.mxu0 0.0
    %6629 = vmatpush1.msra.mxu0 0.0
    %6630 = vmatprep.subr.mxu0 0.0
    %6631 = vmatpush1.msra.mxu0 0.0
    %6632 = vmatprep.subr.mxu0 0.0
    %6633 = vmatpush1.msra.mxu0 0.0
    %6634 = vmatprep.subr.mxu0 0.0
    %6635 = vmatpush1.msra.mxu0 0.0
    %6636 = vmatprep.subr.mxu0 0.0
    %6637 = vmatpush1.msra.mxu0 0.0
    %6638 = vmatprep.subr.mxu0 0.0
    %6639 = vmatpush1.msra.mxu0 0.0
    %6640 = vmatprep.subr.mxu0 0.0
    %6641 = vmatpush1.msra.mxu0 0.0
    %6642 = vmatprep.subr.mxu0 0.0
    %6643 = vmatpush1.msra.mxu0 0.0
    %6644 = vmatprep.subr.mxu0 0.0
    %6645 = vmatpush1.msra.mxu0 0.0
    %6646 = vmatprep.subr.mxu0 0.0
    %6647 = vmatpush1.msra.mxu0 0.0
    %6648 = vmatprep.subr.mxu0 0.0
    %6649 = vmatpush1.msra.mxu0 0.0
    %6650 = vmatprep.subr.mxu0 0.0
    %6651 = vmatpush1.msra.mxu0 0.0
    %6652 = vmatprep.subr.mxu0 0.0
    %6653 = vmatpush1.msra.mxu0 0.0
    %6654 = vmatprep.subr.mxu0 0.0
    %6655 = vmatpush1.msra.mxu0 0.0
    %6656 = vmatprep.subr.mxu0 0.0
    %6657 = vmatpush1.msra.mxu0 0.0
    %6658 = vmatprep.subr.mxu0 0.0
    %6659 = vmatpush1.msra.mxu0 0.0
    %6660 = vmatprep.subr.mxu0 0.0
    %6661 = vmatpush1.msra.mxu0 0.0
    %6662 = vmatprep.subr.mxu0 0.0
    %6663 = vmatpush1.msra.mxu0 0.0
    %6664 = vmatprep.subr.mxu0 0.0
    %6665 = vmatpush1.msra.mxu0 0.0
    %6666 = vmatprep.subr.mxu0 0.0
    %6667 = vmatpush1.msra.mxu0 0.0
    %6668 = vmatprep.subr.mxu0 0.0
    %6669 = vmatpush1.msra.mxu0 0.0
    %6670 = vmatprep.subr.mxu0 0.0
    %6671 = vmatpush1.msra.mxu0 0.0
    %6672 = vmatprep.mubr.f32.mxu0 0.0
    %6673 = vmatmul.mubr.f32.gmra.mrb[0].mxu0 %v6366
    %v6674 = vpop.f32.mrb[0].mxu0
    %v6675 = vadd.f32 0.0, %v6674
    %v6676 = vpop.f32.mrb[0].mxu0
    %6677 = vdwg.mxu0
    %6678 = vmatprep.subr.mxu0 0.0
    %6679 = vmatpush1.msra.mxu0 %v6600
    %6680 = vmatprep.subr.mxu0 0.0
    %6681 = vmatpush1.msra.mxu0 %v6601
    %6682 = vmatprep.subr.mxu0 0.0
    %6683 = vmatpush1.msra.mxu0 %v6602
    %6684 = vmatprep.subr.mxu0 0.0
    %6685 = vmatpush1.msra.mxu0 %v6603
    %6686 = vmatprep.subr.mxu0 0.0
    %6687 = vmatpush1.msra.mxu0 0.0
    %6688 = vmatprep.subr.mxu0 0.0
    %6689 = vmatpush1.msra.mxu0 0.0
    %6690 = vmatprep.subr.mxu0 0.0
    %6691 = vmatpush1.msra.mxu0 0.0
    %6692 = vmatprep.subr.mxu0 0.0
    %6693 = vmatpush1.msra.mxu0 0.0
    %6694 = vmatprep.subr.mxu0 0.0
    %6695 = vmatpush1.msra.mxu0 0.0
    %6696 = vmatprep.subr.mxu0 0.0
    %6697 = vmatpush1.msra.mxu0 0.0
    %6698 = vmatprep.subr.mxu0 0.0
    %6699 = vmatpush1.msra.mxu0 0.0
    %6700 = vmatprep.subr.mxu0 0.0
    %6701 = vmatpush1.msra.mxu0 0.0
    %6702 = vmatprep.subr.mxu0 0.0
    %6703 = vmatpush1.msra.mxu0 0.0
    %6704 = vmatprep.subr.mxu0 0.0
    %6705 = vmatpush1.msra.mxu0 0.0
    %6706 = vmatprep.subr.mxu0 0.0
    %6707 = vmatpush1.msra.mxu0 0.0
    %6708 = vmatprep.subr.mxu0 0.0
    %6709 = vmatpush1.msra.mxu0 0.0
    %6710 = vmatprep.subr.mxu0 0.0
    %6711 = vmatpush1.msra.mxu0 0.0
    %6712 = vmatprep.subr.mxu0 0.0
    %6713 = vmatpush1.msra.mxu0 0.0
    %6714 = vmatprep.subr.mxu0 0.0
    %6715 = vmatpush1.msra.mxu0 0.0
    %6716 = vmatprep.subr.mxu0 0.0
    %6717 = vmatpush1.msra.mxu0 0.0
    %6718 = vmatprep.subr.mxu0 0.0
    %6719 = vmatpush1.msra.mxu0 0.0
    %6720 = vmatprep.subr.mxu0 0.0
    %6721 = vmatpush1.msra.mxu0 0.0
    %6722 = vmatprep.subr.mxu0 0.0
    %6723 = vmatpush1.msra.mxu0 0.0
    %6724 = vmatprep.subr.mxu0 0.0
    %6725 = vmatpush1.msra.mxu0 0.0
    %6726 = vmatprep.subr.mxu0 0.0
    %6727 = vmatpush1.msra.mxu0 0.0
    %6728 = vmatprep.subr.mxu0 0.0
    %6729 = vmatpush1.msra.mxu0 0.0
    %6730 = vmatprep.subr.mxu0 0.0
    %6731 = vmatpush1.msra.mxu0 0.0
    %6732 = vmatprep.subr.mxu0 0.0
    %6733 = vmatpush1.msra.mxu0 0.0
    %6734 = vmatprep.subr.mxu0 0.0
    %6735 = vmatpush1.msra.mxu0 0.0
    %6736 = vmatprep.subr.mxu0 0.0
    %6737 = vmatpush1.msra.mxu0 0.0
    %6738 = vmatprep.subr.mxu0 0.0
    %6739 = vmatpush1.msra.mxu0 0.0
    %6740 = vmatprep.subr.mxu0 0.0
    %6741 = vmatpush1.msra.mxu0 0.0
    %6742 = vmatprep.mubr.f32.mxu0 0.0
    %6743 = vmatmul.mubr.f32.gmra.mrb[0].mxu0 %v6439
    %v6744 = vpop.f32.mrb[0].mxu0
    %v6745 = vadd.f32 %v6675, %v6744
    %v6746 = vpop.f32.mrb[0].mxu0
    %6747 = vdwg.mxu0
    %v6748 = vld [vmem:[#allocation11] sm:$0x1]
    %v6750 = vlaneseq
    %v6751 = vshrl.u32 %v6750, 7
    %v6752 = vsub.s32 0, %v6751
    %v6753 = vrot.slane %v6748, %v6752
    %v6755 = vadd.f32 %v6745, %v6753
    %v6756 = vld [vmem:[#allocation7] sm:$0xff]
    %v6757 = vld [vmem:[#allocation7 + $0x8] sm:$0xff]
    %v6758 = vld [vmem:[#allocation7 + $0x10] sm:$0xff]
    %v6759 = vld [vmem:[#allocation7 + $0x18] sm:$0xff]
    %6760 = vmatprep.subr.mxu0 0.0
    %6761 = vmatpush1.msra.mxu0 %v6756
    %6762 = vmatprep.subr.mxu0 0.0
    %6763 = vmatpush1.msra.mxu0 %v6757
    %6764 = vmatprep.subr.mxu0 0.0
    %6765 = vmatpush1.msra.mxu0 %v6758
    %6766 = vmatprep.subr.mxu0 0.0
    %6767 = vmatpush1.msra.mxu0 %v6759
    %6768 = vmatprep.subr.mxu0 0.0
    %6769 = vmatpush1.msra.mxu0 0.0
    %6770 = vmatprep.subr.mxu0 0.0
    %6771 = vmatpush1.msra.mxu0 0.0
    %6772 = vmatprep.subr.mxu0 0.0
    %6773 = vmatpush1.msra.mxu0 0.0
    %6774 = vmatprep.subr.mxu0 0.0
    %6775 = vmatpush1.msra.mxu0 0.0
    %6776 = vmatprep.subr.mxu0 0.0
    %6777 = vmatpush1.msra.mxu0 0.0
    %6778 = vmatprep.subr.mxu0 0.0
    %6779 = vmatpush1.msra.mxu0 0.0
    %6780 = vmatprep.subr.mxu0 0.0
    %6781 = vmatpush1.msra.mxu0 0.0
    %6782 = vmatprep.subr.mxu0 0.0
    %6783 = vmatpush1.msra.mxu0 0.0
    %6784 = vmatprep.subr.mxu0 0.0
    %6785 = vmatpush1.msra.mxu0 0.0
    %6786 = vmatprep.subr.mxu0 0.0
    %6787 = vmatpush1.msra.mxu0 0.0
    %6788 = vmatprep.subr.mxu0 0.0
    %6789 = vmatpush1.msra.mxu0 0.0
    %6790 = vmatprep.subr.mxu0 0.0
    %6791 = vmatpush1.msra.mxu0 0.0
    %6792 = vmatprep.subr.mxu0 0.0
    %6793 = vmatpush1.msra.mxu0 0.0
    %6794 = vmatprep.subr.mxu0 0.0
    %6795 = vmatpush1.msra.mxu0 0.0
    %6796 = vmatprep.subr.mxu0 0.0
    %6797 = vmatpush1.msra.mxu0 0.0
    %6798 = vmatprep.subr.mxu0 0.0
    %6799 = vmatpush1.msra.mxu0 0.0
    %6800 = vmatprep.subr.mxu0 0.0
    %6801 = vmatpush1.msra.mxu0 0.0
    %6802 = vmatprep.subr.mxu0 0.0
    %6803 = vmatpush1.msra.mxu0 0.0
    %6804 = vmatprep.subr.mxu0 0.0
    %6805 = vmatpush1.msra.mxu0 0.0
    %6806 = vmatprep.subr.mxu0 0.0
    %6807 = vmatpush1.msra.mxu0 0.0
    %6808 = vmatprep.subr.mxu0 0.0
    %6809 = vmatpush1.msra.mxu0 0.0
    %6810 = vmatprep.subr.mxu0 0.0
    %6811 = vmatpush1.msra.mxu0 0.0
    %6812 = vmatprep.subr.mxu0 0.0
    %6813 = vmatpush1.msra.mxu0 0.0
    %6814 = vmatprep.subr.mxu0 0.0
    %6815 = vmatpush1.msra.mxu0 0.0
    %6816 = vmatprep.subr.mxu0 0.0
    %6817 = vmatpush1.msra.mxu0 0.0
    %6818 = vmatprep.subr.mxu0 0.0
    %6819 = vmatpush1.msra.mxu0 0.0
    %6820 = vmatprep.subr.mxu0 0.0
    %6821 = vmatpush1.msra.mxu0 0.0
    %6822 = vmatprep.subr.mxu0 0.0
    %6823 = vmatpush1.msra.mxu0 0.0
    %6824 = vmatprep.mubr.f32.mxu0 0.0
    %6825 = vmatmul.mubr.f32.gmra.mrb[0].mxu0 %v5793
    %v6826 = vpop.f32.mrb[0].mxu0
    %v6827 = vadd.f32 0.0, %v6826
    %v6828 = vpop.f32.mrb[0].mxu0
    %6829 = vdwg.mxu0
    %v6830 = vadd.f32 %v6755, %v6827
    %v6831 = vxor.u32 %v6830, 2147483648
    %v6832 = vmul.f32 %v6831, 1.442695
    %v6833 = vpow.pop %v6832
    %v6834 = vadd.f32 %v6833, 1.0
    %v6835 = vrcp.pop %v6834
    %v6836 = vmul.f32 1.0, %v6835
    %v6837 = vld [vmem:[%s33] sm:$0xff]
    %v6838 = vld [vmem:[%s33 + $0x8] sm:$0xff]
    %v6839 = vld [vmem:[%s33 + $0x10] sm:$0xff]
    %v6840 = vld [vmem:[%s33 + $0x18] sm:$0xff]
    %v6841 = vld [vmem:[%s39] sm:$0xff]
    %v6842 = vld [vmem:[%s39 + $0x8] sm:$0xff]
    %v6843 = vld [vmem:[%s39 + $0x10] sm:$0xff]
    %v6844 = vld [vmem:[%s39 + $0x18] sm:$0xff]
    %6845 = vmatprep.subr.mxu0 0.0
    %6846 = vmatpush1.msra.mxu0 %v6841
    %6847 = vmatprep.subr.mxu0 0.0
    %6848 = vmatpush1.msra.mxu0 %v6842
    %6849 = vmatprep.subr.mxu0 0.0
    %6850 = vmatpush1.msra.mxu0 %v6843
    %6851 = vmatprep.subr.mxu0 0.0
    %6852 = vmatpush1.msra.mxu0 %v6844
    %6853 = vmatprep.subr.mxu0 0.0
    %6854 = vmatpush1.msra.mxu0 0.0
    %6855 = vmatprep.subr.mxu0 0.0
    %6856 = vmatpush1.msra.mxu0 0.0
    %6857 = vmatprep.subr.mxu0 0.0
    %6858 = vmatpush1.msra.mxu0 0.0
    %6859 = vmatprep.subr.mxu0 0.0
    %6860 = vmatpush1.msra.mxu0 0.0
    %6861 = vmatprep.subr.mxu0 0.0
    %6862 = vmatpush1.msra.mxu0 0.0
    %6863 = vmatprep.subr.mxu0 0.0
    %6864 = vmatpush1.msra.mxu0 0.0
    %6865 = vmatprep.subr.mxu0 0.0
    %6866 = vmatpush1.msra.mxu0 0.0
    %6867 = vmatprep.subr.mxu0 0.0
    %6868 = vmatpush1.msra.mxu0 0.0
    %6869 = vmatprep.subr.mxu0 0.0
    %6870 = vmatpush1.msra.mxu0 0.0
    %6871 = vmatprep.subr.mxu0 0.0
    %6872 = vmatpush1.msra.mxu0 0.0
    %6873 = vmatprep.subr.mxu0 0.0
    %6874 = vmatpush1.msra.mxu0 0.0
    %6875 = vmatprep.subr.mxu0 0.0
    %6876 = vmatpush1.msra.mxu0 0.0
    %6877 = vmatprep.subr.mxu0 0.0
    %6878 = vmatpush1.msra.mxu0 0.0
    %6879 = vmatprep.subr.mxu0 0.0
    %6880 = vmatpush1.msra.mxu0 0.0
    %6881 = vmatprep.subr.mxu0 0.0
    %6882 = vmatpush1.msra.mxu0 0.0
    %6883 = vmatprep.subr.mxu0 0.0
    %6884 = vmatpush1.msra.mxu0 0.0
    %6885 = vmatprep.subr.mxu0 0.0
    %6886 = vmatpush1.msra.mxu0 0.0
    %6887 = vmatprep.subr.mxu0 0.0
    %6888 = vmatpush1.msra.mxu0 0.0
    %6889 = vmatprep.subr.mxu0 0.0
    %6890 = vmatpush1.msra.mxu0 0.0
    %6891 = vmatprep.subr.mxu0 0.0
    %6892 = vmatpush1.msra.mxu0 0.0
    %6893 = vmatprep.subr.mxu0 0.0
    %6894 = vmatpush1.msra.mxu0 0.0
    %6895 = vmatprep.subr.mxu0 0.0
    %6896 = vmatpush1.msra.mxu0 0.0
    %6897 = vmatprep.subr.mxu0 0.0
    %6898 = vmatpush1.msra.mxu0 0.0
    %6899 = vmatprep.subr.mxu0 0.0
    %6900 = vmatpush1.msra.mxu0 0.0
    %6901 = vmatprep.subr.mxu0 0.0
    %6902 = vmatpush1.msra.mxu0 0.0
    %6903 = vmatprep.subr.mxu0 0.0
    %6904 = vmatpush1.msra.mxu0 0.0
    %6905 = vmatprep.subr.mxu0 0.0
    %6906 = vmatpush1.msra.mxu0 0.0
    %6907 = vmatprep.subr.mxu0 0.0
    %6908 = vmatpush1.msra.mxu0 0.0
    %6909 = vmatprep.mubr.f32.mxu0 0.0
    %6910 = vmatmul.mubr.f32.gmra.mrb[0].mxu0 %v6366
    %v6911 = vpop.f32.mrb[0].mxu0
    %v6912 = vadd.f32 0.0, %v6911
    %v6913 = vpop.f32.mrb[0].mxu0
    %6914 = vdwg.mxu0
    %6915 = vmatprep.subr.mxu0 0.0
    %6916 = vmatpush1.msra.mxu0 %v6837
    %6917 = vmatprep.subr.mxu0 0.0
    %6918 = vmatpush1.msra.mxu0 %v6838
    %6919 = vmatprep.subr.mxu0 0.0
    %6920 = vmatpush1.msra.mxu0 %v6839
    %6921 = vmatprep.subr.mxu0 0.0
    %6922 = vmatpush1.msra.mxu0 %v6840
    %6923 = vmatprep.subr.mxu0 0.0
    %6924 = vmatpush1.msra.mxu0 0.0
    %6925 = vmatprep.subr.mxu0 0.0
    %6926 = vmatpush1.msra.mxu0 0.0
    %6927 = vmatprep.subr.mxu0 0.0
    %6928 = vmatpush1.msra.mxu0 0.0
    %6929 = vmatprep.subr.mxu0 0.0
    %6930 = vmatpush1.msra.mxu0 0.0
    %6931 = vmatprep.subr.mxu0 0.0
    %6932 = vmatpush1.msra.mxu0 0.0
    %6933 = vmatprep.subr.mxu0 0.0
    %6934 = vmatpush1.msra.mxu0 0.0
    %6935 = vmatprep.subr.mxu0 0.0
    %6936 = vmatpush1.msra.mxu0 0.0
    %6937 = vmatprep.subr.mxu0 0.0
    %6938 = vmatpush1.msra.mxu0 0.0
    %6939 = vmatprep.subr.mxu0 0.0
    %6940 = vmatpush1.msra.mxu0 0.0
    %6941 = vmatprep.subr.mxu0 0.0
    %6942 = vmatpush1.msra.mxu0 0.0
    %6943 = vmatprep.subr.mxu0 0.0
    %6944 = vmatpush1.msra.mxu0 0.0
    %6945 = vmatprep.subr.mxu0 0.0
    %6946 = vmatpush1.msra.mxu0 0.0
    %6947 = vmatprep.subr.mxu0 0.0
    %6948 = vmatpush1.msra.mxu0 0.0
    %6949 = vmatprep.subr.mxu0 0.0
    %6950 = vmatpush1.msra.mxu0 0.0
    %6951 = vmatprep.subr.mxu0 0.0
    %6952 = vmatpush1.msra.mxu0 0.0
    %6953 = vmatprep.subr.mxu0 0.0
    %6954 = vmatpush1.msra.mxu0 0.0
    %6955 = vmatprep.subr.mxu0 0.0
    %6956 = vmatpush1.msra.mxu0 0.0
    %6957 = vmatprep.subr.mxu0 0.0
    %6958 = vmatpush1.msra.mxu0 0.0
    %6959 = vmatprep.subr.mxu0 0.0
    %6960 = vmatpush1.msra.mxu0 0.0
    %6961 = vmatprep.subr.mxu0 0.0
    %6962 = vmatpush1.msra.mxu0 0.0
    %6963 = vmatprep.subr.mxu0 0.0
    %6964 = vmatpush1.msra.mxu0 0.0
    %6965 = vmatprep.subr.mxu0 0.0
    %6966 = vmatpush1.msra.mxu0 0.0
    %6967 = vmatprep.subr.mxu0 0.0
    %6968 = vmatpush1.msra.mxu0 0.0
    %6969 = vmatprep.subr.mxu0 0.0
    %6970 = vmatpush1.msra.mxu0 0.0
    %6971 = vmatprep.subr.mxu0 0.0
    %6972 = vmatpush1.msra.mxu0 0.0
    %6973 = vmatprep.subr.mxu0 0.0
    %6974 = vmatpush1.msra.mxu0 0.0
    %6975 = vmatprep.subr.mxu0 0.0
    %6976 = vmatpush1.msra.mxu0 0.0
    %6977 = vmatprep.subr.mxu0 0.0
    %6978 = vmatpush1.msra.mxu0 0.0
    %6979 = vmatprep.mubr.f32.mxu0 0.0
    %6980 = vmatmul.mubr.f32.gmra.mrb[0].mxu0 %v6439
    %v6981 = vpop.f32.mrb[0].mxu0
    %v6982 = vadd.f32 %v6912, %v6981
    %v6983 = vpop.f32.mrb[0].mxu0
    %6984 = vdwg.mxu0
    %v6985 = vld [vmem:[#allocation13] sm:$0x1]
    %v6987 = vlaneseq
    %v6988 = vshrl.u32 %v6987, 7
    %v6989 = vsub.s32 0, %v6988
    %v6990 = vrot.slane %v6985, %v6989
    %v6992 = vadd.f32 %v6982, %v6990
    %v6993 = vld [vmem:[#allocation8] sm:$0xff]
    %v6994 = vld [vmem:[#allocation8 + $0x8] sm:$0xff]
    %v6995 = vld [vmem:[#allocation8 + $0x10] sm:$0xff]
    %v6996 = vld [vmem:[#allocation8 + $0x18] sm:$0xff]
    %6997 = vmatprep.subr.mxu0 0.0
    %6998 = vmatpush1.msra.mxu0 %v6993
    %6999 = vmatprep.subr.mxu0 0.0
    %7000 = vmatpush1.msra.mxu0 %v6994
    %7001 = vmatprep.subr.mxu0 0.0
    %7002 = vmatpush1.msra.mxu0 %v6995
    %7003 = vmatprep.subr.mxu0 0.0
    %7004 = vmatpush1.msra.mxu0 %v6996
    %7005 = vmatprep.subr.mxu0 0.0
    %7006 = vmatpush1.msra.mxu0 0.0
    %7007 = vmatprep.subr.mxu0 0.0
    %7008 = vmatpush1.msra.mxu0 0.0
    %7009 = vmatprep.subr.mxu0 0.0
    %7010 = vmatpush1.msra.mxu0 0.0
    %7011 = vmatprep.subr.mxu0 0.0
    %7012 = vmatpush1.msra.mxu0 0.0
    %7013 = vmatprep.subr.mxu0 0.0
    %7014 = vmatpush1.msra.mxu0 0.0
    %7015 = vmatprep.subr.mxu0 0.0
    %7016 = vmatpush1.msra.mxu0 0.0
    %7017 = vmatprep.subr.mxu0 0.0
    %7018 = vmatpush1.msra.mxu0 0.0
    %7019 = vmatprep.subr.mxu0 0.0
    %7020 = vmatpush1.msra.mxu0 0.0
    %7021 = vmatprep.subr.mxu0 0.0
    %7022 = vmatpush1.msra.mxu0 0.0
    %7023 = vmatprep.subr.mxu0 0.0
    %7024 = vmatpush1.msra.mxu0 0.0
    %7025 = vmatprep.subr.mxu0 0.0
    %7026 = vmatpush1.msra.mxu0 0.0
    %7027 = vmatprep.subr.mxu0 0.0
    %7028 = vmatpush1.msra.mxu0 0.0
    %7029 = vmatprep.subr.mxu0 0.0
    %7030 = vmatpush1.msra.mxu0 0.0
    %7031 = vmatprep.subr.mxu0 0.0
    %7032 = vmatpush1.msra.mxu0 0.0
    %7033 = vmatprep.subr.mxu0 0.0
    %7034 = vmatpush1.msra.mxu0 0.0
    %7035 = vmatprep.subr.mxu0 0.0
    %7036 = vmatpush1.msra.mxu0 0.0
    %7037 = vmatprep.subr.mxu0 0.0
    %7038 = vmatpush1.msra.mxu0 0.0
    %7039 = vmatprep.subr.mxu0 0.0
    %7040 = vmatpush1.msra.mxu0 0.0
    %7041 = vmatprep.subr.mxu0 0.0
    %7042 = vmatpush1.msra.mxu0 0.0
    %7043 = vmatprep.subr.mxu0 0.0
    %7044 = vmatpush1.msra.mxu0 0.0
    %7045 = vmatprep.subr.mxu0 0.0
    %7046 = vmatpush1.msra.mxu0 0.0
    %7047 = vmatprep.subr.mxu0 0.0
    %7048 = vmatpush1.msra.mxu0 0.0
    %7049 = vmatprep.subr.mxu0 0.0
    %7050 = vmatpush1.msra.mxu0 0.0
    %7051 = vmatprep.subr.mxu0 0.0
    %7052 = vmatpush1.msra.mxu0 0.0
    %7053 = vmatprep.subr.mxu0 0.0
    %7054 = vmatpush1.msra.mxu0 0.0
    %7055 = vmatprep.subr.mxu0 0.0
    %7056 = vmatpush1.msra.mxu0 0.0
    %7057 = vmatprep.subr.mxu0 0.0
    %7058 = vmatpush1.msra.mxu0 0.0
    %7059 = vmatprep.subr.mxu0 0.0
    %7060 = vmatpush1.msra.mxu0 0.0
    %7061 = vmatprep.mubr.f32.mxu0 0.0
    %7062 = vmatmul.mubr.f32.gmra.mrb[0].mxu0 %v5793
    %v7063 = vpop.f32.mrb[0].mxu0
    %v7064 = vadd.f32 0.0, %v7063
    %v7065 = vpop.f32.mrb[0].mxu0
    %7066 = vdwg.mxu0
    %v7067 = vmul.f32 %v6599, %v7064
    %v7068 = vadd.f32 %v6992, %v7067
    %v7069 = vtanh.pop %v7068
    %v7070 = vsub.f32 1.0, %v6836
    %v7071 = vmul.f32 %v7070, %v7069
    %v7072 = vmul.f32 %v6836, %v5713
    %v7073 = vadd.f32 %v7071, %v7072
    %v7074 = vld [vmem:[%s53] sm:$0xff]
    %v7075 = vld [vmem:[%s53 + $0x8] sm:$0xff]
    %v7076 = vld [vmem:[%s53 + $0x10] sm:$0xff]
    %v7077 = vld [vmem:[%s53 + $0x18] sm:$0xff]
    %v7078 = vld [vmem:[#allocation14] sm:$0xff]
    %v7079 = vld [vmem:[#allocation14 + $0x8] sm:$0xff]
    %v7080 = vld [vmem:[#allocation14 + $0x10] sm:$0xff]
    %v7081 = vld [vmem:[#allocation14 + $0x18] sm:$0xff]
    %7082 = vmatprep.subr.mxu0 0.0
    %7083 = vmatpush1.msra.mxu0 %v7078
    %7084 = vmatprep.subr.mxu0 0.0
    %7085 = vmatpush1.msra.mxu0 %v7079
    %7086 = vmatprep.subr.mxu0 0.0
    %7087 = vmatpush1.msra.mxu0 %v7080
    %7088 = vmatprep.subr.mxu0 0.0
    %7089 = vmatpush1.msra.mxu0 %v7081
    %7090 = vmatprep.subr.mxu0 0.0
    %7091 = vmatpush1.msra.mxu0 0.0
    %7092 = vmatprep.subr.mxu0 0.0
    %7093 = vmatpush1.msra.mxu0 0.0
    %7094 = vmatprep.subr.mxu0 0.0
    %7095 = vmatpush1.msra.mxu0 0.0
    %7096 = vmatprep.subr.mxu0 0.0
    %7097 = vmatpush1.msra.mxu0 0.0
    %7098 = vmatprep.subr.mxu0 0.0
    %7099 = vmatpush1.msra.mxu0 0.0
    %7100 = vmatprep.subr.mxu0 0.0
    %7101 = vmatpush1.msra.mxu0 0.0
    %7102 = vmatprep.subr.mxu0 0.0
    %7103 = vmatpush1.msra.mxu0 0.0
    %7104 = vmatprep.subr.mxu0 0.0
    %7105 = vmatpush1.msra.mxu0 0.0
    %7106 = vmatprep.subr.mxu0 0.0
    %7107 = vmatpush1.msra.mxu0 0.0
    %7108 = vmatprep.subr.mxu0 0.0
    %7109 = vmatpush1.msra.mxu0 0.0
    %7110 = vmatprep.subr.mxu0 0.0
    %7111 = vmatpush1.msra.mxu0 0.0
    %7112 = vmatprep.subr.mxu0 0.0
    %7113 = vmatpush1.msra.mxu0 0.0
    %7114 = vmatprep.subr.mxu0 0.0
    %7115 = vmatpush1.msra.mxu0 0.0
    %7116 = vmatprep.subr.mxu0 0.0
    %7117 = vmatpush1.msra.mxu0 0.0
    %7118 = vmatprep.subr.mxu0 0.0
    %7119 = vmatpush1.msra.mxu0 0.0
    %7120 = vmatprep.subr.mxu0 0.0
    %7121 = vmatpush1.msra.mxu0 0.0
    %7122 = vmatprep.subr.mxu0 0.0
    %7123 = vmatpush1.msra.mxu0 0.0
    %7124 = vmatprep.subr.mxu0 0.0
    %7125 = vmatpush1.msra.mxu0 0.0
    %7126 = vmatprep.subr.mxu0 0.0
    %7127 = vmatpush1.msra.mxu0 0.0
    %7128 = vmatprep.subr.mxu0 0.0
    %7129 = vmatpush1.msra.mxu0 0.0
    %7130 = vmatprep.subr.mxu0 0.0
    %7131 = vmatpush1.msra.mxu0 0.0
    %7132 = vmatprep.subr.mxu0 0.0
    %7133 = vmatpush1.msra.mxu0 0.0
    %7134 = vmatprep.subr.mxu0 0.0
    %7135 = vmatpush1.msra.mxu0 0.0
    %7136 = vmatprep.subr.mxu0 0.0
    %7137 = vmatpush1.msra.mxu0 0.0
    %7138 = vmatprep.subr.mxu0 0.0
    %7139 = vmatpush1.msra.mxu0 0.0
    %7140 = vmatprep.subr.mxu0 0.0
    %7141 = vmatpush1.msra.mxu0 0.0
    %7142 = vmatprep.subr.mxu0 0.0
    %7143 = vmatpush1.msra.mxu0 0.0
    %7144 = vmatprep.subr.mxu0 0.0
    %7145 = vmatpush1.msra.mxu0 0.0
    %7146 = vmatprep.mubr.f32.mxu0 0.0
    %7147 = vmatmul.mubr.f32.gmra.mrb[0].mxu0 %v6366
    %v7148 = vpop.f32.mrb[0].mxu0
    %v7149 = vadd.f32 0.0, %v7148
    %v7150 = vpop.f32.mrb[0].mxu0
    %7151 = vdwg.mxu0
    %v7153 = vsel %vm410, %v7073, 0
    %7155 = vmatprep.subr.mxu0 0.0
    %7156 = vmatpush1.msra.mxu0 %v7074
    %7157 = vmatprep.subr.mxu0 0.0
    %7158 = vmatpush1.msra.mxu0 %v7075
    %7159 = vmatprep.subr.mxu0 0.0
    %7160 = vmatpush1.msra.mxu0 %v7076
    %7161 = vmatprep.subr.mxu0 0.0
    %7162 = vmatpush1.msra.mxu0 %v7077
    %7163 = vmatprep.subr.mxu0 0.0
    %7164 = vmatpush1.msra.mxu0 0.0
    %7165 = vmatprep.subr.mxu0 0.0
    %7166 = vmatpush1.msra.mxu0 0.0
    %7167 = vmatprep.subr.mxu0 0.0
    %7168 = vmatpush1.msra.mxu0 0.0
    %7169 = vmatprep.subr.mxu0 0.0
    %7170 = vmatpush1.msra.mxu0 0.0
    %7171 = vmatprep.subr.mxu0 0.0
    %7172 = vmatpush1.msra.mxu0 0.0
    %7173 = vmatprep.subr.mxu0 0.0
    %7174 = vmatpush1.msra.mxu0 0.0
    %7175 = vmatprep.subr.mxu0 0.0
    %7176 = vmatpush1.msra.mxu0 0.0
    %7177 = vmatprep.subr.mxu0 0.0
    %7178 = vmatpush1.msra.mxu0 0.0
    %7179 = vmatprep.subr.mxu0 0.0
    %7180 = vmatpush1.msra.mxu0 0.0
    %7181 = vmatprep.subr.mxu0 0.0
    %7182 = vmatpush1.msra.mxu0 0.0
    %7183 = vmatprep.subr.mxu0 0.0
    %7184 = vmatpush1.msra.mxu0 0.0
    %7185 = vmatprep.subr.mxu0 0.0
    %7186 = vmatpush1.msra.mxu0 0.0
    %7187 = vmatprep.subr.mxu0 0.0
    %7188 = vmatpush1.msra.mxu0 0.0
    %7189 = vmatprep.subr.mxu0 0.0
    %7190 = vmatpush1.msra.mxu0 0.0
    %7191 = vmatprep.subr.mxu0 0.0
    %7192 = vmatpush1.msra.mxu0 0.0
    %7193 = vmatprep.subr.mxu0 0.0
    %7194 = vmatpush1.msra.mxu0 0.0
    %7195 = vmatprep.subr.mxu0 0.0
    %7196 = vmatpush1.msra.mxu0 0.0
    %7197 = vmatprep.subr.mxu0 0.0
    %7198 = vmatpush1.msra.mxu0 0.0
    %7199 = vmatprep.subr.mxu0 0.0
    %7200 = vmatpush1.msra.mxu0 0.0
    %7201 = vmatprep.subr.mxu0 0.0
    %7202 = vmatpush1.msra.mxu0 0.0
    %7203 = vmatprep.subr.mxu0 0.0
    %7204 = vmatpush1.msra.mxu0 0.0
    %7205 = vmatprep.subr.mxu0 0.0
    %7206 = vmatpush1.msra.mxu0 0.0
    %7207 = vmatprep.subr.mxu0 0.0
    %7208 = vmatpush1.msra.mxu0 0.0
    %7209 = vmatprep.subr.mxu0 0.0
    %7210 = vmatpush1.msra.mxu0 0.0
    %7211 = vmatprep.subr.mxu0 0.0
    %7212 = vmatpush1.msra.mxu0 0.0
    %7213 = vmatprep.subr.mxu0 0.0
    %7214 = vmatpush1.msra.mxu0 0.0
    %7215 = vmatprep.subr.mxu0 0.0
    %7216 = vmatpush1.msra.mxu0 0.0
    %7217 = vmatprep.subr.mxu0 0.0
    %7218 = vmatpush1.msra.mxu0 0.0
    %7219 = vmatprep.mubr.f32.mxu0 0.0
    %7220 = vmatmul.mubr.f32.gmra.mrb[0].mxu0 %v7153
    %v7221 = vpop.f32.mrb[0].mxu0
    %v7222 = vadd.f32 %v7149, %v7221
    %v7223 = vpop.f32.mrb[0].mxu0
    %7224 = vdwg.mxu0
    %v7225 = vld [vmem:[#allocation16] sm:$0xff]
    %v7226 = vld [vmem:[#allocation16 + $0x8] sm:$0xff]
    %v7227 = vld [vmem:[#allocation16 + $0x10] sm:$0xff]
    %v7228 = vld [vmem:[#allocation16 + $0x18] sm:$0xff]
    %7229 = vmatprep.subr.mxu0 0.0
    %7230 = vmatpush1.msra.mxu0 %v7225
    %7231 = vmatprep.subr.mxu0 0.0
    %7232 = vmatpush1.msra.mxu0 %v7226
    %7233 = vmatprep.subr.mxu0 0.0
    %7234 = vmatpush1.msra.mxu0 %v7227
    %7235 = vmatprep.subr.mxu0 0.0
    %7236 = vmatpush1.msra.mxu0 %v7228
    %7237 = vmatprep.subr.mxu0 0.0
    %7238 = vmatpush1.msra.mxu0 0.0
    %7239 = vmatprep.subr.mxu0 0.0
    %7240 = vmatpush1.msra.mxu0 0.0
    %7241 = vmatprep.subr.mxu0 0.0
    %7242 = vmatpush1.msra.mxu0 0.0
    %7243 = vmatprep.subr.mxu0 0.0
    %7244 = vmatpush1.msra.mxu0 0.0
    %7245 = vmatprep.subr.mxu0 0.0
    %7246 = vmatpush1.msra.mxu0 0.0
    %7247 = vmatprep.subr.mxu0 0.0
    %7248 = vmatpush1.msra.mxu0 0.0
    %7249 = vmatprep.subr.mxu0 0.0
    %7250 = vmatpush1.msra.mxu0 0.0
    %7251 = vmatprep.subr.mxu0 0.0
    %7252 = vmatpush1.msra.mxu0 0.0
    %7253 = vmatprep.subr.mxu0 0.0
    %7254 = vmatpush1.msra.mxu0 0.0
    %7255 = vmatprep.subr.mxu0 0.0
    %7256 = vmatpush1.msra.mxu0 0.0
    %7257 = vmatprep.subr.mxu0 0.0
    %7258 = vmatpush1.msra.mxu0 0.0
    %7259 = vmatprep.subr.mxu0 0.0
    %7260 = vmatpush1.msra.mxu0 0.0
    %7261 = vmatprep.subr.mxu0 0.0
    %7262 = vmatpush1.msra.mxu0 0.0
    %7263 = vmatprep.subr.mxu0 0.0
    %7264 = vmatpush1.msra.mxu0 0.0
    %7265 = vmatprep.subr.mxu0 0.0
    %7266 = vmatpush1.msra.mxu0 0.0
    %7267 = vmatprep.subr.mxu0 0.0
    %7268 = vmatpush1.msra.mxu0 0.0
    %7269 = vmatprep.subr.mxu0 0.0
    %7270 = vmatpush1.msra.mxu0 0.0
    %7271 = vmatprep.subr.mxu0 0.0
    %7272 = vmatpush1.msra.mxu0 0.0
    %7273 = vmatprep.subr.mxu0 0.0
    %7274 = vmatpush1.msra.mxu0 0.0
    %7275 = vmatprep.subr.mxu0 0.0
    %7276 = vmatpush1.msra.mxu0 0.0
    %7277 = vmatprep.subr.mxu0 0.0
    %7278 = vmatpush1.msra.mxu0 0.0
    %7279 = vmatprep.subr.mxu0 0.0
    %7280 = vmatpush1.msra.mxu0 0.0
    %7281 = vmatprep.subr.mxu0 0.0
    %7282 = vmatpush1.msra.mxu0 0.0
    %7283 = vmatprep.subr.mxu0 0.0
    %7284 = vmatpush1.msra.mxu0 0.0
    %7285 = vmatprep.subr.mxu0 0.0
    %7286 = vmatpush1.msra.mxu0 0.0
    %7287 = vmatprep.subr.mxu0 0.0
    %7288 = vmatpush1.msra.mxu0 0.0
    %7289 = vmatprep.subr.mxu0 0.0
    %7290 = vmatpush1.msra.mxu0 0.0
    %7291 = vmatprep.subr.mxu0 0.0
    %7292 = vmatpush1.msra.mxu0 0.0
    %7293 = vmatprep.mubr.f32.mxu0 0.0
    %7294 = vmatmul.mubr.f32.gmra.mrb[0].mxu0 %v6439
    %v7295 = vpop.f32.mrb[0].mxu0
    %v7296 = vadd.f32 0.0, %v7295
    %v7297 = vpop.f32.mrb[0].mxu0
    %7298 = vdwg.mxu0
    %v7299 = vadd.f32 %v7222, %v7296
    %v7300 = vld [vmem:[#allocation17] sm:$0x1]
    %v7302 = vlaneseq
    %v7303 = vshrl.u32 %v7302, 7
    %v7304 = vsub.s32 0, %v7303
    %v7305 = vrot.slane %v7300, %v7304
    %v7307 = vadd.f32 %v7299, %v7305
    %s7308 = scalar_lea.vmem [#allocation19], 10
    %7309 = vst [vmem:[%s7308] sm:$0x3] %v7307
    // Predicated region
    $region162: #{seq2seq_forward.1} parent=1 // pred_check
      _
    $region163: #{seq2seq_forward.1} parent=1 // pred_check_branch
      %7311 = sbr.rel (0) target = $region165
    $region164: #{seq2seq_forward.1} parent=1 // pred_region
      %s7313 = ssub.s32 192, 192
      %7314 = vsyncadd [#allocation4], %s7313
      %s7315 = sshll.u32 [#allocation19], 4
      %s7316 = int_to_ptr.vmem [resolvable:$true] %s7315
      %7321 = dma.vmem_to_hbm [thread:$0]  %s7316, 192, %s61, [#allocation4], 32, 32, 2
    $region165: #{seq2seq_forward.1} parent=1 // pred_fallthru
      _
    // Predicated region
    $region166: #{seq2seq_forward.1} parent=1 // pred_check
      _
    $region167: #{seq2seq_forward.1} parent=1 // pred_check_branch
      %7323 = sbr.rel (0) target = $region169
    $region168: #{seq2seq_forward.1} parent=1 // pred_region
      %7324 = dma.done [#allocation4], 192
    $region169: #{seq2seq_forward.1} parent=1 // pred_fallthru
      _
    %7325 = vsyncpa [#allocation3], 1
    %7326 = vsyncpa [#allocation6], 1
    %7327 = vsyncpa [#allocation9], 1
    %7328 = vsyncpa [#allocation12], 1
    %7329 = vsyncpa [#allocation15], 1
    %7330 = vsyncpa [#allocation18], 1
    %7331 = vsyncpa [#allocation4], 1

</llo_original>
